<compile_context>
chip_gen: v5e
topology: v5e:2x2
jax: 0.10.0
libtpu: 0.0.40
codegen_flags: <defaults>
</compile_context>

<pallas_src>
import functools
import math

import jax
import jax.numpy as jnp
from jax import lax
from jax.experimental import pallas as pl
from jax.experimental.pallas import tpu as pltpu


# ----------------------------------------------------------------------------
# Per-generation scoped-VMEM budget
# ----------------------------------------------------------------------------
@functools.lru_cache(maxsize=None)
def _vmem_limit_bytes():
    """~3/4 of physical VMEM, capped at 96 MiB.

    v7x (64 MiB physical) -> 48 MiB, leaving headroom for Mosaic internal
    scratch and the double-buffered BlockSpec windows; v5e/v6e (128 MiB) ->
    96 MiB so large matmul tiles keep pipelining.
    """
    try:
        cap = pltpu.get_tpu_info().vmem_capacity_bytes
    except Exception:
        cap = 64 * 1024 * 1024  # conservative fallback, safe on every generation
    return int(min(cap * 3 // 4, 96 * 1024 * 1024))


def _ceil_to(x, m):
    return ((x + m - 1) // m) * m


def _fit_tile(dim, target, align):
    """Largest multiple of `align` <= target that evenly tiles the padded dim."""
    dim_p = _ceil_to(dim, align)
    t = min(_ceil_to(target, align), dim_p)
    while dim_p % t:
        t -= align
    return t


def _row_tile(M, target, *, align=16, min_steps=1):
    """Row (sublane) tile: 16-aligned for bf16 packing.  Prefers keeping a large
    tile (+ padded rows) over collapsing to a tiny divisor, and optionally
    halves the tile until there are >= min_steps grid steps (v7x megacore)."""
    Mp0 = _ceil_to(M, align)
    cap = min(_ceil_to(target, align), Mp0)
    t = cap
    while Mp0 % t and t - align >= max(align, cap // 4):
        t -= align
    if Mp0 % t:
        t = cap                       # keep big tile, pad rows instead
    Mp = _ceil_to(M, t)
    while (Mp // t) < min_steps and t > align and (t // 2) % align == 0:
        t //= 2
        Mp = _ceil_to(M, t)
    return t, Mp


# ----------------------------------------------------------------------------
# Tiled linear: (M, K) @ (K, N) + (N,)  [bf16 in, f32 accumulate]
# ----------------------------------------------------------------------------
def _linear_kernel(x_ref, w_ref, b_ref, o_ref, acc_ref, *, n_k):
    @pl.when(pl.program_id(2) == 0)
    def _init():
        acc_ref[...] = jnp.zeros_like(acc_ref)

    acc_ref[...] += jnp.dot(x_ref[...], w_ref[...],
                            preferred_element_type=jnp.float32)

    @pl.when(pl.program_id(2) == n_k - 1)
    def _finalize():
        o_ref[...] = (acc_ref[...] + b_ref[...]).astype(o_ref.dtype)


def linear_pallas(x2d, w, b, *, out_dtype=jnp.bfloat16, tm=256, tn=256, tk=512):
    # TODO(synk): if profiles show exposed weight DMA on v7x, add
    # pipeline_mode=pl.Buffered(3) on the (tk, tn) weight spec only.
    M, K = x2d.shape
    N = w.shape[1]
    tm, Mp = _row_tile(M, tm)
    tk = _fit_tile(K, tk, 128)
    tn = _fit_tile(N, tn, 128)
    Kp, Np = _ceil_to(K, tk), _ceil_to(N, tn)

    xb = x2d.astype(jnp.bfloat16)
    wb = w.astype(jnp.bfloat16)
    bb = b.astype(jnp.float32)
    if (Mp, Kp) != (M, K):
        xb = jnp.pad(xb, ((0, Mp - M), (0, Kp - K)))
    if (Kp, Np) != (K, N):
        wb = jnp.pad(wb, ((0, Kp - K), (0, Np - N)))
    if Np != N:
        bb = jnp.pad(bb, ((0, Np - N),))

    n_k = Kp // tk
    kern = functools.partial(_linear_kernel, n_k=n_k)
    out = pl.pallas_call(
        kern,
        out_shape=jax.ShapeDtypeStruct((Mp, Np), out_dtype),
        grid=(Mp // tm, Np // tn, n_k),
        in_specs=[
            pl.BlockSpec((tm, tk), lambda i, j, k: (i, k)),
            pl.BlockSpec((tk, tn), lambda i, j, k: (k, j)),
            pl.BlockSpec((1, tn), lambda i, j, k: (0, j)),
        ],
        out_specs=pl.BlockSpec((tm, tn), lambda i, j, k: (i, j)),
        scratch_shapes=[pltpu.VMEM((tm, tn), jnp.float32)],
        compiler_params=pltpu.CompilerParams(
            dimension_semantics=("parallel", "parallel", "arbitrary"),
            vmem_limit_bytes=_vmem_limit_bytes(),
        ),
    )(xb, wb, bb.reshape(1, Np))
    if (Mp, Np) != (M, N):
        out = out[:M, :N]
    return out


# ----------------------------------------------------------------------------
# Fused linear + residual add + LayerNorm (attention out-projection epilogue)
# ----------------------------------------------------------------------------
def _linear_add_ln_kernel(x_ref, w_ref, b_ref, res_ref, g_ref, be_ref,
                          o_ref, acc_ref, *, n_k, eps):
    @pl.when(pl.program_id(1) == 0)
    def _init():
        acc_ref[...] = jnp.zeros_like(acc_ref)

    acc_ref[...] += jnp.dot(x_ref[...], w_ref[...],
                            preferred_element_type=jnp.float32)

    @pl.when(pl.program_id(1) == n_k - 1)
    def _finalize():
        r = acc_ref[...] + b_ref[...] + res_ref[...].astype(jnp.float32)
        mu = jnp.mean(r, axis=-1, keepdims=True)
        var = jnp.mean(jnp.square(r - mu), axis=-1, keepdims=True)
        y = (r - mu) * lax.rsqrt(var + eps)
        o_ref[...] = (y * g_ref[...] + be_ref[...]).astype(o_ref.dtype)


def linear_add_ln_pallas(x2d, w, b, res2d, gamma, beta, *, eps=1e-5,
                         tm=256, tk=512):
    """x@w + b + residual, LayerNorm — fused epilogue saves one full HBM write
    + re-read of the (M, D) activation per LN pass."""
    M, K = x2d.shape
    D = w.shape[1]
    assert K % 128 == 0 and D % 128 == 0
    tk = _fit_tile(K, tk, 128)
    tm, Mp = _row_tile(M, tm, min_steps=2)   # >=2 parallel row steps for v7x
    xb = x2d.astype(jnp.bfloat16)
    rb = res2d.astype(jnp.bfloat16)
    if Mp != M:
        xb = jnp.pad(xb, ((0, Mp - M), (0, 0)))
        rb = jnp.pad(rb, ((0, Mp - M), (0, 0)))
    n_k = K // tk
    kern = functools.partial(_linear_add_ln_kernel, n_k=n_k, eps=eps)
    out = pl.pallas_call(
        kern,
        out_shape=jax.ShapeDtypeStruct((Mp, D), jnp.bfloat16),
        grid=(Mp // tm, n_k),
        in_specs=[
            pl.BlockSpec((tm, tk), lambda i, k: (i, k)),
            pl.BlockSpec((tk, D), lambda i, k: (k, 0)),
            pl.BlockSpec((1, D), lambda i, k: (0, 0)),
            pl.BlockSpec((tm, D), lambda i, k: (i, 0)),
            pl.BlockSpec((1, D), lambda i, k: (0, 0)),
            pl.BlockSpec((1, D), lambda i, k: (0, 0)),
        ],
        out_specs=pl.BlockSpec((tm, D), lambda i, k: (i, 0)),
        scratch_shapes=[pltpu.VMEM((tm, D), jnp.float32)],
        compiler_params=pltpu.CompilerParams(
            dimension_semantics=("parallel", "arbitrary"),
            vmem_limit_bytes=_vmem_limit_bytes(),
        ),
    )(xb, w.astype(jnp.bfloat16), b.astype(jnp.float32).reshape(1, D),
      rb, gamma.astype(jnp.float32).reshape(1, D),
      beta.astype(jnp.float32).reshape(1, D))
    if Mp != M:
        out = out[:M]
    return out


# ----------------------------------------------------------------------------
# Fused position-wise FFN (+ residual add + LayerNorm), d_ff tiled as reduction
# ----------------------------------------------------------------------------
def _ffn_add_ln_kernel(x_ref, w1_ref, b1_ref, w2_ref, b2_ref, res_ref,
                       g_ref, be_ref, o_ref, acc_ref, *, n_f, eps):
    @pl.when(pl.program_id(1) == 0)
    def _init():
        acc_ref[...] = jnp.zeros_like(acc_ref)

    h = jnp.dot(x_ref[...], w1_ref[...],
                preferred_element_type=jnp.float32) + b1_ref[...]
    h = jnp.maximum(h, 0.0)
    acc_ref[...] += jnp.dot(h.astype(jnp.bfloat16), w2_ref[...],
                            preferred_element_type=jnp.float32)

    @pl.when(pl.program_id(1) == n_f - 1)
    def _finalize():
        r = acc_ref[...] + b2_ref[...] + res_ref[...].astype(jnp.float32)
        mu = jnp.mean(r, axis=-1, keepdims=True)
        var = jnp.mean(jnp.square(r - mu), axis=-1, keepdims=True)
        y = (r - mu) * lax.rsqrt(var + eps)
        o_ref[...] = (y * g_ref[...] + be_ref[...]).astype(o_ref.dtype)


def ffn_add_ln_pallas(x2d, w1, b1, w2, b2, res2d, gamma, beta, *,
                      eps=1e-5, tm=256, tf=512):
    """relu(x@w1+b1)@w2+b2 + residual, LayerNorm.  d_ff is an 'arbitrary'
    reduction grid axis so weight blocks stay bounded (fits v7x 64 MiB)."""
    M, D = x2d.shape
    F = w1.shape[1]
    assert D % 128 == 0 and F % 128 == 0
    tf = _fit_tile(F, tf, 128)
    tm, Mp = _row_tile(M, tm, min_steps=2)
    xb = x2d.astype(jnp.bfloat16)
    rb = res2d.astype(jnp.bfloat16)
    if Mp != M:
        xb = jnp.pad(xb, ((0, Mp - M), (0, 0)))
        rb = jnp.pad(rb, ((0, Mp - M), (0, 0)))
    n_f = F // tf
    kern = functools.partial(_ffn_add_ln_kernel, n_f=n_f, eps=eps)
    out = pl.pallas_call(
        kern,
        out_shape=jax.ShapeDtypeStruct((Mp, D), jnp.bfloat16),
        grid=(Mp // tm, n_f),
        in_specs=[
            pl.BlockSpec((tm, D), lambda i, f: (i, 0)),
            pl.BlockSpec((D, tf), lambda i, f: (0, f)),
            pl.BlockSpec((1, tf), lambda i, f: (0, f)),
            pl.BlockSpec((tf, D), lambda i, f: (f, 0)),
            pl.BlockSpec((1, D), lambda i, f: (0, 0)),
            pl.BlockSpec((tm, D), lambda i, f: (i, 0)),
            pl.BlockSpec((1, D), lambda i, f: (0, 0)),
            pl.BlockSpec((1, D), lambda i, f: (0, 0)),
        ],
        out_specs=pl.BlockSpec((tm, D), lambda i, f: (i, 0)),
        scratch_shapes=[pltpu.VMEM((tm, D), jnp.float32)],
        compiler_params=pltpu.CompilerParams(
            dimension_semantics=("parallel", "arbitrary"),
            vmem_limit_bytes=_vmem_limit_bytes(),
        ),
    )(xb, w1.astype(jnp.bfloat16), b1.astype(jnp.float32).reshape(1, F),
      w2.astype(jnp.bfloat16), b2.astype(jnp.float32).reshape(1, D),
      rb, gamma.astype(jnp.float32).reshape(1, D),
      beta.astype(jnp.float32).reshape(1, D))
    if Mp != M:
        out = out[:M]
    return out


# ----------------------------------------------------------------------------
# Multi-head attention: (batch, head-group, kv-tile) grid, flash-style online
# softmax, in-kernel masking, single lane-dense store per head group
# ----------------------------------------------------------------------------
def _mha_kernel(ids_ref, q_ref, k_ref, v_ref, o_ref, m_sc, l_sc, acc_sc, *,
                hg, dk, scale, causal, tkv, n_kv):
    t = pl.program_id(2)

    @pl.when(t == 0)
    def _init():
        m_sc[...] = jnp.full(m_sc.shape, -1e30, dtype=jnp.float32)
        l_sc[...] = jnp.zeros_like(l_sc)
        acc_sc[...] = jnp.zeros_like(acc_sc)

    q = q_ref[0]                                    # (Sq,  GW) bf16
    k = k_ref[0]                                    # (tkv, GW) bf16
    v = v_ref[0]                                    # (tkv, GW) bf16
    Sq = q.shape[0]

    neg = jnp.float32(-1e9)
    zero = jnp.float32(0.0)
    # padding mask built in-kernel from key token ids (id 0 == <pad>)
    bias = jnp.where(ids_ref[0] == 0, neg, zero)                      # (1, tkv)
    if causal:
        qi = lax.broadcasted_iota(jnp.int32, (Sq, tkv), 0)
        ki = lax.broadcasted_iota(jnp.int32, (Sq, tkv), 1) + t * tkv
        bias = bias + jnp.where(ki > qi, neg, zero)                   # (Sq, tkv)

    # NOTE: with dk < MXU depth each QK^T feeds only dk contraction rows;
    # prefer head_dim >= 64 (128 ideal) in real configs.
    for h in range(hg):                     # heads of this >=128-lane group
        lo = h * dk
        qh = q[:, lo:lo + dk]
        kh = k[:, lo:lo + dk]
        vh = v[:, lo:lo + dk]
        s = lax.dot_general(qh, kh, (((1,), (1,)), ((), ())),
                            preferred_element_type=jnp.float32) * scale + bias
        m_prev = m_sc[h]                                              # (Sq, 1)
        m_new = jnp.maximum(m_prev, jnp.max(s, axis=-1, keepdims=True))
        alpha = jnp.exp(m_prev - m_new)
        p = jnp.exp(s - m_new)
        l_sc[h] = alpha * l_sc[h] + jnp.sum(p, axis=-1, keepdims=True)
        acc_sc[:, lo:lo + dk] = alpha * acc_sc[:, lo:lo + dk] + jnp.dot(
            p.astype(v.dtype), vh, preferred_element_type=jnp.float32)
        m_sc[h] = m_new

    @pl.when(t == n_kv - 1)
    def _finalize():
        for h in range(hg):
            lo = h * dk
            acc_sc[:, lo:lo + dk] = acc_sc[:, lo:lo + dk] * pl.reciprocal(
                l_sc[h], approx=True)
        o_ref[0] = acc_sc[...].astype(o_ref.dtype)   # one lane-dense store


def attention_pallas(q_src, kv_src, key_ids, *, d_model, head, causal,
                     q_col, k_col, v_col, max_kv_tile=512):
    """q_src carries Q in column block q_col (units of d_model); kv_src carries
    K/V in column blocks k_col / v_col of a fused projection output — the
    kernel reads them straight out via BlockSpec index_maps (no JAX-side
    slices or (0,2,1,3) transposes)."""
    assert d_model % 128 == 0, "fused column blocks need d_model % 128 == 0"
    B, Sq = q_src.shape[0], q_src.shape[1]
    Skv = kv_src.shape[1]
    D = d_model
    dk = D // head
    # head-group width: >=128 lanes so every column block stays vreg aligned
    if dk % 128 == 0:
        gw = dk
    elif 128 % dk == 0:
        gw = 128
    else:
        gw = D
    hg = gw // dk               # heads handled per grid step
    G = D // gw                 # head-group grid axis (extra parallelism)
    # kv tiling bounds VMEM to O(Sq*D) and overlaps K/V DMA with compute
    if Skv > max_kv_tile and Skv % 128 == 0:
        tkv = _fit_tile(Skv, max_kv_tile, 128)
    else:
        tkv = Skv
    n_kv = Skv // tkv

    ids3 = key_ids.astype(jnp.int32).reshape(B, 1, Skv)
    qoff, koff, voff = q_col * G, k_col * G, v_col * G
    kern = functools.partial(_mha_kernel, hg=hg, dk=dk,
                             scale=1.0 / math.sqrt(dk), causal=causal,
                             tkv=tkv, n_kv=n_kv)
    return pl.pallas_call(
        kern,
        out_shape=jax.ShapeDtypeStruct((B, Sq, D), jnp.bfloat16),
        grid=(B, G, n_kv),
        in_specs=[
            pl.BlockSpec((1, 1, tkv), lambda b, g, t: (b, 0, t)),
            pl.BlockSpec((1, Sq, gw), lambda b, g, t: (b, 0, qoff + g)),
            pl.BlockSpec((1, tkv, gw), lambda b, g, t: (b, t, koff + g)),
            pl.BlockSpec((1, tkv, gw), lambda b, g, t: (b, t, voff + g)),
        ],
        out_specs=pl.BlockSpec((1, Sq, gw), lambda b, g, t: (b, 0, g)),
        scratch_shapes=[
            pltpu.VMEM((hg, Sq, 1), jnp.float32),   # running max per head
            pltpu.VMEM((hg, Sq, 1), jnp.float32),   # running sum per head
            pltpu.VMEM((Sq, gw), jnp.float32),      # output accumulator
        ],
        compiler_params=pltpu.CompilerParams(
            dimension_semantics=("parallel", "parallel", "arbitrary"),
            vmem_limit_bytes=_vmem_limit_bytes(),
        ),
    )(ids3, q_src, kv_src, kv_src)


def mha_self_block(x, token_ids, p, ln_g, ln_b, *, head, d_model, causal):
    B, S, D = x.shape
    qkv = linear_pallas(x.reshape(-1, D), p["w_qkv"], p["b_qkv"],
                        tn=min(3 * D, 512)).reshape(B, S, 3 * D)
    o = attention_pallas(qkv, qkv, token_ids, d_model=D, head=head,
                         causal=causal, q_col=0, k_col=1, v_col=2)
    y = linear_add_ln_pallas(o.reshape(-1, D), p["wo"], p["bo"],
                             x.reshape(-1, D), ln_g, ln_b)
    return y.reshape(B, S, D)


def mha_cross_block(x_q, x_kv, key_ids, p, ln_g, ln_b, *, head, d_model):
    B, Sq, D = x_q.shape
    Skv = x_kv.shape[1]
    q = linear_pallas(x_q.reshape(-1, D), p["wq"], p["bq"]).reshape(B, Sq, D)
    kv = linear_pallas(x_kv.reshape(-1, D), p["w_kv"], p["b_kv"],
                       tn=min(2 * D, 512)).reshape(B, Skv, 2 * D)
    o = attention_pallas(q, kv, key_ids, d_model=D, head=head,
                         causal=False, q_col=0, k_col=0, v_col=1)
    y = linear_add_ln_pallas(o.reshape(-1, D), p["wo"], p["bo"],
                             x_q.reshape(-1, D), ln_g, ln_b)
    return y.reshape(B, Sq, D)


# ----------------------------------------------------------------------------
# Parameters, embeddings, layer wiring (plain JAX glue)
# ----------------------------------------------------------------------------
def _init_linear(key, fan_in, fan_out):
    kw, kb = jax.random.split(key)
    bound = 1.0 / math.sqrt(fan_in)
    w = jax.random.uniform(kw, (fan_in, fan_out), jnp.float32, -bound, bound)
    b = jax.random.uniform(kb, (fan_out,), jnp.float32, -bound, bound)
    return w.astype(jnp.bfloat16), b          # bf16 weights, f32 bias


def _init_self_mha(key, d_model):
    kq, kk, kv, ko = jax.random.split(key, 4)
    wq, bq = _init_linear(kq, d_model, d_model)
    wk, bk = _init_linear(kk, d_model, d_model)
    wv, bv = _init_linear(kv, d_model, d_model)
    wo, bo = _init_linear(ko, d_model, d_model)
    return dict(w_qkv=jnp.concatenate([wq, wk, wv], axis=1),
                b_qkv=jnp.concatenate([bq, bk, bv], axis=0),
                wo=wo, bo=bo)


def _init_cross_mha(key, d_model):
    kq, kk, kv, ko = jax.random.split(key, 4)
    wq, bq = _init_linear(kq, d_model, d_model)
    wk, bk = _init_linear(kk, d_model, d_model)
    wv, bv = _init_linear(kv, d_model, d_model)
    wo, bo = _init_linear(ko, d_model, d_model)
    return dict(wq=wq, bq=bq,
                w_kv=jnp.concatenate([wk, wv], axis=1),
                b_kv=jnp.concatenate([bk, bv], axis=0),
                wo=wo, bo=bo)


def _init_enc_layer(key, d_model, d_ff):
    ks = jax.random.split(key, 3)
    w1, b1 = _init_linear(ks[1], d_model, d_ff)
    w2, b2 = _init_linear(ks[2], d_ff, d_model)
    ones = jnp.ones((d_model,), jnp.float32)
    zeros = jnp.zeros((d_model,), jnp.float32)
    return dict(mha=_init_self_mha(ks[0], d_model),
                ln1_g=ones, ln1_b=zeros,
                w1=w1, b1=b1, w2=w2, b2=b2,
                ln2_g=ones, ln2_b=zeros)


def _init_dec_layer(key, d_model, d_ff):
    ks = jax.random.split(key, 4)
    w1, b1 = _init_linear(ks[2], d_model, d_ff)
    w2, b2 = _init_linear(ks[3], d_ff, d_model)
    ones = jnp.ones((d_model,), jnp.float32)
    zeros = jnp.zeros((d_model,), jnp.float32)
    return dict(self_mha=_init_self_mha(ks[0], d_model),
                ln1_g=ones, ln1_b=zeros,
                cross_mha=_init_cross_mha(ks[1], d_model),
                ln2_g=ones, ln2_b=zeros,
                w1=w1, b1=b1, w2=w2, b2=b2,
                ln3_g=ones, ln3_b=zeros)


def _positional_encoding(max_len, d_model):
    pos = jnp.arange(max_len, dtype=jnp.float32)[:, None]
    i = jnp.arange(d_model, dtype=jnp.float32)[None, :]
    angle = pos / jnp.power(10000.0, (2.0 * jnp.floor(i / 2.0)) / d_model)
    return jnp.where((jnp.arange(d_model)[None, :] % 2) == 0,
                     jnp.sin(angle), jnp.cos(angle)).astype(jnp.float32)


def init_transformer_params(key, src_vocab, tgt_vocab, max_len, d_model, N):
    d_ff = 4 * d_model
    keys = jax.random.split(key, 4 + 2 * N)
    enc_layers = [_init_enc_layer(keys[4 + i], d_model, d_ff) for i in range(N)]
    dec_layers = [_init_dec_layer(keys[4 + N + i], d_model, d_ff) for i in range(N)]
    w_out, b_out = _init_linear(keys[2], d_model, tgt_vocab)
    return dict(
        src_emb=jax.random.normal(keys[0], (src_vocab, d_model), jnp.float32),
        tgt_emb=jax.random.normal(keys[1], (tgt_vocab, d_model), jnp.float32),
        pe=_positional_encoding(max_len, d_model),
        enc_layers=enc_layers, dec_layers=dec_layers,
        w_out=w_out, b_out=b_out)


def _embed(emb, pe, ids, d_model):
    # TODO(synk): embedding gather left to XLA (no clean small-scale Pallas win).
    x = jnp.take(emb, ids, axis=0) * math.sqrt(d_model)
    x = x + pe[None, : ids.shape[1], :]
    return x.astype(jnp.bfloat16)


def encoder_forward(params, src, *, head, d_model):
    x = _embed(params["src_emb"], params["pe"], src, d_model)
    B, S, D = x.shape
    for lp in params["enc_layers"]:
        x = mha_self_block(x, src, lp["mha"], lp["ln1_g"], lp["ln1_b"],
                           head=head, d_model=d_model, causal=False)
        x = ffn_add_ln_pallas(x.reshape(-1, D), lp["w1"], lp["b1"],
                              lp["w2"], lp["b2"], x.reshape(-1, D),
                              lp["ln2_g"], lp["ln2_b"]).reshape(B, S, D)
    return x


def decoder_forward(params, enc_out, tgt, src, *, head, d_model):
    x = _embed(params["tgt_emb"], params["pe"], tgt, d_model)
    B, S, D = x.shape
    for lp in params["dec_layers"]:
        x = mha_self_block(x, tgt, lp["self_mha"], lp["ln1_g"], lp["ln1_b"],
                           head=head, d_model=d_model, causal=True)
        # cross-attention keys come from the *source* ids -> (B, S_tgt, S_src) mask
        x = mha_cross_block(x, enc_out, src, lp["cross_mha"],
                            lp["ln2_g"], lp["ln2_b"], head=head, d_model=d_model)
        x = ffn_add_ln_pallas(x.reshape(-1, D), lp["w1"], lp["b1"],
                              lp["w2"], lp["b2"], x.reshape(-1, D),
                              lp["ln3_g"], lp["ln3_b"]).reshape(B, S, D)
    return x


@functools.partial(jax.jit, static_argnames=("head", "d_model"))
def transformer_forward(params, src, tgt, *, head, d_model):
    enc_out = encoder_forward(params, src, head=head, d_model=d_model)
    dec_out = decoder_forward(params, enc_out, tgt, src, head=head, d_model=d_model)
    B, S, D = dec_out.shape
    logits = linear_pallas(dec_out.reshape(-1, D), params["w_out"],
                           params["b_out"], out_dtype=jnp.float32)
    return logits.reshape(B, S, -1)


# ----------------------------------------------------------------------------
# Main
# ----------------------------------------------------------------------------
if __name__ == "__main__":
    SRC_VOCAB, TGT_VOCAB = 50, 60
    MAX_LEN, D_MODEL, HEAD, N_LAYERS = 16, 128, 4, 2
    B, S = 2, 8

    key = jax.random.PRNGKey(0)
    kp, ks, kt = jax.random.split(key, 3)

    params = init_transformer_params(kp, SRC_VOCAB, TGT_VOCAB, MAX_LEN,
                                     D_MODEL, N_LAYERS)

    src = jax.random.randint(ks, (B, S), 1, SRC_VOCAB, dtype=jnp.int32)
    tgt = jax.random.randint(kt, (B, S), 1, TGT_VOCAB, dtype=jnp.int32)
    # introduce padding (id 0) to exercise the in-kernel padding masks
    src = src.at[:, -2:].set(0)
    tgt = tgt.at[:, -1:].set(0)

    out = transformer_forward(params, src, tgt, head=HEAD, d_model=D_MODEL)
    out = jax.block_until_ready(out)

    assert out.shape == (B, S, TGT_VOCAB), out.shape
    assert out.dtype == jnp.float32
    assert bool(jnp.all(jnp.isfinite(out)))
    print("KERNEL_OK")
</pallas_src>

<mosaic_0001>
module attributes {stable_mosaic.version = 11 : i64} {
  func.func @_linear_add_ln_kernel(%arg0: i32, %arg1: i32, %arg2: memref<16x128xbf16, #tpu.memory_space<vmem>>, %arg3: memref<128x128xbf16, #tpu.memory_space<vmem>>, %arg4: memref<1x128xf32, #tpu.memory_space<vmem>>, %arg5: memref<16x128xbf16, #tpu.memory_space<vmem>>, %arg6: memref<1x128xf32, #tpu.memory_space<vmem>>, %arg7: memref<1x128xf32, #tpu.memory_space<vmem>>, %arg8: memref<16x128xbf16, #tpu.memory_space<vmem>>, %arg9: memref<16x128xf32, #tpu.memory_space<vmem>>) attributes {dimension_semantics = [#tpu.dimension_semantics<parallel>, #tpu.dimension_semantics<arbitrary>], iteration_bounds = array<i64: 1, 1>, scalar_prefetch = 0 : i64, scratch_operands = 1 : i64, tpu.core_type = #tpu.core_type<tc>, window_params = [{transform_indices = @transform_0, window_bounds = array<i64: 16, 128>}, {transform_indices = @transform_1, window_bounds = array<i64: 128, 128>}, {pipeline_mode = #tpu.pipeline_mode<synchronous>, transform_indices = @transform_2, window_bounds = array<i64: 1, 128>}, {transform_indices = @transform_3, window_bounds = array<i64: 16, 128>}, {pipeline_mode = #tpu.pipeline_mode<synchronous>, transform_indices = @transform_4, window_bounds = array<i64: 1, 128>}, {pipeline_mode = #tpu.pipeline_mode<synchronous>, transform_indices = @transform_5, window_bounds = array<i64: 1, 128>}, {transform_indices = @transform_6, window_bounds = array<i64: 16, 128>}]} {
    %c0_i32 = arith.constant 0 : i32
    %0 = arith.cmpi eq, %arg1, %c0_i32 : i32
    %1 = arith.extui %0 : i1 to i32
    %c0_i32_0 = arith.constant 0 : i32
    %2 = arith.cmpi ne, %1, %c0_i32_0 : i32
    scf.if %2 {
      %cst_10 = arith.constant 0.000000e+00 : f32
      %12 = vector.broadcast %cst_10 : f32 to vector<16x128xf32>
      %c0_11 = arith.constant 0 : index
      %c0_12 = arith.constant 0 : index
      %13 = vector.load %arg9[%c0_11, %c0_12] : memref<16x128xf32, #tpu.memory_space<vmem>>, vector<16x128xf32>
      tpu.vector_store %arg9[%c0_11, %c0_12], %12 {strides = array<i32>} : memref<16x128xf32, #tpu.memory_space<vmem>>, vector<16x128xf32>,
    } else {
    }
    %c0 = arith.constant 0 : index
    %c0_1 = arith.constant 0 : index
    %3 = vector.load %arg9[%c0, %c0_1] : memref<16x128xf32, #tpu.memory_space<vmem>>, vector<16x128xf32>
    %c0_2 = arith.constant 0 : index
    %c0_3 = arith.constant 0 : index
    %4 = vector.load %arg2[%c0_2, %c0_3] : memref<16x128xbf16, #tpu.memory_space<vmem>>, vector<16x128xbf16>
    %c0_4 = arith.constant 0 : index
    %c0_5 = arith.constant 0 : index
    %5 = vector.load %arg3[%c0_4, %c0_5] : memref<128x128xbf16, #tpu.memory_space<vmem>>, vector<128x128xbf16>
    %cst = arith.constant dense<0.000000e+00> : vector<16x128xf32>
    %6 = tpu.matmul %4, %5, %cst {dimension_numbers = #tpu.dot_dimension_numbers<[1], [0], [0], [1], [0, 0, 1, 1], [], []>} : vector<16x128xbf16>, vector<128x128xbf16>, vector<16x128xf32> -> vector<16x128xf32>
    %7 = arith.addf %3, %6 : vector<16x128xf32>
    %c0_6 = arith.constant 0 : index
    %c0_7 = arith.constant 0 : index
    %8 = vector.load %arg9[%c0_6, %c0_7] : memref<16x128xf32, #tpu.memory_space<vmem>>, vector<16x128xf32>
    tpu.vector_store %arg9[%c0_6, %c0_7], %7 {strides = array<i32>} : memref<16x128xf32, #tpu.memory_space<vmem>>, vector<16x128xf32>,
    %c0_i32_8 = arith.constant 0 : i32
    %9 = arith.cmpi eq, %arg1, %c0_i32_8 : i32
    %10 = arith.extui %9 : i1 to i32
    %c0_i32_9 = arith.constant 0 : i32
    %11 = arith.cmpi ne, %10, %c0_i32_9 : i32
    scf.if %11 {
      %c0_10 = arith.constant 0 : index
      %c0_11 = arith.constant 0 : index
      %12 = vector.load %arg9[%c0_10, %c0_11] : memref<16x128xf32, #tpu.memory_space<vmem>>, vector<16x128xf32>
      %c0_12 = arith.constant 0 : index
      %c0_13 = arith.constant 0 : index
      %13 = vector.load %arg4[%c0_12, %c0_13] : memref<1x128xf32, #tpu.memory_space<vmem>>, vector<1x128xf32>
      %14 = vector.broadcast %13 : vector<1x128xf32> to vector<16x128xf32>
      %15 = arith.addf %12, %14 : vector<16x128xf32>
      %c0_14 = arith.constant 0 : index
      %c0_15 = arith.constant 0 : index
      %16 = vector.load %arg5[%c0_14, %c0_15] : memref<16x128xbf16, #tpu.memory_space<vmem>>, vector<16x128xbf16>
      %17 = arith.extf %16 : vector<16x128xbf16> to vector<16x128xf32>
      %18 = arith.addf %15, %17 : vector<16x128xf32>
      %cst_16 = arith.constant dense<0.000000e+00> : vector<16xf32>
      %19 = vector.multi_reduction <add>, %18, %cst_16 [1] : vector<16x128xf32> to vector<16xf32>
      %20 = vector.shape_cast %19 : vector<16xf32> to vector<16x1xf32>
      %cst_17 = arith.constant 1.280000e+02 : f32
      %21 = vector.broadcast %cst_17 : f32 to vector<16x1xf32>
      %22 = arith.divf %20, %21 : vector<16x1xf32>
      %23 = vector.broadcast %22 : vector<16x1xf32> to vector<16x128xf32>
      %24 = arith.subf %18, %23 : vector<16x128xf32>
      %25 = arith.mulf %24, %24 : vector<16x128xf32>
      %cst_18 = arith.constant dense<0.000000e+00> : vector<16xf32>
      %26 = vector.multi_reduction <add>, %25, %cst_18 [1] : vector<16x128xf32> to vector<16xf32>
      %27 = vector.shape_cast %26 : vector<16xf32> to vector<16x1xf32>
      %cst_19 = arith.constant 1.280000e+02 : f32
      %28 = vector.broadcast %cst_19 : f32 to vector<16x1xf32>
      %29 = arith.divf %27, %28 : vector<16x1xf32>
      %30 = vector.broadcast %22 : vector<16x1xf32> to vector<16x128xf32>
      %31 = arith.subf %18, %30 : vector<16x128xf32>
      %cst_20 = arith.constant 9.99999974E-6 : f32
      %32 = vector.broadcast %cst_20 : f32 to vector<16x1xf32>
      %33 = arith.addf %29, %32 : vector<16x1xf32>
      %34 = math.rsqrt %33 : vector<16x1xf32>
      %35 = vector.broadcast %34 : vector<16x1xf32> to vector<16x128xf32>
      %36 = arith.mulf %31, %35 : vector<16x128xf32>
      %c0_21 = arith.constant 0 : index
      %c0_22 = arith.constant 0 : index
      %37 = vector.load %arg6[%c0_21, %c0_22] : memref<1x128xf32, #tpu.memory_space<vmem>>, vector<1x128xf32>
      %38 = vector.broadcast %37 : vector<1x128xf32> to vector<16x128xf32>
      %39 = arith.mulf %36, %38 : vector<16x128xf32>
      %c0_23 = arith.constant 0 : index
      %c0_24 = arith.constant 0 : index
      %40 = vector.load %arg7[%c0_23, %c0_24] : memref<1x128xf32, #tpu.memory_space<vmem>>, vector<1x128xf32>
      %41 = vector.broadcast %40 : vector<1x128xf32> to vector<16x128xf32>
      %42 = arith.addf %39, %41 : vector<16x128xf32>
      %43 = arith.truncf %42 : vector<16x128xf32> to vector<16x128xbf16>
      %c0_25 = arith.constant 0 : index
      %c0_26 = arith.constant 0 : index
      %44 = vector.load %arg8[%c0_25, %c0_26] : memref<16x128xbf16, #tpu.memory_space<vmem>>, vector<16x128xbf16>
      tpu.vector_store %arg8[%c0_25, %c0_26], %43 {strides = array<i32>} : memref<16x128xbf16, #tpu.memory_space<vmem>>, vector<16x128xbf16>,
    } else {
    }
    return
  }
  func.func @transform_0(%arg0: i32, %arg1: i32) -> (i32, i32) {
    %c0_i32 = arith.constant 0 : i32
    return %arg0, %arg1 : i32, i32
  }
  func.func @transform_1(%arg0: i32, %arg1: i32) -> (i32, i32) {
    %c0_i32 = arith.constant 0 : i32
    %c0_i32_0 = arith.constant 0 : i32
    return %arg1, %c0_i32 : i32, i32
  }
  func.func @transform_2(%arg0: i32, %arg1: i32) -> (i32, i32) {
    %c0_i32 = arith.constant 0 : i32
    %c0_i32_0 = arith.constant 0 : i32
    %c0_i32_1 = arith.constant 0 : i32
    return %c0_i32, %c0_i32_0 : i32, i32
  }
  func.func @transform_3(%arg0: i32, %arg1: i32) -> (i32, i32) {
    %c0_i32 = arith.constant 0 : i32
    %c0_i32_0 = arith.constant 0 : i32
    return %arg0, %c0_i32 : i32, i32
  }
  func.func @transform_4(%arg0: i32, %arg1: i32) -> (i32, i32) {
    %c0_i32 = arith.constant 0 : i32
    %c0_i32_0 = arith.constant 0 : i32
    %c0_i32_1 = arith.constant 0 : i32
    return %c0_i32, %c0_i32_0 : i32, i32
  }
  func.func @transform_5(%arg0: i32, %arg1: i32) -> (i32, i32) {
    %c0_i32 = arith.constant 0 : i32
    %c0_i32_0 = arith.constant 0 : i32
    %c0_i32_1 = arith.constant 0 : i32
    return %c0_i32, %c0_i32_0 : i32, i32
  }
  func.func @transform_6(%arg0: i32, %arg1: i32) -> (i32, i32) {
    %c0_i32 = arith.constant 0 : i32
    %c0_i32_0 = arith.constant 0 : i32
    return %arg0, %c0_i32 : i32, i32
  }
}

module attributes {stable_mosaic.version = 11 : i64} {
  func.func @_linear_kernel(%arg0: i32, %arg1: i32, %arg2: i32, %arg3: memref<16x128xbf16, #tpu.memory_space<vmem>>, %arg4: memref<128x384xbf16, #tpu.memory_space<vmem>>, %arg5: memref<1x384xf32, #tpu.memory_space<vmem>>, %arg6: memref<16x384xbf16, #tpu.memory_space<vmem>>, %arg7: memref<16x384xf32, #tpu.memory_space<vmem>>) attributes {dimension_semantics = [#tpu.dimension_semantics<parallel>, #tpu.dimension_semantics<parallel>, #tpu.dimension_semantics<arbitrary>], iteration_bounds = array<i64: 1, 1, 1>, scalar_prefetch = 0 : i64, scratch_operands = 1 : i64, tpu.core_type = #tpu.core_type<tc>, window_params = [{transform_indices = @transform_0, window_bounds = array<i64: 16, 128>}, {transform_indices = @transform_1, window_bounds = array<i64: 128, 384>}, {transform_indices = @transform_2, window_bounds = array<i64: 1, 384>}, {transform_indices = @transform_3, window_bounds = array<i64: 16, 384>}]} {
    %c0_i32 = arith.constant 0 : i32
    %0 = arith.cmpi eq, %arg2, %c0_i32 : i32
    %1 = arith.extui %0 : i1 to i32
    %c0_i32_0 = arith.constant 0 : i32
    %2 = arith.cmpi ne, %1, %c0_i32_0 : i32
    scf.if %2 {
      %cst_10 = arith.constant 0.000000e+00 : f32
      %12 = vector.broadcast %cst_10 : f32 to vector<16x384xf32>
      %c0_11 = arith.constant 0 : index
      %c0_12 = arith.constant 0 : index
      %13 = vector.load %arg7[%c0_11, %c0_12] : memref<16x384xf32, #tpu.memory_space<vmem>>, vector<16x384xf32>
      tpu.vector_store %arg7[%c0_11, %c0_12], %12 {strides = array<i32>} : memref<16x384xf32, #tpu.memory_space<vmem>>, vector<16x384xf32>,
    } else {
    }
    %c0 = arith.constant 0 : index
    %c0_1 = arith.constant 0 : index
    %3 = vector.load %arg7[%c0, %c0_1] : memref<16x384xf32, #tpu.memory_space<vmem>>, vector<16x384xf32>
    %c0_2 = arith.constant 0 : index
    %c0_3 = arith.constant 0 : index
    %4 = vector.load %arg3[%c0_2, %c0_3] : memref<16x128xbf16, #tpu.memory_space<vmem>>, vector<16x128xbf16>
    %c0_4 = arith.constant 0 : index
    %c0_5 = arith.constant 0 : index
    %5 = vector.load %arg4[%c0_4, %c0_5] : memref<128x384xbf16, #tpu.memory_space<vmem>>, vector<128x384xbf16>
    %cst = arith.constant dense<0.000000e+00> : vector<16x384xf32>
    %6 = tpu.matmul %4, %5, %cst {dimension_numbers = #tpu.dot_dimension_numbers<[1], [0], [0], [1], [0, 0, 1, 1], [], []>} : vector<16x128xbf16>, vector<128x384xbf16>, vector<16x384xf32> -> vector<16x384xf32>
    %7 = arith.addf %3, %6 : vector<16x384xf32>
    %c0_6 = arith.constant 0 : index
    %c0_7 = arith.constant 0 : index
    %8 = vector.load %arg7[%c0_6, %c0_7] : memref<16x384xf32, #tpu.memory_space<vmem>>, vector<16x384xf32>
    tpu.vector_store %arg7[%c0_6, %c0_7], %7 {strides = array<i32>} : memref<16x384xf32, #tpu.memory_space<vmem>>, vector<16x384xf32>,
    %c0_i32_8 = arith.constant 0 : i32
    %9 = arith.cmpi eq, %arg2, %c0_i32_8 : i32
    %10 = arith.extui %9 : i1 to i32
    %c0_i32_9 = arith.constant 0 : i32
    %11 = arith.cmpi ne, %10, %c0_i32_9 : i32
    scf.if %11 {
      %c0_10 = arith.constant 0 : index
      %c0_11 = arith.constant 0 : index
      %12 = vector.load %arg7[%c0_10, %c0_11] : memref<16x384xf32, #tpu.memory_space<vmem>>, vector<16x384xf32>
      %c0_12 = arith.constant 0 : index
      %c0_13 = arith.constant 0 : index
      %13 = vector.load %arg5[%c0_12, %c0_13] : memref<1x384xf32, #tpu.memory_space<vmem>>, vector<1x384xf32>
      %14 = vector.broadcast %13 : vector<1x384xf32> to vector<16x384xf32>
      %15 = arith.addf %12, %14 : vector<16x384xf32>
      %16 = arith.truncf %15 : vector<16x384xf32> to vector<16x384xbf16>
      %c0_14 = arith.constant 0 : index
      %c0_15 = arith.constant 0 : index
      %17 = vector.load %arg6[%c0_14, %c0_15] : memref<16x384xbf16, #tpu.memory_space<vmem>>, vector<16x384xbf16>
      tpu.vector_store %arg6[%c0_14, %c0_15], %16 {strides = array<i32>} : memref<16x384xbf16, #tpu.memory_space<vmem>>, vector<16x384xbf16>,
    } else {
    }
    return
  }
  func.func @transform_0(%arg0: i32, %arg1: i32, %arg2: i32) -> (i32, i32) {
    %c0_i32 = arith.constant 0 : i32
    return %arg0, %arg2 : i32, i32
  }
  func.func @transform_1(%arg0: i32, %arg1: i32, %arg2: i32) -> (i32, i32) {
    %c0_i32 = arith.constant 0 : i32
    return %arg2, %arg1 : i32, i32
  }
  func.func @transform_2(%arg0: i32, %arg1: i32, %arg2: i32) -> (i32, i32) {
    %c0_i32 = arith.constant 0 : i32
    %c0_i32_0 = arith.constant 0 : i32
    return %c0_i32, %arg1 : i32, i32
  }
  func.func @transform_3(%arg0: i32, %arg1: i32, %arg2: i32) -> (i32, i32) {
    %c0_i32 = arith.constant 0 : i32
    return %arg0, %arg1 : i32, i32
  }
}

module attributes {stable_mosaic.version = 11 : i64} {
  func.func @_ffn_add_ln_kernel(%arg0: i32, %arg1: i32, %arg2: memref<16x128xbf16, #tpu.memory_space<vmem>>, %arg3: memref<128x512xbf16, #tpu.memory_space<vmem>>, %arg4: memref<1x512xf32, #tpu.memory_space<vmem>>, %arg5: memref<512x128xbf16, #tpu.memory_space<vmem>>, %arg6: memref<1x128xf32, #tpu.memory_space<vmem>>, %arg7: memref<16x128xbf16, #tpu.memory_space<vmem>>, %arg8: memref<1x128xf32, #tpu.memory_space<vmem>>, %arg9: memref<1x128xf32, #tpu.memory_space<vmem>>, %arg10: memref<16x128xbf16, #tpu.memory_space<vmem>>, %arg11: memref<16x128xf32, #tpu.memory_space<vmem>>) attributes {dimension_semantics = [#tpu.dimension_semantics<parallel>, #tpu.dimension_semantics<arbitrary>], iteration_bounds = array<i64: 1, 1>, scalar_prefetch = 0 : i64, scratch_operands = 1 : i64, tpu.core_type = #tpu.core_type<tc>, window_params = [{transform_indices = @transform_0, window_bounds = array<i64: 16, 128>}, {transform_indices = @transform_1, window_bounds = array<i64: 128, 512>}, {transform_indices = @transform_2, window_bounds = array<i64: 1, 512>}, {transform_indices = @transform_3, window_bounds = array<i64: 512, 128>}, {pipeline_mode = #tpu.pipeline_mode<synchronous>, transform_indices = @transform_4, window_bounds = array<i64: 1, 128>}, {transform_indices = @transform_5, window_bounds = array<i64: 16, 128>}, {pipeline_mode = #tpu.pipeline_mode<synchronous>, transform_indices = @transform_6, window_bounds = array<i64: 1, 128>}, {pipeline_mode = #tpu.pipeline_mode<synchronous>, transform_indices = @transform_7, window_bounds = array<i64: 1, 128>}, {transform_indices = @transform_8, window_bounds = array<i64: 16, 128>}]} {
    %c0_i32 = arith.constant 0 : i32
    %0 = arith.cmpi eq, %arg1, %c0_i32 : i32
    %1 = arith.extui %0 : i1 to i32
    %c0_i32_0 = arith.constant 0 : i32
    %2 = arith.cmpi ne, %1, %c0_i32_0 : i32
    scf.if %2 {
      %cst_16 = arith.constant 0.000000e+00 : f32
      %20 = vector.broadcast %cst_16 : f32 to vector<16x128xf32>
      %c0_17 = arith.constant 0 : index
      %c0_18 = arith.constant 0 : index
      %21 = vector.load %arg11[%c0_17, %c0_18] : memref<16x128xf32, #tpu.memory_space<vmem>>, vector<16x128xf32>
      tpu.vector_store %arg11[%c0_17, %c0_18], %20 {strides = array<i32>} : memref<16x128xf32, #tpu.memory_space<vmem>>, vector<16x128xf32>,
    } else {
    }
    %c0 = arith.constant 0 : index
    %c0_1 = arith.constant 0 : index
    %3 = vector.load %arg2[%c0, %c0_1] : memref<16x128xbf16, #tpu.memory_space<vmem>>, vector<16x128xbf16>
    %c0_2 = arith.constant 0 : index
    %c0_3 = arith.constant 0 : index
    %4 = vector.load %arg3[%c0_2, %c0_3] : memref<128x512xbf16, #tpu.memory_space<vmem>>, vector<128x512xbf16>
    %cst = arith.constant dense<0.000000e+00> : vector<16x512xf32>
    %5 = tpu.matmul %3, %4, %cst {dimension_numbers = #tpu.dot_dimension_numbers<[1], [0], [0], [1], [0, 0, 1, 1], [], []>} : vector<16x128xbf16>, vector<128x512xbf16>, vector<16x512xf32> -> vector<16x512xf32>
    %c0_4 = arith.constant 0 : index
    %c0_5 = arith.constant 0 : index
    %6 = vector.load %arg4[%c0_4, %c0_5] : memref<1x512xf32, #tpu.memory_space<vmem>>, vector<1x512xf32>
    %7 = vector.broadcast %6 : vector<1x512xf32> to vector<16x512xf32>
    %8 = arith.addf %5, %7 : vector<16x512xf32>
    %cst_6 = arith.constant 0.000000e+00 : f32
    %9 = vector.broadcast %cst_6 : f32 to vector<16x512xf32>
    %10 = arith.maximumf %8, %9 : vector<16x512xf32>
    %c0_7 = arith.constant 0 : index
    %c0_8 = arith.constant 0 : index
    %11 = vector.load %arg11[%c0_7, %c0_8] : memref<16x128xf32, #tpu.memory_space<vmem>>, vector<16x128xf32>
    %12 = arith.truncf %10 : vector<16x512xf32> to vector<16x512xbf16>
    %c0_9 = arith.constant 0 : index
    %c0_10 = arith.constant 0 : index
    %13 = vector.load %arg5[%c0_9, %c0_10] : memref<512x128xbf16, #tpu.memory_space<vmem>>, vector<512x128xbf16>
    %cst_11 = arith.constant dense<0.000000e+00> : vector<16x128xf32>
    %14 = tpu.matmul %12, %13, %cst_11 {dimension_numbers = #tpu.dot_dimension_numbers<[1], [0], [0], [1], [0, 0, 1, 1], [], []>} : vector<16x512xbf16>, vector<512x128xbf16>, vector<16x128xf32> -> vector<16x128xf32>
    %15 = arith.addf %11, %14 : vector<16x128xf32>
    %c0_12 = arith.constant 0 : index
    %c0_13 = arith.constant 0 : index
    %16 = vector.load %arg11[%c0_12, %c0_13] : memref<16x128xf32, #tpu.memory_space<vmem>>, vector<16x128xf32>
    tpu.vector_store %arg11[%c0_12, %c0_13], %15 {strides = array<i32>} : memref<16x128xf32, #tpu.memory_space<vmem>>, vector<16x128xf32>,
    %c0_i32_14 = arith.constant 0 : i32
    %17 = arith.cmpi eq, %arg1, %c0_i32_14 : i32
    %18 = arith.extui %17 : i1 to i32
    %c0_i32_15 = arith.constant 0 : i32
    %19 = arith.cmpi ne, %18, %c0_i32_15 : i32
    scf.if %19 {
      %c0_16 = arith.constant 0 : index
      %c0_17 = arith.constant 0 : index
      %20 = vector.load %arg11[%c0_16, %c0_17] : memref<16x128xf32, #tpu.memory_space<vmem>>, vector<16x128xf32>
      %c0_18 = arith.constant 0 : index
      %c0_19 = arith.constant 0 : index
      %21 = vector.load %arg6[%c0_18, %c0_19] : memref<1x128xf32, #tpu.memory_space<vmem>>, vector<1x128xf32>
      %22 = vector.broadcast %21 : vector<1x128xf32> to vector<16x128xf32>
      %23 = arith.addf %20, %22 : vector<16x128xf32>
      %c0_20 = arith.constant 0 : index
      %c0_21 = arith.constant 0 : index
      %24 = vector.load %arg7[%c0_20, %c0_21] : memref<16x128xbf16, #tpu.memory_space<vmem>>, vector<16x128xbf16>
      %25 = arith.extf %24 : vector<16x128xbf16> to vector<16x128xf32>
      %26 = arith.addf %23, %25 : vector<16x128xf32>
      %cst_22 = arith.constant dense<0.000000e+00> : vector<16xf32>
      %27 = vector.multi_reduction <add>, %26, %cst_22 [1] : vector<16x128xf32> to vector<16xf32>
      %28 = vector.shape_cast %27 : vector<16xf32> to vector<16x1xf32>
      %cst_23 = arith.constant 1.280000e+02 : f32
      %29 = vector.broadcast %cst_23 : f32 to vector<16x1xf32>
      %30 = arith.divf %28, %29 : vector<16x1xf32>
      %31 = vector.broadcast %30 : vector<16x1xf32> to vector<16x128xf32>
      %32 = arith.subf %26, %31 : vector<16x128xf32>
      %33 = arith.mulf %32, %32 : vector<16x128xf32>
      %cst_24 = arith.constant dense<0.000000e+00> : vector<16xf32>
      %34 = vector.multi_reduction <add>, %33, %cst_24 [1] : vector<16x128xf32> to vector<16xf32>
      %35 = vector.shape_cast %34 : vector<16xf32> to vector<16x1xf32>
      %cst_25 = arith.constant 1.280000e+02 : f32
      %36 = vector.broadcast %cst_25 : f32 to vector<16x1xf32>
      %37 = arith.divf %35, %36 : vector<16x1xf32>
      %38 = vector.broadcast %30 : vector<16x1xf32> to vector<16x128xf32>
      %39 = arith.subf %26, %38 : vector<16x128xf32>
      %cst_26 = arith.constant 9.99999974E-6 : f32
      %40 = vector.broadcast %cst_26 : f32 to vector<16x1xf32>
      %41 = arith.addf %37, %40 : vector<16x1xf32>
      %42 = math.rsqrt %41 : vector<16x1xf32>
      %43 = vector.broadcast %42 : vector<16x1xf32> to vector<16x128xf32>
      %44 = arith.mulf %39, %43 : vector<16x128xf32>
      %c0_27 = arith.constant 0 : index
      %c0_28 = arith.constant 0 : index
      %45 = vector.load %arg8[%c0_27, %c0_28] : memref<1x128xf32, #tpu.memory_space<vmem>>, vector<1x128xf32>
      %46 = vector.broadcast %45 : vector<1x128xf32> to vector<16x128xf32>
      %47 = arith.mulf %44, %46 : vector<16x128xf32>
      %c0_29 = arith.constant 0 : index
      %c0_30 = arith.constant 0 : index
      %48 = vector.load %arg9[%c0_29, %c0_30] : memref<1x128xf32, #tpu.memory_space<vmem>>, vector<1x128xf32>
      %49 = vector.broadcast %48 : vector<1x128xf32> to vector<16x128xf32>
      %50 = arith.addf %47, %49 : vector<16x128xf32>
      %51 = arith.truncf %50 : vector<16x128xf32> to vector<16x128xbf16>
      %c0_31 = arith.constant 0 : index
      %c0_32 = arith.constant 0 : index
      %52 = vector.load %arg10[%c0_31, %c0_32] : memref<16x128xbf16, #tpu.memory_space<vmem>>, vector<16x128xbf16>
      tpu.vector_store %arg10[%c0_31, %c0_32], %51 {strides = array<i32>} : memref<16x128xbf16, #tpu.memory_space<vmem>>, vector<16x128xbf16>,
    } else {
    }
    return
  }
  func.func @transform_0(%arg0: i32, %arg1: i32) -> (i32, i32) {
    %c0_i32 = arith.constant 0 : i32
    %c0_i32_0 = arith.constant 0 : i32
    return %arg0, %c0_i32 : i32, i32
  }
  func.func @transform_1(%arg0: i32, %arg1: i32) -> (i32, i32) {
    %c0_i32 = arith.constant 0 : i32
    %c0_i32_0 = arith.constant 0 : i32
    return %c0_i32, %arg1 : i32, i32
  }
  func.func @transform_2(%arg0: i32, %arg1: i32) -> (i32, i32) {
    %c0_i32 = arith.constant 0 : i32
    %c0_i32_0 = arith.constant 0 : i32
    return %c0_i32, %arg1 : i32, i32
  }
  func.func @transform_3(%arg0: i32, %arg1: i32) -> (i32, i32) {
    %c0_i32 = arith.constant 0 : i32
    %c0_i32_0 = arith.constant 0 : i32
    return %arg1, %c0_i32 : i32, i32
  }
  func.func @transform_4(%arg0: i32, %arg1: i32) -> (i32, i32) {
    %c0_i32 = arith.constant 0 : i32
    %c0_i32_0 = arith.constant 0 : i32
    %c0_i32_1 = arith.constant 0 : i32
    return %c0_i32, %c0_i32_0 : i32, i32
  }
  func.func @transform_5(%arg0: i32, %arg1: i32) -> (i32, i32) {
    %c0_i32 = arith.constant 0 : i32
    %c0_i32_0 = arith.constant 0 : i32
    return %arg0, %c0_i32 : i32, i32
  }
  func.func @transform_6(%arg0: i32, %arg1: i32) -> (i32, i32) {
    %c0_i32 = arith.constant 0 : i32
    %c0_i32_0 = arith.constant 0 : i32
    %c0_i32_1 = arith.constant 0 : i32
    return %c0_i32, %c0_i32_0 : i32, i32
  }
  func.func @transform_7(%arg0: i32, %arg1: i32) -> (i32, i32) {
    %c0_i32 = arith.constant 0 : i32
    %c0_i32_0 = arith.constant 0 : i32
    %c0_i32_1 = arith.constant 0 : i32
    return %c0_i32, %c0_i32_0 : i32, i32
  }
  func.func @transform_8(%arg0: i32, %arg1: i32) -> (i32, i32) {
    %c0_i32 = arith.constant 0 : i32
    %c0_i32_0 = arith.constant 0 : i32
    return %arg0, %c0_i32 : i32, i32
  }
}

module attributes {stable_mosaic.version = 11 : i64} {
  func.func @_mha_kernel(%arg0: i32, %arg1: i32, %arg2: i32, %arg3: memref<1x1x8xi32, #tpu.memory_space<vmem>>, %arg4: memref<1x8x128xbf16, #tpu.memory_space<vmem>>, %arg5: memref<1x8x128xbf16, #tpu.memory_space<vmem>>, %arg6: memref<1x8x128xbf16, #tpu.memory_space<vmem>>, %arg7: memref<1x8x128xbf16, #tpu.memory_space<vmem>>, %arg8: memref<4x8x1xf32, #tpu.memory_space<vmem>>, %arg9: memref<4x8x1xf32, #tpu.memory_space<vmem>>, %arg10: memref<8x128xf32, #tpu.memory_space<vmem>>) attributes {dimension_semantics = [#tpu.dimension_semantics<parallel>, #tpu.dimension_semantics<parallel>, #tpu.dimension_semantics<arbitrary>], iteration_bounds = array<i64: 2, 1, 1>, scalar_prefetch = 0 : i64, scratch_operands = 3 : i64, tpu.core_type = #tpu.core_type<tc>, window_params = [{transform_indices = @transform_0, window_bounds = array<i64: 1, 1, 8>}, {transform_indices = @transform_1, window_bounds = array<i64: 1, 8, 128>}, {transform_indices = @transform_2, window_bounds = array<i64: 1, 8, 128>}, {transform_indices = @transform_3, window_bounds = array<i64: 1, 8, 128>}, {transform_indices = @transform_4, window_bounds = array<i64: 1, 8, 128>}]} {
    %c0_i32 = arith.constant 0 : i32
    %0 = arith.cmpi eq, %arg2, %c0_i32 : i32
    %1 = arith.extui %0 : i1 to i32
    %c0_i32_0 = arith.constant 0 : i32
    %2 = arith.cmpi ne, %1, %c0_i32_0 : i32
    scf.if %2 {
      %cst_94 = arith.constant -1.000000e+30 : f32
      %167 = vector.broadcast %cst_94 : f32 to vector<4x8x1xf32>
      %c0_95 = arith.constant 0 : index
      %c0_96 = arith.constant 0 : index
      %c0_97 = arith.constant 0 : index
      %168 = vector.load %arg8[%c0_95, %c0_96, %c0_97] : memref<4x8x1xf32, #tpu.memory_space<vmem>>, vector<4x8x1xf32>
      tpu.vector_store %arg8[%c0_95, %c0_96, %c0_97], %167 {strides = array<i32>} : memref<4x8x1xf32, #tpu.memory_space<vmem>>, vector<4x8x1xf32>,
      %cst_98 = arith.constant 0.000000e+00 : f32
      %169 = vector.broadcast %cst_98 : f32 to vector<4x8x1xf32>
      %c0_99 = arith.constant 0 : index
      %c0_100 = arith.constant 0 : index
      %c0_101 = arith.constant 0 : index
      %170 = vector.load %arg9[%c0_99, %c0_100, %c0_101] : memref<4x8x1xf32, #tpu.memory_space<vmem>>, vector<4x8x1xf32>
      tpu.vector_store %arg9[%c0_99, %c0_100, %c0_101], %169 {strides = array<i32>} : memref<4x8x1xf32, #tpu.memory_space<vmem>>, vector<4x8x1xf32>,
      %cst_102 = arith.constant 0.000000e+00 : f32
      %171 = vector.broadcast %cst_102 : f32 to vector<8x128xf32>
      %c0_103 = arith.constant 0 : index
      %c0_104 = arith.constant 0 : index
      %172 = vector.load %arg10[%c0_103, %c0_104] : memref<8x128xf32, #tpu.memory_space<vmem>>, vector<8x128xf32>
      tpu.vector_store %arg10[%c0_103, %c0_104], %171 {strides = array<i32>} : memref<8x128xf32, #tpu.memory_space<vmem>>, vector<8x128xf32>,
    } else {
    }
    %c0 = arith.constant 0 : index
    %c0_1 = arith.constant 0 : index
    %c0_2 = arith.constant 0 : index
    %3 = vector.load %arg4[%c0, %c0_1, %c0_2] : memref<1x8x128xbf16, #tpu.memory_space<vmem>>, vector<1x8x128xbf16>
    %4 = vector.shape_cast %3 : vector<1x8x128xbf16> to vector<8x128xbf16>
    %c0_3 = arith.constant 0 : index
    %c0_4 = arith.constant 0 : index
    %c0_5 = arith.constant 0 : index
    %5 = vector.load %arg5[%c0_3, %c0_4, %c0_5] : memref<1x8x128xbf16, #tpu.memory_space<vmem>>, vector<1x8x128xbf16>
    %6 = vector.shape_cast %5 : vector<1x8x128xbf16> to vector<8x128xbf16>
    %c0_6 = arith.constant 0 : index
    %c0_7 = arith.constant 0 : index
    %c0_8 = arith.constant 0 : index
    %7 = vector.load %arg6[%c0_6, %c0_7, %c0_8] : memref<1x8x128xbf16, #tpu.memory_space<vmem>>, vector<1x8x128xbf16>
    %8 = vector.shape_cast %7 : vector<1x8x128xbf16> to vector<8x128xbf16>
    %c0_9 = arith.constant 0 : index
    %c0_10 = arith.constant 0 : index
    %c0_11 = arith.constant 0 : index
    %9 = vector.load %arg3[%c0_9, %c0_10, %c0_11] : memref<1x1x8xi32, #tpu.memory_space<vmem>>, vector<1x1x8xi32>
    %10 = vector.shape_cast %9 : vector<1x1x8xi32> to vector<1x8xi32>
    %c0_i32_12 = arith.constant 0 : i32
    %11 = vector.broadcast %c0_i32_12 : i32 to vector<1x8xi32>
    %12 = arith.cmpi eq, %10, %11 : vector<1x8xi32>
    %cst = arith.constant -1.000000e+09 : f32
    %cst_13 = arith.constant 0.000000e+00 : f32
    %13 = vector.broadcast %cst : f32 to vector<1x8xf32>
    %14 = vector.broadcast %cst_13 : f32 to vector<1x8xf32>
    %15 = arith.select %12, %13, %14 : vector<1x8xi1>, vector<1x8xf32>
    %16 = vector.extract_strided_slice %4 {offsets = [0, 0], sizes = [8, 32], strides = [1, 1]} : vector<8x128xbf16> to vector<8x32xbf16>
    %17 = vector.extract_strided_slice %6 {offsets = [0, 0], sizes = [8, 32], strides = [1, 1]} : vector<8x128xbf16> to vector<8x32xbf16>
    %18 = vector.extract_strided_slice %8 {offsets = [0, 0], sizes = [8, 32], strides = [1, 1]} : vector<8x128xbf16> to vector<8x32xbf16>
    %cst_14 = arith.constant dense<0.000000e+00> : vector<8x8xf32>
    %19 = tpu.matmul %16, %17, %cst_14 {dimension_numbers = #tpu.dot_dimension_numbers<[1], [1], [0], [0], [0, 0, 1, 0], [], []>} : vector<8x32xbf16>, vector<8x32xbf16>, vector<8x8xf32> -> vector<8x8xf32>
    %cst_15 = arith.constant 0.176776692 : f32
    %20 = vector.broadcast %cst_15 : f32 to vector<8x8xf32>
    %21 = arith.mulf %19, %20 : vector<8x8xf32>
    %22 = vector.broadcast %15 : vector<1x8xf32> to vector<8x8xf32>
    %23 = arith.addf %21, %22 : vector<8x8xf32>
    %c0_16 = arith.constant 0 : index
    %c0_17 = arith.constant 0 : index
    %c0_18 = arith.constant 0 : index
    %24 = vector.load %arg8[%c0_16, %c0_17, %c0_18] : memref<4x8x1xf32, #tpu.memory_space<vmem>>, vector<1x8x1xf32>
    %25 = vector.shape_cast %24 : vector<1x8x1xf32> to vector<8x1xf32>
    %cst_19 = arith.constant dense<0xFF800000> : vector<8xf32>
    %26 = vector.multi_reduction <maximumf>, %23, %cst_19 [1] : vector<8x8xf32> to vector<8xf32>
    %27 = vector.shape_cast %26 : vector<8xf32> to vector<8x1xf32>
    %28 = arith.maximumf %25, %27 : vector<8x1xf32>
    %29 = arith.subf %25, %28 : vector<8x1xf32>
    %30 = math.exp %29 : vector<8x1xf32>
    %31 = vector.broadcast %28 : vector<8x1xf32> to vector<8x8xf32>
    %32 = arith.subf %23, %31 : vector<8x8xf32>
    %33 = math.exp %32 : vector<8x8xf32>
    %c0_20 = arith.constant 0 : index
    %c0_21 = arith.constant 0 : index
    %c0_22 = arith.constant 0 : index
    %34 = vector.load %arg9[%c0_20, %c0_21, %c0_22] : memref<4x8x1xf32, #tpu.memory_space<vmem>>, vector<1x8x1xf32>
    %35 = vector.shape_cast %34 : vector<1x8x1xf32> to vector<8x1xf32>
    %36 = arith.mulf %30, %35 : vector<8x1xf32>
    %cst_23 = arith.constant dense<0.000000e+00> : vector<8xf32>
    %37 = vector.multi_reduction <add>, %33, %cst_23 [1] : vector<8x8xf32> to vector<8xf32>
    %38 = vector.shape_cast %37 : vector<8xf32> to vector<8x1xf32>
    %39 = arith.addf %36, %38 : vector<8x1xf32>
    %c0_24 = arith.constant 0 : index
    %c0_25 = arith.constant 0 : index
    %c0_26 = arith.constant 0 : index
    %40 = vector.load %arg9[%c0_24, %c0_25, %c0_26] : memref<4x8x1xf32, #tpu.memory_space<vmem>>, vector<1x8x1xf32>
    %41 = vector.shape_cast %40 : vector<1x8x1xf32> to vector<8x1xf32>
    %42 = vector.shape_cast %39 : vector<8x1xf32> to vector<1x8x1xf32>
    tpu.vector_store %arg9[%c0_24, %c0_25, %c0_26], %42 {strides = array<i32>} : memref<4x8x1xf32, #tpu.memory_space<vmem>>, vector<1x8x1xf32>,
    %c0_27 = arith.constant 0 : index
    %c0_28 = arith.constant 0 : index
    %43 = vector.load %arg10[%c0_27, %c0_28] : memref<8x128xf32, #tpu.memory_space<vmem>>, vector<8x32xf32>
    %44 = vector.broadcast %30 : vector<8x1xf32> to vector<8x32xf32>
    %45 = arith.mulf %44, %43 : vector<8x32xf32>
    %46 = arith.truncf %33 : vector<8x8xf32> to vector<8x8xbf16>
    %cst_29 = arith.constant dense<0.000000e+00> : vector<8x32xf32>
    %47 = tpu.matmul %46, %18, %cst_29 {dimension_numbers = #tpu.dot_dimension_numbers<[1], [0], [0], [1], [0, 0, 1, 1], [], []>} : vector<8x8xbf16>, vector<8x32xbf16>, vector<8x32xf32> -> vector<8x32xf32>
    %48 = arith.addf %45, %47 : vector<8x32xf32>
    %c0_30 = arith.constant 0 : index
    %c0_31 = arith.constant 0 : index
    %49 = vector.load %arg10[%c0_30, %c0_31] : memref<8x128xf32, #tpu.memory_space<vmem>>, vector<8x32xf32>
    tpu.vector_store %arg10[%c0_30, %c0_31], %48 {strides = array<i32>} : memref<8x128xf32, #tpu.memory_space<vmem>>, vector<8x32xf32>,
    %c0_32 = arith.constant 0 : index
    %c0_33 = arith.constant 0 : index
    %c0_34 = arith.constant 0 : index
    %50 = vector.load %arg8[%c0_32, %c0_33, %c0_34] : memref<4x8x1xf32, #tpu.memory_space<vmem>>, vector<1x8x1xf32>
    %51 = vector.shape_cast %50 : vector<1x8x1xf32> to vector<8x1xf32>
    %52 = vector.shape_cast %28 : vector<8x1xf32> to vector<1x8x1xf32>
    tpu.vector_store %arg8[%c0_32, %c0_33, %c0_34], %52 {strides = array<i32>} : memref<4x8x1xf32, #tpu.memory_space<vmem>>, vector<1x8x1xf32>,
    %53 = vector.extract_strided_slice %4 {offsets = [0, 32], sizes = [8, 32], strides = [1, 1]} : vector<8x128xbf16> to vector<8x32xbf16>
    %54 = vector.extract_strided_slice %6 {offsets = [0, 32], sizes = [8, 32], strides = [1, 1]} : vector<8x128xbf16> to vector<8x32xbf16>
    %55 = vector.extract_strided_slice %8 {offsets = [0, 32], sizes = [8, 32], strides = [1, 1]} : vector<8x128xbf16> to vector<8x32xbf16>
    %cst_35 = arith.constant dense<0.000000e+00> : vector<8x8xf32>
    %56 = tpu.matmul %53, %54, %cst_35 {dimension_numbers = #tpu.dot_dimension_numbers<[1], [1], [0], [0], [0, 0, 1, 0], [], []>} : vector<8x32xbf16>, vector<8x32xbf16>, vector<8x8xf32> -> vector<8x8xf32>
    %cst_36 = arith.constant 0.176776692 : f32
    %57 = vector.broadcast %cst_36 : f32 to vector<8x8xf32>
    %58 = arith.mulf %56, %57 : vector<8x8xf32>
    %59 = vector.broadcast %15 : vector<1x8xf32> to vector<8x8xf32>
    %60 = arith.addf %58, %59 : vector<8x8xf32>
    %c1 = arith.constant 1 : index
    %c0_37 = arith.constant 0 : index
    %c0_38 = arith.constant 0 : index
    %61 = vector.load %arg8[%c1, %c0_37, %c0_38] : memref<4x8x1xf32, #tpu.memory_space<vmem>>, vector<1x8x1xf32>
    %62 = vector.shape_cast %61 : vector<1x8x1xf32> to vector<8x1xf32>
    %cst_39 = arith.constant dense<0xFF800000> : vector<8xf32>
    %63 = vector.multi_reduction <maximumf>, %60, %cst_39 [1] : vector<8x8xf32> to vector<8xf32>
    %64 = vector.shape_cast %63 : vector<8xf32> to vector<8x1xf32>
    %65 = arith.maximumf %62, %64 : vector<8x1xf32>
    %66 = arith.subf %62, %65 : vector<8x1xf32>
    %67 = math.exp %66 : vector<8x1xf32>
    %68 = vector.broadcast %65 : vector<8x1xf32> to vector<8x8xf32>
    %69 = arith.subf %60, %68 : vector<8x8xf32>
    %70 = math.exp %69 : vector<8x8xf32>
    %c1_40 = arith.constant 1 : index
    %c0_41 = arith.constant 0 : index
    %c0_42 = arith.constant 0 : index
    %71 = vector.load %arg9[%c1_40, %c0_41, %c0_42] : memref<4x8x1xf32, #tpu.memory_space<vmem>>, vector<1x8x1xf32>
    %72 = vector.shape_cast %71 : vector<1x8x1xf32> to vector<8x1xf32>
    %73 = arith.mulf %67, %72 : vector<8x1xf32>
    %cst_43 = arith.constant dense<0.000000e+00> : vector<8xf32>
    %74 = vector.multi_reduction <add>, %70, %cst_43 [1] : vector<8x8xf32> to vector<8xf32>
    %75 = vector.shape_cast %74 : vector<8xf32> to vector<8x1xf32>
    %76 = arith.addf %73, %75 : vector<8x1xf32>
    %c1_44 = arith.constant 1 : index
    %c0_45 = arith.constant 0 : index
    %c0_46 = arith.constant 0 : index
    %77 = vector.load %arg9[%c1_44, %c0_45, %c0_46] : memref<4x8x1xf32, #tpu.memory_space<vmem>>, vector<1x8x1xf32>
    %78 = vector.shape_cast %77 : vector<1x8x1xf32> to vector<8x1xf32>
    %79 = vector.shape_cast %76 : vector<8x1xf32> to vector<1x8x1xf32>
    tpu.vector_store %arg9[%c1_44, %c0_45, %c0_46], %79 {strides = array<i32>} : memref<4x8x1xf32, #tpu.memory_space<vmem>>, vector<1x8x1xf32>,
    %c0_47 = arith.constant 0 : index
    %c32 = arith.constant 32 : index
    %80 = vector.load %arg10[%c0_47, %c32] : memref<8x128xf32, #tpu.memory_space<vmem>>, vector<8x32xf32>
    %81 = vector.broadcast %67 : vector<8x1xf32> to vector<8x32xf32>
    %82 = arith.mulf %81, %80 : vector<8x32xf32>
    %83 = arith.truncf %70 : vector<8x8xf32> to vector<8x8xbf16>
    %cst_48 = arith.constant dense<0.000000e+00> : vector<8x32xf32>
    %84 = tpu.matmul %83, %55, %cst_48 {dimension_numbers = #tpu.dot_dimension_numbers<[1], [0], [0], [1], [0, 0, 1, 1], [], []>} : vector<8x8xbf16>, vector<8x32xbf16>, vector<8x32xf32> -> vector<8x32xf32>
    %85 = arith.addf %82, %84 : vector<8x32xf32>
    %c0_49 = arith.constant 0 : index
    %c32_50 = arith.constant 32 : index
    %86 = vector.load %arg10[%c0_49, %c32_50] : memref<8x128xf32, #tpu.memory_space<vmem>>, vector<8x32xf32>
    tpu.vector_store %arg10[%c0_49, %c32_50], %85 {strides = array<i32>} : memref<8x128xf32, #tpu.memory_space<vmem>>, vector<8x32xf32>,
    %c1_51 = arith.constant 1 : index
    %c0_52 = arith.constant 0 : index
    %c0_53 = arith.constant 0 : index
    %87 = vector.load %arg8[%c1_51, %c0_52, %c0_53] : memref<4x8x1xf32, #tpu.memory_space<vmem>>, vector<1x8x1xf32>
    %88 = vector.shape_cast %87 : vector<1x8x1xf32> to vector<8x1xf32>
    %89 = vector.shape_cast %65 : vector<8x1xf32> to vector<1x8x1xf32>
    tpu.vector_store %arg8[%c1_51, %c0_52, %c0_53], %89 {strides = array<i32>} : memref<4x8x1xf32, #tpu.memory_space<vmem>>, vector<1x8x1xf32>,
    %90 = vector.extract_strided_slice %4 {offsets = [0, 64], sizes = [8, 32], strides = [1, 1]} : vector<8x128xbf16> to vector<8x32xbf16>
    %91 = vector.extract_strided_slice %6 {offsets = [0, 64], sizes = [8, 32], strides = [1, 1]} : vector<8x128xbf16> to vector<8x32xbf16>
    %92 = vector.extract_strided_slice %8 {offsets = [0, 64], sizes = [8, 32], strides = [1, 1]} : vector<8x128xbf16> to vector<8x32xbf16>
    %cst_54 = arith.constant dense<0.000000e+00> : vector<8x8xf32>
    %93 = tpu.matmul %90, %91, %cst_54 {dimension_numbers = #tpu.dot_dimension_numbers<[1], [1], [0], [0], [0, 0, 1, 0], [], []>} : vector<8x32xbf16>, vector<8x32xbf16>, vector<8x8xf32> -> vector<8x8xf32>
    %cst_55 = arith.constant 0.176776692 : f32
    %94 = vector.broadcast %cst_55 : f32 to vector<8x8xf32>
    %95 = arith.mulf %93, %94 : vector<8x8xf32>
    %96 = vector.broadcast %15 : vector<1x8xf32> to vector<8x8xf32>
    %97 = arith.addf %95, %96 : vector<8x8xf32>
    %c2 = arith.constant 2 : index
    %c0_56 = arith.constant 0 : index
    %c0_57 = arith.constant 0 : index
    %98 = vector.load %arg8[%c2, %c0_56, %c0_57] : memref<4x8x1xf32, #tpu.memory_space<vmem>>, vector<1x8x1xf32>
    %99 = vector.shape_cast %98 : vector<1x8x1xf32> to vector<8x1xf32>
    %cst_58 = arith.constant dense<0xFF800000> : vector<8xf32>
    %100 = vector.multi_reduction <maximumf>, %97, %cst_58 [1] : vector<8x8xf32> to vector<8xf32>
    %101 = vector.shape_cast %100 : vector<8xf32> to vector<8x1xf32>
    %102 = arith.maximumf %99, %101 : vector<8x1xf32>
    %103 = arith.subf %99, %102 : vector<8x1xf32>
    %104 = math.exp %103 : vector<8x1xf32>
    %105 = vector.broadcast %102 : vector<8x1xf32> to vector<8x8xf32>
    %106 = arith.subf %97, %105 : vector<8x8xf32>
    %107 = math.exp %106 : vector<8x8xf32>
    %c2_59 = arith.constant 2 : index
    %c0_60 = arith.constant 0 : index
    %c0_61 = arith.constant 0 : index
    %108 = vector.load %arg9[%c2_59, %c0_60, %c0_61] : memref<4x8x1xf32, #tpu.memory_space<vmem>>, vector<1x8x1xf32>
    %109 = vector.shape_cast %108 : vector<1x8x1xf32> to vector<8x1xf32>
    %110 = arith.mulf %104, %109 : vector<8x1xf32>
    %cst_62 = arith.constant dense<0.000000e+00> : vector<8xf32>
    %111 = vector.multi_reduction <add>, %107, %cst_62 [1] : vector<8x8xf32> to vector<8xf32>
    %112 = vector.shape_cast %111 : vector<8xf32> to vector<8x1xf32>
    %113 = arith.addf %110, %112 : vector<8x1xf32>
    %c2_63 = arith.constant 2 : index
    %c0_64 = arith.constant 0 : index
    %c0_65 = arith.constant 0 : index
    %114 = vector.load %arg9[%c2_63, %c0_64, %c0_65] : memref<4x8x1xf32, #tpu.memory_space<vmem>>, vector<1x8x1xf32>
    %115 = vector.shape_cast %114 : vector<1x8x1xf32> to vector<8x1xf32>
    %116 = vector.shape_cast %113 : vector<8x1xf32> to vector<1x8x1xf32>
    tpu.vector_store %arg9[%c2_63, %c0_64, %c0_65], %116 {strides = array<i32>} : memref<4x8x1xf32, #tpu.memory_space<vmem>>, vector<1x8x1xf32>,
    %c0_66 = arith.constant 0 : index
    %c64 = arith.constant 64 : index
    %117 = vector.load %arg10[%c0_66, %c64] : memref<8x128xf32, #tpu.memory_space<vmem>>, vector<8x32xf32>
    %118 = vector.broadcast %104 : vector<8x1xf32> to vector<8x32xf32>
    %119 = arith.mulf %118, %117 : vector<8x32xf32>
    %120 = arith.truncf %107 : vector<8x8xf32> to vector<8x8xbf16>
    %cst_67 = arith.constant dense<0.000000e+00> : vector<8x32xf32>
    %121 = tpu.matmul %120, %92, %cst_67 {dimension_numbers = #tpu.dot_dimension_numbers<[1], [0], [0], [1], [0, 0, 1, 1], [], []>} : vector<8x8xbf16>, vector<8x32xbf16>, vector<8x32xf32> -> vector<8x32xf32>
    %122 = arith.addf %119, %121 : vector<8x32xf32>
    %c0_68 = arith.constant 0 : index
    %c64_69 = arith.constant 64 : index
    %123 = vector.load %arg10[%c0_68, %c64_69] : memref<8x128xf32, #tpu.memory_space<vmem>>, vector<8x32xf32>
    tpu.vector_store %arg10[%c0_68, %c64_69], %122 {strides = array<i32>} : memref<8x128xf32, #tpu.memory_space<vmem>>, vector<8x32xf32>,
    %c2_70 = arith.constant 2 : index
    %c0_71 = arith.constant 0 : index
    %c0_72 = arith.constant 0 : index
    %124 = vector.load %arg8[%c2_70, %c0_71, %c0_72] : memref<4x8x1xf32, #tpu.memory_space<vmem>>, vector<1x8x1xf32>
    %125 = vector.shape_cast %124 : vector<1x8x1xf32> to vector<8x1xf32>
    %126 = vector.shape_cast %102 : vector<8x1xf32> to vector<1x8x1xf32>
    tpu.vector_store %arg8[%c2_70, %c0_71, %c0_72], %126 {strides = array<i32>} : memref<4x8x1xf32, #tpu.memory_space<vmem>>, vector<1x8x1xf32>,
    %127 = vector.extract_strided_slice %4 {offsets = [0, 96], sizes = [8, 32], strides = [1, 1]} : vector<8x128xbf16> to vector<8x32xbf16>
    %128 = vector.extract_strided_slice %6 {offsets = [0, 96], sizes = [8, 32], strides = [1, 1]} : vector<8x128xbf16> to vector<8x32xbf16>
    %129 = vector.extract_strided_slice %8 {offsets = [0, 96], sizes = [8, 32], strides = [1, 1]} : vector<8x128xbf16> to vector<8x32xbf16>
    %cst_73 = arith.constant dense<0.000000e+00> : vector<8x8xf32>
    %130 = tpu.matmul %127, %128, %cst_73 {dimension_numbers = #tpu.dot_dimension_numbers<[1], [1], [0], [0], [0, 0, 1, 0], [], []>} : vector<8x32xbf16>, vector<8x32xbf16>, vector<8x8xf32> -> vector<8x8xf32>
    %cst_74 = arith.constant 0.176776692 : f32
    %131 = vector.broadcast %cst_74 : f32 to vector<8x8xf32>
    %132 = arith.mulf %130, %131 : vector<8x8xf32>
    %133 = vector.broadcast %15 : vector<1x8xf32> to vector<8x8xf32>
    %134 = arith.addf %132, %133 : vector<8x8xf32>
    %c3 = arith.constant 3 : index
    %c0_75 = arith.constant 0 : index
    %c0_76 = arith.constant 0 : index
    %135 = vector.load %arg8[%c3, %c0_75, %c0_76] : memref<4x8x1xf32, #tpu.memory_space<vmem>>, vector<1x8x1xf32>
    %136 = vector.shape_cast %135 : vector<1x8x1xf32> to vector<8x1xf32>
    %cst_77 = arith.constant dense<0xFF800000> : vector<8xf32>
    %137 = vector.multi_reduction <maximumf>, %134, %cst_77 [1] : vector<8x8xf32> to vector<8xf32>
    %138 = vector.shape_cast %137 : vector<8xf32> to vector<8x1xf32>
    %139 = arith.maximumf %136, %138 : vector<8x1xf32>
    %140 = arith.subf %136, %139 : vector<8x1xf32>
    %141 = math.exp %140 : vector<8x1xf32>
    %142 = vector.broadcast %139 : vector<8x1xf32> to vector<8x8xf32>
    %143 = arith.subf %134, %142 : vector<8x8xf32>
    %144 = math.exp %143 : vector<8x8xf32>
    %c3_78 = arith.constant 3 : index
    %c0_79 = arith.constant 0 : index
    %c0_80 = arith.constant 0 : index
    %145 = vector.load %arg9[%c3_78, %c0_79, %c0_80] : memref<4x8x1xf32, #tpu.memory_space<vmem>>, vector<1x8x1xf32>
    %146 = vector.shape_cast %145 : vector<1x8x1xf32> to vector<8x1xf32>
    %147 = arith.mulf %141, %146 : vector<8x1xf32>
    %cst_81 = arith.constant dense<0.000000e+00> : vector<8xf32>
    %148 = vector.multi_reduction <add>, %144, %cst_81 [1] : vector<8x8xf32> to vector<8xf32>
    %149 = vector.shape_cast %148 : vector<8xf32> to vector<8x1xf32>
    %150 = arith.addf %147, %149 : vector<8x1xf32>
    %c3_82 = arith.constant 3 : index
    %c0_83 = arith.constant 0 : index
    %c0_84 = arith.constant 0 : index
    %151 = vector.load %arg9[%c3_82, %c0_83, %c0_84] : memref<4x8x1xf32, #tpu.memory_space<vmem>>, vector<1x8x1xf32>
    %152 = vector.shape_cast %151 : vector<1x8x1xf32> to vector<8x1xf32>
    %153 = vector.shape_cast %150 : vector<8x1xf32> to vector<1x8x1xf32>
    tpu.vector_store %arg9[%c3_82, %c0_83, %c0_84], %153 {strides = array<i32>} : memref<4x8x1xf32, #tpu.memory_space<vmem>>, vector<1x8x1xf32>,
    %c0_85 = arith.constant 0 : index
    %c96 = arith.constant 96 : index
    %154 = vector.load %arg10[%c0_85, %c96] : memref<8x128xf32, #tpu.memory_space<vmem>>, vector<8x32xf32>
    %155 = vector.broadcast %141 : vector<8x1xf32> to vector<8x32xf32>
    %156 = arith.mulf %155, %154 : vector<8x32xf32>
    %157 = arith.truncf %144 : vector<8x8xf32> to vector<8x8xbf16>
    %cst_86 = arith.constant dense<0.000000e+00> : vector<8x32xf32>
    %158 = tpu.matmul %157, %129, %cst_86 {dimension_numbers = #tpu.dot_dimension_numbers<[1], [0], [0], [1], [0, 0, 1, 1], [], []>} : vector<8x8xbf16>, vector<8x32xbf16>, vector<8x32xf32> -> vector<8x32xf32>
    %159 = arith.addf %156, %158 : vector<8x32xf32>
    %c0_87 = arith.constant 0 : index
    %c96_88 = arith.constant 96 : index
    %160 = vector.load %arg10[%c0_87, %c96_88] : memref<8x128xf32, #tpu.memory_space<vmem>>, vector<8x32xf32>
    tpu.vector_store %arg10[%c0_87, %c96_88], %159 {strides = array<i32>} : memref<8x128xf32, #tpu.memory_space<vmem>>, vector<8x32xf32>,
    %c3_89 = arith.constant 3 : index
    %c0_90 = arith.constant 0 : index
    %c0_91 = arith.constant 0 : index
    %161 = vector.load %arg8[%c3_89, %c0_90, %c0_91] : memref<4x8x1xf32, #tpu.memory_space<vmem>>, vector<1x8x1xf32>
    %162 = vector.shape_cast %161 : vector<1x8x1xf32> to vector<8x1xf32>
    %163 = vector.shape_cast %139 : vector<8x1xf32> to vector<1x8x1xf32>
    tpu.vector_store %arg8[%c3_89, %c0_90, %c0_91], %163 {strides = array<i32>} : memref<4x8x1xf32, #tpu.memory_space<vmem>>, vector<1x8x1xf32>,
    %c0_i32_92 = arith.constant 0 : i32
    %164 = arith.cmpi eq, %arg2, %c0_i32_92 : i32
    %165 = arith.extui %164 : i1 to i32
    %c0_i32_93 = arith.constant 0 : i32
    %166 = arith.cmpi ne, %165, %c0_i32_93 : i32
    scf.if %166 {
      %c0_94 = arith.constant 0 : index
      %c0_95 = arith.constant 0 : index
      %167 = vector.load %arg10[%c0_94, %c0_95] : memref<8x128xf32, #tpu.memory_space<vmem>>, vector<8x32xf32>
      %c0_96 = arith.constant 0 : index
      %c0_97 = arith.constant 0 : index
      %c0_98 = arith.constant 0 : index
      %168 = vector.load %arg9[%c0_96, %c0_97, %c0_98] : memref<4x8x1xf32, #tpu.memory_space<vmem>>, vector<1x8x1xf32>
      %169 = vector.shape_cast %168 : vector<1x8x1xf32> to vector<8x1xf32>
      %170 = tpu.reciprocal %169 {approx = true} : vector<8x1xf32> -> vector<8x1xf32>
      %171 = vector.broadcast %170 : vector<8x1xf32> to vector<8x32xf32>
      %172 = arith.mulf %167, %171 : vector<8x32xf32>
      %c0_99 = arith.constant 0 : index
      %c0_100 = arith.constant 0 : index
      %173 = vector.load %arg10[%c0_99, %c0_100] : memref<8x128xf32, #tpu.memory_space<vmem>>, vector<8x32xf32>
      tpu.vector_store %arg10[%c0_99, %c0_100], %172 {strides = array<i32>} : memref<8x128xf32, #tpu.memory_space<vmem>>, vector<8x32xf32>,
      %c0_101 = arith.constant 0 : index
      %c32_102 = arith.constant 32 : index
      %174 = vector.load %arg10[%c0_101, %c32_102] : memref<8x128xf32, #tpu.memory_space<vmem>>, vector<8x32xf32>
      %c1_103 = arith.constant 1 : index
      %c0_104 = arith.constant 0 : index
      %c0_105 = arith.constant 0 : index
      %175 = vector.load %arg9[%c1_103, %c0_104, %c0_105] : memref<4x8x1xf32, #tpu.memory_space<vmem>>, vector<1x8x1xf32>
      %176 = vector.shape_cast %175 : vector<1x8x1xf32> to vector<8x1xf32>
      %177 = tpu.reciprocal %176 {approx = true} : vector<8x1xf32> -> vector<8x1xf32>
      %178 = vector.broadcast %177 : vector<8x1xf32> to vector<8x32xf32>
      %179 = arith.mulf %174, %178 : vector<8x32xf32>
      %c0_106 = arith.constant 0 : index
      %c32_107 = arith.constant 32 : index
      %180 = vector.load %arg10[%c0_106, %c32_107] : memref<8x128xf32, #tpu.memory_space<vmem>>, vector<8x32xf32>
      tpu.vector_store %arg10[%c0_106, %c32_107], %179 {strides = array<i32>} : memref<8x128xf32, #tpu.memory_space<vmem>>, vector<8x32xf32>,
      %c0_108 = arith.constant 0 : index
      %c64_109 = arith.constant 64 : index
      %181 = vector.load %arg10[%c0_108, %c64_109] : memref<8x128xf32, #tpu.memory_space<vmem>>, vector<8x32xf32>
      %c2_110 = arith.constant 2 : index
      %c0_111 = arith.constant 0 : index
      %c0_112 = arith.constant 0 : index
      %182 = vector.load %arg9[%c2_110, %c0_111, %c0_112] : memref<4x8x1xf32, #tpu.memory_space<vmem>>, vector<1x8x1xf32>
      %183 = vector.shape_cast %182 : vector<1x8x1xf32> to vector<8x1xf32>
      %184 = tpu.reciprocal %183 {approx = true} : vector<8x1xf32> -> vector<8x1xf32>
      %185 = vector.broadcast %184 : vector<8x1xf32> to vector<8x32xf32>
      %186 = arith.mulf %181, %185 : vector<8x32xf32>
      %c0_113 = arith.constant 0 : index
      %c64_114 = arith.constant 64 : index
      %187 = vector.load %arg10[%c0_113, %c64_114] : memref<8x128xf32, #tpu.memory_space<vmem>>, vector<8x32xf32>
      tpu.vector_store %arg10[%c0_113, %c64_114], %186 {strides = array<i32>} : memref<8x128xf32, #tpu.memory_space<vmem>>, vector<8x32xf32>,
      %c0_115 = arith.constant 0 : index
      %c96_116 = arith.constant 96 : index
      %188 = vector.load %arg10[%c0_115, %c96_116] : memref<8x128xf32, #tpu.memory_space<vmem>>, vector<8x32xf32>
      %c3_117 = arith.constant 3 : index
      %c0_118 = arith.constant 0 : index
      %c0_119 = arith.constant 0 : index
      %189 = vector.load %arg9[%c3_117, %c0_118, %c0_119] : memref<4x8x1xf32, #tpu.memory_space<vmem>>, vector<1x8x1xf32>
      %190 = vector.shape_cast %189 : vector<1x8x1xf32> to vector<8x1xf32>
      %191 = tpu.reciprocal %190 {approx = true} : vector<8x1xf32> -> vector<8x1xf32>
      %192 = vector.broadcast %191 : vector<8x1xf32> to vector<8x32xf32>
      %193 = arith.mulf %188, %192 : vector<8x32xf32>
      %c0_120 = arith.constant 0 : index
      %c96_121 = arith.constant 96 : index
      %194 = vector.load %arg10[%c0_120, %c96_121] : memref<8x128xf32, #tpu.memory_space<vmem>>, vector<8x32xf32>
      tpu.vector_store %arg10[%c0_120, %c96_121], %193 {strides = array<i32>} : memref<8x128xf32, #tpu.memory_space<vmem>>, vector<8x32xf32>,
      %c0_122 = arith.constant 0 : index
      %c0_123 = arith.constant 0 : index
      %195 = vector.load %arg10[%c0_122, %c0_123] : memref<8x128xf32, #tpu.memory_space<vmem>>, vector<8x128xf32>
      %196 = arith.truncf %195 : vector<8x128xf32> to vector<8x128xbf16>
      %c0_124 = arith.constant 0 : index
      %c0_125 = arith.constant 0 : index
      %c0_126 = arith.constant 0 : index
      %197 = vector.load %arg7[%c0_124, %c0_125, %c0_126] : memref<1x8x128xbf16, #tpu.memory_space<vmem>>, vector<1x8x128xbf16>
      %198 = vector.shape_cast %197 : vector<1x8x128xbf16> to vector<8x128xbf16>
      %199 = vector.shape_cast %196 : vector<8x128xbf16> to vector<1x8x128xbf16>
      tpu.vector_store %arg7[%c0_124, %c0_125, %c0_126], %199 {strides = array<i32>} : memref<1x8x128xbf16, #tpu.memory_space<vmem>>, vector<1x8x128xbf16>,
    } else {
    }
    return
  }
  func.func @transform_0(%arg0: i32, %arg1: i32, %arg2: i32) -> (i32, i32, i32) {
    %c0_i32 = arith.constant 0 : i32
    %c0_i32_0 = arith.constant 0 : i32
    return %arg0, %c0_i32, %arg2 : i32, i32, i32
  }
  func.func @transform_1(%arg0: i32, %arg1: i32, %arg2: i32) -> (i32, i32, i32) {
    %c0_i32 = arith.constant 0 : i32
    %0 = arith.addi %c0_i32, %arg1 : i32
    %c0_i32_0 = arith.constant 0 : i32
    %c0_i32_1 = arith.constant 0 : i32
    return %arg0, %c0_i32_0, %0 : i32, i32, i32
  }
  func.func @transform_2(%arg0: i32, %arg1: i32, %arg2: i32) -> (i32, i32, i32) {
    %c1_i32 = arith.constant 1 : i32
    %0 = arith.addi %c1_i32, %arg1 : i32
    %c0_i32 = arith.constant 0 : i32
    return %arg0, %arg2, %0 : i32, i32, i32
  }
  func.func @transform_3(%arg0: i32, %arg1: i32, %arg2: i32) -> (i32, i32, i32) {
    %c2_i32 = arith.constant 2 : i32
    %0 = arith.addi %c2_i32, %arg1 : i32
    %c0_i32 = arith.constant 0 : i32
    return %arg0, %arg2, %0 : i32, i32, i32
  }
  func.func @transform_4(%arg0: i32, %arg1: i32, %arg2: i32) -> (i32, i32, i32) {
    %c0_i32 = arith.constant 0 : i32
    %c0_i32_0 = arith.constant 0 : i32
    return %arg0, %c0_i32, %arg1 : i32, i32, i32
  }
}

module attributes {stable_mosaic.version = 11 : i64} {
  func.func @_ffn_add_ln_kernel(%arg0: i32, %arg1: i32, %arg2: memref<16x128xbf16, #tpu.memory_space<vmem>>, %arg3: memref<128x512xbf16, #tpu.memory_space<vmem>>, %arg4: memref<1x512xf32, #tpu.memory_space<vmem>>, %arg5: memref<512x128xbf16, #tpu.memory_space<vmem>>, %arg6: memref<1x128xf32, #tpu.memory_space<vmem>>, %arg7: memref<16x128xbf16, #tpu.memory_space<vmem>>, %arg8: memref<1x128xf32, #tpu.memory_space<vmem>>, %arg9: memref<1x128xf32, #tpu.memory_space<vmem>>, %arg10: memref<16x128xbf16, #tpu.memory_space<vmem>>, %arg11: memref<16x128xf32, #tpu.memory_space<vmem>>) attributes {dimension_semantics = [#tpu.dimension_semantics<parallel>, #tpu.dimension_semantics<arbitrary>], iteration_bounds = array<i64: 1, 1>, scalar_prefetch = 0 : i64, scratch_operands = 1 : i64, tpu.core_type = #tpu.core_type<tc>, window_params = [{transform_indices = @transform_0, window_bounds = array<i64: 16, 128>}, {transform_indices = @transform_1, window_bounds = array<i64: 128, 512>}, {transform_indices = @transform_2, window_bounds = array<i64: 1, 512>}, {transform_indices = @transform_3, window_bounds = array<i64: 512, 128>}, {pipeline_mode = #tpu.pipeline_mode<synchronous>, transform_indices = @transform_4, window_bounds = array<i64: 1, 128>}, {transform_indices = @transform_5, window_bounds = array<i64: 16, 128>}, {pipeline_mode = #tpu.pipeline_mode<synchronous>, transform_indices = @transform_6, window_bounds = array<i64: 1, 128>}, {pipeline_mode = #tpu.pipeline_mode<synchronous>, transform_indices = @transform_7, window_bounds = array<i64: 1, 128>}, {transform_indices = @transform_8, window_bounds = array<i64: 16, 128>}]} {
    %c0_i32 = arith.constant 0 : i32
    %0 = arith.cmpi eq, %arg1, %c0_i32 : i32
    %1 = arith.extui %0 : i1 to i32
    %c0_i32_0 = arith.constant 0 : i32
    %2 = arith.cmpi ne, %1, %c0_i32_0 : i32
    scf.if %2 {
      %cst_16 = arith.constant 0.000000e+00 : f32
      %20 = vector.broadcast %cst_16 : f32 to vector<16x128xf32>
      %c0_17 = arith.constant 0 : index
      %c0_18 = arith.constant 0 : index
      %21 = vector.load %arg11[%c0_17, %c0_18] : memref<16x128xf32, #tpu.memory_space<vmem>>, vector<16x128xf32>
      tpu.vector_store %arg11[%c0_17, %c0_18], %20 {strides = array<i32>} : memref<16x128xf32, #tpu.memory_space<vmem>>, vector<16x128xf32>,
    } else {
    }
    %c0 = arith.constant 0 : index
    %c0_1 = arith.constant 0 : index
    %3 = vector.load %arg2[%c0, %c0_1] : memref<16x128xbf16, #tpu.memory_space<vmem>>, vector<16x128xbf16>
    %c0_2 = arith.constant 0 : index
    %c0_3 = arith.constant 0 : index
    %4 = vector.load %arg3[%c0_2, %c0_3] : memref<128x512xbf16, #tpu.memory_space<vmem>>, vector<128x512xbf16>
    %cst = arith.constant dense<0.000000e+00> : vector<16x512xf32>
    %5 = tpu.matmul %3, %4, %cst {dimension_numbers = #tpu.dot_dimension_numbers<[1], [0], [0], [1], [0, 0, 1, 1], [], []>} : vector<16x128xbf16>, vector<128x512xbf16>, vector<16x512xf32> -> vector<16x512xf32>
    %c0_4 = arith.constant 0 : index
    %c0_5 = arith.constant 0 : index
    %6 = vector.load %arg4[%c0_4, %c0_5] : memref<1x512xf32, #tpu.memory_space<vmem>>, vector<1x512xf32>
    %7 = vector.broadcast %6 : vector<1x512xf32> to vector<16x512xf32>
    %8 = arith.addf %5, %7 : vector<16x512xf32>
    %cst_6 = arith.constant 0.000000e+00 : f32
    %9 = vector.broadcast %cst_6 : f32 to vector<16x512xf32>
    %10 = arith.maximumf %8, %9 : vector<16x512xf32>
    %c0_7 = arith.constant 0 : index
    %c0_8 = arith.constant 0 : index
    %11 = vector.load %arg11[%c0_7, %c0_8] : memref<16x128xf32, #tpu.memory_space<vmem>>, vector<16x128xf32>
    %12 = arith.truncf %10 : vector<16x512xf32> to vector<16x512xbf16>
    %c0_9 = arith.constant 0 : index
    %c0_10 = arith.constant 0 : index
    %13 = vector.load %arg5[%c0_9, %c0_10] : memref<512x128xbf16, #tpu.memory_space<vmem>>, vector<512x128xbf16>
    %cst_11 = arith.constant dense<0.000000e+00> : vector<16x128xf32>
    %14 = tpu.matmul %12, %13, %cst_11 {dimension_numbers = #tpu.dot_dimension_numbers<[1], [0], [0], [1], [0, 0, 1, 1], [], []>} : vector<16x512xbf16>, vector<512x128xbf16>, vector<16x128xf32> -> vector<16x128xf32>
    %15 = arith.addf %11, %14 : vector<16x128xf32>
    %c0_12 = arith.constant 0 : index
    %c0_13 = arith.constant 0 : index
    %16 = vector.load %arg11[%c0_12, %c0_13] : memref<16x128xf32, #tpu.memory_space<vmem>>, vector<16x128xf32>
    tpu.vector_store %arg11[%c0_12, %c0_13], %15 {strides = array<i32>} : memref<16x128xf32, #tpu.memory_space<vmem>>, vector<16x128xf32>,
    %c0_i32_14 = arith.constant 0 : i32
    %17 = arith.cmpi eq, %arg1, %c0_i32_14 : i32
    %18 = arith.extui %17 : i1 to i32
    %c0_i32_15 = arith.constant 0 : i32
    %19 = arith.cmpi ne, %18, %c0_i32_15 : i32
    scf.if %19 {
      %c0_16 = arith.constant 0 : index
      %c0_17 = arith.constant 0 : index
      %20 = vector.load %arg11[%c0_16, %c0_17] : memref<16x128xf32, #tpu.memory_space<vmem>>, vector<16x128xf32>
      %c0_18 = arith.constant 0 : index
      %c0_19 = arith.constant 0 : index
      %21 = vector.load %arg6[%c0_18, %c0_19] : memref<1x128xf32, #tpu.memory_space<vmem>>, vector<1x128xf32>
      %22 = vector.broadcast %21 : vector<1x128xf32> to vector<16x128xf32>
      %23 = arith.addf %20, %22 : vector<16x128xf32>
      %c0_20 = arith.constant 0 : index
      %c0_21 = arith.constant 0 : index
      %24 = vector.load %arg7[%c0_20, %c0_21] : memref<16x128xbf16, #tpu.memory_space<vmem>>, vector<16x128xbf16>
      %25 = arith.extf %24 : vector<16x128xbf16> to vector<16x128xf32>
      %26 = arith.addf %23, %25 : vector<16x128xf32>
      %cst_22 = arith.constant dense<0.000000e+00> : vector<16xf32>
      %27 = vector.multi_reduction <add>, %26, %cst_22 [1] : vector<16x128xf32> to vector<16xf32>
      %28 = vector.shape_cast %27 : vector<16xf32> to vector<16x1xf32>
      %cst_23 = arith.constant 1.280000e+02 : f32
      %29 = vector.broadcast %cst_23 : f32 to vector<16x1xf32>
      %30 = arith.divf %28, %29 : vector<16x1xf32>
      %31 = vector.broadcast %30 : vector<16x1xf32> to vector<16x128xf32>
      %32 = arith.subf %26, %31 : vector<16x128xf32>
      %33 = arith.mulf %32, %32 : vector<16x128xf32>
      %cst_24 = arith.constant dense<0.000000e+00> : vector<16xf32>
      %34 = vector.multi_reduction <add>, %33, %cst_24 [1] : vector<16x128xf32> to vector<16xf32>
      %35 = vector.shape_cast %34 : vector<16xf32> to vector<16x1xf32>
      %cst_25 = arith.constant 1.280000e+02 : f32
      %36 = vector.broadcast %cst_25 : f32 to vector<16x1xf32>
      %37 = arith.divf %35, %36 : vector<16x1xf32>
      %38 = vector.broadcast %30 : vector<16x1xf32> to vector<16x128xf32>
      %39 = arith.subf %26, %38 : vector<16x128xf32>
      %cst_26 = arith.constant 9.99999974E-6 : f32
      %40 = vector.broadcast %cst_26 : f32 to vector<16x1xf32>
      %41 = arith.addf %37, %40 : vector<16x1xf32>
      %42 = math.rsqrt %41 : vector<16x1xf32>
      %43 = vector.broadcast %42 : vector<16x1xf32> to vector<16x128xf32>
      %44 = arith.mulf %39, %43 : vector<16x128xf32>
      %c0_27 = arith.constant 0 : index
      %c0_28 = arith.constant 0 : index
      %45 = vector.load %arg8[%c0_27, %c0_28] : memref<1x128xf32, #tpu.memory_space<vmem>>, vector<1x128xf32>
      %46 = vector.broadcast %45 : vector<1x128xf32> to vector<16x128xf32>
      %47 = arith.mulf %44, %46 : vector<16x128xf32>
      %c0_29 = arith.constant 0 : index
      %c0_30 = arith.constant 0 : index
      %48 = vector.load %arg9[%c0_29, %c0_30] : memref<1x128xf32, #tpu.memory_space<vmem>>, vector<1x128xf32>
      %49 = vector.broadcast %48 : vector<1x128xf32> to vector<16x128xf32>
      %50 = arith.addf %47, %49 : vector<16x128xf32>
      %51 = arith.truncf %50 : vector<16x128xf32> to vector<16x128xbf16>
      %c0_31 = arith.constant 0 : index
      %c0_32 = arith.constant 0 : index
      %52 = vector.load %arg10[%c0_31, %c0_32] : memref<16x128xbf16, #tpu.memory_space<vmem>>, vector<16x128xbf16>
      tpu.vector_store %arg10[%c0_31, %c0_32], %51 {strides = array<i32>} : memref<16x128xbf16, #tpu.memory_space<vmem>>, vector<16x128xbf16>,
    } else {
    }
    return
  }
  func.func @transform_0(%arg0: i32, %arg1: i32) -> (i32, i32) {
    %c0_i32 = arith.constant 0 : i32
    %c0_i32_0 = arith.constant 0 : i32
    return %arg0, %c0_i32 : i32, i32
  }
  func.func @transform_1(%arg0: i32, %arg1: i32) -> (i32, i32) {
    %c0_i32 = arith.constant 0 : i32
    %c0_i32_0 = arith.constant 0 : i32
    return %c0_i32, %arg1 : i32, i32
  }
  func.func @transform_2(%arg0: i32, %arg1: i32) -> (i32, i32) {
    %c0_i32 = arith.constant 0 : i32
    %c0_i32_0 = arith.constant 0 : i32
    return %c0_i32, %arg1 : i32, i32
  }
  func.func @transform_3(%arg0: i32, %arg1: i32) -> (i32, i32) {
    %c0_i32 = arith.constant 0 : i32
    %c0_i32_0 = arith.constant 0 : i32
    return %arg1, %c0_i32 : i32, i32
  }
  func.func @transform_4(%arg0: i32, %arg1: i32) -> (i32, i32) {
    %c0_i32 = arith.constant 0 : i32
    %c0_i32_0 = arith.constant 0 : i32
    %c0_i32_1 = arith.constant 0 : i32
    return %c0_i32, %c0_i32_0 : i32, i32
  }
  func.func @transform_5(%arg0: i32, %arg1: i32) -> (i32, i32) {
    %c0_i32 = arith.constant 0 : i32
    %c0_i32_0 = arith.constant 0 : i32
    return %arg0, %c0_i32 : i32, i32
  }
  func.func @transform_6(%arg0: i32, %arg1: i32) -> (i32, i32) {
    %c0_i32 = arith.constant 0 : i32
    %c0_i32_0 = arith.constant 0 : i32
    %c0_i32_1 = arith.constant 0 : i32
    return %c0_i32, %c0_i32_0 : i32, i32
  }
  func.func @transform_7(%arg0: i32, %arg1: i32) -> (i32, i32) {
    %c0_i32 = arith.constant 0 : i32
    %c0_i32_0 = arith.constant 0 : i32
    %c0_i32_1 = arith.constant 0 : i32
    return %c0_i32, %c0_i32_0 : i32, i32
  }
  func.func @transform_8(%arg0: i32, %arg1: i32) -> (i32, i32) {
    %c0_i32 = arith.constant 0 : i32
    %c0_i32_0 = arith.constant 0 : i32
    return %arg0, %c0_i32 : i32, i32
  }
}

module attributes {stable_mosaic.version = 11 : i64} {
  func.func @_linear_add_ln_kernel(%arg0: i32, %arg1: i32, %arg2: memref<16x128xbf16, #tpu.memory_space<vmem>>, %arg3: memref<128x128xbf16, #tpu.memory_space<vmem>>, %arg4: memref<1x128xf32, #tpu.memory_space<vmem>>, %arg5: memref<16x128xbf16, #tpu.memory_space<vmem>>, %arg6: memref<1x128xf32, #tpu.memory_space<vmem>>, %arg7: memref<1x128xf32, #tpu.memory_space<vmem>>, %arg8: memref<16x128xbf16, #tpu.memory_space<vmem>>, %arg9: memref<16x128xf32, #tpu.memory_space<vmem>>) attributes {dimension_semantics = [#tpu.dimension_semantics<parallel>, #tpu.dimension_semantics<arbitrary>], iteration_bounds = array<i64: 1, 1>, scalar_prefetch = 0 : i64, scratch_operands = 1 : i64, tpu.core_type = #tpu.core_type<tc>, window_params = [{transform_indices = @transform_0, window_bounds = array<i64: 16, 128>}, {transform_indices = @transform_1, window_bounds = array<i64: 128, 128>}, {pipeline_mode = #tpu.pipeline_mode<synchronous>, transform_indices = @transform_2, window_bounds = array<i64: 1, 128>}, {transform_indices = @transform_3, window_bounds = array<i64: 16, 128>}, {pipeline_mode = #tpu.pipeline_mode<synchronous>, transform_indices = @transform_4, window_bounds = array<i64: 1, 128>}, {pipeline_mode = #tpu.pipeline_mode<synchronous>, transform_indices = @transform_5, window_bounds = array<i64: 1, 128>}, {transform_indices = @transform_6, window_bounds = array<i64: 16, 128>}]} {
    %c0_i32 = arith.constant 0 : i32
    %0 = arith.cmpi eq, %arg1, %c0_i32 : i32
    %1 = arith.extui %0 : i1 to i32
    %c0_i32_0 = arith.constant 0 : i32
    %2 = arith.cmpi ne, %1, %c0_i32_0 : i32
    scf.if %2 {
      %cst_10 = arith.constant 0.000000e+00 : f32
      %12 = vector.broadcast %cst_10 : f32 to vector<16x128xf32>
      %c0_11 = arith.constant 0 : index
      %c0_12 = arith.constant 0 : index
      %13 = vector.load %arg9[%c0_11, %c0_12] : memref<16x128xf32, #tpu.memory_space<vmem>>, vector<16x128xf32>
      tpu.vector_store %arg9[%c0_11, %c0_12], %12 {strides = array<i32>} : memref<16x128xf32, #tpu.memory_space<vmem>>, vector<16x128xf32>,
    } else {
    }
    %c0 = arith.constant 0 : index
    %c0_1 = arith.constant 0 : index
    %3 = vector.load %arg9[%c0, %c0_1] : memref<16x128xf32, #tpu.memory_space<vmem>>, vector<16x128xf32>
    %c0_2 = arith.constant 0 : index
    %c0_3 = arith.constant 0 : index
    %4 = vector.load %arg2[%c0_2, %c0_3] : memref<16x128xbf16, #tpu.memory_space<vmem>>, vector<16x128xbf16>
    %c0_4 = arith.constant 0 : index
    %c0_5 = arith.constant 0 : index
    %5 = vector.load %arg3[%c0_4, %c0_5] : memref<128x128xbf16, #tpu.memory_space<vmem>>, vector<128x128xbf16>
    %cst = arith.constant dense<0.000000e+00> : vector<16x128xf32>
    %6 = tpu.matmul %4, %5, %cst {dimension_numbers = #tpu.dot_dimension_numbers<[1], [0], [0], [1], [0, 0, 1, 1], [], []>} : vector<16x128xbf16>, vector<128x128xbf16>, vector<16x128xf32> -> vector<16x128xf32>
    %7 = arith.addf %3, %6 : vector<16x128xf32>
    %c0_6 = arith.constant 0 : index
    %c0_7 = arith.constant 0 : index
    %8 = vector.load %arg9[%c0_6, %c0_7] : memref<16x128xf32, #tpu.memory_space<vmem>>, vector<16x128xf32>
    tpu.vector_store %arg9[%c0_6, %c0_7], %7 {strides = array<i32>} : memref<16x128xf32, #tpu.memory_space<vmem>>, vector<16x128xf32>,
    %c0_i32_8 = arith.constant 0 : i32
    %9 = arith.cmpi eq, %arg1, %c0_i32_8 : i32
    %10 = arith.extui %9 : i1 to i32
    %c0_i32_9 = arith.constant 0 : i32
    %11 = arith.cmpi ne, %10, %c0_i32_9 : i32
    scf.if %11 {
      %c0_10 = arith.constant 0 : index
      %c0_11 = arith.constant 0 : index
      %12 = vector.load %arg9[%c0_10, %c0_11] : memref<16x128xf32, #tpu.memory_space<vmem>>, vector<16x128xf32>
      %c0_12 = arith.constant 0 : index
      %c0_13 = arith.constant 0 : index
      %13 = vector.load %arg4[%c0_12, %c0_13] : memref<1x128xf32, #tpu.memory_space<vmem>>, vector<1x128xf32>
      %14 = vector.broadcast %13 : vector<1x128xf32> to vector<16x128xf32>
      %15 = arith.addf %12, %14 : vector<16x128xf32>
      %c0_14 = arith.constant 0 : index
      %c0_15 = arith.constant 0 : index
      %16 = vector.load %arg5[%c0_14, %c0_15] : memref<16x128xbf16, #tpu.memory_space<vmem>>, vector<16x128xbf16>
      %17 = arith.extf %16 : vector<16x128xbf16> to vector<16x128xf32>
      %18 = arith.addf %15, %17 : vector<16x128xf32>
      %cst_16 = arith.constant dense<0.000000e+00> : vector<16xf32>
      %19 = vector.multi_reduction <add>, %18, %cst_16 [1] : vector<16x128xf32> to vector<16xf32>
      %20 = vector.shape_cast %19 : vector<16xf32> to vector<16x1xf32>
      %cst_17 = arith.constant 1.280000e+02 : f32
      %21 = vector.broadcast %cst_17 : f32 to vector<16x1xf32>
      %22 = arith.divf %20, %21 : vector<16x1xf32>
      %23 = vector.broadcast %22 : vector<16x1xf32> to vector<16x128xf32>
      %24 = arith.subf %18, %23 : vector<16x128xf32>
      %25 = arith.mulf %24, %24 : vector<16x128xf32>
      %cst_18 = arith.constant dense<0.000000e+00> : vector<16xf32>
      %26 = vector.multi_reduction <add>, %25, %cst_18 [1] : vector<16x128xf32> to vector<16xf32>
      %27 = vector.shape_cast %26 : vector<16xf32> to vector<16x1xf32>
      %cst_19 = arith.constant 1.280000e+02 : f32
      %28 = vector.broadcast %cst_19 : f32 to vector<16x1xf32>
      %29 = arith.divf %27, %28 : vector<16x1xf32>
      %30 = vector.broadcast %22 : vector<16x1xf32> to vector<16x128xf32>
      %31 = arith.subf %18, %30 : vector<16x128xf32>
      %cst_20 = arith.constant 9.99999974E-6 : f32
      %32 = vector.broadcast %cst_20 : f32 to vector<16x1xf32>
      %33 = arith.addf %29, %32 : vector<16x1xf32>
      %34 = math.rsqrt %33 : vector<16x1xf32>
      %35 = vector.broadcast %34 : vector<16x1xf32> to vector<16x128xf32>
      %36 = arith.mulf %31, %35 : vector<16x128xf32>
      %c0_21 = arith.constant 0 : index
      %c0_22 = arith.constant 0 : index
      %37 = vector.load %arg6[%c0_21, %c0_22] : memref<1x128xf32, #tpu.memory_space<vmem>>, vector<1x128xf32>
      %38 = vector.broadcast %37 : vector<1x128xf32> to vector<16x128xf32>
      %39 = arith.mulf %36, %38 : vector<16x128xf32>
      %c0_23 = arith.constant 0 : index
      %c0_24 = arith.constant 0 : index
      %40 = vector.load %arg7[%c0_23, %c0_24] : memref<1x128xf32, #tpu.memory_space<vmem>>, vector<1x128xf32>
      %41 = vector.broadcast %40 : vector<1x128xf32> to vector<16x128xf32>
      %42 = arith.addf %39, %41 : vector<16x128xf32>
      %43 = arith.truncf %42 : vector<16x128xf32> to vector<16x128xbf16>
      %c0_25 = arith.constant 0 : index
      %c0_26 = arith.constant 0 : index
      %44 = vector.load %arg8[%c0_25, %c0_26] : memref<16x128xbf16, #tpu.memory_space<vmem>>, vector<16x128xbf16>
      tpu.vector_store %arg8[%c0_25, %c0_26], %43 {strides = array<i32>} : memref<16x128xbf16, #tpu.memory_space<vmem>>, vector<16x128xbf16>,
    } else {
    }
    return
  }
  func.func @transform_0(%arg0: i32, %arg1: i32) -> (i32, i32) {
    %c0_i32 = arith.constant 0 : i32
    return %arg0, %arg1 : i32, i32
  }
  func.func @transform_1(%arg0: i32, %arg1: i32) -> (i32, i32) {
    %c0_i32 = arith.constant 0 : i32
    %c0_i32_0 = arith.constant 0 : i32
    return %arg1, %c0_i32 : i32, i32
  }
  func.func @transform_2(%arg0: i32, %arg1: i32) -> (i32, i32) {
    %c0_i32 = arith.constant 0 : i32
    %c0_i32_0 = arith.constant 0 : i32
    %c0_i32_1 = arith.constant 0 : i32
    return %c0_i32, %c0_i32_0 : i32, i32
  }
  func.func @transform_3(%arg0: i32, %arg1: i32) -> (i32, i32) {
    %c0_i32 = arith.constant 0 : i32
    %c0_i32_0 = arith.constant 0 : i32
    return %arg0, %c0_i32 : i32, i32
  }
  func.func @transform_4(%arg0: i32, %arg1: i32) -> (i32, i32) {
    %c0_i32 = arith.constant 0 : i32
    %c0_i32_0 = arith.constant 0 : i32
    %c0_i32_1 = arith.constant 0 : i32
    return %c0_i32, %c0_i32_0 : i32, i32
  }
  func.func @transform_5(%arg0: i32, %arg1: i32) -> (i32, i32) {
    %c0_i32 = arith.constant 0 : i32
    %c0_i32_0 = arith.constant 0 : i32
    %c0_i32_1 = arith.constant 0 : i32
    return %c0_i32, %c0_i32_0 : i32, i32
  }
  func.func @transform_6(%arg0: i32, %arg1: i32) -> (i32, i32) {
    %c0_i32 = arith.constant 0 : i32
    %c0_i32_0 = arith.constant 0 : i32
    return %arg0, %c0_i32 : i32, i32
  }
}

module attributes {stable_mosaic.version = 11 : i64} {
  func.func @_linear_kernel(%arg0: i32, %arg1: i32, %arg2: i32, %arg3: memref<16x128xbf16, #tpu.memory_space<vmem>>, %arg4: memref<128x256xbf16, #tpu.memory_space<vmem>>, %arg5: memref<1x256xf32, #tpu.memory_space<vmem>>, %arg6: memref<16x256xbf16, #tpu.memory_space<vmem>>, %arg7: memref<16x256xf32, #tpu.memory_space<vmem>>) attributes {dimension_semantics = [#tpu.dimension_semantics<parallel>, #tpu.dimension_semantics<parallel>, #tpu.dimension_semantics<arbitrary>], iteration_bounds = array<i64: 1, 1, 1>, scalar_prefetch = 0 : i64, scratch_operands = 1 : i64, tpu.core_type = #tpu.core_type<tc>, window_params = [{transform_indices = @transform_0, window_bounds = array<i64: 16, 128>}, {transform_indices = @transform_1, window_bounds = array<i64: 128, 256>}, {transform_indices = @transform_2, window_bounds = array<i64: 1, 256>}, {transform_indices = @transform_3, window_bounds = array<i64: 16, 256>}]} {
    %c0_i32 = arith.constant 0 : i32
    %0 = arith.cmpi eq, %arg2, %c0_i32 : i32
    %1 = arith.extui %0 : i1 to i32
    %c0_i32_0 = arith.constant 0 : i32
    %2 = arith.cmpi ne, %1, %c0_i32_0 : i32
    scf.if %2 {
      %cst_10 = arith.constant 0.000000e+00 : f32
      %12 = vector.broadcast %cst_10 : f32 to vector<16x256xf32>
      %c0_11 = arith.constant 0 : index
      %c0_12 = arith.constant 0 : index
      %13 = vector.load %arg7[%c0_11, %c0_12] : memref<16x256xf32, #tpu.memory_space<vmem>>, vector<16x256xf32>
      tpu.vector_store %arg7[%c0_11, %c0_12], %12 {strides = array<i32>} : memref<16x256xf32, #tpu.memory_space<vmem>>, vector<16x256xf32>,
    } else {
    }
    %c0 = arith.constant 0 : index
    %c0_1 = arith.constant 0 : index
    %3 = vector.load %arg7[%c0, %c0_1] : memref<16x256xf32, #tpu.memory_space<vmem>>, vector<16x256xf32>
    %c0_2 = arith.constant 0 : index
    %c0_3 = arith.constant 0 : index
    %4 = vector.load %arg3[%c0_2, %c0_3] : memref<16x128xbf16, #tpu.memory_space<vmem>>, vector<16x128xbf16>
    %c0_4 = arith.constant 0 : index
    %c0_5 = arith.constant 0 : index
    %5 = vector.load %arg4[%c0_4, %c0_5] : memref<128x256xbf16, #tpu.memory_space<vmem>>, vector<128x256xbf16>
    %cst = arith.constant dense<0.000000e+00> : vector<16x256xf32>
    %6 = tpu.matmul %4, %5, %cst {dimension_numbers = #tpu.dot_dimension_numbers<[1], [0], [0], [1], [0, 0, 1, 1], [], []>} : vector<16x128xbf16>, vector<128x256xbf16>, vector<16x256xf32> -> vector<16x256xf32>
    %7 = arith.addf %3, %6 : vector<16x256xf32>
    %c0_6 = arith.constant 0 : index
    %c0_7 = arith.constant 0 : index
    %8 = vector.load %arg7[%c0_6, %c0_7] : memref<16x256xf32, #tpu.memory_space<vmem>>, vector<16x256xf32>
    tpu.vector_store %arg7[%c0_6, %c0_7], %7 {strides = array<i32>} : memref<16x256xf32, #tpu.memory_space<vmem>>, vector<16x256xf32>,
    %c0_i32_8 = arith.constant 0 : i32
    %9 = arith.cmpi eq, %arg2, %c0_i32_8 : i32
    %10 = arith.extui %9 : i1 to i32
    %c0_i32_9 = arith.constant 0 : i32
    %11 = arith.cmpi ne, %10, %c0_i32_9 : i32
    scf.if %11 {
      %c0_10 = arith.constant 0 : index
      %c0_11 = arith.constant 0 : index
      %12 = vector.load %arg7[%c0_10, %c0_11] : memref<16x256xf32, #tpu.memory_space<vmem>>, vector<16x256xf32>
      %c0_12 = arith.constant 0 : index
      %c0_13 = arith.constant 0 : index
      %13 = vector.load %arg5[%c0_12, %c0_13] : memref<1x256xf32, #tpu.memory_space<vmem>>, vector<1x256xf32>
      %14 = vector.broadcast %13 : vector<1x256xf32> to vector<16x256xf32>
      %15 = arith.addf %12, %14 : vector<16x256xf32>
      %16 = arith.truncf %15 : vector<16x256xf32> to vector<16x256xbf16>
      %c0_14 = arith.constant 0 : index
      %c0_15 = arith.constant 0 : index
      %17 = vector.load %arg6[%c0_14, %c0_15] : memref<16x256xbf16, #tpu.memory_space<vmem>>, vector<16x256xbf16>
      tpu.vector_store %arg6[%c0_14, %c0_15], %16 {strides = array<i32>} : memref<16x256xbf16, #tpu.memory_space<vmem>>, vector<16x256xbf16>,
    } else {
    }
    return
  }
  func.func @transform_0(%arg0: i32, %arg1: i32, %arg2: i32) -> (i32, i32) {
    %c0_i32 = arith.constant 0 : i32
    return %arg0, %arg2 : i32, i32
  }
  func.func @transform_1(%arg0: i32, %arg1: i32, %arg2: i32) -> (i32, i32) {
    %c0_i32 = arith.constant 0 : i32
    return %arg2, %arg1 : i32, i32
  }
  func.func @transform_2(%arg0: i32, %arg1: i32, %arg2: i32) -> (i32, i32) {
    %c0_i32 = arith.constant 0 : i32
    %c0_i32_0 = arith.constant 0 : i32
    return %c0_i32, %arg1 : i32, i32
  }
  func.func @transform_3(%arg0: i32, %arg1: i32, %arg2: i32) -> (i32, i32) {
    %c0_i32 = arith.constant 0 : i32
    return %arg0, %arg1 : i32, i32
  }
}

module attributes {stable_mosaic.version = 11 : i64} {
  func.func @_mha_kernel(%arg0: i32, %arg1: i32, %arg2: i32, %arg3: memref<1x1x8xi32, #tpu.memory_space<vmem>>, %arg4: memref<1x8x128xbf16, #tpu.memory_space<vmem>>, %arg5: memref<1x8x128xbf16, #tpu.memory_space<vmem>>, %arg6: memref<1x8x128xbf16, #tpu.memory_space<vmem>>, %arg7: memref<1x8x128xbf16, #tpu.memory_space<vmem>>, %arg8: memref<4x8x1xf32, #tpu.memory_space<vmem>>, %arg9: memref<4x8x1xf32, #tpu.memory_space<vmem>>, %arg10: memref<8x128xf32, #tpu.memory_space<vmem>>) attributes {dimension_semantics = [#tpu.dimension_semantics<parallel>, #tpu.dimension_semantics<parallel>, #tpu.dimension_semantics<arbitrary>], iteration_bounds = array<i64: 2, 1, 1>, scalar_prefetch = 0 : i64, scratch_operands = 3 : i64, tpu.core_type = #tpu.core_type<tc>, window_params = [{transform_indices = @transform_0, window_bounds = array<i64: 1, 1, 8>}, {transform_indices = @transform_1, window_bounds = array<i64: 1, 8, 128>}, {transform_indices = @transform_2, window_bounds = array<i64: 1, 8, 128>}, {transform_indices = @transform_3, window_bounds = array<i64: 1, 8, 128>}, {transform_indices = @transform_4, window_bounds = array<i64: 1, 8, 128>}]} {
    %c0_i32 = arith.constant 0 : i32
    %0 = arith.cmpi eq, %arg2, %c0_i32 : i32
    %1 = arith.extui %0 : i1 to i32
    %c0_i32_0 = arith.constant 0 : i32
    %2 = arith.cmpi ne, %1, %c0_i32_0 : i32
    scf.if %2 {
      %cst_96 = arith.constant -1.000000e+30 : f32
      %174 = vector.broadcast %cst_96 : f32 to vector<4x8x1xf32>
      %c0_97 = arith.constant 0 : index
      %c0_98 = arith.constant 0 : index
      %c0_99 = arith.constant 0 : index
      %175 = vector.load %arg8[%c0_97, %c0_98, %c0_99] : memref<4x8x1xf32, #tpu.memory_space<vmem>>, vector<4x8x1xf32>
      tpu.vector_store %arg8[%c0_97, %c0_98, %c0_99], %174 {strides = array<i32>} : memref<4x8x1xf32, #tpu.memory_space<vmem>>, vector<4x8x1xf32>,
      %cst_100 = arith.constant 0.000000e+00 : f32
      %176 = vector.broadcast %cst_100 : f32 to vector<4x8x1xf32>
      %c0_101 = arith.constant 0 : index
      %c0_102 = arith.constant 0 : index
      %c0_103 = arith.constant 0 : index
      %177 = vector.load %arg9[%c0_101, %c0_102, %c0_103] : memref<4x8x1xf32, #tpu.memory_space<vmem>>, vector<4x8x1xf32>
      tpu.vector_store %arg9[%c0_101, %c0_102, %c0_103], %176 {strides = array<i32>} : memref<4x8x1xf32, #tpu.memory_space<vmem>>, vector<4x8x1xf32>,
      %cst_104 = arith.constant 0.000000e+00 : f32
      %178 = vector.broadcast %cst_104 : f32 to vector<8x128xf32>
      %c0_105 = arith.constant 0 : index
      %c0_106 = arith.constant 0 : index
      %179 = vector.load %arg10[%c0_105, %c0_106] : memref<8x128xf32, #tpu.memory_space<vmem>>, vector<8x128xf32>
      tpu.vector_store %arg10[%c0_105, %c0_106], %178 {strides = array<i32>} : memref<8x128xf32, #tpu.memory_space<vmem>>, vector<8x128xf32>,
    } else {
    }
    %c0 = arith.constant 0 : index
    %c0_1 = arith.constant 0 : index
    %c0_2 = arith.constant 0 : index
    %3 = vector.load %arg4[%c0, %c0_1, %c0_2] : memref<1x8x128xbf16, #tpu.memory_space<vmem>>, vector<1x8x128xbf16>
    %4 = vector.shape_cast %3 : vector<1x8x128xbf16> to vector<8x128xbf16>
    %c0_3 = arith.constant 0 : index
    %c0_4 = arith.constant 0 : index
    %c0_5 = arith.constant 0 : index
    %5 = vector.load %arg5[%c0_3, %c0_4, %c0_5] : memref<1x8x128xbf16, #tpu.memory_space<vmem>>, vector<1x8x128xbf16>
    %6 = vector.shape_cast %5 : vector<1x8x128xbf16> to vector<8x128xbf16>
    %c0_6 = arith.constant 0 : index
    %c0_7 = arith.constant 0 : index
    %c0_8 = arith.constant 0 : index
    %7 = vector.load %arg6[%c0_6, %c0_7, %c0_8] : memref<1x8x128xbf16, #tpu.memory_space<vmem>>, vector<1x8x128xbf16>
    %8 = vector.shape_cast %7 : vector<1x8x128xbf16> to vector<8x128xbf16>
    %c0_9 = arith.constant 0 : index
    %c0_10 = arith.constant 0 : index
    %c0_11 = arith.constant 0 : index
    %9 = vector.load %arg3[%c0_9, %c0_10, %c0_11] : memref<1x1x8xi32, #tpu.memory_space<vmem>>, vector<1x1x8xi32>
    %10 = vector.shape_cast %9 : vector<1x1x8xi32> to vector<1x8xi32>
    %c0_i32_12 = arith.constant 0 : i32
    %11 = vector.broadcast %c0_i32_12 : i32 to vector<1x8xi32>
    %12 = arith.cmpi eq, %10, %11 : vector<1x8xi32>
    %cst = arith.constant -1.000000e+09 : f32
    %cst_13 = arith.constant 0.000000e+00 : f32
    %13 = vector.broadcast %cst : f32 to vector<1x8xf32>
    %14 = vector.broadcast %cst_13 : f32 to vector<1x8xf32>
    %15 = arith.select %12, %13, %14 : vector<1x8xi1>, vector<1x8xf32>
    %16 = tpu.iota {dimensions = array<i32: 0>} : vector<8x8xi32>
    %17 = tpu.iota {dimensions = array<i32: 1>} : vector<8x8xi32>
    %c8_i32 = arith.constant 8 : i32
    %18 = arith.muli %arg2, %c8_i32 : i32
    %19 = vector.broadcast %18 : i32 to vector<8x8xi32>
    %20 = arith.addi %17, %19 : vector<8x8xi32>
    %21 = arith.cmpi sgt, %20, %16 : vector<8x8xi32>
    %cst_14 = arith.constant -1.000000e+09 : f32
    %cst_15 = arith.constant 0.000000e+00 : f32
    %22 = vector.broadcast %cst_14 : f32 to vector<8x8xf32>
    %23 = vector.broadcast %cst_15 : f32 to vector<8x8xf32>
    %24 = arith.select %21, %22, %23 : vector<8x8xi1>, vector<8x8xf32>
    %25 = vector.broadcast %15 : vector<1x8xf32> to vector<8x8xf32>
    %26 = arith.addf %25, %24 : vector<8x8xf32>
    %27 = vector.extract_strided_slice %4 {offsets = [0, 0], sizes = [8, 32], strides = [1, 1]} : vector<8x128xbf16> to vector<8x32xbf16>
    %28 = vector.extract_strided_slice %6 {offsets = [0, 0], sizes = [8, 32], strides = [1, 1]} : vector<8x128xbf16> to vector<8x32xbf16>
    %29 = vector.extract_strided_slice %8 {offsets = [0, 0], sizes = [8, 32], strides = [1, 1]} : vector<8x128xbf16> to vector<8x32xbf16>
    %cst_16 = arith.constant dense<0.000000e+00> : vector<8x8xf32>
    %30 = tpu.matmul %27, %28, %cst_16 {dimension_numbers = #tpu.dot_dimension_numbers<[1], [1], [0], [0], [0, 0, 1, 0], [], []>} : vector<8x32xbf16>, vector<8x32xbf16>, vector<8x8xf32> -> vector<8x8xf32>
    %cst_17 = arith.constant 0.176776692 : f32
    %31 = vector.broadcast %cst_17 : f32 to vector<8x8xf32>
    %32 = arith.mulf %30, %31 : vector<8x8xf32>
    %33 = arith.addf %32, %26 : vector<8x8xf32>
    %c0_18 = arith.constant 0 : index
    %c0_19 = arith.constant 0 : index
    %c0_20 = arith.constant 0 : index
    %34 = vector.load %arg8[%c0_18, %c0_19, %c0_20] : memref<4x8x1xf32, #tpu.memory_space<vmem>>, vector<1x8x1xf32>
    %35 = vector.shape_cast %34 : vector<1x8x1xf32> to vector<8x1xf32>
    %cst_21 = arith.constant dense<0xFF800000> : vector<8xf32>
    %36 = vector.multi_reduction <maximumf>, %33, %cst_21 [1] : vector<8x8xf32> to vector<8xf32>
    %37 = vector.shape_cast %36 : vector<8xf32> to vector<8x1xf32>
    %38 = arith.maximumf %35, %37 : vector<8x1xf32>
    %39 = arith.subf %35, %38 : vector<8x1xf32>
    %40 = math.exp %39 : vector<8x1xf32>
    %41 = vector.broadcast %38 : vector<8x1xf32> to vector<8x8xf32>
    %42 = arith.subf %33, %41 : vector<8x8xf32>
    %43 = math.exp %42 : vector<8x8xf32>
    %c0_22 = arith.constant 0 : index
    %c0_23 = arith.constant 0 : index
    %c0_24 = arith.constant 0 : index
    %44 = vector.load %arg9[%c0_22, %c0_23, %c0_24] : memref<4x8x1xf32, #tpu.memory_space<vmem>>, vector<1x8x1xf32>
    %45 = vector.shape_cast %44 : vector<1x8x1xf32> to vector<8x1xf32>
    %46 = arith.mulf %40, %45 : vector<8x1xf32>
    %cst_25 = arith.constant dense<0.000000e+00> : vector<8xf32>
    %47 = vector.multi_reduction <add>, %43, %cst_25 [1] : vector<8x8xf32> to vector<8xf32>
    %48 = vector.shape_cast %47 : vector<8xf32> to vector<8x1xf32>
    %49 = arith.addf %46, %48 : vector<8x1xf32>
    %c0_26 = arith.constant 0 : index
    %c0_27 = arith.constant 0 : index
    %c0_28 = arith.constant 0 : index
    %50 = vector.load %arg9[%c0_26, %c0_27, %c0_28] : memref<4x8x1xf32, #tpu.memory_space<vmem>>, vector<1x8x1xf32>
    %51 = vector.shape_cast %50 : vector<1x8x1xf32> to vector<8x1xf32>
    %52 = vector.shape_cast %49 : vector<8x1xf32> to vector<1x8x1xf32>
    tpu.vector_store %arg9[%c0_26, %c0_27, %c0_28], %52 {strides = array<i32>} : memref<4x8x1xf32, #tpu.memory_space<vmem>>, vector<1x8x1xf32>,
    %c0_29 = arith.constant 0 : index
    %c0_30 = arith.constant 0 : index
    %53 = vector.load %arg10[%c0_29, %c0_30] : memref<8x128xf32, #tpu.memory_space<vmem>>, vector<8x32xf32>
    %54 = vector.broadcast %40 : vector<8x1xf32> to vector<8x32xf32>
    %55 = arith.mulf %54, %53 : vector<8x32xf32>
    %56 = arith.truncf %43 : vector<8x8xf32> to vector<8x8xbf16>
    %cst_31 = arith.constant dense<0.000000e+00> : vector<8x32xf32>
    %57 = tpu.matmul %56, %29, %cst_31 {dimension_numbers = #tpu.dot_dimension_numbers<[1], [0], [0], [1], [0, 0, 1, 1], [], []>} : vector<8x8xbf16>, vector<8x32xbf16>, vector<8x32xf32> -> vector<8x32xf32>
    %58 = arith.addf %55, %57 : vector<8x32xf32>
    %c0_32 = arith.constant 0 : index
    %c0_33 = arith.constant 0 : index
    %59 = vector.load %arg10[%c0_32, %c0_33] : memref<8x128xf32, #tpu.memory_space<vmem>>, vector<8x32xf32>
    tpu.vector_store %arg10[%c0_32, %c0_33], %58 {strides = array<i32>} : memref<8x128xf32, #tpu.memory_space<vmem>>, vector<8x32xf32>,
    %c0_34 = arith.constant 0 : index
    %c0_35 = arith.constant 0 : index
    %c0_36 = arith.constant 0 : index
    %60 = vector.load %arg8[%c0_34, %c0_35, %c0_36] : memref<4x8x1xf32, #tpu.memory_space<vmem>>, vector<1x8x1xf32>
    %61 = vector.shape_cast %60 : vector<1x8x1xf32> to vector<8x1xf32>
    %62 = vector.shape_cast %38 : vector<8x1xf32> to vector<1x8x1xf32>
    tpu.vector_store %arg8[%c0_34, %c0_35, %c0_36], %62 {strides = array<i32>} : memref<4x8x1xf32, #tpu.memory_space<vmem>>, vector<1x8x1xf32>,
    %63 = vector.extract_strided_slice %4 {offsets = [0, 32], sizes = [8, 32], strides = [1, 1]} : vector<8x128xbf16> to vector<8x32xbf16>
    %64 = vector.extract_strided_slice %6 {offsets = [0, 32], sizes = [8, 32], strides = [1, 1]} : vector<8x128xbf16> to vector<8x32xbf16>
    %65 = vector.extract_strided_slice %8 {offsets = [0, 32], sizes = [8, 32], strides = [1, 1]} : vector<8x128xbf16> to vector<8x32xbf16>
    %cst_37 = arith.constant dense<0.000000e+00> : vector<8x8xf32>
    %66 = tpu.matmul %63, %64, %cst_37 {dimension_numbers = #tpu.dot_dimension_numbers<[1], [1], [0], [0], [0, 0, 1, 0], [], []>} : vector<8x32xbf16>, vector<8x32xbf16>, vector<8x8xf32> -> vector<8x8xf32>
    %cst_38 = arith.constant 0.176776692 : f32
    %67 = vector.broadcast %cst_38 : f32 to vector<8x8xf32>
    %68 = arith.mulf %66, %67 : vector<8x8xf32>
    %69 = arith.addf %68, %26 : vector<8x8xf32>
    %c1 = arith.constant 1 : index
    %c0_39 = arith.constant 0 : index
    %c0_40 = arith.constant 0 : index
    %70 = vector.load %arg8[%c1, %c0_39, %c0_40] : memref<4x8x1xf32, #tpu.memory_space<vmem>>, vector<1x8x1xf32>
    %71 = vector.shape_cast %70 : vector<1x8x1xf32> to vector<8x1xf32>
    %cst_41 = arith.constant dense<0xFF800000> : vector<8xf32>
    %72 = vector.multi_reduction <maximumf>, %69, %cst_41 [1] : vector<8x8xf32> to vector<8xf32>
    %73 = vector.shape_cast %72 : vector<8xf32> to vector<8x1xf32>
    %74 = arith.maximumf %71, %73 : vector<8x1xf32>
    %75 = arith.subf %71, %74 : vector<8x1xf32>
    %76 = math.exp %75 : vector<8x1xf32>
    %77 = vector.broadcast %74 : vector<8x1xf32> to vector<8x8xf32>
    %78 = arith.subf %69, %77 : vector<8x8xf32>
    %79 = math.exp %78 : vector<8x8xf32>
    %c1_42 = arith.constant 1 : index
    %c0_43 = arith.constant 0 : index
    %c0_44 = arith.constant 0 : index
    %80 = vector.load %arg9[%c1_42, %c0_43, %c0_44] : memref<4x8x1xf32, #tpu.memory_space<vmem>>, vector<1x8x1xf32>
    %81 = vector.shape_cast %80 : vector<1x8x1xf32> to vector<8x1xf32>
    %82 = arith.mulf %76, %81 : vector<8x1xf32>
    %cst_45 = arith.constant dense<0.000000e+00> : vector<8xf32>
    %83 = vector.multi_reduction <add>, %79, %cst_45 [1] : vector<8x8xf32> to vector<8xf32>
    %84 = vector.shape_cast %83 : vector<8xf32> to vector<8x1xf32>
    %85 = arith.addf %82, %84 : vector<8x1xf32>
    %c1_46 = arith.constant 1 : index
    %c0_47 = arith.constant 0 : index
    %c0_48 = arith.constant 0 : index
    %86 = vector.load %arg9[%c1_46, %c0_47, %c0_48] : memref<4x8x1xf32, #tpu.memory_space<vmem>>, vector<1x8x1xf32>
    %87 = vector.shape_cast %86 : vector<1x8x1xf32> to vector<8x1xf32>
    %88 = vector.shape_cast %85 : vector<8x1xf32> to vector<1x8x1xf32>
    tpu.vector_store %arg9[%c1_46, %c0_47, %c0_48], %88 {strides = array<i32>} : memref<4x8x1xf32, #tpu.memory_space<vmem>>, vector<1x8x1xf32>,
    %c0_49 = arith.constant 0 : index
    %c32 = arith.constant 32 : index
    %89 = vector.load %arg10[%c0_49, %c32] : memref<8x128xf32, #tpu.memory_space<vmem>>, vector<8x32xf32>
    %90 = vector.broadcast %76 : vector<8x1xf32> to vector<8x32xf32>
    %91 = arith.mulf %90, %89 : vector<8x32xf32>
    %92 = arith.truncf %79 : vector<8x8xf32> to vector<8x8xbf16>
    %cst_50 = arith.constant dense<0.000000e+00> : vector<8x32xf32>
    %93 = tpu.matmul %92, %65, %cst_50 {dimension_numbers = #tpu.dot_dimension_numbers<[1], [0], [0], [1], [0, 0, 1, 1], [], []>} : vector<8x8xbf16>, vector<8x32xbf16>, vector<8x32xf32> -> vector<8x32xf32>
    %94 = arith.addf %91, %93 : vector<8x32xf32>
    %c0_51 = arith.constant 0 : index
    %c32_52 = arith.constant 32 : index
    %95 = vector.load %arg10[%c0_51, %c32_52] : memref<8x128xf32, #tpu.memory_space<vmem>>, vector<8x32xf32>
    tpu.vector_store %arg10[%c0_51, %c32_52], %94 {strides = array<i32>} : memref<8x128xf32, #tpu.memory_space<vmem>>, vector<8x32xf32>,
    %c1_53 = arith.constant 1 : index
    %c0_54 = arith.constant 0 : index
    %c0_55 = arith.constant 0 : index
    %96 = vector.load %arg8[%c1_53, %c0_54, %c0_55] : memref<4x8x1xf32, #tpu.memory_space<vmem>>, vector<1x8x1xf32>
    %97 = vector.shape_cast %96 : vector<1x8x1xf32> to vector<8x1xf32>
    %98 = vector.shape_cast %74 : vector<8x1xf32> to vector<1x8x1xf32>
    tpu.vector_store %arg8[%c1_53, %c0_54, %c0_55], %98 {strides = array<i32>} : memref<4x8x1xf32, #tpu.memory_space<vmem>>, vector<1x8x1xf32>,
    %99 = vector.extract_strided_slice %4 {offsets = [0, 64], sizes = [8, 32], strides = [1, 1]} : vector<8x128xbf16> to vector<8x32xbf16>
    %100 = vector.extract_strided_slice %6 {offsets = [0, 64], sizes = [8, 32], strides = [1, 1]} : vector<8x128xbf16> to vector<8x32xbf16>
    %101 = vector.extract_strided_slice %8 {offsets = [0, 64], sizes = [8, 32], strides = [1, 1]} : vector<8x128xbf16> to vector<8x32xbf16>
    %cst_56 = arith.constant dense<0.000000e+00> : vector<8x8xf32>
    %102 = tpu.matmul %99, %100, %cst_56 {dimension_numbers = #tpu.dot_dimension_numbers<[1], [1], [0], [0], [0, 0, 1, 0], [], []>} : vector<8x32xbf16>, vector<8x32xbf16>, vector<8x8xf32> -> vector<8x8xf32>
    %cst_57 = arith.constant 0.176776692 : f32
    %103 = vector.broadcast %cst_57 : f32 to vector<8x8xf32>
    %104 = arith.mulf %102, %103 : vector<8x8xf32>
    %105 = arith.addf %104, %26 : vector<8x8xf32>
    %c2 = arith.constant 2 : index
    %c0_58 = arith.constant 0 : index
    %c0_59 = arith.constant 0 : index
    %106 = vector.load %arg8[%c2, %c0_58, %c0_59] : memref<4x8x1xf32, #tpu.memory_space<vmem>>, vector<1x8x1xf32>
    %107 = vector.shape_cast %106 : vector<1x8x1xf32> to vector<8x1xf32>
    %cst_60 = arith.constant dense<0xFF800000> : vector<8xf32>
    %108 = vector.multi_reduction <maximumf>, %105, %cst_60 [1] : vector<8x8xf32> to vector<8xf32>
    %109 = vector.shape_cast %108 : vector<8xf32> to vector<8x1xf32>
    %110 = arith.maximumf %107, %109 : vector<8x1xf32>
    %111 = arith.subf %107, %110 : vector<8x1xf32>
    %112 = math.exp %111 : vector<8x1xf32>
    %113 = vector.broadcast %110 : vector<8x1xf32> to vector<8x8xf32>
    %114 = arith.subf %105, %113 : vector<8x8xf32>
    %115 = math.exp %114 : vector<8x8xf32>
    %c2_61 = arith.constant 2 : index
    %c0_62 = arith.constant 0 : index
    %c0_63 = arith.constant 0 : index
    %116 = vector.load %arg9[%c2_61, %c0_62, %c0_63] : memref<4x8x1xf32, #tpu.memory_space<vmem>>, vector<1x8x1xf32>
    %117 = vector.shape_cast %116 : vector<1x8x1xf32> to vector<8x1xf32>
    %118 = arith.mulf %112, %117 : vector<8x1xf32>
    %cst_64 = arith.constant dense<0.000000e+00> : vector<8xf32>
    %119 = vector.multi_reduction <add>, %115, %cst_64 [1] : vector<8x8xf32> to vector<8xf32>
    %120 = vector.shape_cast %119 : vector<8xf32> to vector<8x1xf32>
    %121 = arith.addf %118, %120 : vector<8x1xf32>
    %c2_65 = arith.constant 2 : index
    %c0_66 = arith.constant 0 : index
    %c0_67 = arith.constant 0 : index
    %122 = vector.load %arg9[%c2_65, %c0_66, %c0_67] : memref<4x8x1xf32, #tpu.memory_space<vmem>>, vector<1x8x1xf32>
    %123 = vector.shape_cast %122 : vector<1x8x1xf32> to vector<8x1xf32>
    %124 = vector.shape_cast %121 : vector<8x1xf32> to vector<1x8x1xf32>
    tpu.vector_store %arg9[%c2_65, %c0_66, %c0_67], %124 {strides = array<i32>} : memref<4x8x1xf32, #tpu.memory_space<vmem>>, vector<1x8x1xf32>,
    %c0_68 = arith.constant 0 : index
    %c64 = arith.constant 64 : index
    %125 = vector.load %arg10[%c0_68, %c64] : memref<8x128xf32, #tpu.memory_space<vmem>>, vector<8x32xf32>
    %126 = vector.broadcast %112 : vector<8x1xf32> to vector<8x32xf32>
    %127 = arith.mulf %126, %125 : vector<8x32xf32>
    %128 = arith.truncf %115 : vector<8x8xf32> to vector<8x8xbf16>
    %cst_69 = arith.constant dense<0.000000e+00> : vector<8x32xf32>
    %129 = tpu.matmul %128, %101, %cst_69 {dimension_numbers = #tpu.dot_dimension_numbers<[1], [0], [0], [1], [0, 0, 1, 1], [], []>} : vector<8x8xbf16>, vector<8x32xbf16>, vector<8x32xf32> -> vector<8x32xf32>
    %130 = arith.addf %127, %129 : vector<8x32xf32>
    %c0_70 = arith.constant 0 : index
    %c64_71 = arith.constant 64 : index
    %131 = vector.load %arg10[%c0_70, %c64_71] : memref<8x128xf32, #tpu.memory_space<vmem>>, vector<8x32xf32>
    tpu.vector_store %arg10[%c0_70, %c64_71], %130 {strides = array<i32>} : memref<8x128xf32, #tpu.memory_space<vmem>>, vector<8x32xf32>,
    %c2_72 = arith.constant 2 : index
    %c0_73 = arith.constant 0 : index
    %c0_74 = arith.constant 0 : index
    %132 = vector.load %arg8[%c2_72, %c0_73, %c0_74] : memref<4x8x1xf32, #tpu.memory_space<vmem>>, vector<1x8x1xf32>
    %133 = vector.shape_cast %132 : vector<1x8x1xf32> to vector<8x1xf32>
    %134 = vector.shape_cast %110 : vector<8x1xf32> to vector<1x8x1xf32>
    tpu.vector_store %arg8[%c2_72, %c0_73, %c0_74], %134 {strides = array<i32>} : memref<4x8x1xf32, #tpu.memory_space<vmem>>, vector<1x8x1xf32>,
    %135 = vector.extract_strided_slice %4 {offsets = [0, 96], sizes = [8, 32], strides = [1, 1]} : vector<8x128xbf16> to vector<8x32xbf16>
    %136 = vector.extract_strided_slice %6 {offsets = [0, 96], sizes = [8, 32], strides = [1, 1]} : vector<8x128xbf16> to vector<8x32xbf16>
    %137 = vector.extract_strided_slice %8 {offsets = [0, 96], sizes = [8, 32], strides = [1, 1]} : vector<8x128xbf16> to vector<8x32xbf16>
    %cst_75 = arith.constant dense<0.000000e+00> : vector<8x8xf32>
    %138 = tpu.matmul %135, %136, %cst_75 {dimension_numbers = #tpu.dot_dimension_numbers<[1], [1], [0], [0], [0, 0, 1, 0], [], []>} : vector<8x32xbf16>, vector<8x32xbf16>, vector<8x8xf32> -> vector<8x8xf32>
    %cst_76 = arith.constant 0.176776692 : f32
    %139 = vector.broadcast %cst_76 : f32 to vector<8x8xf32>
    %140 = arith.mulf %138, %139 : vector<8x8xf32>
    %141 = arith.addf %140, %26 : vector<8x8xf32>
    %c3 = arith.constant 3 : index
    %c0_77 = arith.constant 0 : index
    %c0_78 = arith.constant 0 : index
    %142 = vector.load %arg8[%c3, %c0_77, %c0_78] : memref<4x8x1xf32, #tpu.memory_space<vmem>>, vector<1x8x1xf32>
    %143 = vector.shape_cast %142 : vector<1x8x1xf32> to vector<8x1xf32>
    %cst_79 = arith.constant dense<0xFF800000> : vector<8xf32>
    %144 = vector.multi_reduction <maximumf>, %141, %cst_79 [1] : vector<8x8xf32> to vector<8xf32>
    %145 = vector.shape_cast %144 : vector<8xf32> to vector<8x1xf32>
    %146 = arith.maximumf %143, %145 : vector<8x1xf32>
    %147 = arith.subf %143, %146 : vector<8x1xf32>
    %148 = math.exp %147 : vector<8x1xf32>
    %149 = vector.broadcast %146 : vector<8x1xf32> to vector<8x8xf32>
    %150 = arith.subf %141, %149 : vector<8x8xf32>
    %151 = math.exp %150 : vector<8x8xf32>
    %c3_80 = arith.constant 3 : index
    %c0_81 = arith.constant 0 : index
    %c0_82 = arith.constant 0 : index
    %152 = vector.load %arg9[%c3_80, %c0_81, %c0_82] : memref<4x8x1xf32, #tpu.memory_space<vmem>>, vector<1x8x1xf32>
    %153 = vector.shape_cast %152 : vector<1x8x1xf32> to vector<8x1xf32>
    %154 = arith.mulf %148, %153 : vector<8x1xf32>
    %cst_83 = arith.constant dense<0.000000e+00> : vector<8xf32>
    %155 = vector.multi_reduction <add>, %151, %cst_83 [1] : vector<8x8xf32> to vector<8xf32>
    %156 = vector.shape_cast %155 : vector<8xf32> to vector<8x1xf32>
    %157 = arith.addf %154, %156 : vector<8x1xf32>
    %c3_84 = arith.constant 3 : index
    %c0_85 = arith.constant 0 : index
    %c0_86 = arith.constant 0 : index
    %158 = vector.load %arg9[%c3_84, %c0_85, %c0_86] : memref<4x8x1xf32, #tpu.memory_space<vmem>>, vector<1x8x1xf32>
    %159 = vector.shape_cast %158 : vector<1x8x1xf32> to vector<8x1xf32>
    %160 = vector.shape_cast %157 : vector<8x1xf32> to vector<1x8x1xf32>
    tpu.vector_store %arg9[%c3_84, %c0_85, %c0_86], %160 {strides = array<i32>} : memref<4x8x1xf32, #tpu.memory_space<vmem>>, vector<1x8x1xf32>,
    %c0_87 = arith.constant 0 : index
    %c96 = arith.constant 96 : index
    %161 = vector.load %arg10[%c0_87, %c96] : memref<8x128xf32, #tpu.memory_space<vmem>>, vector<8x32xf32>
    %162 = vector.broadcast %148 : vector<8x1xf32> to vector<8x32xf32>
    %163 = arith.mulf %162, %161 : vector<8x32xf32>
    %164 = arith.truncf %151 : vector<8x8xf32> to vector<8x8xbf16>
    %cst_88 = arith.constant dense<0.000000e+00> : vector<8x32xf32>
    %165 = tpu.matmul %164, %137, %cst_88 {dimension_numbers = #tpu.dot_dimension_numbers<[1], [0], [0], [1], [0, 0, 1, 1], [], []>} : vector<8x8xbf16>, vector<8x32xbf16>, vector<8x32xf32> -> vector<8x32xf32>
    %166 = arith.addf %163, %165 : vector<8x32xf32>
    %c0_89 = arith.constant 0 : index
    %c96_90 = arith.constant 96 : index
    %167 = vector.load %arg10[%c0_89, %c96_90] : memref<8x128xf32, #tpu.memory_space<vmem>>, vector<8x32xf32>
    tpu.vector_store %arg10[%c0_89, %c96_90], %166 {strides = array<i32>} : memref<8x128xf32, #tpu.memory_space<vmem>>, vector<8x32xf32>,
    %c3_91 = arith.constant 3 : index
    %c0_92 = arith.constant 0 : index
    %c0_93 = arith.constant 0 : index
    %168 = vector.load %arg8[%c3_91, %c0_92, %c0_93] : memref<4x8x1xf32, #tpu.memory_space<vmem>>, vector<1x8x1xf32>
    %169 = vector.shape_cast %168 : vector<1x8x1xf32> to vector<8x1xf32>
    %170 = vector.shape_cast %146 : vector<8x1xf32> to vector<1x8x1xf32>
    tpu.vector_store %arg8[%c3_91, %c0_92, %c0_93], %170 {strides = array<i32>} : memref<4x8x1xf32, #tpu.memory_space<vmem>>, vector<1x8x1xf32>,
    %c0_i32_94 = arith.constant 0 : i32
    %171 = arith.cmpi eq, %arg2, %c0_i32_94 : i32
    %172 = arith.extui %171 : i1 to i32
    %c0_i32_95 = arith.constant 0 : i32
    %173 = arith.cmpi ne, %172, %c0_i32_95 : i32
    scf.if %173 {
      %c0_96 = arith.constant 0 : index
      %c0_97 = arith.constant 0 : index
      %174 = vector.load %arg10[%c0_96, %c0_97] : memref<8x128xf32, #tpu.memory_space<vmem>>, vector<8x32xf32>
      %c0_98 = arith.constant 0 : index
      %c0_99 = arith.constant 0 : index
      %c0_100 = arith.constant 0 : index
      %175 = vector.load %arg9[%c0_98, %c0_99, %c0_100] : memref<4x8x1xf32, #tpu.memory_space<vmem>>, vector<1x8x1xf32>
      %176 = vector.shape_cast %175 : vector<1x8x1xf32> to vector<8x1xf32>
      %177 = tpu.reciprocal %176 {approx = true} : vector<8x1xf32> -> vector<8x1xf32>
      %178 = vector.broadcast %177 : vector<8x1xf32> to vector<8x32xf32>
      %179 = arith.mulf %174, %178 : vector<8x32xf32>
      %c0_101 = arith.constant 0 : index
      %c0_102 = arith.constant 0 : index
      %180 = vector.load %arg10[%c0_101, %c0_102] : memref<8x128xf32, #tpu.memory_space<vmem>>, vector<8x32xf32>
      tpu.vector_store %arg10[%c0_101, %c0_102], %179 {strides = array<i32>} : memref<8x128xf32, #tpu.memory_space<vmem>>, vector<8x32xf32>,
      %c0_103 = arith.constant 0 : index
      %c32_104 = arith.constant 32 : index
      %181 = vector.load %arg10[%c0_103, %c32_104] : memref<8x128xf32, #tpu.memory_space<vmem>>, vector<8x32xf32>
      %c1_105 = arith.constant 1 : index
      %c0_106 = arith.constant 0 : index
      %c0_107 = arith.constant 0 : index
      %182 = vector.load %arg9[%c1_105, %c0_106, %c0_107] : memref<4x8x1xf32, #tpu.memory_space<vmem>>, vector<1x8x1xf32>
      %183 = vector.shape_cast %182 : vector<1x8x1xf32> to vector<8x1xf32>
      %184 = tpu.reciprocal %183 {approx = true} : vector<8x1xf32> -> vector<8x1xf32>
      %185 = vector.broadcast %184 : vector<8x1xf32> to vector<8x32xf32>
      %186 = arith.mulf %181, %185 : vector<8x32xf32>
      %c0_108 = arith.constant 0 : index
      %c32_109 = arith.constant 32 : index
      %187 = vector.load %arg10[%c0_108, %c32_109] : memref<8x128xf32, #tpu.memory_space<vmem>>, vector<8x32xf32>
      tpu.vector_store %arg10[%c0_108, %c32_109], %186 {strides = array<i32>} : memref<8x128xf32, #tpu.memory_space<vmem>>, vector<8x32xf32>,
      %c0_110 = arith.constant 0 : index
      %c64_111 = arith.constant 64 : index
      %188 = vector.load %arg10[%c0_110, %c64_111] : memref<8x128xf32, #tpu.memory_space<vmem>>, vector<8x32xf32>
      %c2_112 = arith.constant 2 : index
      %c0_113 = arith.constant 0 : index
      %c0_114 = arith.constant 0 : index
      %189 = vector.load %arg9[%c2_112, %c0_113, %c0_114] : memref<4x8x1xf32, #tpu.memory_space<vmem>>, vector<1x8x1xf32>
      %190 = vector.shape_cast %189 : vector<1x8x1xf32> to vector<8x1xf32>
      %191 = tpu.reciprocal %190 {approx = true} : vector<8x1xf32> -> vector<8x1xf32>
      %192 = vector.broadcast %191 : vector<8x1xf32> to vector<8x32xf32>
      %193 = arith.mulf %188, %192 : vector<8x32xf32>
      %c0_115 = arith.constant 0 : index
      %c64_116 = arith.constant 64 : index
      %194 = vector.load %arg10[%c0_115, %c64_116] : memref<8x128xf32, #tpu.memory_space<vmem>>, vector<8x32xf32>
      tpu.vector_store %arg10[%c0_115, %c64_116], %193 {strides = array<i32>} : memref<8x128xf32, #tpu.memory_space<vmem>>, vector<8x32xf32>,
      %c0_117 = arith.constant 0 : index
      %c96_118 = arith.constant 96 : index
      %195 = vector.load %arg10[%c0_117, %c96_118] : memref<8x128xf32, #tpu.memory_space<vmem>>, vector<8x32xf32>
      %c3_119 = arith.constant 3 : index
      %c0_120 = arith.constant 0 : index
      %c0_121 = arith.constant 0 : index
      %196 = vector.load %arg9[%c3_119, %c0_120, %c0_121] : memref<4x8x1xf32, #tpu.memory_space<vmem>>, vector<1x8x1xf32>
      %197 = vector.shape_cast %196 : vector<1x8x1xf32> to vector<8x1xf32>
      %198 = tpu.reciprocal %197 {approx = true} : vector<8x1xf32> -> vector<8x1xf32>
      %199 = vector.broadcast %198 : vector<8x1xf32> to vector<8x32xf32>
      %200 = arith.mulf %195, %199 : vector<8x32xf32>
      %c0_122 = arith.constant 0 : index
      %c96_123 = arith.constant 96 : index
      %201 = vector.load %arg10[%c0_122, %c96_123] : memref<8x128xf32, #tpu.memory_space<vmem>>, vector<8x32xf32>
      tpu.vector_store %arg10[%c0_122, %c96_123], %200 {strides = array<i32>} : memref<8x128xf32, #tpu.memory_space<vmem>>, vector<8x32xf32>,
      %c0_124 = arith.constant 0 : index
      %c0_125 = arith.constant 0 : index
      %202 = vector.load %arg10[%c0_124, %c0_125] : memref<8x128xf32, #tpu.memory_space<vmem>>, vector<8x128xf32>
      %203 = arith.truncf %202 : vector<8x128xf32> to vector<8x128xbf16>
      %c0_126 = arith.constant 0 : index
      %c0_127 = arith.constant 0 : index
      %c0_128 = arith.constant 0 : index
      %204 = vector.load %arg7[%c0_126, %c0_127, %c0_128] : memref<1x8x128xbf16, #tpu.memory_space<vmem>>, vector<1x8x128xbf16>
      %205 = vector.shape_cast %204 : vector<1x8x128xbf16> to vector<8x128xbf16>
      %206 = vector.shape_cast %203 : vector<8x128xbf16> to vector<1x8x128xbf16>
      tpu.vector_store %arg7[%c0_126, %c0_127, %c0_128], %206 {strides = array<i32>} : memref<1x8x128xbf16, #tpu.memory_space<vmem>>, vector<1x8x128xbf16>,
    } else {
    }
    return
  }
  func.func @transform_0(%arg0: i32, %arg1: i32, %arg2: i32) -> (i32, i32, i32) {
    %c0_i32 = arith.constant 0 : i32
    %c0_i32_0 = arith.constant 0 : i32
    return %arg0, %c0_i32, %arg2 : i32, i32, i32
  }
  func.func @transform_1(%arg0: i32, %arg1: i32, %arg2: i32) -> (i32, i32, i32) {
    %c0_i32 = arith.constant 0 : i32
    %0 = arith.addi %c0_i32, %arg1 : i32
    %c0_i32_0 = arith.constant 0 : i32
    %c0_i32_1 = arith.constant 0 : i32
    return %arg0, %c0_i32_0, %0 : i32, i32, i32
  }
  func.func @transform_2(%arg0: i32, %arg1: i32, %arg2: i32) -> (i32, i32, i32) {
    %c1_i32 = arith.constant 1 : i32
    %0 = arith.addi %c1_i32, %arg1 : i32
    %c0_i32 = arith.constant 0 : i32
    return %arg0, %arg2, %0 : i32, i32, i32
  }
  func.func @transform_3(%arg0: i32, %arg1: i32, %arg2: i32) -> (i32, i32, i32) {
    %c2_i32 = arith.constant 2 : i32
    %0 = arith.addi %c2_i32, %arg1 : i32
    %c0_i32 = arith.constant 0 : i32
    return %arg0, %arg2, %0 : i32, i32, i32
  }
  func.func @transform_4(%arg0: i32, %arg1: i32, %arg2: i32) -> (i32, i32, i32) {
    %c0_i32 = arith.constant 0 : i32
    %c0_i32_0 = arith.constant 0 : i32
    return %arg0, %c0_i32, %arg1 : i32, i32, i32
  }
}

module attributes {stable_mosaic.version = 11 : i64} {
  func.func @_mha_kernel(%arg0: i32, %arg1: i32, %arg2: i32, %arg3: memref<1x1x8xi32, #tpu.memory_space<vmem>>, %arg4: memref<1x8x128xbf16, #tpu.memory_space<vmem>>, %arg5: memref<1x8x128xbf16, #tpu.memory_space<vmem>>, %arg6: memref<1x8x128xbf16, #tpu.memory_space<vmem>>, %arg7: memref<1x8x128xbf16, #tpu.memory_space<vmem>>, %arg8: memref<4x8x1xf32, #tpu.memory_space<vmem>>, %arg9: memref<4x8x1xf32, #tpu.memory_space<vmem>>, %arg10: memref<8x128xf32, #tpu.memory_space<vmem>>) attributes {dimension_semantics = [#tpu.dimension_semantics<parallel>, #tpu.dimension_semantics<parallel>, #tpu.dimension_semantics<arbitrary>], iteration_bounds = array<i64: 2, 1, 1>, scalar_prefetch = 0 : i64, scratch_operands = 3 : i64, tpu.core_type = #tpu.core_type<tc>, window_params = [{transform_indices = @transform_0, window_bounds = array<i64: 1, 1, 8>}, {transform_indices = @transform_1, window_bounds = array<i64: 1, 8, 128>}, {transform_indices = @transform_2, window_bounds = array<i64: 1, 8, 128>}, {transform_indices = @transform_3, window_bounds = array<i64: 1, 8, 128>}, {transform_indices = @transform_4, window_bounds = array<i64: 1, 8, 128>}]} {
    %c0_i32 = arith.constant 0 : i32
    %0 = arith.cmpi eq, %arg2, %c0_i32 : i32
    %1 = arith.extui %0 : i1 to i32
    %c0_i32_0 = arith.constant 0 : i32
    %2 = arith.cmpi ne, %1, %c0_i32_0 : i32
    scf.if %2 {
      %cst_94 = arith.constant -1.000000e+30 : f32
      %167 = vector.broadcast %cst_94 : f32 to vector<4x8x1xf32>
      %c0_95 = arith.constant 0 : index
      %c0_96 = arith.constant 0 : index
      %c0_97 = arith.constant 0 : index
      %168 = vector.load %arg8[%c0_95, %c0_96, %c0_97] : memref<4x8x1xf32, #tpu.memory_space<vmem>>, vector<4x8x1xf32>
      tpu.vector_store %arg8[%c0_95, %c0_96, %c0_97], %167 {strides = array<i32>} : memref<4x8x1xf32, #tpu.memory_space<vmem>>, vector<4x8x1xf32>,
      %cst_98 = arith.constant 0.000000e+00 : f32
      %169 = vector.broadcast %cst_98 : f32 to vector<4x8x1xf32>
      %c0_99 = arith.constant 0 : index
      %c0_100 = arith.constant 0 : index
      %c0_101 = arith.constant 0 : index
      %170 = vector.load %arg9[%c0_99, %c0_100, %c0_101] : memref<4x8x1xf32, #tpu.memory_space<vmem>>, vector<4x8x1xf32>
      tpu.vector_store %arg9[%c0_99, %c0_100, %c0_101], %169 {strides = array<i32>} : memref<4x8x1xf32, #tpu.memory_space<vmem>>, vector<4x8x1xf32>,
      %cst_102 = arith.constant 0.000000e+00 : f32
      %171 = vector.broadcast %cst_102 : f32 to vector<8x128xf32>
      %c0_103 = arith.constant 0 : index
      %c0_104 = arith.constant 0 : index
      %172 = vector.load %arg10[%c0_103, %c0_104] : memref<8x128xf32, #tpu.memory_space<vmem>>, vector<8x128xf32>
      tpu.vector_store %arg10[%c0_103, %c0_104], %171 {strides = array<i32>} : memref<8x128xf32, #tpu.memory_space<vmem>>, vector<8x128xf32>,
    } else {
    }
    %c0 = arith.constant 0 : index
    %c0_1 = arith.constant 0 : index
    %c0_2 = arith.constant 0 : index
    %3 = vector.load %arg4[%c0, %c0_1, %c0_2] : memref<1x8x128xbf16, #tpu.memory_space<vmem>>, vector<1x8x128xbf16>
    %4 = vector.shape_cast %3 : vector<1x8x128xbf16> to vector<8x128xbf16>
    %c0_3 = arith.constant 0 : index
    %c0_4 = arith.constant 0 : index
    %c0_5 = arith.constant 0 : index
    %5 = vector.load %arg5[%c0_3, %c0_4, %c0_5] : memref<1x8x128xbf16, #tpu.memory_space<vmem>>, vector<1x8x128xbf16>
    %6 = vector.shape_cast %5 : vector<1x8x128xbf16> to vector<8x128xbf16>
    %c0_6 = arith.constant 0 : index
    %c0_7 = arith.constant 0 : index
    %c0_8 = arith.constant 0 : index
    %7 = vector.load %arg6[%c0_6, %c0_7, %c0_8] : memref<1x8x128xbf16, #tpu.memory_space<vmem>>, vector<1x8x128xbf16>
    %8 = vector.shape_cast %7 : vector<1x8x128xbf16> to vector<8x128xbf16>
    %c0_9 = arith.constant 0 : index
    %c0_10 = arith.constant 0 : index
    %c0_11 = arith.constant 0 : index
    %9 = vector.load %arg3[%c0_9, %c0_10, %c0_11] : memref<1x1x8xi32, #tpu.memory_space<vmem>>, vector<1x1x8xi32>
    %10 = vector.shape_cast %9 : vector<1x1x8xi32> to vector<1x8xi32>
    %c0_i32_12 = arith.constant 0 : i32
    %11 = vector.broadcast %c0_i32_12 : i32 to vector<1x8xi32>
    %12 = arith.cmpi eq, %10, %11 : vector<1x8xi32>
    %cst = arith.constant -1.000000e+09 : f32
    %cst_13 = arith.constant 0.000000e+00 : f32
    %13 = vector.broadcast %cst : f32 to vector<1x8xf32>
    %14 = vector.broadcast %cst_13 : f32 to vector<1x8xf32>
    %15 = arith.select %12, %13, %14 : vector<1x8xi1>, vector<1x8xf32>
    %16 = vector.extract_strided_slice %4 {offsets = [0, 0], sizes = [8, 32], strides = [1, 1]} : vector<8x128xbf16> to vector<8x32xbf16>
    %17 = vector.extract_strided_slice %6 {offsets = [0, 0], sizes = [8, 32], strides = [1, 1]} : vector<8x128xbf16> to vector<8x32xbf16>
    %18 = vector.extract_strided_slice %8 {offsets = [0, 0], sizes = [8, 32], strides = [1, 1]} : vector<8x128xbf16> to vector<8x32xbf16>
    %cst_14 = arith.constant dense<0.000000e+00> : vector<8x8xf32>
    %19 = tpu.matmul %16, %17, %cst_14 {dimension_numbers = #tpu.dot_dimension_numbers<[1], [1], [0], [0], [0, 0, 1, 0], [], []>} : vector<8x32xbf16>, vector<8x32xbf16>, vector<8x8xf32> -> vector<8x8xf32>
    %cst_15 = arith.constant 0.176776692 : f32
    %20 = vector.broadcast %cst_15 : f32 to vector<8x8xf32>
    %21 = arith.mulf %19, %20 : vector<8x8xf32>
    %22 = vector.broadcast %15 : vector<1x8xf32> to vector<8x8xf32>
    %23 = arith.addf %21, %22 : vector<8x8xf32>
    %c0_16 = arith.constant 0 : index
    %c0_17 = arith.constant 0 : index
    %c0_18 = arith.constant 0 : index
    %24 = vector.load %arg8[%c0_16, %c0_17, %c0_18] : memref<4x8x1xf32, #tpu.memory_space<vmem>>, vector<1x8x1xf32>
    %25 = vector.shape_cast %24 : vector<1x8x1xf32> to vector<8x1xf32>
    %cst_19 = arith.constant dense<0xFF800000> : vector<8xf32>
    %26 = vector.multi_reduction <maximumf>, %23, %cst_19 [1] : vector<8x8xf32> to vector<8xf32>
    %27 = vector.shape_cast %26 : vector<8xf32> to vector<8x1xf32>
    %28 = arith.maximumf %25, %27 : vector<8x1xf32>
    %29 = arith.subf %25, %28 : vector<8x1xf32>
    %30 = math.exp %29 : vector<8x1xf32>
    %31 = vector.broadcast %28 : vector<8x1xf32> to vector<8x8xf32>
    %32 = arith.subf %23, %31 : vector<8x8xf32>
    %33 = math.exp %32 : vector<8x8xf32>
    %c0_20 = arith.constant 0 : index
    %c0_21 = arith.constant 0 : index
    %c0_22 = arith.constant 0 : index
    %34 = vector.load %arg9[%c0_20, %c0_21, %c0_22] : memref<4x8x1xf32, #tpu.memory_space<vmem>>, vector<1x8x1xf32>
    %35 = vector.shape_cast %34 : vector<1x8x1xf32> to vector<8x1xf32>
    %36 = arith.mulf %30, %35 : vector<8x1xf32>
    %cst_23 = arith.constant dense<0.000000e+00> : vector<8xf32>
    %37 = vector.multi_reduction <add>, %33, %cst_23 [1] : vector<8x8xf32> to vector<8xf32>
    %38 = vector.shape_cast %37 : vector<8xf32> to vector<8x1xf32>
    %39 = arith.addf %36, %38 : vector<8x1xf32>
    %c0_24 = arith.constant 0 : index
    %c0_25 = arith.constant 0 : index
    %c0_26 = arith.constant 0 : index
    %40 = vector.load %arg9[%c0_24, %c0_25, %c0_26] : memref<4x8x1xf32, #tpu.memory_space<vmem>>, vector<1x8x1xf32>
    %41 = vector.shape_cast %40 : vector<1x8x1xf32> to vector<8x1xf32>
    %42 = vector.shape_cast %39 : vector<8x1xf32> to vector<1x8x1xf32>
    tpu.vector_store %arg9[%c0_24, %c0_25, %c0_26], %42 {strides = array<i32>} : memref<4x8x1xf32, #tpu.memory_space<vmem>>, vector<1x8x1xf32>,
    %c0_27 = arith.constant 0 : index
    %c0_28 = arith.constant 0 : index
    %43 = vector.load %arg10[%c0_27, %c0_28] : memref<8x128xf32, #tpu.memory_space<vmem>>, vector<8x32xf32>
    %44 = vector.broadcast %30 : vector<8x1xf32> to vector<8x32xf32>
    %45 = arith.mulf %44, %43 : vector<8x32xf32>
    %46 = arith.truncf %33 : vector<8x8xf32> to vector<8x8xbf16>
    %cst_29 = arith.constant dense<0.000000e+00> : vector<8x32xf32>
    %47 = tpu.matmul %46, %18, %cst_29 {dimension_numbers = #tpu.dot_dimension_numbers<[1], [0], [0], [1], [0, 0, 1, 1], [], []>} : vector<8x8xbf16>, vector<8x32xbf16>, vector<8x32xf32> -> vector<8x32xf32>
    %48 = arith.addf %45, %47 : vector<8x32xf32>
    %c0_30 = arith.constant 0 : index
    %c0_31 = arith.constant 0 : index
    %49 = vector.load %arg10[%c0_30, %c0_31] : memref<8x128xf32, #tpu.memory_space<vmem>>, vector<8x32xf32>
    tpu.vector_store %arg10[%c0_30, %c0_31], %48 {strides = array<i32>} : memref<8x128xf32, #tpu.memory_space<vmem>>, vector<8x32xf32>,
    %c0_32 = arith.constant 0 : index
    %c0_33 = arith.constant 0 : index
    %c0_34 = arith.constant 0 : index
    %50 = vector.load %arg8[%c0_32, %c0_33, %c0_34] : memref<4x8x1xf32, #tpu.memory_space<vmem>>, vector<1x8x1xf32>
    %51 = vector.shape_cast %50 : vector<1x8x1xf32> to vector<8x1xf32>
    %52 = vector.shape_cast %28 : vector<8x1xf32> to vector<1x8x1xf32>
    tpu.vector_store %arg8[%c0_32, %c0_33, %c0_34], %52 {strides = array<i32>} : memref<4x8x1xf32, #tpu.memory_space<vmem>>, vector<1x8x1xf32>,
    %53 = vector.extract_strided_slice %4 {offsets = [0, 32], sizes = [8, 32], strides = [1, 1]} : vector<8x128xbf16> to vector<8x32xbf16>
    %54 = vector.extract_strided_slice %6 {offsets = [0, 32], sizes = [8, 32], strides = [1, 1]} : vector<8x128xbf16> to vector<8x32xbf16>
    %55 = vector.extract_strided_slice %8 {offsets = [0, 32], sizes = [8, 32], strides = [1, 1]} : vector<8x128xbf16> to vector<8x32xbf16>
    %cst_35 = arith.constant dense<0.000000e+00> : vector<8x8xf32>
    %56 = tpu.matmul %53, %54, %cst_35 {dimension_numbers = #tpu.dot_dimension_numbers<[1], [1], [0], [0], [0, 0, 1, 0], [], []>} : vector<8x32xbf16>, vector<8x32xbf16>, vector<8x8xf32> -> vector<8x8xf32>
    %cst_36 = arith.constant 0.176776692 : f32
    %57 = vector.broadcast %cst_36 : f32 to vector<8x8xf32>
    %58 = arith.mulf %56, %57 : vector<8x8xf32>
    %59 = vector.broadcast %15 : vector<1x8xf32> to vector<8x8xf32>
    %60 = arith.addf %58, %59 : vector<8x8xf32>
    %c1 = arith.constant 1 : index
    %c0_37 = arith.constant 0 : index
    %c0_38 = arith.constant 0 : index
    %61 = vector.load %arg8[%c1, %c0_37, %c0_38] : memref<4x8x1xf32, #tpu.memory_space<vmem>>, vector<1x8x1xf32>
    %62 = vector.shape_cast %61 : vector<1x8x1xf32> to vector<8x1xf32>
    %cst_39 = arith.constant dense<0xFF800000> : vector<8xf32>
    %63 = vector.multi_reduction <maximumf>, %60, %cst_39 [1] : vector<8x8xf32> to vector<8xf32>
    %64 = vector.shape_cast %63 : vector<8xf32> to vector<8x1xf32>
    %65 = arith.maximumf %62, %64 : vector<8x1xf32>
    %66 = arith.subf %62, %65 : vector<8x1xf32>
    %67 = math.exp %66 : vector<8x1xf32>
    %68 = vector.broadcast %65 : vector<8x1xf32> to vector<8x8xf32>
    %69 = arith.subf %60, %68 : vector<8x8xf32>
    %70 = math.exp %69 : vector<8x8xf32>
    %c1_40 = arith.constant 1 : index
    %c0_41 = arith.constant 0 : index
    %c0_42 = arith.constant 0 : index
    %71 = vector.load %arg9[%c1_40, %c0_41, %c0_42] : memref<4x8x1xf32, #tpu.memory_space<vmem>>, vector<1x8x1xf32>
    %72 = vector.shape_cast %71 : vector<1x8x1xf32> to vector<8x1xf32>
    %73 = arith.mulf %67, %72 : vector<8x1xf32>
    %cst_43 = arith.constant dense<0.000000e+00> : vector<8xf32>
    %74 = vector.multi_reduction <add>, %70, %cst_43 [1] : vector<8x8xf32> to vector<8xf32>
    %75 = vector.shape_cast %74 : vector<8xf32> to vector<8x1xf32>
    %76 = arith.addf %73, %75 : vector<8x1xf32>
    %c1_44 = arith.constant 1 : index
    %c0_45 = arith.constant 0 : index
    %c0_46 = arith.constant 0 : index
    %77 = vector.load %arg9[%c1_44, %c0_45, %c0_46] : memref<4x8x1xf32, #tpu.memory_space<vmem>>, vector<1x8x1xf32>
    %78 = vector.shape_cast %77 : vector<1x8x1xf32> to vector<8x1xf32>
    %79 = vector.shape_cast %76 : vector<8x1xf32> to vector<1x8x1xf32>
    tpu.vector_store %arg9[%c1_44, %c0_45, %c0_46], %79 {strides = array<i32>} : memref<4x8x1xf32, #tpu.memory_space<vmem>>, vector<1x8x1xf32>,
    %c0_47 = arith.constant 0 : index
    %c32 = arith.constant 32 : index
    %80 = vector.load %arg10[%c0_47, %c32] : memref<8x128xf32, #tpu.memory_space<vmem>>, vector<8x32xf32>
    %81 = vector.broadcast %67 : vector<8x1xf32> to vector<8x32xf32>
    %82 = arith.mulf %81, %80 : vector<8x32xf32>
    %83 = arith.truncf %70 : vector<8x8xf32> to vector<8x8xbf16>
    %cst_48 = arith.constant dense<0.000000e+00> : vector<8x32xf32>
    %84 = tpu.matmul %83, %55, %cst_48 {dimension_numbers = #tpu.dot_dimension_numbers<[1], [0], [0], [1], [0, 0, 1, 1], [], []>} : vector<8x8xbf16>, vector<8x32xbf16>, vector<8x32xf32> -> vector<8x32xf32>
    %85 = arith.addf %82, %84 : vector<8x32xf32>
    %c0_49 = arith.constant 0 : index
    %c32_50 = arith.constant 32 : index
    %86 = vector.load %arg10[%c0_49, %c32_50] : memref<8x128xf32, #tpu.memory_space<vmem>>, vector<8x32xf32>
    tpu.vector_store %arg10[%c0_49, %c32_50], %85 {strides = array<i32>} : memref<8x128xf32, #tpu.memory_space<vmem>>, vector<8x32xf32>,
    %c1_51 = arith.constant 1 : index
    %c0_52 = arith.constant 0 : index
    %c0_53 = arith.constant 0 : index
    %87 = vector.load %arg8[%c1_51, %c0_52, %c0_53] : memref<4x8x1xf32, #tpu.memory_space<vmem>>, vector<1x8x1xf32>
    %88 = vector.shape_cast %87 : vector<1x8x1xf32> to vector<8x1xf32>
    %89 = vector.shape_cast %65 : vector<8x1xf32> to vector<1x8x1xf32>
    tpu.vector_store %arg8[%c1_51, %c0_52, %c0_53], %89 {strides = array<i32>} : memref<4x8x1xf32, #tpu.memory_space<vmem>>, vector<1x8x1xf32>,
    %90 = vector.extract_strided_slice %4 {offsets = [0, 64], sizes = [8, 32], strides = [1, 1]} : vector<8x128xbf16> to vector<8x32xbf16>
    %91 = vector.extract_strided_slice %6 {offsets = [0, 64], sizes = [8, 32], strides = [1, 1]} : vector<8x128xbf16> to vector<8x32xbf16>
    %92 = vector.extract_strided_slice %8 {offsets = [0, 64], sizes = [8, 32], strides = [1, 1]} : vector<8x128xbf16> to vector<8x32xbf16>
    %cst_54 = arith.constant dense<0.000000e+00> : vector<8x8xf32>
    %93 = tpu.matmul %90, %91, %cst_54 {dimension_numbers = #tpu.dot_dimension_numbers<[1], [1], [0], [0], [0, 0, 1, 0], [], []>} : vector<8x32xbf16>, vector<8x32xbf16>, vector<8x8xf32> -> vector<8x8xf32>
    %cst_55 = arith.constant 0.176776692 : f32
    %94 = vector.broadcast %cst_55 : f32 to vector<8x8xf32>
    %95 = arith.mulf %93, %94 : vector<8x8xf32>
    %96 = vector.broadcast %15 : vector<1x8xf32> to vector<8x8xf32>
    %97 = arith.addf %95, %96 : vector<8x8xf32>
    %c2 = arith.constant 2 : index
    %c0_56 = arith.constant 0 : index
    %c0_57 = arith.constant 0 : index
    %98 = vector.load %arg8[%c2, %c0_56, %c0_57] : memref<4x8x1xf32, #tpu.memory_space<vmem>>, vector<1x8x1xf32>
    %99 = vector.shape_cast %98 : vector<1x8x1xf32> to vector<8x1xf32>
    %cst_58 = arith.constant dense<0xFF800000> : vector<8xf32>
    %100 = vector.multi_reduction <maximumf>, %97, %cst_58 [1] : vector<8x8xf32> to vector<8xf32>
    %101 = vector.shape_cast %100 : vector<8xf32> to vector<8x1xf32>
    %102 = arith.maximumf %99, %101 : vector<8x1xf32>
    %103 = arith.subf %99, %102 : vector<8x1xf32>
    %104 = math.exp %103 : vector<8x1xf32>
    %105 = vector.broadcast %102 : vector<8x1xf32> to vector<8x8xf32>
    %106 = arith.subf %97, %105 : vector<8x8xf32>
    %107 = math.exp %106 : vector<8x8xf32>
    %c2_59 = arith.constant 2 : index
    %c0_60 = arith.constant 0 : index
    %c0_61 = arith.constant 0 : index
    %108 = vector.load %arg9[%c2_59, %c0_60, %c0_61] : memref<4x8x1xf32, #tpu.memory_space<vmem>>, vector<1x8x1xf32>
    %109 = vector.shape_cast %108 : vector<1x8x1xf32> to vector<8x1xf32>
    %110 = arith.mulf %104, %109 : vector<8x1xf32>
    %cst_62 = arith.constant dense<0.000000e+00> : vector<8xf32>
    %111 = vector.multi_reduction <add>, %107, %cst_62 [1] : vector<8x8xf32> to vector<8xf32>
    %112 = vector.shape_cast %111 : vector<8xf32> to vector<8x1xf32>
    %113 = arith.addf %110, %112 : vector<8x1xf32>
    %c2_63 = arith.constant 2 : index
    %c0_64 = arith.constant 0 : index
    %c0_65 = arith.constant 0 : index
    %114 = vector.load %arg9[%c2_63, %c0_64, %c0_65] : memref<4x8x1xf32, #tpu.memory_space<vmem>>, vector<1x8x1xf32>
    %115 = vector.shape_cast %114 : vector<1x8x1xf32> to vector<8x1xf32>
    %116 = vector.shape_cast %113 : vector<8x1xf32> to vector<1x8x1xf32>
    tpu.vector_store %arg9[%c2_63, %c0_64, %c0_65], %116 {strides = array<i32>} : memref<4x8x1xf32, #tpu.memory_space<vmem>>, vector<1x8x1xf32>,
    %c0_66 = arith.constant 0 : index
    %c64 = arith.constant 64 : index
    %117 = vector.load %arg10[%c0_66, %c64] : memref<8x128xf32, #tpu.memory_space<vmem>>, vector<8x32xf32>
    %118 = vector.broadcast %104 : vector<8x1xf32> to vector<8x32xf32>
    %119 = arith.mulf %118, %117 : vector<8x32xf32>
    %120 = arith.truncf %107 : vector<8x8xf32> to vector<8x8xbf16>
    %cst_67 = arith.constant dense<0.000000e+00> : vector<8x32xf32>
    %121 = tpu.matmul %120, %92, %cst_67 {dimension_numbers = #tpu.dot_dimension_numbers<[1], [0], [0], [1], [0, 0, 1, 1], [], []>} : vector<8x8xbf16>, vector<8x32xbf16>, vector<8x32xf32> -> vector<8x32xf32>
    %122 = arith.addf %119, %121 : vector<8x32xf32>
    %c0_68 = arith.constant 0 : index
    %c64_69 = arith.constant 64 : index
    %123 = vector.load %arg10[%c0_68, %c64_69] : memref<8x128xf32, #tpu.memory_space<vmem>>, vector<8x32xf32>
    tpu.vector_store %arg10[%c0_68, %c64_69], %122 {strides = array<i32>} : memref<8x128xf32, #tpu.memory_space<vmem>>, vector<8x32xf32>,
    %c2_70 = arith.constant 2 : index
    %c0_71 = arith.constant 0 : index
    %c0_72 = arith.constant 0 : index
    %124 = vector.load %arg8[%c2_70, %c0_71, %c0_72] : memref<4x8x1xf32, #tpu.memory_space<vmem>>, vector<1x8x1xf32>
    %125 = vector.shape_cast %124 : vector<1x8x1xf32> to vector<8x1xf32>
    %126 = vector.shape_cast %102 : vector<8x1xf32> to vector<1x8x1xf32>
    tpu.vector_store %arg8[%c2_70, %c0_71, %c0_72], %126 {strides = array<i32>} : memref<4x8x1xf32, #tpu.memory_space<vmem>>, vector<1x8x1xf32>,
    %127 = vector.extract_strided_slice %4 {offsets = [0, 96], sizes = [8, 32], strides = [1, 1]} : vector<8x128xbf16> to vector<8x32xbf16>
    %128 = vector.extract_strided_slice %6 {offsets = [0, 96], sizes = [8, 32], strides = [1, 1]} : vector<8x128xbf16> to vector<8x32xbf16>
    %129 = vector.extract_strided_slice %8 {offsets = [0, 96], sizes = [8, 32], strides = [1, 1]} : vector<8x128xbf16> to vector<8x32xbf16>
    %cst_73 = arith.constant dense<0.000000e+00> : vector<8x8xf32>
    %130 = tpu.matmul %127, %128, %cst_73 {dimension_numbers = #tpu.dot_dimension_numbers<[1], [1], [0], [0], [0, 0, 1, 0], [], []>} : vector<8x32xbf16>, vector<8x32xbf16>, vector<8x8xf32> -> vector<8x8xf32>
    %cst_74 = arith.constant 0.176776692 : f32
    %131 = vector.broadcast %cst_74 : f32 to vector<8x8xf32>
    %132 = arith.mulf %130, %131 : vector<8x8xf32>
    %133 = vector.broadcast %15 : vector<1x8xf32> to vector<8x8xf32>
    %134 = arith.addf %132, %133 : vector<8x8xf32>
    %c3 = arith.constant 3 : index
    %c0_75 = arith.constant 0 : index
    %c0_76 = arith.constant 0 : index
    %135 = vector.load %arg8[%c3, %c0_75, %c0_76] : memref<4x8x1xf32, #tpu.memory_space<vmem>>, vector<1x8x1xf32>
    %136 = vector.shape_cast %135 : vector<1x8x1xf32> to vector<8x1xf32>
    %cst_77 = arith.constant dense<0xFF800000> : vector<8xf32>
    %137 = vector.multi_reduction <maximumf>, %134, %cst_77 [1] : vector<8x8xf32> to vector<8xf32>
    %138 = vector.shape_cast %137 : vector<8xf32> to vector<8x1xf32>
    %139 = arith.maximumf %136, %138 : vector<8x1xf32>
    %140 = arith.subf %136, %139 : vector<8x1xf32>
    %141 = math.exp %140 : vector<8x1xf32>
    %142 = vector.broadcast %139 : vector<8x1xf32> to vector<8x8xf32>
    %143 = arith.subf %134, %142 : vector<8x8xf32>
    %144 = math.exp %143 : vector<8x8xf32>
    %c3_78 = arith.constant 3 : index
    %c0_79 = arith.constant 0 : index
    %c0_80 = arith.constant 0 : index
    %145 = vector.load %arg9[%c3_78, %c0_79, %c0_80] : memref<4x8x1xf32, #tpu.memory_space<vmem>>, vector<1x8x1xf32>
    %146 = vector.shape_cast %145 : vector<1x8x1xf32> to vector<8x1xf32>
    %147 = arith.mulf %141, %146 : vector<8x1xf32>
    %cst_81 = arith.constant dense<0.000000e+00> : vector<8xf32>
    %148 = vector.multi_reduction <add>, %144, %cst_81 [1] : vector<8x8xf32> to vector<8xf32>
    %149 = vector.shape_cast %148 : vector<8xf32> to vector<8x1xf32>
    %150 = arith.addf %147, %149 : vector<8x1xf32>
    %c3_82 = arith.constant 3 : index
    %c0_83 = arith.constant 0 : index
    %c0_84 = arith.constant 0 : index
    %151 = vector.load %arg9[%c3_82, %c0_83, %c0_84] : memref<4x8x1xf32, #tpu.memory_space<vmem>>, vector<1x8x1xf32>
    %152 = vector.shape_cast %151 : vector<1x8x1xf32> to vector<8x1xf32>
    %153 = vector.shape_cast %150 : vector<8x1xf32> to vector<1x8x1xf32>
    tpu.vector_store %arg9[%c3_82, %c0_83, %c0_84], %153 {strides = array<i32>} : memref<4x8x1xf32, #tpu.memory_space<vmem>>, vector<1x8x1xf32>,
    %c0_85 = arith.constant 0 : index
    %c96 = arith.constant 96 : index
    %154 = vector.load %arg10[%c0_85, %c96] : memref<8x128xf32, #tpu.memory_space<vmem>>, vector<8x32xf32>
    %155 = vector.broadcast %141 : vector<8x1xf32> to vector<8x32xf32>
    %156 = arith.mulf %155, %154 : vector<8x32xf32>
    %157 = arith.truncf %144 : vector<8x8xf32> to vector<8x8xbf16>
    %cst_86 = arith.constant dense<0.000000e+00> : vector<8x32xf32>
    %158 = tpu.matmul %157, %129, %cst_86 {dimension_numbers = #tpu.dot_dimension_numbers<[1], [0], [0], [1], [0, 0, 1, 1], [], []>} : vector<8x8xbf16>, vector<8x32xbf16>, vector<8x32xf32> -> vector<8x32xf32>
    %159 = arith.addf %156, %158 : vector<8x32xf32>
    %c0_87 = arith.constant 0 : index
    %c96_88 = arith.constant 96 : index
    %160 = vector.load %arg10[%c0_87, %c96_88] : memref<8x128xf32, #tpu.memory_space<vmem>>, vector<8x32xf32>
    tpu.vector_store %arg10[%c0_87, %c96_88], %159 {strides = array<i32>} : memref<8x128xf32, #tpu.memory_space<vmem>>, vector<8x32xf32>,
    %c3_89 = arith.constant 3 : index
    %c0_90 = arith.constant 0 : index
    %c0_91 = arith.constant 0 : index
    %161 = vector.load %arg8[%c3_89, %c0_90, %c0_91] : memref<4x8x1xf32, #tpu.memory_space<vmem>>, vector<1x8x1xf32>
    %162 = vector.shape_cast %161 : vector<1x8x1xf32> to vector<8x1xf32>
    %163 = vector.shape_cast %139 : vector<8x1xf32> to vector<1x8x1xf32>
    tpu.vector_store %arg8[%c3_89, %c0_90, %c0_91], %163 {strides = array<i32>} : memref<4x8x1xf32, #tpu.memory_space<vmem>>, vector<1x8x1xf32>,
    %c0_i32_92 = arith.constant 0 : i32
    %164 = arith.cmpi eq, %arg2, %c0_i32_92 : i32
    %165 = arith.extui %164 : i1 to i32
    %c0_i32_93 = arith.constant 0 : i32
    %166 = arith.cmpi ne, %165, %c0_i32_93 : i32
    scf.if %166 {
      %c0_94 = arith.constant 0 : index
      %c0_95 = arith.constant 0 : index
      %167 = vector.load %arg10[%c0_94, %c0_95] : memref<8x128xf32, #tpu.memory_space<vmem>>, vector<8x32xf32>
      %c0_96 = arith.constant 0 : index
      %c0_97 = arith.constant 0 : index
      %c0_98 = arith.constant 0 : index
      %168 = vector.load %arg9[%c0_96, %c0_97, %c0_98] : memref<4x8x1xf32, #tpu.memory_space<vmem>>, vector<1x8x1xf32>
      %169 = vector.shape_cast %168 : vector<1x8x1xf32> to vector<8x1xf32>
      %170 = tpu.reciprocal %169 {approx = true} : vector<8x1xf32> -> vector<8x1xf32>
      %171 = vector.broadcast %170 : vector<8x1xf32> to vector<8x32xf32>
      %172 = arith.mulf %167, %171 : vector<8x32xf32>
      %c0_99 = arith.constant 0 : index
      %c0_100 = arith.constant 0 : index
      %173 = vector.load %arg10[%c0_99, %c0_100] : memref<8x128xf32, #tpu.memory_space<vmem>>, vector<8x32xf32>
      tpu.vector_store %arg10[%c0_99, %c0_100], %172 {strides = array<i32>} : memref<8x128xf32, #tpu.memory_space<vmem>>, vector<8x32xf32>,
      %c0_101 = arith.constant 0 : index
      %c32_102 = arith.constant 32 : index
      %174 = vector.load %arg10[%c0_101, %c32_102] : memref<8x128xf32, #tpu.memory_space<vmem>>, vector<8x32xf32>
      %c1_103 = arith.constant 1 : index
      %c0_104 = arith.constant 0 : index
      %c0_105 = arith.constant 0 : index
      %175 = vector.load %arg9[%c1_103, %c0_104, %c0_105] : memref<4x8x1xf32, #tpu.memory_space<vmem>>, vector<1x8x1xf32>
      %176 = vector.shape_cast %175 : vector<1x8x1xf32> to vector<8x1xf32>
      %177 = tpu.reciprocal %176 {approx = true} : vector<8x1xf32> -> vector<8x1xf32>
      %178 = vector.broadcast %177 : vector<8x1xf32> to vector<8x32xf32>
      %179 = arith.mulf %174, %178 : vector<8x32xf32>
      %c0_106 = arith.constant 0 : index
      %c32_107 = arith.constant 32 : index
      %180 = vector.load %arg10[%c0_106, %c32_107] : memref<8x128xf32, #tpu.memory_space<vmem>>, vector<8x32xf32>
      tpu.vector_store %arg10[%c0_106, %c32_107], %179 {strides = array<i32>} : memref<8x128xf32, #tpu.memory_space<vmem>>, vector<8x32xf32>,
      %c0_108 = arith.constant 0 : index
      %c64_109 = arith.constant 64 : index
      %181 = vector.load %arg10[%c0_108, %c64_109] : memref<8x128xf32, #tpu.memory_space<vmem>>, vector<8x32xf32>
      %c2_110 = arith.constant 2 : index
      %c0_111 = arith.constant 0 : index
      %c0_112 = arith.constant 0 : index
      %182 = vector.load %arg9[%c2_110, %c0_111, %c0_112] : memref<4x8x1xf32, #tpu.memory_space<vmem>>, vector<1x8x1xf32>
      %183 = vector.shape_cast %182 : vector<1x8x1xf32> to vector<8x1xf32>
      %184 = tpu.reciprocal %183 {approx = true} : vector<8x1xf32> -> vector<8x1xf32>
      %185 = vector.broadcast %184 : vector<8x1xf32> to vector<8x32xf32>
      %186 = arith.mulf %181, %185 : vector<8x32xf32>
      %c0_113 = arith.constant 0 : index
      %c64_114 = arith.constant 64 : index
      %187 = vector.load %arg10[%c0_113, %c64_114] : memref<8x128xf32, #tpu.memory_space<vmem>>, vector<8x32xf32>
      tpu.vector_store %arg10[%c0_113, %c64_114], %186 {strides = array<i32>} : memref<8x128xf32, #tpu.memory_space<vmem>>, vector<8x32xf32>,
      %c0_115 = arith.constant 0 : index
      %c96_116 = arith.constant 96 : index
      %188 = vector.load %arg10[%c0_115, %c96_116] : memref<8x128xf32, #tpu.memory_space<vmem>>, vector<8x32xf32>
      %c3_117 = arith.constant 3 : index
      %c0_118 = arith.constant 0 : index
      %c0_119 = arith.constant 0 : index
      %189 = vector.load %arg9[%c3_117, %c0_118, %c0_119] : memref<4x8x1xf32, #tpu.memory_space<vmem>>, vector<1x8x1xf32>
      %190 = vector.shape_cast %189 : vector<1x8x1xf32> to vector<8x1xf32>
      %191 = tpu.reciprocal %190 {approx = true} : vector<8x1xf32> -> vector<8x1xf32>
      %192 = vector.broadcast %191 : vector<8x1xf32> to vector<8x32xf32>
      %193 = arith.mulf %188, %192 : vector<8x32xf32>
      %c0_120 = arith.constant 0 : index
      %c96_121 = arith.constant 96 : index
      %194 = vector.load %arg10[%c0_120, %c96_121] : memref<8x128xf32, #tpu.memory_space<vmem>>, vector<8x32xf32>
      tpu.vector_store %arg10[%c0_120, %c96_121], %193 {strides = array<i32>} : memref<8x128xf32, #tpu.memory_space<vmem>>, vector<8x32xf32>,
      %c0_122 = arith.constant 0 : index
      %c0_123 = arith.constant 0 : index
      %195 = vector.load %arg10[%c0_122, %c0_123] : memref<8x128xf32, #tpu.memory_space<vmem>>, vector<8x128xf32>
      %196 = arith.truncf %195 : vector<8x128xf32> to vector<8x128xbf16>
      %c0_124 = arith.constant 0 : index
      %c0_125 = arith.constant 0 : index
      %c0_126 = arith.constant 0 : index
      %197 = vector.load %arg7[%c0_124, %c0_125, %c0_126] : memref<1x8x128xbf16, #tpu.memory_space<vmem>>, vector<1x8x128xbf16>
      %198 = vector.shape_cast %197 : vector<1x8x128xbf16> to vector<8x128xbf16>
      %199 = vector.shape_cast %196 : vector<8x128xbf16> to vector<1x8x128xbf16>
      tpu.vector_store %arg7[%c0_124, %c0_125, %c0_126], %199 {strides = array<i32>} : memref<1x8x128xbf16, #tpu.memory_space<vmem>>, vector<1x8x128xbf16>,
    } else {
    }
    return
  }
  func.func @transform_0(%arg0: i32, %arg1: i32, %arg2: i32) -> (i32, i32, i32) {
    %c0_i32 = arith.constant 0 : i32
    %c0_i32_0 = arith.constant 0 : i32
    return %arg0, %c0_i32, %arg2 : i32, i32, i32
  }
  func.func @transform_1(%arg0: i32, %arg1: i32, %arg2: i32) -> (i32, i32, i32) {
    %c0_i32 = arith.constant 0 : i32
    %0 = arith.addi %c0_i32, %arg1 : i32
    %c0_i32_0 = arith.constant 0 : i32
    %c0_i32_1 = arith.constant 0 : i32
    return %arg0, %c0_i32_0, %0 : i32, i32, i32
  }
  func.func @transform_2(%arg0: i32, %arg1: i32, %arg2: i32) -> (i32, i32, i32) {
    %c0_i32 = arith.constant 0 : i32
    %0 = arith.addi %c0_i32, %arg1 : i32
    %c0_i32_0 = arith.constant 0 : i32
    return %arg0, %arg2, %0 : i32, i32, i32
  }
  func.func @transform_3(%arg0: i32, %arg1: i32, %arg2: i32) -> (i32, i32, i32) {
    %c1_i32 = arith.constant 1 : i32
    %0 = arith.addi %c1_i32, %arg1 : i32
    %c0_i32 = arith.constant 0 : i32
    return %arg0, %arg2, %0 : i32, i32, i32
  }
  func.func @transform_4(%arg0: i32, %arg1: i32, %arg2: i32) -> (i32, i32, i32) {
    %c0_i32 = arith.constant 0 : i32
    %c0_i32_0 = arith.constant 0 : i32
    return %arg0, %c0_i32, %arg1 : i32, i32, i32
  }
}

module attributes {stable_mosaic.version = 11 : i64} {
  func.func @_linear_kernel(%arg0: i32, %arg1: i32, %arg2: i32, %arg3: memref<16x128xbf16, #tpu.memory_space<vmem>>, %arg4: memref<128x128xbf16, #tpu.memory_space<vmem>>, %arg5: memref<1x128xf32, #tpu.memory_space<vmem>>, %arg6: memref<16x128xbf16, #tpu.memory_space<vmem>>, %arg7: memref<16x128xf32, #tpu.memory_space<vmem>>) attributes {dimension_semantics = [#tpu.dimension_semantics<parallel>, #tpu.dimension_semantics<parallel>, #tpu.dimension_semantics<arbitrary>], iteration_bounds = array<i64: 1, 1, 1>, scalar_prefetch = 0 : i64, scratch_operands = 1 : i64, tpu.core_type = #tpu.core_type<tc>, window_params = [{transform_indices = @transform_0, window_bounds = array<i64: 16, 128>}, {transform_indices = @transform_1, window_bounds = array<i64: 128, 128>}, {transform_indices = @transform_2, window_bounds = array<i64: 1, 128>}, {transform_indices = @transform_3, window_bounds = array<i64: 16, 128>}]} {
    %c0_i32 = arith.constant 0 : i32
    %0 = arith.cmpi eq, %arg2, %c0_i32 : i32
    %1 = arith.extui %0 : i1 to i32
    %c0_i32_0 = arith.constant 0 : i32
    %2 = arith.cmpi ne, %1, %c0_i32_0 : i32
    scf.if %2 {
      %cst_10 = arith.constant 0.000000e+00 : f32
      %12 = vector.broadcast %cst_10 : f32 to vector<16x128xf32>
      %c0_11 = arith.constant 0 : index
      %c0_12 = arith.constant 0 : index
      %13 = vector.load %arg7[%c0_11, %c0_12] : memref<16x128xf32, #tpu.memory_space<vmem>>, vector<16x128xf32>
      tpu.vector_store %arg7[%c0_11, %c0_12], %12 {strides = array<i32>} : memref<16x128xf32, #tpu.memory_space<vmem>>, vector<16x128xf32>,
    } else {
    }
    %c0 = arith.constant 0 : index
    %c0_1 = arith.constant 0 : index
    %3 = vector.load %arg7[%c0, %c0_1] : memref<16x128xf32, #tpu.memory_space<vmem>>, vector<16x128xf32>
    %c0_2 = arith.constant 0 : index
    %c0_3 = arith.constant 0 : index
    %4 = vector.load %arg3[%c0_2, %c0_3] : memref<16x128xbf16, #tpu.memory_space<vmem>>, vector<16x128xbf16>
    %c0_4 = arith.constant 0 : index
    %c0_5 = arith.constant 0 : index
    %5 = vector.load %arg4[%c0_4, %c0_5] : memref<128x128xbf16, #tpu.memory_space<vmem>>, vector<128x128xbf16>
    %cst = arith.constant dense<0.000000e+00> : vector<16x128xf32>
    %6 = tpu.matmul %4, %5, %cst {dimension_numbers = #tpu.dot_dimension_numbers<[1], [0], [0], [1], [0, 0, 1, 1], [], []>} : vector<16x128xbf16>, vector<128x128xbf16>, vector<16x128xf32> -> vector<16x128xf32>
    %7 = arith.addf %3, %6 : vector<16x128xf32>
    %c0_6 = arith.constant 0 : index
    %c0_7 = arith.constant 0 : index
    %8 = vector.load %arg7[%c0_6, %c0_7] : memref<16x128xf32, #tpu.memory_space<vmem>>, vector<16x128xf32>
    tpu.vector_store %arg7[%c0_6, %c0_7], %7 {strides = array<i32>} : memref<16x128xf32, #tpu.memory_space<vmem>>, vector<16x128xf32>,
    %c0_i32_8 = arith.constant 0 : i32
    %9 = arith.cmpi eq, %arg2, %c0_i32_8 : i32
    %10 = arith.extui %9 : i1 to i32
    %c0_i32_9 = arith.constant 0 : i32
    %11 = arith.cmpi ne, %10, %c0_i32_9 : i32
    scf.if %11 {
      %c0_10 = arith.constant 0 : index
      %c0_11 = arith.constant 0 : index
      %12 = vector.load %arg7[%c0_10, %c0_11] : memref<16x128xf32, #tpu.memory_space<vmem>>, vector<16x128xf32>
      %c0_12 = arith.constant 0 : index
      %c0_13 = arith.constant 0 : index
      %13 = vector.load %arg5[%c0_12, %c0_13] : memref<1x128xf32, #tpu.memory_space<vmem>>, vector<1x128xf32>
      %14 = vector.broadcast %13 : vector<1x128xf32> to vector<16x128xf32>
      %15 = arith.addf %12, %14 : vector<16x128xf32>
      %16 = arith.truncf %15 : vector<16x128xf32> to vector<16x128xbf16>
      %c0_14 = arith.constant 0 : index
      %c0_15 = arith.constant 0 : index
      %17 = vector.load %arg6[%c0_14, %c0_15] : memref<16x128xbf16, #tpu.memory_space<vmem>>, vector<16x128xbf16>
      tpu.vector_store %arg6[%c0_14, %c0_15], %16 {strides = array<i32>} : memref<16x128xbf16, #tpu.memory_space<vmem>>, vector<16x128xbf16>,
    } else {
    }
    return
  }
  func.func @transform_0(%arg0: i32, %arg1: i32, %arg2: i32) -> (i32, i32) {
    %c0_i32 = arith.constant 0 : i32
    return %arg0, %arg2 : i32, i32
  }
  func.func @transform_1(%arg0: i32, %arg1: i32, %arg2: i32) -> (i32, i32) {
    %c0_i32 = arith.constant 0 : i32
    return %arg2, %arg1 : i32, i32
  }
  func.func @transform_2(%arg0: i32, %arg1: i32, %arg2: i32) -> (i32, i32) {
    %c0_i32 = arith.constant 0 : i32
    %c0_i32_0 = arith.constant 0 : i32
    return %c0_i32, %arg1 : i32, i32
  }
  func.func @transform_3(%arg0: i32, %arg1: i32, %arg2: i32) -> (i32, i32) {
    %c0_i32 = arith.constant 0 : i32
    return %arg0, %arg1 : i32, i32
  }
}

module attributes {stable_mosaic.version = 11 : i64} {
  func.func @_linear_kernel(%arg0: i32, %arg1: i32, %arg2: i32, %arg3: memref<16x128xbf16, #tpu.memory_space<vmem>>, %arg4: memref<128x128xbf16, #tpu.memory_space<vmem>>, %arg5: memref<1x128xf32, #tpu.memory_space<vmem>>, %arg6: memref<16x128xf32, #tpu.memory_space<vmem>>, %arg7: memref<16x128xf32, #tpu.memory_space<vmem>>) attributes {dimension_semantics = [#tpu.dimension_semantics<parallel>, #tpu.dimension_semantics<parallel>, #tpu.dimension_semantics<arbitrary>], iteration_bounds = array<i64: 1, 1, 1>, scalar_prefetch = 0 : i64, scratch_operands = 1 : i64, tpu.core_type = #tpu.core_type<tc>, window_params = [{transform_indices = @transform_0, window_bounds = array<i64: 16, 128>}, {transform_indices = @transform_1, window_bounds = array<i64: 128, 128>}, {transform_indices = @transform_2, window_bounds = array<i64: 1, 128>}, {transform_indices = @transform_3, window_bounds = array<i64: 16, 128>}]} {
    %c0_i32 = arith.constant 0 : i32
    %0 = arith.cmpi eq, %arg2, %c0_i32 : i32
    %1 = arith.extui %0 : i1 to i32
    %c0_i32_0 = arith.constant 0 : i32
    %2 = arith.cmpi ne, %1, %c0_i32_0 : i32
    scf.if %2 {
      %cst_10 = arith.constant 0.000000e+00 : f32
      %12 = vector.broadcast %cst_10 : f32 to vector<16x128xf32>
      %c0_11 = arith.constant 0 : index
      %c0_12 = arith.constant 0 : index
      %13 = vector.load %arg7[%c0_11, %c0_12] : memref<16x128xf32, #tpu.memory_space<vmem>>, vector<16x128xf32>
      tpu.vector_store %arg7[%c0_11, %c0_12], %12 {strides = array<i32>} : memref<16x128xf32, #tpu.memory_space<vmem>>, vector<16x128xf32>,
    } else {
    }
    %c0 = arith.constant 0 : index
    %c0_1 = arith.constant 0 : index
    %3 = vector.load %arg7[%c0, %c0_1] : memref<16x128xf32, #tpu.memory_space<vmem>>, vector<16x128xf32>
    %c0_2 = arith.constant 0 : index
    %c0_3 = arith.constant 0 : index
    %4 = vector.load %arg3[%c0_2, %c0_3] : memref<16x128xbf16, #tpu.memory_space<vmem>>, vector<16x128xbf16>
    %c0_4 = arith.constant 0 : index
    %c0_5 = arith.constant 0 : index
    %5 = vector.load %arg4[%c0_4, %c0_5] : memref<128x128xbf16, #tpu.memory_space<vmem>>, vector<128x128xbf16>
    %cst = arith.constant dense<0.000000e+00> : vector<16x128xf32>
    %6 = tpu.matmul %4, %5, %cst {dimension_numbers = #tpu.dot_dimension_numbers<[1], [0], [0], [1], [0, 0, 1, 1], [], []>} : vector<16x128xbf16>, vector<128x128xbf16>, vector<16x128xf32> -> vector<16x128xf32>
    %7 = arith.addf %3, %6 : vector<16x128xf32>
    %c0_6 = arith.constant 0 : index
    %c0_7 = arith.constant 0 : index
    %8 = vector.load %arg7[%c0_6, %c0_7] : memref<16x128xf32, #tpu.memory_space<vmem>>, vector<16x128xf32>
    tpu.vector_store %arg7[%c0_6, %c0_7], %7 {strides = array<i32>} : memref<16x128xf32, #tpu.memory_space<vmem>>, vector<16x128xf32>,
    %c0_i32_8 = arith.constant 0 : i32
    %9 = arith.cmpi eq, %arg2, %c0_i32_8 : i32
    %10 = arith.extui %9 : i1 to i32
    %c0_i32_9 = arith.constant 0 : i32
    %11 = arith.cmpi ne, %10, %c0_i32_9 : i32
    scf.if %11 {
      %c0_10 = arith.constant 0 : index
      %c0_11 = arith.constant 0 : index
      %12 = vector.load %arg7[%c0_10, %c0_11] : memref<16x128xf32, #tpu.memory_space<vmem>>, vector<16x128xf32>
      %c0_12 = arith.constant 0 : index
      %c0_13 = arith.constant 0 : index
      %13 = vector.load %arg5[%c0_12, %c0_13] : memref<1x128xf32, #tpu.memory_space<vmem>>, vector<1x128xf32>
      %14 = vector.broadcast %13 : vector<1x128xf32> to vector<16x128xf32>
      %15 = arith.addf %12, %14 : vector<16x128xf32>
      %c0_14 = arith.constant 0 : index
      %c0_15 = arith.constant 0 : index
      %16 = vector.load %arg6[%c0_14, %c0_15] : memref<16x128xf32, #tpu.memory_space<vmem>>, vector<16x128xf32>
      tpu.vector_store %arg6[%c0_14, %c0_15], %15 {strides = array<i32>} : memref<16x128xf32, #tpu.memory_space<vmem>>, vector<16x128xf32>,
    } else {
    }
    return
  }
  func.func @transform_0(%arg0: i32, %arg1: i32, %arg2: i32) -> (i32, i32) {
    %c0_i32 = arith.constant 0 : i32
    return %arg0, %arg2 : i32, i32
  }
  func.func @transform_1(%arg0: i32, %arg1: i32, %arg2: i32) -> (i32, i32) {
    %c0_i32 = arith.constant 0 : i32
    return %arg2, %arg1 : i32, i32
  }
  func.func @transform_2(%arg0: i32, %arg1: i32, %arg2: i32) -> (i32, i32) {
    %c0_i32 = arith.constant 0 : i32
    %c0_i32_0 = arith.constant 0 : i32
    return %c0_i32, %arg1 : i32, i32
  }
  func.func @transform_3(%arg0: i32, %arg1: i32, %arg2: i32) -> (i32, i32) {
    %c0_i32 = arith.constant 0 : i32
    return %arg0, %arg1 : i32, i32
  }
}

</mosaic_0001>

<llo_original>
// kernel: transformer_forward.25
$region0: #{transformer_forward.25}
  #allocation0 [shape = 'u32[]', space=smem, size = 0x4, offset = 0x4, fixed_abs, tag = 'smem constant byte address 0x4 - core index']
  #allocation1 [shape = 'u32[72,128]{1,0:T(1,128)}', space=vmem, size = 0x9000, scoped, tag = 'internal scratch']
  #allocation2 [shape = 'f32[16,384]{1,0:T(8,128)}', space=vmem, size = 0x6000, scoped, tag = 'scratch operand']
  %s0 = inlined_call_operand.vmem [shape: bf16[16,128], index: 0, kind: input, shape index: {}]
  %s1 = inlined_call_operand.hbm [shape: bf16[128,384], index: 1, kind: input, shape index: {}]
  %s2 = inlined_call_operand.vmem [shape: f32[1,384], index: 2, kind: input, shape index: {}]
  %s3 = inlined_call_operand.vmem [shape: bf16[16,384], index: 3, kind: output, shape index: {}]
  %s4 = sld [smem:[#allocation0]]
  $region34: #{transformer_forward.25} parent=0
    _
  %s6 = ssub.s32 1, %s4
  %s7 = scalar_select 0, %s6, %s4
  $region1: #{transformer_forward.25} parent=0
    #allocation3 [shape = 'u8[98304]{0}', space=vmem, size = 0x18000, scoped, tag = 'input window, operand 1, single buffered']
    #allocation4 [shape = 's32[1]{0}', space=sflag, size = 0x4, scoped, tag = 'scoped memory for transformer_forward.25']
    %8 = vsyncpa [#allocation4], 0
    // Predicated region
    $region2: #{transformer_forward.25} parent=1 // pred_check
      _
    $region3: #{transformer_forward.25} parent=1 // pred_check_branch
      %10 = sbr.rel (0) target = $region5
    $region4: #{transformer_forward.25} parent=1 // pred_region
      _
    $region5: #{transformer_forward.25} parent=1 // pred_fallthru
      _
    // Predicated region
    $region6: #{transformer_forward.25} parent=1 // pred_check
      _
    $region7: #{transformer_forward.25} parent=1 // pred_check_branch
      %12 = sbr.rel (0) target = $region9
    $region8: #{transformer_forward.25} parent=1 // pred_region
      %14 = vsyncadd [#allocation4], 0
      %s15 = sshll.u32 %s1, 4
      %s16 = int_to_ptr.hbm [resolvable:$true] %s15
      %s17 = sshll.u32 [#allocation3], 4
      %s18 = int_to_ptr.vmem [resolvable:$true] %s17
      %23 = dma.hbm_to_vmem [thread:$0]  %s16, 3072, %s18, [#allocation4], 192, 192, 12
    $region9: #{transformer_forward.25} parent=1 // pred_fallthru
      _
    // Predicated region
    $region10: #{transformer_forward.25} parent=1 // pred_check
      _
    $region11: #{transformer_forward.25} parent=1 // pred_check_branch
      %25 = sbr.rel (0) target = $region13
    $region12: #{transformer_forward.25} parent=1 // pred_region
      _
    $region13: #{transformer_forward.25} parent=1 // pred_fallthru
      _
    // Predicated region
    $region14: #{transformer_forward.25} parent=1 // pred_check
      _
    $region15: #{transformer_forward.25} parent=1 // pred_check_branch
      %27 = sbr.rel (0) target = $region17
    $region16: #{transformer_forward.25} parent=1 // pred_region
      %29 = dma.done [#allocation4], 3072
    $region17: #{transformer_forward.25} parent=1 // pred_fallthru
      _
    %p30 = scmp.eq.s32.totalorder 0, 0
    // Predicated region
    $region18: #{transformer_forward.25} parent=1 // pred_check
      %p31 = pneg %p30
    $region19: #{transformer_forward.25} parent=1 // pred_check_branch
      %33 = sbr.rel (%p31) target = $region21
    $region20: #{transformer_forward.25} parent=1 // pred_region
      %34 = vst [vmem:[#allocation2] sm:$0xff] 0.0
      %35 = vst [vmem:[#allocation2 + $0x8] sm:$0xff] 0.0
      %36 = vst [vmem:[#allocation2 + $0x10] sm:$0xff] 0.0
      %37 = vst [vmem:[#allocation2 + $0x18] sm:$0xff] 0.0
      %38 = vst [vmem:[#allocation2 + $0x20] sm:$0xff] 0.0
      %39 = vst [vmem:[#allocation2 + $0x28] sm:$0xff] 0.0
    $region21: #{transformer_forward.25} parent=1 // pred_fallthru
      _
    %v40 = vld [vmem:[#allocation2] sm:$0xff]
    %v41 = vld [vmem:[#allocation2 + $0x8] sm:$0xff]
    %v42 = vld [vmem:[#allocation2 + $0x10] sm:$0xff]
    %v43 = vld [vmem:[#allocation2 + $0x18] sm:$0xff]
    %v44 = vld [vmem:[#allocation2 + $0x20] sm:$0xff]
    %v45 = vld [vmem:[#allocation2 + $0x28] sm:$0xff]
    %v46 = vld [vmem:[%s0] sm:$0xf]
    %v47 = vld [vmem:[%s0 + $0x4] sm:$0xf]
    %v48 = vld [vmem:[#allocation3] sm:$0xff]
    %v49 = vld [vmem:[#allocation3 + $0x8] sm:$0xf]
    %v50 = vld [vmem:[#allocation3 + $0xc] sm:$0xff]
    %v51 = vld [vmem:[#allocation3 + $0x14] sm:$0xf]
    %v52 = vld [vmem:[#allocation3 + $0x18] sm:$0xff]
    %v53 = vld [vmem:[#allocation3 + $0x20] sm:$0xf]
    %v54 = vld [vmem:[#allocation3 + $0x24] sm:$0xff]
    %v55 = vld [vmem:[#allocation3 + $0x2c] sm:$0xf]
    %v56 = vld [vmem:[#allocation3 + $0x30] sm:$0xff]
    %v57 = vld [vmem:[#allocation3 + $0x38] sm:$0xf]
    %v58 = vld [vmem:[#allocation3 + $0x3c] sm:$0xff]
    %v59 = vld [vmem:[#allocation3 + $0x44] sm:$0xf]
    %v60 = vld [vmem:[#allocation3 + $0x48] sm:$0xff]
    %v61 = vld [vmem:[#allocation3 + $0x50] sm:$0xf]
    %v62 = vld [vmem:[#allocation3 + $0x54] sm:$0xff]
    %v63 = vld [vmem:[#allocation3 + $0x5c] sm:$0xf]
    %v64 = vld [vmem:[#allocation3 + $0x60] sm:$0xff]
    %v65 = vld [vmem:[#allocation3 + $0x68] sm:$0xf]
    %v66 = vld [vmem:[#allocation3 + $0x6c] sm:$0xff]
    %v67 = vld [vmem:[#allocation3 + $0x74] sm:$0xf]
    %v68 = vld [vmem:[#allocation3 + $0x78] sm:$0xff]
    %v69 = vld [vmem:[#allocation3 + $0x80] sm:$0xf]
    %v70 = vld [vmem:[#allocation3 + $0x84] sm:$0xff]
    %v71 = vld [vmem:[#allocation3 + $0x8c] sm:$0xf]
    %v72 = vld [vmem:[#allocation3 + $0x90] sm:$0xff]
    %v73 = vld [vmem:[#allocation3 + $0x98] sm:$0xf]
    %v74 = vld [vmem:[#allocation3 + $0x9c] sm:$0xff]
    %v75 = vld [vmem:[#allocation3 + $0xa4] sm:$0xf]
    %v76 = vld [vmem:[#allocation3 + $0xa8] sm:$0xff]
    %v77 = vld [vmem:[#allocation3 + $0xb0] sm:$0xf]
    %v78 = vld [vmem:[#allocation3 + $0xb4] sm:$0xff]
    %v79 = vld [vmem:[#allocation3 + $0xbc] sm:$0xf]
    %v82 = vunpack.c.l.b16 %v46
    %v83 = vunpack.c.l.b16 %v47
    %v84 = vpack.c.b16 %v83, %v82
    %v118 = vunpack.c.l.b16 %v48
    %v119 = vunpack.c.h.b16 %v48
    %v120 = vunpack.c.l.b16 %v49
    %v121 = vunpack.c.l.b16 %v50
    %v122 = vunpack.c.h.b16 %v50
    %v123 = vunpack.c.l.b16 %v51
    %v124 = vunpack.c.l.b16 %v52
    %v125 = vunpack.c.h.b16 %v52
    %v126 = vunpack.c.l.b16 %v53
    %v127 = vunpack.c.l.b16 %v54
    %v128 = vunpack.c.h.b16 %v54
    %v129 = vunpack.c.l.b16 %v55
    %v130 = vunpack.c.l.b16 %v56
    %v131 = vunpack.c.h.b16 %v56
    %v132 = vunpack.c.l.b16 %v57
    %v133 = vunpack.c.l.b16 %v58
    %v134 = vunpack.c.h.b16 %v58
    %v135 = vunpack.c.l.b16 %v59
    %v136 = vunpack.c.l.b16 %v60
    %v137 = vunpack.c.h.b16 %v60
    %v138 = vunpack.c.l.b16 %v61
    %v139 = vunpack.c.l.b16 %v62
    %v140 = vunpack.c.h.b16 %v62
    %v141 = vunpack.c.l.b16 %v63
    %v142 = vunpack.c.l.b16 %v64
    %v143 = vunpack.c.h.b16 %v64
    %v144 = vunpack.c.l.b16 %v65
    %v145 = vunpack.c.l.b16 %v66
    %v146 = vunpack.c.h.b16 %v66
    %v147 = vunpack.c.l.b16 %v67
    %v148 = vunpack.c.l.b16 %v68
    %v149 = vunpack.c.h.b16 %v68
    %v150 = vunpack.c.l.b16 %v69
    %v151 = vunpack.c.l.b16 %v70
    %v152 = vunpack.c.h.b16 %v70
    %v153 = vunpack.c.l.b16 %v71
    %v154 = vunpack.c.l.b16 %v72
    %v155 = vunpack.c.h.b16 %v72
    %v156 = vunpack.c.l.b16 %v73
    %v157 = vunpack.c.l.b16 %v74
    %v158 = vunpack.c.h.b16 %v74
    %v159 = vunpack.c.l.b16 %v75
    %v160 = vunpack.c.l.b16 %v76
    %v161 = vunpack.c.h.b16 %v76
    %v162 = vunpack.c.l.b16 %v77
    %v163 = vunpack.c.l.b16 %v78
    %v164 = vunpack.c.h.b16 %v78
    %v165 = vunpack.c.l.b16 %v79
    %v166 = vpack.c.b16 %v121, %v118
    %v167 = vpack.c.b16 %v122, %v119
    %v168 = vpack.c.b16 %v123, %v120
    %v169 = vpack.c.b16 %v127, %v124
    %v170 = vpack.c.b16 %v128, %v125
    %v171 = vpack.c.b16 %v129, %v126
    %v172 = vpack.c.b16 %v133, %v130
    %v173 = vpack.c.b16 %v134, %v131
    %v174 = vpack.c.b16 %v135, %v132
    %v175 = vpack.c.b16 %v139, %v136
    %v176 = vpack.c.b16 %v140, %v137
    %v177 = vpack.c.b16 %v141, %v138
    %v178 = vpack.c.b16 %v145, %v142
    %v179 = vpack.c.b16 %v146, %v143
    %v180 = vpack.c.b16 %v147, %v144
    %v181 = vpack.c.b16 %v151, %v148
    %v182 = vpack.c.b16 %v152, %v149
    %v183 = vpack.c.b16 %v153, %v150
    %v184 = vpack.c.b16 %v157, %v154
    %v185 = vpack.c.b16 %v158, %v155
    %v186 = vpack.c.b16 %v159, %v156
    %v187 = vpack.c.b16 %v163, %v160
    %v188 = vpack.c.b16 %v164, %v161
    %v189 = vpack.c.b16 %v165, %v162
    %214 = vmatpush.bf16.msra.mxu0 %v187
    %215 = vmatpush.bf16.msra.mxu0 %v184
    %216 = vmatpush.bf16.msra.mxu0 %v181
    %217 = vmatpush.bf16.msra.mxu0 %v178
    %218 = vmatpush.bf16.msra.mxu0 %v175
    %219 = vmatpush.bf16.msra.mxu0 %v172
    %220 = vmatpush.bf16.msra.mxu0 %v169
    %221 = vmatpush.bf16.msra.mxu0 %v166
    %222 = vmatmul.bf16.gmra.mxu0 %v84
    %v223 = vpop.f32.mrf.mxu0
    %v224 = vadd.f32 0.0, %v223
    %v225 = vpop.f32.mrf.mxu0
    %v226 = vadd.f32 0.0, %v225
    %227 = vdwg.mxu0
    %228 = vmatpush.bf16.msra.mxu0 %v188
    %229 = vmatpush.bf16.msra.mxu0 %v185
    %230 = vmatpush.bf16.msra.mxu0 %v182
    %231 = vmatpush.bf16.msra.mxu0 %v179
    %232 = vmatpush.bf16.msra.mxu0 %v176
    %233 = vmatpush.bf16.msra.mxu0 %v173
    %234 = vmatpush.bf16.msra.mxu0 %v170
    %235 = vmatpush.bf16.msra.mxu0 %v167
    %236 = vmatmul.bf16.gmra.mxu0 %v84
    %v237 = vpop.f32.mrf.mxu0
    %v238 = vadd.f32 0.0, %v237
    %v239 = vpop.f32.mrf.mxu0
    %v240 = vadd.f32 0.0, %v239
    %241 = vdwg.mxu0
    %242 = vmatpush.bf16.msra.mxu0 %v189
    %243 = vmatpush.bf16.msra.mxu0 %v186
    %244 = vmatpush.bf16.msra.mxu0 %v183
    %245 = vmatpush.bf16.msra.mxu0 %v180
    %246 = vmatpush.bf16.msra.mxu0 %v177
    %247 = vmatpush.bf16.msra.mxu0 %v174
    %248 = vmatpush.bf16.msra.mxu0 %v171
    %249 = vmatpush.bf16.msra.mxu0 %v168
    %250 = vmatmul.bf16.gmra.mxu0 %v84
    %v251 = vpop.f32.mrf.mxu0
    %v252 = vadd.f32 0.0, %v251
    %v253 = vpop.f32.mrf.mxu0
    %v254 = vadd.f32 0.0, %v253
    %255 = vdwg.mxu0
    %v256 = vadd.f32 %v40, %v224
    %v257 = vadd.f32 %v41, %v238
    %v258 = vadd.f32 %v42, %v252
    %v259 = vadd.f32 %v43, %v226
    %v260 = vadd.f32 %v44, %v240
    %v261 = vadd.f32 %v45, %v254
    %262 = vst [vmem:[#allocation2] sm:$0xff] %v256
    %263 = vst [vmem:[#allocation2 + $0x8] sm:$0xff] %v257
    %264 = vst [vmem:[#allocation2 + $0x10] sm:$0xff] %v258
    %265 = vst [vmem:[#allocation2 + $0x18] sm:$0xff] %v259
    %266 = vst [vmem:[#allocation2 + $0x20] sm:$0xff] %v260
    %267 = vst [vmem:[#allocation2 + $0x28] sm:$0xff] %v261
    // Predicated region
    $region22: #{transformer_forward.25} parent=1 // pred_check
      %p268 = pneg %p30
    $region23: #{transformer_forward.25} parent=1 // pred_check_branch
      %270 = sbr.rel (%p268) target = $region25
    $region24: #{transformer_forward.25} parent=1 // pred_region
      %v271 = vld [vmem:[#allocation2] sm:$0xff]
      %v272 = vld [vmem:[#allocation2 + $0x8] sm:$0xff]
      %v273 = vld [vmem:[#allocation2 + $0x10] sm:$0xff]
      %v274 = vld [vmem:[#allocation2 + $0x18] sm:$0xff]
      %v275 = vld [vmem:[#allocation2 + $0x20] sm:$0xff]
      %v276 = vld [vmem:[#allocation2 + $0x28] sm:$0xff]
      %v277 = vld [vmem:[%s2] sm:$0x7]
      %v279 = vperm.slane %v277, 0
      %v280 = vperm.slane %v277, 1
      %v281 = vperm.slane %v277, 2
      %v285 = vadd.f32 %v271, %v279
      %v286 = vadd.f32 %v272, %v280
      %v287 = vadd.f32 %v273, %v281
      %v288 = vadd.f32 %v274, %v279
      %v289 = vadd.f32 %v275, %v280
      %v290 = vadd.f32 %v276, %v281
      %v291 = vpack.c.bf16 %v286, %v285
      %v292 = vpack.c.bf16 %v287, %v287
      %v293 = vpack.c.bf16 %v289, %v288
      %v294 = vpack.c.bf16 %v290, %v290
      %295 = vst [vmem:[%s3] sm:$0xff] %v291
      %296 = vst [vmem:[%s3 + $0x8] sm:$0xf] %v292
      %297 = vst [vmem:[%s3 + $0xc] sm:$0xff] %v293
      %298 = vst [vmem:[%s3 + $0x14] sm:$0xf] %v294
    $region25: #{transformer_forward.25} parent=1 // pred_fallthru
      _
    // Predicated region
    $region26: #{transformer_forward.25} parent=1 // pred_check
      _
    $region27: #{transformer_forward.25} parent=1 // pred_check_branch
      %300 = sbr.rel (0) target = $region29
    $region28: #{transformer_forward.25} parent=1 // pred_region
      _
    $region29: #{transformer_forward.25} parent=1 // pred_fallthru
      _
    // Predicated region
    $region30: #{transformer_forward.25} parent=1 // pred_check
      _
    $region31: #{transformer_forward.25} parent=1 // pred_check_branch
      %302 = sbr.rel (0) target = $region33
    $region32: #{transformer_forward.25} parent=1 // pred_region
      _
    $region33: #{transformer_forward.25} parent=1 // pred_fallthru
      _
    %303 = vsyncpa [#allocation4], 1

// kernel: transformer_forward.27
$region0: #{transformer_forward.27}
  #allocation0 [shape = 'u32[]', space=smem, size = 0x4, offset = 0x4, fixed_abs, tag = 'smem constant byte address 0x4 - core index']
  #allocation1 [shape = 'u32[72,128]{1,0:T(1,128)}', space=vmem, size = 0x9000, scoped, tag = 'internal scratch']
  #allocation2 [shape = 'f32[16,128]{1,0:T(8,128)}', space=vmem, size = 0x2000, scoped, tag = 'scratch operand']
  %s0 = inlined_call_operand.vmem [shape: bf16[16,128], index: 0, kind: input, shape index: {}]
  %s1 = inlined_call_operand.vmem [shape: bf16[128,128], index: 1, kind: input, shape index: {}]
  %s2 = inlined_call_operand.vmem [shape: f32[1,128], index: 2, kind: input, shape index: {}]
  %s3 = inlined_call_operand.vmem [shape: bf16[16,128], index: 3, kind: input, shape index: {}]
  %s4 = inlined_call_operand.vmem [shape: f32[1,128], index: 4, kind: input, shape index: {}]
  %s5 = inlined_call_operand.vmem [shape: f32[1,128], index: 5, kind: input, shape index: {}]
  %s6 = inlined_call_operand.vmem [shape: bf16[16,128], index: 6, kind: output, shape index: {}]
  %s7 = sld [smem:[#allocation0]]
  $region42: #{transformer_forward.27} parent=0
    _
  %s9 = ssub.s32 1, %s7
  %s10 = scalar_select 0, %s9, %s7
  // Predicated region
  $region2: #{transformer_forward.27} parent=0 // pred_check
    _
  $region3: #{transformer_forward.27} parent=0 // pred_check_branch
    %12 = sbr.rel (0) target = $region5
  $region4: #{transformer_forward.27} parent=0 // pred_region
    _
  $region5: #{transformer_forward.27} parent=0 // pred_fallthru
    _
  // Predicated region
  $region6: #{transformer_forward.27} parent=0 // pred_check
    _
  $region7: #{transformer_forward.27} parent=0 // pred_check_branch
    %14 = sbr.rel (0) target = $region9
  $region8: #{transformer_forward.27} parent=0 // pred_region
    _
  $region9: #{transformer_forward.27} parent=0 // pred_fallthru
    _
  // Predicated region
  $region10: #{transformer_forward.27} parent=0 // pred_check
    _
  $region11: #{transformer_forward.27} parent=0 // pred_check_branch
    %16 = sbr.rel (0) target = $region13
  $region12: #{transformer_forward.27} parent=0 // pred_region
    _
  $region13: #{transformer_forward.27} parent=0 // pred_fallthru
    _
  // Predicated region
  $region14: #{transformer_forward.27} parent=0 // pred_check
    _
  $region15: #{transformer_forward.27} parent=0 // pred_check_branch
    %18 = sbr.rel (0) target = $region17
  $region16: #{transformer_forward.27} parent=0 // pred_region
    _
  $region17: #{transformer_forward.27} parent=0 // pred_fallthru
    _
  // Predicated region
  $region18: #{transformer_forward.27} parent=0 // pred_check
    _
  $region19: #{transformer_forward.27} parent=0 // pred_check_branch
    %20 = sbr.rel (0) target = $region21
  $region20: #{transformer_forward.27} parent=0 // pred_region
    _
  $region21: #{transformer_forward.27} parent=0 // pred_fallthru
    _
  // Predicated region
  $region22: #{transformer_forward.27} parent=0 // pred_check
    _
  $region23: #{transformer_forward.27} parent=0 // pred_check_branch
    %22 = sbr.rel (0) target = $region25
  $region24: #{transformer_forward.27} parent=0 // pred_region
    _
  $region25: #{transformer_forward.27} parent=0 // pred_fallthru
    _
  %p23 = scmp.eq.s32.totalorder 0, 0
  // Predicated region
  $region26: #{transformer_forward.27} parent=0 // pred_check
    %p24 = pneg %p23
  $region27: #{transformer_forward.27} parent=0 // pred_check_branch
    %26 = sbr.rel (%p24) target = $region29
  $region28: #{transformer_forward.27} parent=0 // pred_region
    %27 = vst [vmem:[#allocation2] sm:$0xff] 0.0
    %28 = vst [vmem:[#allocation2 + $0x8] sm:$0xff] 0.0
  $region29: #{transformer_forward.27} parent=0 // pred_fallthru
    _
  %v29 = vld [vmem:[#allocation2] sm:$0xff]
  %v30 = vld [vmem:[#allocation2 + $0x8] sm:$0xff]
  %v31 = vld [vmem:[%s0] sm:$0xf]
  %v32 = vld [vmem:[%s0 + $0x4] sm:$0xf]
  %v33 = vld [vmem:[%s1] sm:$0xf]
  %v34 = vld [vmem:[%s1 + $0x4] sm:$0xf]
  %v35 = vld [vmem:[%s1 + $0x8] sm:$0xf]
  %v36 = vld [vmem:[%s1 + $0xc] sm:$0xf]
  %v37 = vld [vmem:[%s1 + $0x10] sm:$0xf]
  %v38 = vld [vmem:[%s1 + $0x14] sm:$0xf]
  %v39 = vld [vmem:[%s1 + $0x18] sm:$0xf]
  %v40 = vld [vmem:[%s1 + $0x1c] sm:$0xf]
  %v41 = vld [vmem:[%s1 + $0x20] sm:$0xf]
  %v42 = vld [vmem:[%s1 + $0x24] sm:$0xf]
  %v43 = vld [vmem:[%s1 + $0x28] sm:$0xf]
  %v44 = vld [vmem:[%s1 + $0x2c] sm:$0xf]
  %v45 = vld [vmem:[%s1 + $0x30] sm:$0xf]
  %v46 = vld [vmem:[%s1 + $0x34] sm:$0xf]
  %v47 = vld [vmem:[%s1 + $0x38] sm:$0xf]
  %v48 = vld [vmem:[%s1 + $0x3c] sm:$0xf]
  %v51 = vunpack.c.l.b16 %v31
  %v52 = vunpack.c.l.b16 %v32
  %v53 = vpack.c.b16 %v52, %v51
  %v71 = vunpack.c.l.b16 %v33
  %v72 = vunpack.c.l.b16 %v34
  %v73 = vunpack.c.l.b16 %v35
  %v74 = vunpack.c.l.b16 %v36
  %v75 = vunpack.c.l.b16 %v37
  %v76 = vunpack.c.l.b16 %v38
  %v77 = vunpack.c.l.b16 %v39
  %v78 = vunpack.c.l.b16 %v40
  %v79 = vunpack.c.l.b16 %v41
  %v80 = vunpack.c.l.b16 %v42
  %v81 = vunpack.c.l.b16 %v43
  %v82 = vunpack.c.l.b16 %v44
  %v83 = vunpack.c.l.b16 %v45
  %v84 = vunpack.c.l.b16 %v46
  %v85 = vunpack.c.l.b16 %v47
  %v86 = vunpack.c.l.b16 %v48
  %v87 = vpack.c.b16 %v72, %v71
  %v88 = vpack.c.b16 %v74, %v73
  %v89 = vpack.c.b16 %v76, %v75
  %v90 = vpack.c.b16 %v78, %v77
  %v91 = vpack.c.b16 %v80, %v79
  %v92 = vpack.c.b16 %v82, %v81
  %v93 = vpack.c.b16 %v84, %v83
  %v94 = vpack.c.b16 %v86, %v85
  %103 = vmatpush.bf16.msra.mxu0 %v94
  %104 = vmatpush.bf16.msra.mxu0 %v93
  %105 = vmatpush.bf16.msra.mxu0 %v92
  %106 = vmatpush.bf16.msra.mxu0 %v91
  %107 = vmatpush.bf16.msra.mxu0 %v90
  %108 = vmatpush.bf16.msra.mxu0 %v89
  %109 = vmatpush.bf16.msra.mxu0 %v88
  %110 = vmatpush.bf16.msra.mxu0 %v87
  %111 = vmatmul.bf16.gmra.mxu0 %v53
  %v112 = vpop.f32.mrf.mxu0
  %v113 = vadd.f32 0.0, %v112
  %v114 = vpop.f32.mrf.mxu0
  %v115 = vadd.f32 0.0, %v114
  %116 = vdwg.mxu0
  %v117 = vadd.f32 %v29, %v113
  %v118 = vadd.f32 %v30, %v115
  %119 = vst [vmem:[#allocation2] sm:$0xff] %v117
  %120 = vst [vmem:[#allocation2 + $0x8] sm:$0xff] %v118
  // Predicated region
  $region30: #{transformer_forward.27} parent=0 // pred_check
    %p121 = pneg %p23
  $region31: #{transformer_forward.27} parent=0 // pred_check_branch
    %123 = sbr.rel (%p121) target = $region33
  $region32: #{transformer_forward.27} parent=0 // pred_region
    %v124 = vld [vmem:[#allocation2] sm:$0xff]
    %v125 = vld [vmem:[#allocation2 + $0x8] sm:$0xff]
    %v126 = vld [vmem:[%s2] sm:$0x1]
    %v128 = vperm.slane %v126, 0
    %v130 = vadd.f32 %v124, %v128
    %v131 = vadd.f32 %v125, %v128
    %v132 = vld [vmem:[%s3] sm:$0xf]
    %v133 = vld [vmem:[%s3 + $0x4] sm:$0xf]
    %v134 = vunpack.c.l.bf16 %v132
    %v135 = vunpack.c.l.bf16 %v133
    %v136 = vadd.f32 %v130, %v134
    %v137 = vadd.f32 %v131, %v135
    %138 = vadd.xlane.f32.xlu0 %v136
    %v139 = vpop.xlane.xlu0 %138
    %140 = vadd.xlane.f32.xlu0 %v137
    %v141 = vpop.xlane.xlu0 %140
    %v142 = vrcp.pop 128.0
    %v143 = vmul.f32 128.0, %v142
    %v144 = vsub.f32 1.0, %v143
    %v145 = vmul.f32 %v142, %v144
    %v146 = vadd.f32 %v142, %v145
    %vm147 = vweird.f32 %v142
    %v148 = vsel %vm147, %v142, %v146
    %v149 = vmul.f32 %v139, %v148
    %v150 = vmul.f32 %v141, %v148
    %v151 = vsub.f32 %v136, %v149
    %v152 = vsub.f32 %v137, %v150
    %v153 = vmul.f32 %v151, %v151
    %v154 = vmul.f32 %v152, %v152
    %155 = vadd.xlane.f32.xlu0 %v153
    %v156 = vpop.xlane.xlu0 %155
    %157 = vadd.xlane.f32.xlu0 %v154
    %v158 = vpop.xlane.xlu0 %157
    %v159 = vmul.f32 %v156, %v148
    %v160 = vmul.f32 %v158, %v148
    %v161 = vadd.f32 %v159, 1e-05
    %v162 = vadd.f32 %v160, 1e-05
    %v163 = vrsqrt.pop %v161
    %v164 = vmul.f32 %v163, %v161
    %v165 = vmul.f32 %v164, %v163
    %v166 = vmul.f32 0.5, %v165
    %v167 = vsub.f32 1.5, %v166
    %v168 = vmul.f32 %v163, %v167
    %vm169 = vweird.f32 %v161
    %vm170 = vweird.f32 %v163
    %vm171 = vmor %vm169, %vm170
    %v172 = vsel %vm171, %v163, %v168
    %v173 = vrsqrt.pop %v162
    %v174 = vmul.f32 %v173, %v162
    %v175 = vmul.f32 %v174, %v173
    %v176 = vmul.f32 0.5, %v175
    %v177 = vsub.f32 1.5, %v176
    %v178 = vmul.f32 %v173, %v177
    %vm179 = vweird.f32 %v162
    %vm180 = vweird.f32 %v173
    %vm181 = vmor %vm179, %vm180
    %v182 = vsel %vm181, %v173, %v178
    %v183 = vmul.f32 %v151, %v172
    %v184 = vmul.f32 %v152, %v182
    %v185 = vld [vmem:[%s4] sm:$0x1]
    %v187 = vperm.slane %v185, 0
    %v189 = vmul.f32 %v183, %v187
    %v190 = vmul.f32 %v184, %v187
    %v191 = vld [vmem:[%s5] sm:$0x1]
    %v193 = vperm.slane %v191, 0
    %v195 = vadd.f32 %v189, %v193
    %v196 = vadd.f32 %v190, %v193
    %v197 = vpack.c.bf16 %v195, %v195
    %v198 = vpack.c.bf16 %v196, %v196
    %199 = vst [vmem:[%s6] sm:$0xf] %v197
    %200 = vst [vmem:[%s6 + $0x4] sm:$0xf] %v198
  $region33: #{transformer_forward.27} parent=0 // pred_fallthru
    _
  // Predicated region
  $region34: #{transformer_forward.27} parent=0 // pred_check
    _
  $region35: #{transformer_forward.27} parent=0 // pred_check_branch
    %202 = sbr.rel (0) target = $region37
  $region36: #{transformer_forward.27} parent=0 // pred_region
    _
  $region37: #{transformer_forward.27} parent=0 // pred_fallthru
    _
  // Predicated region
  $region38: #{transformer_forward.27} parent=0 // pred_check
    _
  $region39: #{transformer_forward.27} parent=0 // pred_check_branch
    %204 = sbr.rel (0) target = $region41
  $region40: #{transformer_forward.27} parent=0 // pred_region
    _
  $region41: #{transformer_forward.27} parent=0 // pred_fallthru
    _

// kernel: transformer_forward.26
$region0: #{transformer_forward.26}
  #allocation0 [shape = 'u32[]', space=smem, size = 0x4, offset = 0x4, fixed_abs, tag = 'smem constant byte address 0x4 - core index']
  #allocation1 [shape = 'u32[72,128]{1,0:T(1,128)}', space=vmem, size = 0x9000, scoped, tag = 'internal scratch']
  #allocation2 [shape = 'f32[4,8,1]{2,1,0:T(8,128)}', space=vmem, size = 0x4000, scoped, tag = 'scratch operand']
  #allocation3 [shape = 'f32[4,8,1]{2,1,0:T(8,128)}', space=vmem, size = 0x4000, scoped, tag = 'scratch operand']
  #allocation4 [shape = 'f32[8,128]{1,0:T(8,128)}', space=vmem, size = 0x1000, scoped, tag = 'scratch operand']
  %s0 = inlined_call_operand.vmem [shape: s32[2,1,8], index: 0, kind: input, shape index: {}]
  %s1 = inlined_call_operand.vmem [shape: bf16[2,8,384], index: 1, kind: input, shape index: {}, may-alias: {1,2,3}]
  %s2 = inlined_call_operand.vmem [shape: bf16[2,8,384], index: 2, kind: input, shape index: {}, may-alias: {1,2,3}]
  %s3 = inlined_call_operand.vmem [shape: bf16[2,8,384], index: 3, kind: input, shape index: {}, may-alias: {1,2,3}]
  %s4 = inlined_call_operand.vmem [shape: bf16[2,8,128], index: 4, kind: output, shape index: {}]
  %s5 = sld [smem:[#allocation0]]
  $region57: #{transformer_forward.26} parent=0
    _
  %s7 = ssub.s32 1, %s5
  %s8 = scalar_select 0, %s7, %s5
  loop: start=0, step=1, limit=4
  $region2: #{transformer_forward.26} parent=0 // loop_pre_header
    _
  $region3: #{transformer_forward.26} parent=0 // loop_header
    %s10 = sphi 0, %s14
    %p11 = scmp.ge.s32.totalorder %s10, 4
    %s17 = sphi 0, %s36
    %s18 = sphi 0, %s32
    %s19 = sphi 0, %s28
    %s20 = sphi 0, %s17
    %s21 = sphi 0, %s18
    %s22 = sphi 0, %s19
    %s23 = sphi 0, %s20
    %s24 = sphi 0, %s21
    %s25 = sphi 0, %s22
    %s41 = sphi 0, %s43
    %s44 = sphi 0, %s41
    %s45 = sphi 0, %s44
    %s61 = sphi 0, %s45
    %s69 = sphi 0, %s71
    %s72 = sphi 0, %s69
    %s73 = sphi 0, %s72
    %s89 = sphi 0, %s73
    %s101 = sphi 0, %s103
    %s104 = sphi 0, %s101
    %s105 = sphi 0, %s104
    %s121 = sphi 0, %s105
    %s133 = sphi 0, %s135
    %s136 = sphi 0, %s133
    %s137 = sphi 0, %s136
    %s153 = sphi 0, %s137
    %s161 = sphi 0, %s163
    %s164 = sphi 0, %s161
    %s165 = sphi 0, %s164
    %s181 = sphi 0, %s165
  $region4: #{transformer_forward.26} parent=0 // loop_header_branch
    %13 = sbr.rel (%p11) target = $region8
  $region5: #{transformer_forward.26} parent=0 // loop_body
    %s15 = ssub.s32 %s10, 1
    %s16 = ssub.s32 %s10, 2
    %s26 = sadd.s32 1, %s19
    %p27 = scmp.ge.s32.totalorder %s26, 1
    %s28 = scalar_select %p27, 0, %s26
    %s29 = sadd.s32 1, %s18
    %s30 = scalar_select %p27, %s29, %s18
    %p31 = scmp.ge.s32.totalorder %s30, 1
    %s32 = scalar_select %p31, 0, %s30
    %s33 = sadd.s32 1, %s17
    %s34 = scalar_select %p31, %s33, %s17
    %p35 = scmp.ge.s32.totalorder %s34, 2
    %s36 = scalar_select %p35, 0, %s34
    %s37 = ssub.s32 %s17, %s36
    %s38 = ssub.s32 %s19, %s28
    %s39 = sor.u32 %s37, %s38
    %p40 = scmp.eq.s32.totalorder %s39, 0
    %s42 = sadd.s32 %s41, 1
    %s43 = scalar_select %p40, %s41, %s42
    %p46 = pneg %p40
    %p47 = scmp.eq.s32.totalorder %s10, 1
    %p48 = por %p46, %p47
    %p49 = scmp.ne.s32.totalorder %s41, %s44
    %p50 = scmp.eq.s32.totalorder %s10, 0
    %p51 = por %p49, %p50
    %p52 = scmp.ne.s32.totalorder %s41, %s44
    %p53 = scmp.eq.s32.totalorder %s15, 1
    %p54 = por %p52, %p53
    %p55 = scmp.ne.s32.totalorder %s44, %s45
    %p56 = scmp.eq.s32.totalorder %s15, 0
    %p57 = por %p55, %p56
    %p58 = scmp.ne.s32.totalorder %s44, %s45
    %p59 = scmp.eq.s32.totalorder %s16, 1
    %p60 = por %p58, %p59
    %p62 = scmp.ne.s32.totalorder %s45, %s61
    %p63 = scmp.eq.s32.totalorder %s16, 0
    %p64 = por %p62, %p63
    %s65 = ssub.s32 %s17, %s36
    %s66 = ssub.s32 %s18, %s32
    %s67 = sor.u32 %s65, %s66
    %p68 = scmp.eq.s32.totalorder %s67, 0
    %s70 = sadd.s32 %s69, 1
    %s71 = scalar_select %p68, %s69, %s70
    %p74 = pneg %p68
    %p75 = scmp.eq.s32.totalorder %s10, 1
    %p76 = por %p74, %p75
    %p77 = scmp.ne.s32.totalorder %s69, %s72
    %p78 = scmp.eq.s32.totalorder %s10, 0
    %p79 = por %p77, %p78
    %p80 = scmp.ne.s32.totalorder %s69, %s72
    %p81 = scmp.eq.s32.totalorder %s15, 1
    %p82 = por %p80, %p81
    %p83 = scmp.ne.s32.totalorder %s72, %s73
    %p84 = scmp.eq.s32.totalorder %s15, 0
    %p85 = por %p83, %p84
    %p86 = scmp.ne.s32.totalorder %s72, %s73
    %p87 = scmp.eq.s32.totalorder %s16, 1
    %p88 = por %p86, %p87
    %p90 = scmp.ne.s32.totalorder %s73, %s89
    %p91 = scmp.eq.s32.totalorder %s16, 0
    %p92 = por %p90, %p91
    %s93 = sadd.s32 %s18, 1
    %s94 = sadd.s32 %s32, 1
    %s95 = ssub.s32 %s17, %s36
    %s96 = ssub.s32 %s19, %s28
    %s97 = sor.u32 %s95, %s96
    %s98 = ssub.s32 %s93, %s94
    %s99 = sor.u32 %s97, %s98
    %p100 = scmp.eq.s32.totalorder %s99, 0
    %s102 = sadd.s32 %s101, 1
    %s103 = scalar_select %p100, %s101, %s102
    %p106 = pneg %p100
    %p107 = scmp.eq.s32.totalorder %s10, 1
    %p108 = por %p106, %p107
    %p109 = scmp.ne.s32.totalorder %s101, %s104
    %p110 = scmp.eq.s32.totalorder %s10, 0
    %p111 = por %p109, %p110
    %p112 = scmp.ne.s32.totalorder %s101, %s104
    %p113 = scmp.eq.s32.totalorder %s15, 1
    %p114 = por %p112, %p113
    %p115 = scmp.ne.s32.totalorder %s104, %s105
    %p116 = scmp.eq.s32.totalorder %s15, 0
    %p117 = por %p115, %p116
    %p118 = scmp.ne.s32.totalorder %s104, %s105
    %p119 = scmp.eq.s32.totalorder %s16, 1
    %p120 = por %p118, %p119
    %p122 = scmp.ne.s32.totalorder %s105, %s121
    %p123 = scmp.eq.s32.totalorder %s16, 0
    %p124 = por %p122, %p123
    %s125 = sadd.s32 %s18, 2
    %s126 = sadd.s32 %s32, 2
    %s127 = ssub.s32 %s17, %s36
    %s128 = ssub.s32 %s19, %s28
    %s129 = sor.u32 %s127, %s128
    %s130 = ssub.s32 %s125, %s126
    %s131 = sor.u32 %s129, %s130
    %p132 = scmp.eq.s32.totalorder %s131, 0
    %s134 = sadd.s32 %s133, 1
    %s135 = scalar_select %p132, %s133, %s134
    %p138 = pneg %p132
    %p139 = scmp.eq.s32.totalorder %s10, 1
    %p140 = por %p138, %p139
    %p141 = scmp.ne.s32.totalorder %s133, %s136
    %p142 = scmp.eq.s32.totalorder %s10, 0
    %p143 = por %p141, %p142
    %p144 = scmp.ne.s32.totalorder %s133, %s136
    %p145 = scmp.eq.s32.totalorder %s15, 1
    %p146 = por %p144, %p145
    %p147 = scmp.ne.s32.totalorder %s136, %s137
    %p148 = scmp.eq.s32.totalorder %s15, 0
    %p149 = por %p147, %p148
    %p150 = scmp.ne.s32.totalorder %s136, %s137
    %p151 = scmp.eq.s32.totalorder %s16, 1
    %p152 = por %p150, %p151
    %p154 = scmp.ne.s32.totalorder %s137, %s153
    %p155 = scmp.eq.s32.totalorder %s16, 0
    %p156 = por %p154, %p155
    %s157 = ssub.s32 %s17, %s36
    %s158 = ssub.s32 %s18, %s32
    %s159 = sor.u32 %s157, %s158
    %p160 = scmp.eq.s32.totalorder %s159, 0
    %s162 = sadd.s32 %s161, 1
    %s163 = scalar_select %p160, %s161, %s162
    %p166 = pneg %p160
    %p167 = scmp.eq.s32.totalorder %s10, 1
    %p168 = por %p166, %p167
    %p169 = scmp.ne.s32.totalorder %s161, %s164
    %p170 = scmp.eq.s32.totalorder %s10, 0
    %p171 = por %p169, %p170
    %p172 = scmp.ne.s32.totalorder %s161, %s164
    %p173 = scmp.eq.s32.totalorder %s15, 1
    %p174 = por %p172, %p173
    %p175 = scmp.ne.s32.totalorder %s164, %s165
    %p176 = scmp.eq.s32.totalorder %s15, 0
    %p177 = por %p175, %p176
    %p178 = scmp.ne.s32.totalorder %s164, %s165
    %p179 = scmp.eq.s32.totalorder %s16, 1
    %p180 = por %p178, %p179
    %p182 = scmp.ne.s32.totalorder %s165, %s181
    %p183 = scmp.eq.s32.totalorder %s16, 0
    %p184 = por %p182, %p183
    %p185 = scmp.le.s32.totalorder 1, %s10
    %p186 = scmp.lt.s32.totalorder %s10, 3
    %p187 = pnand %p185, %p186
    %p188 = pneg %p187
    // Predicated region
    $region9: #{transformer_forward.26} parent=5 // pred_check
      _
    $region10: #{transformer_forward.26} parent=5 // pred_check_branch
      %190 = sbr.rel (%p187) target = $region12
    $region11: #{transformer_forward.26} parent=5 // pred_region
      %s191 = ssub.s32 %s10, 1
    $region12: #{transformer_forward.26} parent=5 // pred_fallthru
      _
    %p192 = scmp.lt.s32.totalorder %s10, 2
    // Predicated region
    $region13: #{transformer_forward.26} parent=5 // pred_check
      %p193 = pneg %p192
    $region14: #{transformer_forward.26} parent=5 // pred_check_branch
      %195 = sbr.rel (%p193) target = $region16
    $region15: #{transformer_forward.26} parent=5 // pred_region
      // Predicated region
      $region17: #{transformer_forward.26} parent=15 // pred_check
        %p196 = pneg %p51
      $region18: #{transformer_forward.26} parent=15 // pred_check_branch
        %198 = sbr.rel (%p196) target = $region20
      $region19: #{transformer_forward.26} parent=15 // pred_region
        %p199 = scmp.lt.s32.totalorder %s17, 1
        %s200 = scalar_select %p199, %s17, 1
        %p201 = scmp.lt.s32.totalorder %s19, 0
        %s202 = scalar_select %p201, %s19, 0
        %s203 = sadd.s32 %s202, %s200
        %s204 = scalar_lea.vmem %s0, %s203
      $region20: #{transformer_forward.26} parent=15 // pred_fallthru
        _
      // Predicated region
      $region21: #{transformer_forward.26} parent=15 // pred_check
        %p205 = pneg %p79
      $region22: #{transformer_forward.26} parent=15 // pred_check_branch
        %207 = sbr.rel (%p205) target = $region24
      $region23: #{transformer_forward.26} parent=15 // pred_region
        %p208 = scmp.lt.s32.totalorder %s17, 1
        %s209 = scalar_select %p208, %s17, 1
        %p210 = scmp.lt.s32.totalorder %s18, 2
        %s211 = scalar_select %p210, %s18, 2
        %s212 = smul.addr %s209, 3
        %s213 = sadd.s32 %s211, %s212
        %s214 = smul.addr %s213, 4
        %s215 = scalar_lea.vmem %s1, %s214
      $region24: #{transformer_forward.26} parent=15 // pred_fallthru
        _
      // Predicated region
      $region25: #{transformer_forward.26} parent=15 // pred_check
        %p216 = pneg %p111
      $region26: #{transformer_forward.26} parent=15 // pred_check_branch
        %218 = sbr.rel (%p216) target = $region28
      $region27: #{transformer_forward.26} parent=15 // pred_region
        %s219 = sadd.s32 %s18, 1
        %p220 = scmp.lt.s32.totalorder %s17, 1
        %s221 = scalar_select %p220, %s17, 1
        %p222 = scmp.lt.s32.totalorder %s19, 0
        %s223 = scalar_select %p222, %s19, 0
        %p224 = scmp.lt.s32.totalorder %s219, 2
        %s225 = scalar_select %p224, %s219, 2
        %s226 = smul.addr %s223, 3
        %s227 = sadd.s32 %s225, %s226
        %s228 = smul.addr %s221, 3
        %s229 = sadd.s32 %s227, %s228
        %s230 = smul.addr %s229, 4
        %s231 = scalar_lea.vmem %s2, %s230
        %s232 = sadd.s32 %s18, 1
      $region28: #{transformer_forward.26} parent=15 // pred_fallthru
        _
      // Predicated region
      $region29: #{transformer_forward.26} parent=15 // pred_check
        %p233 = pneg %p143
      $region30: #{transformer_forward.26} parent=15 // pred_check_branch
        %235 = sbr.rel (%p233) target = $region32
      $region31: #{transformer_forward.26} parent=15 // pred_region
        %s236 = sadd.s32 %s18, 2
        %p237 = scmp.lt.s32.totalorder %s17, 1
        %s238 = scalar_select %p237, %s17, 1
        %p239 = scmp.lt.s32.totalorder %s19, 0
        %s240 = scalar_select %p239, %s19, 0
        %p241 = scmp.lt.s32.totalorder %s236, 2
        %s242 = scalar_select %p241, %s236, 2
        %s243 = smul.addr %s240, 3
        %s244 = sadd.s32 %s242, %s243
        %s245 = smul.addr %s238, 3
        %s246 = sadd.s32 %s244, %s245
        %s247 = smul.addr %s246, 4
        %s248 = scalar_lea.vmem %s3, %s247
        %s249 = sadd.s32 %s18, 2
      $region32: #{transformer_forward.26} parent=15 // pred_fallthru
        _
    $region16: #{transformer_forward.26} parent=5 // pred_fallthru
      _
    %p250 = scmp.le.s32.totalorder 1, %s10
    %p251 = scmp.lt.s32.totalorder %s10, 3
    %p252 = pnand %p250, %p251
    %p253 = pneg %p252
    // Predicated region
    $region33: #{transformer_forward.26} parent=5 // pred_check
      _
    $region34: #{transformer_forward.26} parent=5 // pred_check_branch
      %255 = sbr.rel (%p252) target = $region36
    $region35: #{transformer_forward.26} parent=5 // pred_region
      %s256 = ssub.s32 %s10, 1
      %p257 = scmp.lt.s32.totalorder %s20, 1
      %s258 = scalar_select %p257, %s20, 1
      %p259 = scmp.lt.s32.totalorder %s22, 0
      %s260 = scalar_select %p259, %s22, 0
      %s261 = sadd.s32 %s260, %s258
      %s262 = scalar_lea.vmem %s0, %s261
      %p263 = pneg %p57
      %p264 = pneg %p54
      %p265 = scmp.lt.s32.totalorder %s20, 1
      %s266 = scalar_select %p265, %s20, 1
      %p267 = scmp.lt.s32.totalorder %s21, 2
      %s268 = scalar_select %p267, %s21, 2
      %s269 = smul.addr %s266, 3
      %s270 = sadd.s32 %s268, %s269
      %s271 = smul.addr %s270, 4
      %s272 = scalar_lea.vmem %s1, %s271
      %p273 = pneg %p85
      %p274 = pneg %p82
      %s275 = sadd.s32 %s21, 1
      %p276 = scmp.lt.s32.totalorder %s20, 1
      %s277 = scalar_select %p276, %s20, 1
      %p278 = scmp.lt.s32.totalorder %s22, 0
      %s279 = scalar_select %p278, %s22, 0
      %p280 = scmp.lt.s32.totalorder %s275, 2
      %s281 = scalar_select %p280, %s275, 2
      %s282 = smul.addr %s279, 3
      %s283 = sadd.s32 %s281, %s282
      %s284 = smul.addr %s277, 3
      %s285 = sadd.s32 %s283, %s284
      %s286 = smul.addr %s285, 4
      %s287 = scalar_lea.vmem %s2, %s286
      %p288 = pneg %p117
      %p289 = pneg %p114
      %s290 = sadd.s32 %s21, 2
      %p291 = scmp.lt.s32.totalorder %s20, 1
      %s292 = scalar_select %p291, %s20, 1
      %p293 = scmp.lt.s32.totalorder %s22, 0
      %s294 = scalar_select %p293, %s22, 0
      %p295 = scmp.lt.s32.totalorder %s290, 2
      %s296 = scalar_select %p295, %s290, 2
      %s297 = smul.addr %s294, 3
      %s298 = sadd.s32 %s296, %s297
      %s299 = smul.addr %s292, 3
      %s300 = sadd.s32 %s298, %s299
      %s301 = smul.addr %s300, 4
      %s302 = scalar_lea.vmem %s3, %s301
      %p303 = pneg %p149
      %p304 = pneg %p146
      %p305 = pneg %p177
      %p306 = pneg %p174
      %p307 = scmp.lt.s32.totalorder %s20, 1
      %s308 = scalar_select %p307, %s20, 1
      %p309 = scmp.lt.s32.totalorder %s21, 0
      %s310 = scalar_select %p309, %s21, 0
      %s311 = sadd.s32 %s310, %s308
      %s312 = smul.addr %s311, 4
      %s313 = scalar_lea.vmem %s4, %s312
      %p314 = scmp.lt.s32.totalorder %s20, 1
      %s315 = scalar_select %p314, %s20, 1
      %p316 = scmp.lt.s32.totalorder %s22, 0
      %s317 = scalar_select %p316, %s22, 0
      %s318 = sadd.s32 %s317, %s315
      %s319 = scalar_lea.vmem %s0, %s318
      %p320 = scmp.lt.s32.totalorder %s20, 1
      %s321 = scalar_select %p320, %s20, 1
      %p322 = scmp.lt.s32.totalorder %s21, 2
      %s323 = scalar_select %p322, %s21, 2
      %s324 = smul.addr %s321, 3
      %s325 = sadd.s32 %s323, %s324
      %s326 = smul.addr %s325, 4
      %s327 = scalar_lea.vmem %s1, %s326
      %s328 = sadd.s32 %s21, 1
      %p329 = scmp.lt.s32.totalorder %s20, 1
      %s330 = scalar_select %p329, %s20, 1
      %p331 = scmp.lt.s32.totalorder %s22, 0
      %s332 = scalar_select %p331, %s22, 0
      %p333 = scmp.lt.s32.totalorder %s328, 2
      %s334 = scalar_select %p333, %s328, 2
      %s335 = smul.addr %s332, 3
      %s336 = sadd.s32 %s334, %s335
      %s337 = smul.addr %s330, 3
      %s338 = sadd.s32 %s336, %s337
      %s339 = smul.addr %s338, 4
      %s340 = scalar_lea.vmem %s2, %s339
      %s341 = sadd.s32 %s21, 1
      %s342 = sadd.s32 %s21, 2
      %p343 = scmp.lt.s32.totalorder %s20, 1
      %s344 = scalar_select %p343, %s20, 1
      %p345 = scmp.lt.s32.totalorder %s22, 0
      %s346 = scalar_select %p345, %s22, 0
      %p347 = scmp.lt.s32.totalorder %s342, 2
      %s348 = scalar_select %p347, %s342, 2
      %s349 = smul.addr %s346, 3
      %s350 = sadd.s32 %s348, %s349
      %s351 = smul.addr %s344, 3
      %s352 = sadd.s32 %s350, %s351
      %s353 = smul.addr %s352, 4
      %s354 = scalar_lea.vmem %s3, %s353
      %s355 = sadd.s32 %s21, 2
      %p356 = scmp.lt.s32.totalorder %s20, 1
      %s357 = scalar_select %p356, %s20, 1
      %p358 = scmp.lt.s32.totalorder %s21, 0
      %s359 = scalar_select %p358, %s21, 0
      %s360 = sadd.s32 %s359, %s357
      %s361 = smul.addr %s360, 4
      %s362 = scalar_lea.vmem %s4, %s361
      %p364 = scmp.eq.s32.totalorder %s22, 0
      // Predicated region
      $region37: #{transformer_forward.26} parent=35 // pred_check
        %p365 = pneg %p364
      $region38: #{transformer_forward.26} parent=35 // pred_check_branch
        %367 = sbr.rel (%p365) target = $region40
      $region39: #{transformer_forward.26} parent=35 // pred_region
        %vm368 = vcmask 7168
        %369 = vst.msk [vmem:[#allocation2] sm:$0xff] %vm368, -1e+30
        %370 = vst.msk [vmem:[#allocation2 + $0x8] sm:$0xff] %vm368, -1e+30
        %371 = vst.msk [vmem:[#allocation2 + $0x10] sm:$0xff] %vm368, -1e+30
        %372 = vst.msk [vmem:[#allocation2 + $0x18] sm:$0xff] %vm368, -1e+30
        %373 = vst.msk [vmem:[#allocation3] sm:$0xff] %vm368, 0.0
        %374 = vst.msk [vmem:[#allocation3 + $0x8] sm:$0xff] %vm368, 0.0
        %375 = vst.msk [vmem:[#allocation3 + $0x10] sm:$0xff] %vm368, 0.0
        %376 = vst.msk [vmem:[#allocation3 + $0x18] sm:$0xff] %vm368, 0.0
        %377 = vst [vmem:[#allocation4] sm:$0xff] 0.0
      $region40: #{transformer_forward.26} parent=35 // pred_fallthru
        _
      %v378 = vld [vmem:[%s327] sm:$0xf]
      %v379 = vld [vmem:[%s340] sm:$0xf]
      %v380 = vld [vmem:[%s354] sm:$0xf]
      %v381 = vld [vmem:[%s319] sm:$0x1]
      %vm382 = vcmp.eq.s32.totalorder %v381, 0
      %v383 = vsel %vm382, -1e+09, 0.0
      %vm384 = vcmask 261120
      %v386 = vsel %vm384, %v378, 0
      %v389 = vsel %vm384, %v379, 0
      %391 = vmatpush.bf16.xpose.msra.mxu0 0
      %392 = vmatpush.bf16.xpose.msra.mxu0 0
      %393 = vmatpush.bf16.xpose.msra.mxu0 0
      %394 = vmatpush.bf16.xpose.msra.mxu0 0
      %395 = vmatpush.bf16.xpose.msra.mxu0 0
      %396 = vmatpush.bf16.xpose.msra.mxu0 0
      %397 = vmatpush.bf16.xpose.msra.mxu0 0
      %398 = vmatpush.bf16.xpose.msra.mxu0 %v389
      %399 = vmatmul.bf16.gmra.mxu0 %v386
      %v400 = vpop.f32.mrf.mxu0
      %v401 = vadd.f32 0.0, %v400
      %v402 = vpop.f32.mrf.mxu0
      %403 = vdwg.mxu0
      %v404 = vmul.f32 %v401, 0.17677669
      %v406 = vperm.slane %v383, 0
      %v408 = vadd.f32 %v404, %v406
      %v409 = vld [vmem:[#allocation2] sm:$0xff]
      %vm410 = vcmask 64512
      %v411 = vsel %vm410, %v408, -inf
      %412 = vmax.xlane.f32.xlu0 %v411
      %v413 = vpop.xlane.xlu0 %412
      %v414 = vmax.f32 %v409, %v413
      %v415 = vsub.f32 %v409, %v414
      %v416 = vmul.f32 %v415, 1.442695
      %v417 = vpow.pop %v416
      %419 = vset.pattern.permute.xlu0 0
      %420 = vperm.xlu0 %419, %v414
      %v421 = vpop.permute.xlu0 %420
      %v423 = vsub.f32 %v408, %v421
      %v424 = vmul.f32 %v423, 1.442695
      %v425 = vpow.pop %v424
      %v426 = vld [vmem:[#allocation3] sm:$0xff]
      %v427 = vmul.f32 %v417, %v426
      %v428 = vsel %vm410, %v425, 0.0
      %429 = vadd.xlane.f32.xlu0 %v428
      %v430 = vpop.xlane.xlu0 %429
      %v431 = vadd.f32 %v427, %v430
      %vm432 = vcmask 7168
      %433 = vst.msk [vmem:[#allocation3] sm:$0xff] %vm432, %v431
      %v434 = vld [vmem:[#allocation4] sm:$0xff]
      %436 = vset.pattern.permute.xlu0 0
      %437 = vperm.xlu0 %436, %v417
      %v438 = vpop.permute.xlu0 %437
      %v440 = vmul.f32 %v438, %v434
      %v441 = vpack.c.bf16 %v425, %v425
      %v443 = vsel %vm410, %v441, 0
      %vm445 = vcmask 1043456
      %v447 = vsel %vm445, %v380, 0
      %449 = vmatpush.bf16.msra.mxu0 0
      %450 = vmatpush.bf16.msra.mxu0 0
      %451 = vmatpush.bf16.msra.mxu0 0
      %452 = vmatpush.bf16.msra.mxu0 0
      %453 = vmatpush.bf16.msra.mxu0 0
      %454 = vmatpush.bf16.msra.mxu0 0
      %455 = vmatpush.bf16.msra.mxu0 0
      %456 = vmatpush.bf16.msra.mxu0 %v447
      %457 = vmatmul.bf16.gmra.mxu0 %v443
      %v458 = vpop.f32.mrf.mxu0
      %v459 = vadd.f32 0.0, %v458
      %v460 = vpop.f32.mrf.mxu0
      %461 = vdwg.mxu0
      %v462 = vadd.f32 %v440, %v459
      %463 = vst.msk [vmem:[#allocation4] sm:$0xff] %vm384, %v462
      %464 = vst.msk [vmem:[#allocation2] sm:$0xff] %vm432, %v414
      %v466 = vunpack.c.l.b16 %v378
      %v467 = vpack.c.b16 %v466, %v466
      %468 = vrot.lane.b32.xlu0 %v467, 96
      %v469 = vpop.permute.xlu0 %468
      %v471 = vunpack.c.l.b16 %v379
      %v472 = vpack.c.b16 %v471, %v471
      %473 = vrot.lane.b32.xlu0 %v472, 96
      %v474 = vpop.permute.xlu0 %473
      %v476 = vsel %vm384, %v469, 0
      %v479 = vsel %vm384, %v474, 0
      %481 = vmatpush.bf16.xpose.msra.mxu0 0
      %482 = vmatpush.bf16.xpose.msra.mxu0 0
      %483 = vmatpush.bf16.xpose.msra.mxu0 0
      %484 = vmatpush.bf16.xpose.msra.mxu0 0
      %485 = vmatpush.bf16.xpose.msra.mxu0 0
      %486 = vmatpush.bf16.xpose.msra.mxu0 0
      %487 = vmatpush.bf16.xpose.msra.mxu0 0
      %488 = vmatpush.bf16.xpose.msra.mxu0 %v479
      %489 = vmatmul.bf16.gmra.mxu0 %v476
      %v490 = vpop.f32.mrf.mxu0
      %v491 = vadd.f32 0.0, %v490
      %v492 = vpop.f32.mrf.mxu0
      %493 = vdwg.mxu0
      %v494 = vmul.f32 %v491, 0.17677669
      %v495 = vadd.f32 %v494, %v406
      %s496 = scalar_lea.vmem [#allocation2], 8
      %v497 = vld [vmem:[%s496] sm:$0xff]
      %v498 = vsel %vm410, %v495, -inf
      %499 = vmax.xlane.f32.xlu0 %v498
      %v500 = vpop.xlane.xlu0 %499
      %v501 = vmax.f32 %v497, %v500
      %v502 = vsub.f32 %v497, %v501
      %v503 = vmul.f32 %v502, 1.442695
      %v504 = vpow.pop %v503
      %506 = vset.pattern.permute.xlu0 0
      %507 = vperm.xlu0 %506, %v501
      %v508 = vpop.permute.xlu0 %507
      %v510 = vsub.f32 %v495, %v508
      %v511 = vmul.f32 %v510, 1.442695
      %v512 = vpow.pop %v511
      %s513 = scalar_lea.vmem [#allocation3], 8
      %v514 = vld [vmem:[%s513] sm:$0xff]
      %v515 = vmul.f32 %v504, %v514
      %v516 = vsel %vm410, %v512, 0.0
      %517 = vadd.xlane.f32.xlu0 %v516
      %v518 = vpop.xlane.xlu0 %517
      %v519 = vadd.f32 %v515, %v518
      %520 = vst.msk [vmem:[%s513] sm:$0xff] %vm432, %v519
      %v521 = vld [vmem:[#allocation4] sm:$0xff]
      %523 = vset.pattern.permute.xlu0 0
      %524 = vperm.xlu0 %523, %v504
      %v525 = vpop.permute.xlu0 %524
      %v527 = vmul.f32 %v525, %v521
      %v528 = vpack.c.bf16 %v512, %v512
      %v530 = vunpack.c.l.b16 %v380
      %v531 = vpack.c.b16 %v530, %v530
      %532 = vrot.lane.b32.xlu0 %v531, 96
      %v533 = vpop.permute.xlu0 %532
      %v535 = vsel %vm410, %v528, 0
      %v538 = vsel %vm445, %v533, 0
      %540 = vmatpush.bf16.msra.mxu0 0
      %541 = vmatpush.bf16.msra.mxu0 0
      %542 = vmatpush.bf16.msra.mxu0 0
      %543 = vmatpush.bf16.msra.mxu0 0
      %544 = vmatpush.bf16.msra.mxu0 0
      %545 = vmatpush.bf16.msra.mxu0 0
      %546 = vmatpush.bf16.msra.mxu0 0
      %547 = vmatpush.bf16.msra.mxu0 %v538
      %548 = vmatmul.bf16.gmra.mxu0 %v535
      %v549 = vpop.f32.mrf.mxu0
      %v550 = vadd.f32 0.0, %v549
      %v551 = vpop.f32.mrf.mxu0
      %552 = vdwg.mxu0
      %554 = vrot.lane.b32.xlu0 %v550, 32
      %v555 = vpop.permute.xlu0 %554
      %v557 = vadd.f32 %v527, %v555
      %vm558 = vcmask 523520
      %559 = vst.msk [vmem:[#allocation4] sm:$0xff] %vm558, %v557
      %560 = vst.msk [vmem:[%s496] sm:$0xff] %vm432, %v501
      %561 = vrot.lane.b32.xlu0 %v467, 64
      %v562 = vpop.permute.xlu0 %561
      %563 = vrot.lane.b32.xlu0 %v472, 64
      %v564 = vpop.permute.xlu0 %563
      %v566 = vsel %vm384, %v562, 0
      %v569 = vsel %vm384, %v564, 0
      %571 = vmatpush.bf16.xpose.msra.mxu0 0
      %572 = vmatpush.bf16.xpose.msra.mxu0 0
      %573 = vmatpush.bf16.xpose.msra.mxu0 0
      %574 = vmatpush.bf16.xpose.msra.mxu0 0
      %575 = vmatpush.bf16.xpose.msra.mxu0 0
      %576 = vmatpush.bf16.xpose.msra.mxu0 0
      %577 = vmatpush.bf16.xpose.msra.mxu0 0
      %578 = vmatpush.bf16.xpose.msra.mxu0 %v569
      %579 = vmatmul.bf16.gmra.mxu0 %v566
      %v580 = vpop.f32.mrf.mxu0
      %v581 = vadd.f32 0.0, %v580
      %v582 = vpop.f32.mrf.mxu0
      %583 = vdwg.mxu0
      %v584 = vmul.f32 %v581, 0.17677669
      %v585 = vadd.f32 %v584, %v406
      %s586 = scalar_lea.vmem [#allocation2], 16
      %v587 = vld [vmem:[%s586] sm:$0xff]
      %v588 = vsel %vm410, %v585, -inf
      %589 = vmax.xlane.f32.xlu0 %v588
      %v590 = vpop.xlane.xlu0 %589
      %v591 = vmax.f32 %v587, %v590
      %v592 = vsub.f32 %v587, %v591
      %v593 = vmul.f32 %v592, 1.442695
      %v594 = vpow.pop %v593
      %596 = vset.pattern.permute.xlu0 0
      %597 = vperm.xlu0 %596, %v591
      %v598 = vpop.permute.xlu0 %597
      %v600 = vsub.f32 %v585, %v598
      %v601 = vmul.f32 %v600, 1.442695
      %v602 = vpow.pop %v601
      %s603 = scalar_lea.vmem [#allocation3], 16
      %v604 = vld [vmem:[%s603] sm:$0xff]
      %v605 = vmul.f32 %v594, %v604
      %v606 = vsel %vm410, %v602, 0.0
      %607 = vadd.xlane.f32.xlu0 %v606
      %v608 = vpop.xlane.xlu0 %607
      %v609 = vadd.f32 %v605, %v608
      %610 = vst.msk [vmem:[%s603] sm:$0xff] %vm432, %v609
      %v611 = vld [vmem:[#allocation4] sm:$0xff]
      %613 = vset.pattern.permute.xlu0 0
      %614 = vperm.xlu0 %613, %v594
      %v615 = vpop.permute.xlu0 %614
      %v617 = vmul.f32 %v615, %v611
      %v618 = vpack.c.bf16 %v602, %v602
      %619 = vrot.lane.b32.xlu0 %v531, 64
      %v620 = vpop.permute.xlu0 %619
      %v622 = vsel %vm410, %v618, 0
      %v625 = vsel %vm445, %v620, 0
      %627 = vmatpush.bf16.msra.mxu0 0
      %628 = vmatpush.bf16.msra.mxu0 0
      %629 = vmatpush.bf16.msra.mxu0 0
      %630 = vmatpush.bf16.msra.mxu0 0
      %631 = vmatpush.bf16.msra.mxu0 0
      %632 = vmatpush.bf16.msra.mxu0 0
      %633 = vmatpush.bf16.msra.mxu0 0
      %634 = vmatpush.bf16.msra.mxu0 %v625
      %635 = vmatmul.bf16.gmra.mxu0 %v622
      %v636 = vpop.f32.mrf.mxu0
      %v637 = vadd.f32 0.0, %v636
      %v638 = vpop.f32.mrf.mxu0
      %639 = vdwg.mxu0
      %641 = vrot.lane.b32.xlu0 %v637, 64
      %v642 = vpop.permute.xlu0 %641
      %v644 = vadd.f32 %v617, %v642
      %vm645 = vcmask 785920
      %646 = vst.msk [vmem:[#allocation4] sm:$0xff] %vm645, %v644
      %647 = vst.msk [vmem:[%s586] sm:$0xff] %vm432, %v591
      %648 = vrot.lane.b32.xlu0 %v467, 32
      %v649 = vpop.permute.xlu0 %648
      %650 = vrot.lane.b32.xlu0 %v472, 32
      %v651 = vpop.permute.xlu0 %650
      %v653 = vsel %vm384, %v649, 0
      %v656 = vsel %vm384, %v651, 0
      %658 = vmatpush.bf16.xpose.msra.mxu0 0
      %659 = vmatpush.bf16.xpose.msra.mxu0 0
      %660 = vmatpush.bf16.xpose.msra.mxu0 0
      %661 = vmatpush.bf16.xpose.msra.mxu0 0
      %662 = vmatpush.bf16.xpose.msra.mxu0 0
      %663 = vmatpush.bf16.xpose.msra.mxu0 0
      %664 = vmatpush.bf16.xpose.msra.mxu0 0
      %665 = vmatpush.bf16.xpose.msra.mxu0 %v656
      %666 = vmatmul.bf16.gmra.mxu0 %v653
      %v667 = vpop.f32.mrf.mxu0
      %v668 = vadd.f32 0.0, %v667
      %v669 = vpop.f32.mrf.mxu0
      %670 = vdwg.mxu0
      %v671 = vmul.f32 %v668, 0.17677669
      %v672 = vadd.f32 %v671, %v406
      %s673 = scalar_lea.vmem [#allocation2], 24
      %v674 = vld [vmem:[%s673] sm:$0xff]
      %v675 = vsel %vm410, %v672, -inf
      %676 = vmax.xlane.f32.xlu0 %v675
      %v677 = vpop.xlane.xlu0 %676
      %v678 = vmax.f32 %v674, %v677
      %v679 = vsub.f32 %v674, %v678
      %v680 = vmul.f32 %v679, 1.442695
      %v681 = vpow.pop %v680
      %683 = vset.pattern.permute.xlu0 0
      %684 = vperm.xlu0 %683, %v678
      %v685 = vpop.permute.xlu0 %684
      %v687 = vsub.f32 %v672, %v685
      %v688 = vmul.f32 %v687, 1.442695
      %v689 = vpow.pop %v688
      %s690 = scalar_lea.vmem [#allocation3], 24
      %v691 = vld [vmem:[%s690] sm:$0xff]
      %v692 = vmul.f32 %v681, %v691
      %v693 = vsel %vm410, %v689, 0.0
      %694 = vadd.xlane.f32.xlu0 %v693
      %v695 = vpop.xlane.xlu0 %694
      %v696 = vadd.f32 %v692, %v695
      %697 = vst.msk [vmem:[%s690] sm:$0xff] %vm432, %v696
      %v698 = vld [vmem:[#allocation4] sm:$0xff]
      %700 = vset.pattern.permute.xlu0 0
      %701 = vperm.xlu0 %700, %v681
      %v702 = vpop.permute.xlu0 %701
      %v704 = vmul.f32 %v702, %v698
      %v705 = vpack.c.bf16 %v689, %v689
      %706 = vrot.lane.b32.xlu0 %v531, 32
      %v707 = vpop.permute.xlu0 %706
      %v709 = vsel %vm410, %v705, 0
      %v712 = vsel %vm445, %v707, 0
      %714 = vmatpush.bf16.msra.mxu0 0
      %715 = vmatpush.bf16.msra.mxu0 0
      %716 = vmatpush.bf16.msra.mxu0 0
      %717 = vmatpush.bf16.msra.mxu0 0
      %718 = vmatpush.bf16.msra.mxu0 0
      %719 = vmatpush.bf16.msra.mxu0 0
      %720 = vmatpush.bf16.msra.mxu0 0
      %721 = vmatpush.bf16.msra.mxu0 %v712
      %722 = vmatmul.bf16.gmra.mxu0 %v709
      %v723 = vpop.f32.mrf.mxu0
      %v724 = vadd.f32 0.0, %v723
      %v725 = vpop.f32.mrf.mxu0
      %726 = vdwg.mxu0
      %728 = vrot.lane.b32.xlu0 %v724, 96
      %v729 = vpop.permute.xlu0 %728
      %v731 = vadd.f32 %v704, %v729
      %vm732 = vcmask 1048320
      %733 = vst.msk [vmem:[#allocation4] sm:$0xff] %vm732, %v731
      %734 = vst.msk [vmem:[%s673] sm:$0xff] %vm432, %v678
      // Predicated region
      $region41: #{transformer_forward.26} parent=35 // pred_check
        %p735 = pneg %p364
      $region42: #{transformer_forward.26} parent=35 // pred_check_branch
        %737 = sbr.rel (%p735) target = $region44
      $region43: #{transformer_forward.26} parent=35 // pred_region
        %v738 = vld [vmem:[#allocation4] sm:$0xff]
        %v739 = vld [vmem:[#allocation3] sm:$0xff]
        %v740 = vrcp.pop %v739
        %742 = vset.pattern.permute.xlu0 0
        %743 = vperm.xlu0 %742, %v740
        %v744 = vpop.permute.xlu0 %743
        %v746 = vmul.f32 %v738, %v744
        %747 = vst.msk [vmem:[#allocation4] sm:$0xff] %vm384, %v746
        %v748 = vld [vmem:[#allocation4] sm:$0xff]
        %v749 = vld [vmem:[%s513] sm:$0xff]
        %v750 = vrcp.pop %v749
        %752 = vset.pattern.permute.xlu0 0
        %753 = vperm.xlu0 %752, %v750
        %v754 = vpop.permute.xlu0 %753
        %v756 = vmul.f32 %v748, %v754
        %757 = vst.msk [vmem:[#allocation4] sm:$0xff] %vm558, %v756
        %v758 = vld [vmem:[#allocation4] sm:$0xff]
        %v759 = vld [vmem:[%s603] sm:$0xff]
        %v760 = vrcp.pop %v759
        %762 = vset.pattern.permute.xlu0 0
        %763 = vperm.xlu0 %762, %v760
        %v764 = vpop.permute.xlu0 %763
        %v766 = vmul.f32 %v758, %v764
        %767 = vst.msk [vmem:[#allocation4] sm:$0xff] %vm645, %v766
        %v768 = vld [vmem:[#allocation4] sm:$0xff]
        %v769 = vld [vmem:[%s690] sm:$0xff]
        %v770 = vrcp.pop %v769
        %772 = vset.pattern.permute.xlu0 0
        %773 = vperm.xlu0 %772, %v770
        %v774 = vpop.permute.xlu0 %773
        %v776 = vmul.f32 %v768, %v774
        %777 = vst.msk [vmem:[#allocation4] sm:$0xff] %vm732, %v776
        %v778 = vld [vmem:[#allocation4] sm:$0xff]
        %v779 = vpack.c.bf16 %v778, %v778
        %780 = vst [vmem:[%s362] sm:$0xf] %v779
      $region44: #{transformer_forward.26} parent=35 // pred_fallthru
        _
      %p781 = scmp.lt.s32.totalorder %s20, 1
      %s782 = scalar_select %p781, %s20, 1
      %p783 = scmp.lt.s32.totalorder %s21, 0
      %s784 = scalar_select %p783, %s21, 0
      %s785 = sadd.s32 %s784, %s782
      %s786 = smul.addr %s785, 4
      %s787 = scalar_lea.vmem %s4, %s786
      // Predicated region
      $region45: #{transformer_forward.26} parent=35 // pred_check
        %p788 = pneg %p174
      $region46: #{transformer_forward.26} parent=35 // pred_check_branch
        %790 = sbr.rel (%p788) target = $region48
      $region47: #{transformer_forward.26} parent=35 // pred_region
        _
      $region48: #{transformer_forward.26} parent=35 // pred_fallthru
        _
    $region36: #{transformer_forward.26} parent=5 // pred_fallthru
      _
    %p791 = scmp.le.s32.totalorder 2, %s10
    // Predicated region
    $region49: #{transformer_forward.26} parent=5 // pred_check
      %p792 = pneg %p791
    $region50: #{transformer_forward.26} parent=5 // pred_check_branch
      %794 = sbr.rel (%p792) target = $region52
    $region51: #{transformer_forward.26} parent=5 // pred_region
      %s795 = ssub.s32 %s10, 2
      // Predicated region
      $region53: #{transformer_forward.26} parent=51 // pred_check
        %p796 = pneg %p180
      $region54: #{transformer_forward.26} parent=51 // pred_check_branch
        %798 = sbr.rel (%p796) target = $region56
      $region55: #{transformer_forward.26} parent=51 // pred_region
        %p799 = scmp.lt.s32.totalorder %s23, 1
        %s800 = scalar_select %p799, %s23, 1
        %p801 = scmp.lt.s32.totalorder %s24, 0
        %s802 = scalar_select %p801, %s24, 0
        %s803 = sadd.s32 %s802, %s800
        %s804 = smul.addr %s803, 4
        %s805 = scalar_lea.vmem %s4, %s804
      $region56: #{transformer_forward.26} parent=51 // pred_fallthru
        _
    $region52: #{transformer_forward.26} parent=5 // pred_fallthru
      _
  $region6: #{transformer_forward.26} parent=0 // loop_footer
    %s14 = sadd.s32 1, %s10
  $region7: #{transformer_forward.26} parent=0 // loop_footer_branch
    %9 = sbr.rel target = $region3
  $region8: #{transformer_forward.26} parent=0 // loop_exit
    _

// kernel: transformer_forward.28
$region0: #{transformer_forward.28}
  #allocation0 [shape = 'u32[]', space=smem, size = 0x4, offset = 0x4, fixed_abs, tag = 'smem constant byte address 0x4 - core index']
  #allocation1 [shape = 'u32[72,128]{1,0:T(1,128)}', space=vmem, size = 0x9000, scoped, tag = 'internal scratch']
  #allocation2 [shape = 'f32[16,128]{1,0:T(8,128)}', space=vmem, size = 0x2000, scoped, tag = 'scratch operand']
  %s0 = inlined_call_operand.vmem [shape: bf16[16,128], index: 0, kind: input, shape index: {}, may-alias: {0,5}]
  %s1 = inlined_call_operand.vmem [shape: bf16[128,512], index: 1, kind: input, shape index: {}]
  %s2 = inlined_call_operand.vmem [shape: f32[1,512], index: 2, kind: input, shape index: {}]
  %s3 = inlined_call_operand.hbm [shape: bf16[512,128], index: 3, kind: input, shape index: {}]
  %s4 = inlined_call_operand.vmem [shape: f32[1,128], index: 4, kind: input, shape index: {}]
  %s5 = inlined_call_operand.vmem [shape: bf16[16,128], index: 5, kind: input, shape index: {}, may-alias: {0,5}]
  %s6 = inlined_call_operand.vmem [shape: f32[1,128], index: 6, kind: input, shape index: {}]
  %s7 = inlined_call_operand.vmem [shape: f32[1,128], index: 7, kind: input, shape index: {}]
  %s8 = inlined_call_operand.vmem [shape: bf16[16,128], index: 8, kind: output, shape index: {}]
  %s9 = sld [smem:[#allocation0]]
  $region54: #{transformer_forward.28} parent=0
    _
  %s11 = ssub.s32 1, %s9
  %s12 = scalar_select 0, %s11, %s9
  $region1: #{transformer_forward.28} parent=0
    #allocation3 [shape = 'u8[131072]{0}', space=vmem, size = 0x20000, scoped, tag = 'input window, operand 3, single buffered']
    #allocation4 [shape = 's32[1]{0}', space=sflag, size = 0x4, scoped, tag = 'scoped memory for transformer_forward.28']
    %13 = vsyncpa [#allocation4], 0
    // Predicated region
    $region2: #{transformer_forward.28} parent=1 // pred_check
      _
    $region3: #{transformer_forward.28} parent=1 // pred_check_branch
      %15 = sbr.rel (0) target = $region5
    $region4: #{transformer_forward.28} parent=1 // pred_region
      _
    $region5: #{transformer_forward.28} parent=1 // pred_fallthru
      _
    // Predicated region
    $region6: #{transformer_forward.28} parent=1 // pred_check
      _
    $region7: #{transformer_forward.28} parent=1 // pred_check_branch
      %17 = sbr.rel (0) target = $region9
    $region8: #{transformer_forward.28} parent=1 // pred_region
      _
    $region9: #{transformer_forward.28} parent=1 // pred_fallthru
      _
    // Predicated region
    $region10: #{transformer_forward.28} parent=1 // pred_check
      _
    $region11: #{transformer_forward.28} parent=1 // pred_check_branch
      %19 = sbr.rel (0) target = $region13
    $region12: #{transformer_forward.28} parent=1 // pred_region
      _
    $region13: #{transformer_forward.28} parent=1 // pred_fallthru
      _
    // Predicated region
    $region14: #{transformer_forward.28} parent=1 // pred_check
      _
    $region15: #{transformer_forward.28} parent=1 // pred_check_branch
      %21 = sbr.rel (0) target = $region17
    $region16: #{transformer_forward.28} parent=1 // pred_region
      %23 = vsyncadd [#allocation4], 0
      %s24 = sshll.u32 %s3, 4
      %s25 = int_to_ptr.hbm [resolvable:$true] %s24
      %s26 = sshll.u32 [#allocation3], 4
      %s27 = int_to_ptr.vmem [resolvable:$true] %s26
      %32 = dma.hbm_to_vmem [thread:$0]  %s25, 4096, %s27, [#allocation4], 64, 64, 4
    $region17: #{transformer_forward.28} parent=1 // pred_fallthru
      _
    // Predicated region
    $region18: #{transformer_forward.28} parent=1 // pred_check
      _
    $region19: #{transformer_forward.28} parent=1 // pred_check_branch
      %34 = sbr.rel (0) target = $region21
    $region20: #{transformer_forward.28} parent=1 // pred_region
      _
    $region21: #{transformer_forward.28} parent=1 // pred_fallthru
      _
    // Predicated region
    $region22: #{transformer_forward.28} parent=1 // pred_check
      _
    $region23: #{transformer_forward.28} parent=1 // pred_check_branch
      %36 = sbr.rel (0) target = $region25
    $region24: #{transformer_forward.28} parent=1 // pred_region
      _
    $region25: #{transformer_forward.28} parent=1 // pred_fallthru
      _
    // Predicated region
    $region26: #{transformer_forward.28} parent=1 // pred_check
      _
    $region27: #{transformer_forward.28} parent=1 // pred_check_branch
      %38 = sbr.rel (0) target = $region29
    $region28: #{transformer_forward.28} parent=1 // pred_region
      _
    $region29: #{transformer_forward.28} parent=1 // pred_fallthru
      _
    // Predicated region
    $region30: #{transformer_forward.28} parent=1 // pred_check
      _
    $region31: #{transformer_forward.28} parent=1 // pred_check_branch
      %40 = sbr.rel (0) target = $region33
    $region32: #{transformer_forward.28} parent=1 // pred_region
      _
    $region33: #{transformer_forward.28} parent=1 // pred_fallthru
      _
    // Predicated region
    $region34: #{transformer_forward.28} parent=1 // pred_check
      _
    $region35: #{transformer_forward.28} parent=1 // pred_check_branch
      %42 = sbr.rel (0) target = $region37
    $region36: #{transformer_forward.28} parent=1 // pred_region
      %44 = dma.done [#allocation4], 4096
    $region37: #{transformer_forward.28} parent=1 // pred_fallthru
      _
    %p45 = scmp.eq.s32.totalorder 0, 0
    // Predicated region
    $region38: #{transformer_forward.28} parent=1 // pred_check
      %p46 = pneg %p45
    $region39: #{transformer_forward.28} parent=1 // pred_check_branch
      %48 = sbr.rel (%p46) target = $region41
    $region40: #{transformer_forward.28} parent=1 // pred_region
      %49 = vst [vmem:[#allocation2] sm:$0xff] 0.0
      %50 = vst [vmem:[#allocation2 + $0x8] sm:$0xff] 0.0
    $region41: #{transformer_forward.28} parent=1 // pred_fallthru
      _
    %v51 = vld [vmem:[%s0] sm:$0xf]
    %v52 = vld [vmem:[%s0 + $0x4] sm:$0xf]
    %v53 = vld [vmem:[%s1] sm:$0xff]
    %v54 = vld [vmem:[%s1 + $0x8] sm:$0xff]
    %v55 = vld [vmem:[%s1 + $0x10] sm:$0xff]
    %v56 = vld [vmem:[%s1 + $0x18] sm:$0xff]
    %v57 = vld [vmem:[%s1 + $0x20] sm:$0xff]
    %v58 = vld [vmem:[%s1 + $0x28] sm:$0xff]
    %v59 = vld [vmem:[%s1 + $0x30] sm:$0xff]
    %v60 = vld [vmem:[%s1 + $0x38] sm:$0xff]
    %v61 = vld [vmem:[%s1 + $0x40] sm:$0xff]
    %v62 = vld [vmem:[%s1 + $0x48] sm:$0xff]
    %v63 = vld [vmem:[%s1 + $0x50] sm:$0xff]
    %v64 = vld [vmem:[%s1 + $0x58] sm:$0xff]
    %v65 = vld [vmem:[%s1 + $0x60] sm:$0xff]
    %v66 = vld [vmem:[%s1 + $0x68] sm:$0xff]
    %v67 = vld [vmem:[%s1 + $0x70] sm:$0xff]
    %v68 = vld [vmem:[%s1 + $0x78] sm:$0xff]
    %v69 = vld [vmem:[%s1 + $0x80] sm:$0xff]
    %v70 = vld [vmem:[%s1 + $0x88] sm:$0xff]
    %v71 = vld [vmem:[%s1 + $0x90] sm:$0xff]
    %v72 = vld [vmem:[%s1 + $0x98] sm:$0xff]
    %v73 = vld [vmem:[%s1 + $0xa0] sm:$0xff]
    %v74 = vld [vmem:[%s1 + $0xa8] sm:$0xff]
    %v75 = vld [vmem:[%s1 + $0xb0] sm:$0xff]
    %v76 = vld [vmem:[%s1 + $0xb8] sm:$0xff]
    %v77 = vld [vmem:[%s1 + $0xc0] sm:$0xff]
    %v78 = vld [vmem:[%s1 + $0xc8] sm:$0xff]
    %v79 = vld [vmem:[%s1 + $0xd0] sm:$0xff]
    %v80 = vld [vmem:[%s1 + $0xd8] sm:$0xff]
    %v81 = vld [vmem:[%s1 + $0xe0] sm:$0xff]
    %v82 = vld [vmem:[%s1 + $0xe8] sm:$0xff]
    %v83 = vld [vmem:[%s1 + $0xf0] sm:$0xff]
    %v84 = vld [vmem:[%s1 + $0xf8] sm:$0xff]
    %v85 = vld [vmem:[%s2] sm:$0xf]
    %v87 = vperm.slane %v85, 0
    %v88 = vperm.slane %v85, 1
    %v89 = vperm.slane %v85, 2
    %v90 = vperm.slane %v85, 3
    %v97 = vunpack.c.l.b16 %v51
    %v98 = vunpack.c.l.b16 %v52
    %v99 = vpack.c.b16 %v98, %v97
    %v133 = vunpack.c.l.b16 %v53
    %v134 = vunpack.c.h.b16 %v53
    %v135 = vunpack.c.l.b16 %v54
    %v136 = vunpack.c.h.b16 %v54
    %v137 = vunpack.c.l.b16 %v55
    %v138 = vunpack.c.h.b16 %v55
    %v139 = vunpack.c.l.b16 %v56
    %v140 = vunpack.c.h.b16 %v56
    %v141 = vunpack.c.l.b16 %v57
    %v142 = vunpack.c.h.b16 %v57
    %v143 = vunpack.c.l.b16 %v58
    %v144 = vunpack.c.h.b16 %v58
    %v145 = vunpack.c.l.b16 %v59
    %v146 = vunpack.c.h.b16 %v59
    %v147 = vunpack.c.l.b16 %v60
    %v148 = vunpack.c.h.b16 %v60
    %v149 = vunpack.c.l.b16 %v61
    %v150 = vunpack.c.h.b16 %v61
    %v151 = vunpack.c.l.b16 %v62
    %v152 = vunpack.c.h.b16 %v62
    %v153 = vunpack.c.l.b16 %v63
    %v154 = vunpack.c.h.b16 %v63
    %v155 = vunpack.c.l.b16 %v64
    %v156 = vunpack.c.h.b16 %v64
    %v157 = vunpack.c.l.b16 %v65
    %v158 = vunpack.c.h.b16 %v65
    %v159 = vunpack.c.l.b16 %v66
    %v160 = vunpack.c.h.b16 %v66
    %v161 = vunpack.c.l.b16 %v67
    %v162 = vunpack.c.h.b16 %v67
    %v163 = vunpack.c.l.b16 %v68
    %v164 = vunpack.c.h.b16 %v68
    %v165 = vunpack.c.l.b16 %v69
    %v166 = vunpack.c.h.b16 %v69
    %v167 = vunpack.c.l.b16 %v70
    %v168 = vunpack.c.h.b16 %v70
    %v169 = vunpack.c.l.b16 %v71
    %v170 = vunpack.c.h.b16 %v71
    %v171 = vunpack.c.l.b16 %v72
    %v172 = vunpack.c.h.b16 %v72
    %v173 = vunpack.c.l.b16 %v73
    %v174 = vunpack.c.h.b16 %v73
    %v175 = vunpack.c.l.b16 %v74
    %v176 = vunpack.c.h.b16 %v74
    %v177 = vunpack.c.l.b16 %v75
    %v178 = vunpack.c.h.b16 %v75
    %v179 = vunpack.c.l.b16 %v76
    %v180 = vunpack.c.h.b16 %v76
    %v181 = vunpack.c.l.b16 %v77
    %v182 = vunpack.c.h.b16 %v77
    %v183 = vunpack.c.l.b16 %v78
    %v184 = vunpack.c.h.b16 %v78
    %v185 = vunpack.c.l.b16 %v79
    %v186 = vunpack.c.h.b16 %v79
    %v187 = vunpack.c.l.b16 %v80
    %v188 = vunpack.c.h.b16 %v80
    %v189 = vunpack.c.l.b16 %v81
    %v190 = vunpack.c.h.b16 %v81
    %v191 = vunpack.c.l.b16 %v82
    %v192 = vunpack.c.h.b16 %v82
    %v193 = vunpack.c.l.b16 %v83
    %v194 = vunpack.c.h.b16 %v83
    %v195 = vunpack.c.l.b16 %v84
    %v196 = vunpack.c.h.b16 %v84
    %v197 = vpack.c.b16 %v137, %v133
    %v198 = vpack.c.b16 %v138, %v134
    %v199 = vpack.c.b16 %v139, %v135
    %v200 = vpack.c.b16 %v140, %v136
    %v201 = vpack.c.b16 %v145, %v141
    %v202 = vpack.c.b16 %v146, %v142
    %v203 = vpack.c.b16 %v147, %v143
    %v204 = vpack.c.b16 %v148, %v144
    %v205 = vpack.c.b16 %v153, %v149
    %v206 = vpack.c.b16 %v154, %v150
    %v207 = vpack.c.b16 %v155, %v151
    %v208 = vpack.c.b16 %v156, %v152
    %v209 = vpack.c.b16 %v161, %v157
    %v210 = vpack.c.b16 %v162, %v158
    %v211 = vpack.c.b16 %v163, %v159
    %v212 = vpack.c.b16 %v164, %v160
    %v213 = vpack.c.b16 %v169, %v165
    %v214 = vpack.c.b16 %v170, %v166
    %v215 = vpack.c.b16 %v171, %v167
    %v216 = vpack.c.b16 %v172, %v168
    %v217 = vpack.c.b16 %v177, %v173
    %v218 = vpack.c.b16 %v178, %v174
    %v219 = vpack.c.b16 %v179, %v175
    %v220 = vpack.c.b16 %v180, %v176
    %v221 = vpack.c.b16 %v185, %v181
    %v222 = vpack.c.b16 %v186, %v182
    %v223 = vpack.c.b16 %v187, %v183
    %v224 = vpack.c.b16 %v188, %v184
    %v225 = vpack.c.b16 %v193, %v189
    %v226 = vpack.c.b16 %v194, %v190
    %v227 = vpack.c.b16 %v195, %v191
    %v228 = vpack.c.b16 %v196, %v192
    %261 = vmatpush.bf16.msra.mxu0 %v225
    %262 = vmatpush.bf16.msra.mxu0 %v221
    %263 = vmatpush.bf16.msra.mxu0 %v217
    %264 = vmatpush.bf16.msra.mxu0 %v213
    %265 = vmatpush.bf16.msra.mxu0 %v209
    %266 = vmatpush.bf16.msra.mxu0 %v205
    %267 = vmatpush.bf16.msra.mxu0 %v201
    %268 = vmatpush.bf16.msra.mxu0 %v197
    %269 = vmatmul.bf16.gmra.mxu0 %v99
    %v270 = vpop.f32.mrf.mxu0
    %v271 = vadd.f32 %v87, %v270
    %v272 = vpop.f32.mrf.mxu0
    %v273 = vadd.f32 %v87, %v272
    %274 = vdwg.mxu0
    %275 = vmatpush.bf16.msra.mxu0 %v226
    %276 = vmatpush.bf16.msra.mxu0 %v222
    %277 = vmatpush.bf16.msra.mxu0 %v218
    %278 = vmatpush.bf16.msra.mxu0 %v214
    %279 = vmatpush.bf16.msra.mxu0 %v210
    %280 = vmatpush.bf16.msra.mxu0 %v206
    %281 = vmatpush.bf16.msra.mxu0 %v202
    %282 = vmatpush.bf16.msra.mxu0 %v198
    %283 = vmatmul.bf16.gmra.mxu0 %v99
    %v284 = vpop.f32.mrf.mxu0
    %v285 = vadd.f32 %v88, %v284
    %v286 = vpop.f32.mrf.mxu0
    %v287 = vadd.f32 %v88, %v286
    %288 = vdwg.mxu0
    %289 = vmatpush.bf16.msra.mxu0 %v227
    %290 = vmatpush.bf16.msra.mxu0 %v223
    %291 = vmatpush.bf16.msra.mxu0 %v219
    %292 = vmatpush.bf16.msra.mxu0 %v215
    %293 = vmatpush.bf16.msra.mxu0 %v211
    %294 = vmatpush.bf16.msra.mxu0 %v207
    %295 = vmatpush.bf16.msra.mxu0 %v203
    %296 = vmatpush.bf16.msra.mxu0 %v199
    %297 = vmatmul.bf16.gmra.mxu0 %v99
    %v298 = vpop.f32.mrf.mxu0
    %v299 = vadd.f32 %v89, %v298
    %v300 = vpop.f32.mrf.mxu0
    %v301 = vadd.f32 %v89, %v300
    %302 = vdwg.mxu0
    %303 = vmatpush.bf16.msra.mxu0 %v228
    %304 = vmatpush.bf16.msra.mxu0 %v224
    %305 = vmatpush.bf16.msra.mxu0 %v220
    %306 = vmatpush.bf16.msra.mxu0 %v216
    %307 = vmatpush.bf16.msra.mxu0 %v212
    %308 = vmatpush.bf16.msra.mxu0 %v208
    %309 = vmatpush.bf16.msra.mxu0 %v204
    %310 = vmatpush.bf16.msra.mxu0 %v200
    %311 = vmatmul.bf16.gmra.mxu0 %v99
    %v312 = vpop.f32.mrf.mxu0
    %v313 = vadd.f32 %v90, %v312
    %v314 = vpop.f32.mrf.mxu0
    %v315 = vadd.f32 %v90, %v314
    %316 = vdwg.mxu0
    %v317 = vmax.f32 %v271, 0.0
    %v318 = vmax.f32 %v285, 0.0
    %v319 = vmax.f32 %v299, 0.0
    %v320 = vmax.f32 %v313, 0.0
    %v321 = vmax.f32 %v273, 0.0
    %v322 = vmax.f32 %v287, 0.0
    %v323 = vmax.f32 %v301, 0.0
    %v324 = vmax.f32 %v315, 0.0
    %v325 = vld [vmem:[#allocation2] sm:$0xff]
    %v326 = vld [vmem:[#allocation2 + $0x8] sm:$0xff]
    %v327 = vpack.c.bf16 %v321, %v317
    %v328 = vpack.c.bf16 %v322, %v318
    %v329 = vpack.c.bf16 %v323, %v319
    %v330 = vpack.c.bf16 %v324, %v320
    %v331 = vld [vmem:[#allocation3] sm:$0xf]
    %v332 = vld [vmem:[#allocation3 + $0x4] sm:$0xf]
    %v333 = vld [vmem:[#allocation3 + $0x8] sm:$0xf]
    %v334 = vld [vmem:[#allocation3 + $0xc] sm:$0xf]
    %v335 = vld [vmem:[#allocation3 + $0x10] sm:$0xf]
    %v336 = vld [vmem:[#allocation3 + $0x14] sm:$0xf]
    %v337 = vld [vmem:[#allocation3 + $0x18] sm:$0xf]
    %v338 = vld [vmem:[#allocation3 + $0x1c] sm:$0xf]
    %v339 = vld [vmem:[#allocation3 + $0x20] sm:$0xf]
    %v340 = vld [vmem:[#allocation3 + $0x24] sm:$0xf]
    %v341 = vld [vmem:[#allocation3 + $0x28] sm:$0xf]
    %v342 = vld [vmem:[#allocation3 + $0x2c] sm:$0xf]
    %v343 = vld [vmem:[#allocation3 + $0x30] sm:$0xf]
    %v344 = vld [vmem:[#allocation3 + $0x34] sm:$0xf]
    %v345 = vld [vmem:[#allocation3 + $0x38] sm:$0xf]
    %v346 = vld [vmem:[#allocation3 + $0x3c] sm:$0xf]
    %v347 = vld [vmem:[#allocation3 + $0x40] sm:$0xf]
    %v348 = vld [vmem:[#allocation3 + $0x44] sm:$0xf]
    %v349 = vld [vmem:[#allocation3 + $0x48] sm:$0xf]
    %v350 = vld [vmem:[#allocation3 + $0x4c] sm:$0xf]
    %v351 = vld [vmem:[#allocation3 + $0x50] sm:$0xf]
    %v352 = vld [vmem:[#allocation3 + $0x54] sm:$0xf]
    %v353 = vld [vmem:[#allocation3 + $0x58] sm:$0xf]
    %v354 = vld [vmem:[#allocation3 + $0x5c] sm:$0xf]
    %v355 = vld [vmem:[#allocation3 + $0x60] sm:$0xf]
    %v356 = vld [vmem:[#allocation3 + $0x64] sm:$0xf]
    %v357 = vld [vmem:[#allocation3 + $0x68] sm:$0xf]
    %v358 = vld [vmem:[#allocation3 + $0x6c] sm:$0xf]
    %v359 = vld [vmem:[#allocation3 + $0x70] sm:$0xf]
    %v360 = vld [vmem:[#allocation3 + $0x74] sm:$0xf]
    %v361 = vld [vmem:[#allocation3 + $0x78] sm:$0xf]
    %v362 = vld [vmem:[#allocation3 + $0x7c] sm:$0xf]
    %v363 = vld [vmem:[#allocation3 + $0x80] sm:$0xf]
    %v364 = vld [vmem:[#allocation3 + $0x84] sm:$0xf]
    %v365 = vld [vmem:[#allocation3 + $0x88] sm:$0xf]
    %v366 = vld [vmem:[#allocation3 + $0x8c] sm:$0xf]
    %v367 = vld [vmem:[#allocation3 + $0x90] sm:$0xf]
    %v368 = vld [vmem:[#allocation3 + $0x94] sm:$0xf]
    %v369 = vld [vmem:[#allocation3 + $0x98] sm:$0xf]
    %v370 = vld [vmem:[#allocation3 + $0x9c] sm:$0xf]
    %v371 = vld [vmem:[#allocation3 + $0xa0] sm:$0xf]
    %v372 = vld [vmem:[#allocation3 + $0xa4] sm:$0xf]
    %v373 = vld [vmem:[#allocation3 + $0xa8] sm:$0xf]
    %v374 = vld [vmem:[#allocation3 + $0xac] sm:$0xf]
    %v375 = vld [vmem:[#allocation3 + $0xb0] sm:$0xf]
    %v376 = vld [vmem:[#allocation3 + $0xb4] sm:$0xf]
    %v377 = vld [vmem:[#allocation3 + $0xb8] sm:$0xf]
    %v378 = vld [vmem:[#allocation3 + $0xbc] sm:$0xf]
    %v379 = vld [vmem:[#allocation3 + $0xc0] sm:$0xf]
    %v380 = vld [vmem:[#allocation3 + $0xc4] sm:$0xf]
    %v381 = vld [vmem:[#allocation3 + $0xc8] sm:$0xf]
    %v382 = vld [vmem:[#allocation3 + $0xcc] sm:$0xf]
    %v383 = vld [vmem:[#allocation3 + $0xd0] sm:$0xf]
    %v384 = vld [vmem:[#allocation3 + $0xd4] sm:$0xf]
    %v385 = vld [vmem:[#allocation3 + $0xd8] sm:$0xf]
    %v386 = vld [vmem:[#allocation3 + $0xdc] sm:$0xf]
    %v387 = vld [vmem:[#allocation3 + $0xe0] sm:$0xf]
    %v388 = vld [vmem:[#allocation3 + $0xe4] sm:$0xf]
    %v389 = vld [vmem:[#allocation3 + $0xe8] sm:$0xf]
    %v390 = vld [vmem:[#allocation3 + $0xec] sm:$0xf]
    %v391 = vld [vmem:[#allocation3 + $0xf0] sm:$0xf]
    %v392 = vld [vmem:[#allocation3 + $0xf4] sm:$0xf]
    %v393 = vld [vmem:[#allocation3 + $0xf8] sm:$0xf]
    %v394 = vld [vmem:[#allocation3 + $0xfc] sm:$0xf]
    %v459 = vunpack.c.l.b16 %v331
    %v460 = vunpack.c.l.b16 %v332
    %v461 = vunpack.c.l.b16 %v333
    %v462 = vunpack.c.l.b16 %v334
    %v463 = vunpack.c.l.b16 %v335
    %v464 = vunpack.c.l.b16 %v336
    %v465 = vunpack.c.l.b16 %v337
    %v466 = vunpack.c.l.b16 %v338
    %v467 = vunpack.c.l.b16 %v339
    %v468 = vunpack.c.l.b16 %v340
    %v469 = vunpack.c.l.b16 %v341
    %v470 = vunpack.c.l.b16 %v342
    %v471 = vunpack.c.l.b16 %v343
    %v472 = vunpack.c.l.b16 %v344
    %v473 = vunpack.c.l.b16 %v345
    %v474 = vunpack.c.l.b16 %v346
    %v475 = vunpack.c.l.b16 %v347
    %v476 = vunpack.c.l.b16 %v348
    %v477 = vunpack.c.l.b16 %v349
    %v478 = vunpack.c.l.b16 %v350
    %v479 = vunpack.c.l.b16 %v351
    %v480 = vunpack.c.l.b16 %v352
    %v481 = vunpack.c.l.b16 %v353
    %v482 = vunpack.c.l.b16 %v354
    %v483 = vunpack.c.l.b16 %v355
    %v484 = vunpack.c.l.b16 %v356
    %v485 = vunpack.c.l.b16 %v357
    %v486 = vunpack.c.l.b16 %v358
    %v487 = vunpack.c.l.b16 %v359
    %v488 = vunpack.c.l.b16 %v360
    %v489 = vunpack.c.l.b16 %v361
    %v490 = vunpack.c.l.b16 %v362
    %v491 = vunpack.c.l.b16 %v363
    %v492 = vunpack.c.l.b16 %v364
    %v493 = vunpack.c.l.b16 %v365
    %v494 = vunpack.c.l.b16 %v366
    %v495 = vunpack.c.l.b16 %v367
    %v496 = vunpack.c.l.b16 %v368
    %v497 = vunpack.c.l.b16 %v369
    %v498 = vunpack.c.l.b16 %v370
    %v499 = vunpack.c.l.b16 %v371
    %v500 = vunpack.c.l.b16 %v372
    %v501 = vunpack.c.l.b16 %v373
    %v502 = vunpack.c.l.b16 %v374
    %v503 = vunpack.c.l.b16 %v375
    %v504 = vunpack.c.l.b16 %v376
    %v505 = vunpack.c.l.b16 %v377
    %v506 = vunpack.c.l.b16 %v378
    %v507 = vunpack.c.l.b16 %v379
    %v508 = vunpack.c.l.b16 %v380
    %v509 = vunpack.c.l.b16 %v381
    %v510 = vunpack.c.l.b16 %v382
    %v511 = vunpack.c.l.b16 %v383
    %v512 = vunpack.c.l.b16 %v384
    %v513 = vunpack.c.l.b16 %v385
    %v514 = vunpack.c.l.b16 %v386
    %v515 = vunpack.c.l.b16 %v387
    %v516 = vunpack.c.l.b16 %v388
    %v517 = vunpack.c.l.b16 %v389
    %v518 = vunpack.c.l.b16 %v390
    %v519 = vunpack.c.l.b16 %v391
    %v520 = vunpack.c.l.b16 %v392
    %v521 = vunpack.c.l.b16 %v393
    %v522 = vunpack.c.l.b16 %v394
    %v523 = vpack.c.b16 %v460, %v459
    %v524 = vpack.c.b16 %v462, %v461
    %v525 = vpack.c.b16 %v464, %v463
    %v526 = vpack.c.b16 %v466, %v465
    %v527 = vpack.c.b16 %v468, %v467
    %v528 = vpack.c.b16 %v470, %v469
    %v529 = vpack.c.b16 %v472, %v471
    %v530 = vpack.c.b16 %v474, %v473
    %v531 = vpack.c.b16 %v476, %v475
    %v532 = vpack.c.b16 %v478, %v477
    %v533 = vpack.c.b16 %v480, %v479
    %v534 = vpack.c.b16 %v482, %v481
    %v535 = vpack.c.b16 %v484, %v483
    %v536 = vpack.c.b16 %v486, %v485
    %v537 = vpack.c.b16 %v488, %v487
    %v538 = vpack.c.b16 %v490, %v489
    %v539 = vpack.c.b16 %v492, %v491
    %v540 = vpack.c.b16 %v494, %v493
    %v541 = vpack.c.b16 %v496, %v495
    %v542 = vpack.c.b16 %v498, %v497
    %v543 = vpack.c.b16 %v500, %v499
    %v544 = vpack.c.b16 %v502, %v501
    %v545 = vpack.c.b16 %v504, %v503
    %v546 = vpack.c.b16 %v506, %v505
    %v547 = vpack.c.b16 %v508, %v507
    %v548 = vpack.c.b16 %v510, %v509
    %v549 = vpack.c.b16 %v512, %v511
    %v550 = vpack.c.b16 %v514, %v513
    %v551 = vpack.c.b16 %v516, %v515
    %v552 = vpack.c.b16 %v518, %v517
    %v553 = vpack.c.b16 %v520, %v519
    %v554 = vpack.c.b16 %v522, %v521
    %587 = vmatpush.bf16.msra.mxu0 %v530
    %588 = vmatpush.bf16.msra.mxu0 %v529
    %589 = vmatpush.bf16.msra.mxu0 %v528
    %590 = vmatpush.bf16.msra.mxu0 %v527
    %591 = vmatpush.bf16.msra.mxu0 %v526
    %592 = vmatpush.bf16.msra.mxu0 %v525
    %593 = vmatpush.bf16.msra.mxu0 %v524
    %594 = vmatpush.bf16.msra.mxu0 %v523
    %595 = vmatmul.bf16.gmra.mxu0 %v327
    %v596 = vpop.f32.mrf.mxu0
    %v597 = vadd.f32 0.0, %v596
    %v598 = vpop.f32.mrf.mxu0
    %v599 = vadd.f32 0.0, %v598
    %600 = vdwg.mxu0
    %601 = vmatpush.bf16.msra.mxu0 %v538
    %602 = vmatpush.bf16.msra.mxu0 %v537
    %603 = vmatpush.bf16.msra.mxu0 %v536
    %604 = vmatpush.bf16.msra.mxu0 %v535
    %605 = vmatpush.bf16.msra.mxu0 %v534
    %606 = vmatpush.bf16.msra.mxu0 %v533
    %607 = vmatpush.bf16.msra.mxu0 %v532
    %608 = vmatpush.bf16.msra.mxu0 %v531
    %609 = vmatmul.bf16.gmra.mxu0 %v328
    %v610 = vpop.f32.mrf.mxu0
    %v611 = vadd.f32 %v597, %v610
    %v612 = vpop.f32.mrf.mxu0
    %v613 = vadd.f32 %v599, %v612
    %614 = vdwg.mxu0
    %615 = vmatpush.bf16.msra.mxu0 %v546
    %616 = vmatpush.bf16.msra.mxu0 %v545
    %617 = vmatpush.bf16.msra.mxu0 %v544
    %618 = vmatpush.bf16.msra.mxu0 %v543
    %619 = vmatpush.bf16.msra.mxu0 %v542
    %620 = vmatpush.bf16.msra.mxu0 %v541
    %621 = vmatpush.bf16.msra.mxu0 %v540
    %622 = vmatpush.bf16.msra.mxu0 %v539
    %623 = vmatmul.bf16.gmra.mxu0 %v329
    %v624 = vpop.f32.mrf.mxu0
    %v625 = vadd.f32 %v611, %v624
    %v626 = vpop.f32.mrf.mxu0
    %v627 = vadd.f32 %v613, %v626
    %628 = vdwg.mxu0
    %629 = vmatpush.bf16.msra.mxu0 %v554
    %630 = vmatpush.bf16.msra.mxu0 %v553
    %631 = vmatpush.bf16.msra.mxu0 %v552
    %632 = vmatpush.bf16.msra.mxu0 %v551
    %633 = vmatpush.bf16.msra.mxu0 %v550
    %634 = vmatpush.bf16.msra.mxu0 %v549
    %635 = vmatpush.bf16.msra.mxu0 %v548
    %636 = vmatpush.bf16.msra.mxu0 %v547
    %637 = vmatmul.bf16.gmra.mxu0 %v330
    %v638 = vpop.f32.mrf.mxu0
    %v639 = vadd.f32 %v625, %v638
    %v640 = vpop.f32.mrf.mxu0
    %v641 = vadd.f32 %v627, %v640
    %642 = vdwg.mxu0
    %v643 = vadd.f32 %v325, %v639
    %v644 = vadd.f32 %v326, %v641
    %645 = vst [vmem:[#allocation2] sm:$0xff] %v643
    %646 = vst [vmem:[#allocation2 + $0x8] sm:$0xff] %v644
    // Predicated region
    $region42: #{transformer_forward.28} parent=1 // pred_check
      %p647 = pneg %p45
    $region43: #{transformer_forward.28} parent=1 // pred_check_branch
      %649 = sbr.rel (%p647) target = $region45
    $region44: #{transformer_forward.28} parent=1 // pred_region
      %v650 = vld [vmem:[#allocation2] sm:$0xff]
      %v651 = vld [vmem:[#allocation2 + $0x8] sm:$0xff]
      %v652 = vld [vmem:[%s4] sm:$0x1]
      %v654 = vperm.slane %v652, 0
      %v656 = vadd.f32 %v650, %v654
      %v657 = vadd.f32 %v651, %v654
      %v658 = vld [vmem:[%s5] sm:$0xf]
      %v659 = vld [vmem:[%s5 + $0x4] sm:$0xf]
      %v660 = vunpack.c.l.bf16 %v658
      %v661 = vunpack.c.l.bf16 %v659
      %v662 = vadd.f32 %v656, %v660
      %v663 = vadd.f32 %v657, %v661
      %664 = vadd.xlane.f32.xlu0 %v662
      %v665 = vpop.xlane.xlu0 %664
      %666 = vadd.xlane.f32.xlu0 %v663
      %v667 = vpop.xlane.xlu0 %666
      %v668 = vrcp.pop 128.0
      %v669 = vmul.f32 128.0, %v668
      %v670 = vsub.f32 1.0, %v669
      %v671 = vmul.f32 %v668, %v670
      %v672 = vadd.f32 %v668, %v671
      %vm673 = vweird.f32 %v668
      %v674 = vsel %vm673, %v668, %v672
      %v675 = vmul.f32 %v665, %v674
      %v676 = vmul.f32 %v667, %v674
      %v677 = vsub.f32 %v662, %v675
      %v678 = vsub.f32 %v663, %v676
      %v679 = vmul.f32 %v677, %v677
      %v680 = vmul.f32 %v678, %v678
      %681 = vadd.xlane.f32.xlu0 %v679
      %v682 = vpop.xlane.xlu0 %681
      %683 = vadd.xlane.f32.xlu0 %v680
      %v684 = vpop.xlane.xlu0 %683
      %v685 = vmul.f32 %v682, %v674
      %v686 = vmul.f32 %v684, %v674
      %v687 = vadd.f32 %v685, 1e-05
      %v688 = vadd.f32 %v686, 1e-05
      %v689 = vrsqrt.pop %v687
      %v690 = vmul.f32 %v689, %v687
      %v691 = vmul.f32 %v690, %v689
      %v692 = vmul.f32 0.5, %v691
      %v693 = vsub.f32 1.5, %v692
      %v694 = vmul.f32 %v689, %v693
      %vm695 = vweird.f32 %v687
      %vm696 = vweird.f32 %v689
      %vm697 = vmor %vm695, %vm696
      %v698 = vsel %vm697, %v689, %v694
      %v699 = vrsqrt.pop %v688
      %v700 = vmul.f32 %v699, %v688
      %v701 = vmul.f32 %v700, %v699
      %v702 = vmul.f32 0.5, %v701
      %v703 = vsub.f32 1.5, %v702
      %v704 = vmul.f32 %v699, %v703
      %vm705 = vweird.f32 %v688
      %vm706 = vweird.f32 %v699
      %vm707 = vmor %vm705, %vm706
      %v708 = vsel %vm707, %v699, %v704
      %v709 = vmul.f32 %v677, %v698
      %v710 = vmul.f32 %v678, %v708
      %v711 = vld [vmem:[%s6] sm:$0x1]
      %v713 = vperm.slane %v711, 0
      %v715 = vmul.f32 %v709, %v713
      %v716 = vmul.f32 %v710, %v713
      %v717 = vld [vmem:[%s7] sm:$0x1]
      %v719 = vperm.slane %v717, 0
      %v721 = vadd.f32 %v715, %v719
      %v722 = vadd.f32 %v716, %v719
      %v723 = vpack.c.bf16 %v721, %v721
      %v724 = vpack.c.bf16 %v722, %v722
      %725 = vst [vmem:[%s8] sm:$0xf] %v723
      %726 = vst [vmem:[%s8 + $0x4] sm:$0xf] %v724
    $region45: #{transformer_forward.28} parent=1 // pred_fallthru
      _
    // Predicated region
    $region46: #{transformer_forward.28} parent=1 // pred_check
      _
    $region47: #{transformer_forward.28} parent=1 // pred_check_branch
      %728 = sbr.rel (0) target = $region49
    $region48: #{transformer_forward.28} parent=1 // pred_region
      _
    $region49: #{transformer_forward.28} parent=1 // pred_fallthru
      _
    // Predicated region
    $region50: #{transformer_forward.28} parent=1 // pred_check
      _
    $region51: #{transformer_forward.28} parent=1 // pred_check_branch
      %730 = sbr.rel (0) target = $region53
    $region52: #{transformer_forward.28} parent=1 // pred_region
      _
    $region53: #{transformer_forward.28} parent=1 // pred_fallthru
      _
    %731 = vsyncpa [#allocation4], 1

// kernel: transformer_forward.31
$region0: #{transformer_forward.31}
  #allocation0 [shape = 'u32[]', space=smem, size = 0x4, offset = 0x4, fixed_abs, tag = 'smem constant byte address 0x4 - core index']
  #allocation1 [shape = 'u32[72,128]{1,0:T(1,128)}', space=vmem, size = 0x9000, scoped, tag = 'internal scratch']
  #allocation2 [shape = 'f32[16,128]{1,0:T(8,128)}', space=vmem, size = 0x2000, scoped, tag = 'scratch operand']
  %s0 = inlined_call_operand.vmem [shape: bf16[16,128], index: 0, kind: input, shape index: {}]
  %s1 = inlined_call_operand.hbm [shape: bf16[128,128], index: 1, kind: input, shape index: {}]
  %s2 = inlined_call_operand.vmem [shape: f32[1,128], index: 2, kind: input, shape index: {}]
  %s3 = inlined_call_operand.vmem [shape: bf16[16,128], index: 3, kind: input, shape index: {}]
  %s4 = inlined_call_operand.vmem [shape: f32[1,128], index: 4, kind: input, shape index: {}]
  %s5 = inlined_call_operand.vmem [shape: f32[1,128], index: 5, kind: input, shape index: {}]
  %s6 = inlined_call_operand.vmem [shape: bf16[16,128], index: 6, kind: output, shape index: {}]
  %s7 = sld [smem:[#allocation0]]
  $region46: #{transformer_forward.31} parent=0
    _
  %s9 = ssub.s32 1, %s7
  %s10 = scalar_select 0, %s9, %s7
  $region1: #{transformer_forward.31} parent=0
    #allocation3 [shape = 'u8[32768]{0}', space=vmem, size = 0x8000, scoped, tag = 'input window, operand 1, single buffered']
    #allocation4 [shape = 's32[1]{0}', space=sflag, size = 0x4, scoped, tag = 'scoped memory for transformer_forward.31']
    %11 = vsyncpa [#allocation4], 0
    // Predicated region
    $region2: #{transformer_forward.31} parent=1 // pred_check
      _
    $region3: #{transformer_forward.31} parent=1 // pred_check_branch
      %13 = sbr.rel (0) target = $region5
    $region4: #{transformer_forward.31} parent=1 // pred_region
      _
    $region5: #{transformer_forward.31} parent=1 // pred_fallthru
      _
    // Predicated region
    $region6: #{transformer_forward.31} parent=1 // pred_check
      _
    $region7: #{transformer_forward.31} parent=1 // pred_check_branch
      %15 = sbr.rel (0) target = $region9
    $region8: #{transformer_forward.31} parent=1 // pred_region
      %17 = vsyncadd [#allocation4], 0
      %s18 = sshll.u32 %s1, 4
      %s19 = int_to_ptr.hbm [resolvable:$true] %s18
      %s20 = sshll.u32 [#allocation3], 4
      %s21 = int_to_ptr.vmem [resolvable:$true] %s20
      %26 = dma.hbm_to_vmem [thread:$0]  %s19, 1024, %s21, [#allocation4], 64, 64, 4
    $region9: #{transformer_forward.31} parent=1 // pred_fallthru
      _
    // Predicated region
    $region10: #{transformer_forward.31} parent=1 // pred_check
      _
    $region11: #{transformer_forward.31} parent=1 // pred_check_branch
      %28 = sbr.rel (0) target = $region13
    $region12: #{transformer_forward.31} parent=1 // pred_region
      _
    $region13: #{transformer_forward.31} parent=1 // pred_fallthru
      _
    // Predicated region
    $region14: #{transformer_forward.31} parent=1 // pred_check
      _
    $region15: #{transformer_forward.31} parent=1 // pred_check_branch
      %30 = sbr.rel (0) target = $region17
    $region16: #{transformer_forward.31} parent=1 // pred_region
      _
    $region17: #{transformer_forward.31} parent=1 // pred_fallthru
      _
    // Predicated region
    $region18: #{transformer_forward.31} parent=1 // pred_check
      _
    $region19: #{transformer_forward.31} parent=1 // pred_check_branch
      %32 = sbr.rel (0) target = $region21
    $region20: #{transformer_forward.31} parent=1 // pred_region
      _
    $region21: #{transformer_forward.31} parent=1 // pred_fallthru
      _
    // Predicated region
    $region22: #{transformer_forward.31} parent=1 // pred_check
      _
    $region23: #{transformer_forward.31} parent=1 // pred_check_branch
      %34 = sbr.rel (0) target = $region25
    $region24: #{transformer_forward.31} parent=1 // pred_region
      _
    $region25: #{transformer_forward.31} parent=1 // pred_fallthru
      _
    // Predicated region
    $region26: #{transformer_forward.31} parent=1 // pred_check
      _
    $region27: #{transformer_forward.31} parent=1 // pred_check_branch
      %36 = sbr.rel (0) target = $region29
    $region28: #{transformer_forward.31} parent=1 // pred_region
      %38 = dma.done [#allocation4], 1024
    $region29: #{transformer_forward.31} parent=1 // pred_fallthru
      _
    %p39 = scmp.eq.s32.totalorder 0, 0
    // Predicated region
    $region30: #{transformer_forward.31} parent=1 // pred_check
      %p40 = pneg %p39
    $region31: #{transformer_forward.31} parent=1 // pred_check_branch
      %42 = sbr.rel (%p40) target = $region33
    $region32: #{transformer_forward.31} parent=1 // pred_region
      %43 = vst [vmem:[#allocation2] sm:$0xff] 0.0
      %44 = vst [vmem:[#allocation2 + $0x8] sm:$0xff] 0.0
    $region33: #{transformer_forward.31} parent=1 // pred_fallthru
      _
    %v45 = vld [vmem:[#allocation2] sm:$0xff]
    %v46 = vld [vmem:[#allocation2 + $0x8] sm:$0xff]
    %v47 = vld [vmem:[%s0] sm:$0xf]
    %v48 = vld [vmem:[%s0 + $0x4] sm:$0xf]
    %v49 = vld [vmem:[#allocation3] sm:$0xf]
    %v50 = vld [vmem:[#allocation3 + $0x4] sm:$0xf]
    %v51 = vld [vmem:[#allocation3 + $0x8] sm:$0xf]
    %v52 = vld [vmem:[#allocation3 + $0xc] sm:$0xf]
    %v53 = vld [vmem:[#allocation3 + $0x10] sm:$0xf]
    %v54 = vld [vmem:[#allocation3 + $0x14] sm:$0xf]
    %v55 = vld [vmem:[#allocation3 + $0x18] sm:$0xf]
    %v56 = vld [vmem:[#allocation3 + $0x1c] sm:$0xf]
    %v57 = vld [vmem:[#allocation3 + $0x20] sm:$0xf]
    %v58 = vld [vmem:[#allocation3 + $0x24] sm:$0xf]
    %v59 = vld [vmem:[#allocation3 + $0x28] sm:$0xf]
    %v60 = vld [vmem:[#allocation3 + $0x2c] sm:$0xf]
    %v61 = vld [vmem:[#allocation3 + $0x30] sm:$0xf]
    %v62 = vld [vmem:[#allocation3 + $0x34] sm:$0xf]
    %v63 = vld [vmem:[#allocation3 + $0x38] sm:$0xf]
    %v64 = vld [vmem:[#allocation3 + $0x3c] sm:$0xf]
    %v67 = vunpack.c.l.b16 %v47
    %v68 = vunpack.c.l.b16 %v48
    %v69 = vpack.c.b16 %v68, %v67
    %v87 = vunpack.c.l.b16 %v49
    %v88 = vunpack.c.l.b16 %v50
    %v89 = vunpack.c.l.b16 %v51
    %v90 = vunpack.c.l.b16 %v52
    %v91 = vunpack.c.l.b16 %v53
    %v92 = vunpack.c.l.b16 %v54
    %v93 = vunpack.c.l.b16 %v55
    %v94 = vunpack.c.l.b16 %v56
    %v95 = vunpack.c.l.b16 %v57
    %v96 = vunpack.c.l.b16 %v58
    %v97 = vunpack.c.l.b16 %v59
    %v98 = vunpack.c.l.b16 %v60
    %v99 = vunpack.c.l.b16 %v61
    %v100 = vunpack.c.l.b16 %v62
    %v101 = vunpack.c.l.b16 %v63
    %v102 = vunpack.c.l.b16 %v64
    %v103 = vpack.c.b16 %v88, %v87
    %v104 = vpack.c.b16 %v90, %v89
    %v105 = vpack.c.b16 %v92, %v91
    %v106 = vpack.c.b16 %v94, %v93
    %v107 = vpack.c.b16 %v96, %v95
    %v108 = vpack.c.b16 %v98, %v97
    %v109 = vpack.c.b16 %v100, %v99
    %v110 = vpack.c.b16 %v102, %v101
    %119 = vmatpush.bf16.msra.mxu0 %v110
    %120 = vmatpush.bf16.msra.mxu0 %v109
    %121 = vmatpush.bf16.msra.mxu0 %v108
    %122 = vmatpush.bf16.msra.mxu0 %v107
    %123 = vmatpush.bf16.msra.mxu0 %v106
    %124 = vmatpush.bf16.msra.mxu0 %v105
    %125 = vmatpush.bf16.msra.mxu0 %v104
    %126 = vmatpush.bf16.msra.mxu0 %v103
    %127 = vmatmul.bf16.gmra.mxu0 %v69
    %v128 = vpop.f32.mrf.mxu0
    %v129 = vadd.f32 0.0, %v128
    %v130 = vpop.f32.mrf.mxu0
    %v131 = vadd.f32 0.0, %v130
    %132 = vdwg.mxu0
    %v133 = vadd.f32 %v45, %v129
    %v134 = vadd.f32 %v46, %v131
    %135 = vst [vmem:[#allocation2] sm:$0xff] %v133
    %136 = vst [vmem:[#allocation2 + $0x8] sm:$0xff] %v134
    // Predicated region
    $region34: #{transformer_forward.31} parent=1 // pred_check
      %p137 = pneg %p39
    $region35: #{transformer_forward.31} parent=1 // pred_check_branch
      %139 = sbr.rel (%p137) target = $region37
    $region36: #{transformer_forward.31} parent=1 // pred_region
      %v140 = vld [vmem:[#allocation2] sm:$0xff]
      %v141 = vld [vmem:[#allocation2 + $0x8] sm:$0xff]
      %v142 = vld [vmem:[%s2] sm:$0x1]
      %v144 = vperm.slane %v142, 0
      %v146 = vadd.f32 %v140, %v144
      %v147 = vadd.f32 %v141, %v144
      %v148 = vld [vmem:[%s3] sm:$0xf]
      %v149 = vld [vmem:[%s3 + $0x4] sm:$0xf]
      %v150 = vunpack.c.l.bf16 %v148
      %v151 = vunpack.c.l.bf16 %v149
      %v152 = vadd.f32 %v146, %v150
      %v153 = vadd.f32 %v147, %v151
      %154 = vadd.xlane.f32.xlu0 %v152
      %v155 = vpop.xlane.xlu0 %154
      %156 = vadd.xlane.f32.xlu0 %v153
      %v157 = vpop.xlane.xlu0 %156
      %v158 = vrcp.pop 128.0
      %v159 = vmul.f32 128.0, %v158
      %v160 = vsub.f32 1.0, %v159
      %v161 = vmul.f32 %v158, %v160
      %v162 = vadd.f32 %v158, %v161
      %vm163 = vweird.f32 %v158
      %v164 = vsel %vm163, %v158, %v162
      %v165 = vmul.f32 %v155, %v164
      %v166 = vmul.f32 %v157, %v164
      %v167 = vsub.f32 %v152, %v165
      %v168 = vsub.f32 %v153, %v166
      %v169 = vmul.f32 %v167, %v167
      %v170 = vmul.f32 %v168, %v168
      %171 = vadd.xlane.f32.xlu0 %v169
      %v172 = vpop.xlane.xlu0 %171
      %173 = vadd.xlane.f32.xlu0 %v170
      %v174 = vpop.xlane.xlu0 %173
      %v175 = vmul.f32 %v172, %v164
      %v176 = vmul.f32 %v174, %v164
      %v177 = vadd.f32 %v175, 1e-05
      %v178 = vadd.f32 %v176, 1e-05
      %v179 = vrsqrt.pop %v177
      %v180 = vmul.f32 %v179, %v177
      %v181 = vmul.f32 %v180, %v179
      %v182 = vmul.f32 0.5, %v181
      %v183 = vsub.f32 1.5, %v182
      %v184 = vmul.f32 %v179, %v183
      %vm185 = vweird.f32 %v177
      %vm186 = vweird.f32 %v179
      %vm187 = vmor %vm185, %vm186
      %v188 = vsel %vm187, %v179, %v184
      %v189 = vrsqrt.pop %v178
      %v190 = vmul.f32 %v189, %v178
      %v191 = vmul.f32 %v190, %v189
      %v192 = vmul.f32 0.5, %v191
      %v193 = vsub.f32 1.5, %v192
      %v194 = vmul.f32 %v189, %v193
      %vm195 = vweird.f32 %v178
      %vm196 = vweird.f32 %v189
      %vm197 = vmor %vm195, %vm196
      %v198 = vsel %vm197, %v189, %v194
      %v199 = vmul.f32 %v167, %v188
      %v200 = vmul.f32 %v168, %v198
      %v201 = vld [vmem:[%s4] sm:$0x1]
      %v203 = vperm.slane %v201, 0
      %v205 = vmul.f32 %v199, %v203
      %v206 = vmul.f32 %v200, %v203
      %v207 = vld [vmem:[%s5] sm:$0x1]
      %v209 = vperm.slane %v207, 0
      %v211 = vadd.f32 %v205, %v209
      %v212 = vadd.f32 %v206, %v209
      %v213 = vpack.c.bf16 %v211, %v211
      %v214 = vpack.c.bf16 %v212, %v212
      %215 = vst [vmem:[%s6] sm:$0xf] %v213
      %216 = vst [vmem:[%s6 + $0x4] sm:$0xf] %v214
    $region37: #{transformer_forward.31} parent=1 // pred_fallthru
      _
    // Predicated region
    $region38: #{transformer_forward.31} parent=1 // pred_check
      _
    $region39: #{transformer_forward.31} parent=1 // pred_check_branch
      %218 = sbr.rel (0) target = $region41
    $region40: #{transformer_forward.31} parent=1 // pred_region
      _
    $region41: #{transformer_forward.31} parent=1 // pred_fallthru
      _
    // Predicated region
    $region42: #{transformer_forward.31} parent=1 // pred_check
      _
    $region43: #{transformer_forward.31} parent=1 // pred_check_branch
      %220 = sbr.rel (0) target = $region45
    $region44: #{transformer_forward.31} parent=1 // pred_region
      _
    $region45: #{transformer_forward.31} parent=1 // pred_fallthru
      _
    %221 = vsyncpa [#allocation4], 1

// kernel: transformer_forward.37
$region0: #{transformer_forward.37}
  #allocation0 [shape = 'u32[]', space=smem, size = 0x4, offset = 0x4, fixed_abs, tag = 'smem constant byte address 0x4 - core index']
  #allocation1 [shape = 'u32[72,128]{1,0:T(1,128)}', space=vmem, size = 0x9000, scoped, tag = 'internal scratch']
  #allocation2 [shape = 'f32[16,256]{1,0:T(8,128)}', space=vmem, size = 0x4000, scoped, tag = 'scratch operand']
  %s0 = inlined_call_operand.vmem [shape: bf16[16,128], index: 0, kind: input, shape index: {}]
  %s1 = inlined_call_operand.hbm [shape: bf16[128,256], index: 1, kind: input, shape index: {}]
  %s2 = inlined_call_operand.vmem [shape: f32[1,256], index: 2, kind: input, shape index: {}]
  %s3 = inlined_call_operand.vmem [shape: bf16[16,256], index: 3, kind: output, shape index: {}]
  %s4 = sld [smem:[#allocation0]]
  $region34: #{transformer_forward.37} parent=0
    _
  %s6 = ssub.s32 1, %s4
  %s7 = scalar_select 0, %s6, %s4
  $region1: #{transformer_forward.37} parent=0
    #allocation3 [shape = 'u8[65536]{0}', space=vmem, size = 0x10000, scoped, tag = 'input window, operand 1, single buffered']
    #allocation4 [shape = 's32[1]{0}', space=sflag, size = 0x4, scoped, tag = 'scoped memory for transformer_forward.37']
    %8 = vsyncpa [#allocation4], 0
    // Predicated region
    $region2: #{transformer_forward.37} parent=1 // pred_check
      _
    $region3: #{transformer_forward.37} parent=1 // pred_check_branch
      %10 = sbr.rel (0) target = $region5
    $region4: #{transformer_forward.37} parent=1 // pred_region
      _
    $region5: #{transformer_forward.37} parent=1 // pred_fallthru
      _
    // Predicated region
    $region6: #{transformer_forward.37} parent=1 // pred_check
      _
    $region7: #{transformer_forward.37} parent=1 // pred_check_branch
      %12 = sbr.rel (0) target = $region9
    $region8: #{transformer_forward.37} parent=1 // pred_region
      %14 = vsyncadd [#allocation4], 0
      %s15 = sshll.u32 %s1, 4
      %s16 = int_to_ptr.hbm [resolvable:$true] %s15
      %s17 = sshll.u32 [#allocation3], 4
      %s18 = int_to_ptr.vmem [resolvable:$true] %s17
      %23 = dma.hbm_to_vmem [thread:$0]  %s16, 2048, %s18, [#allocation4], 128, 128, 8
    $region9: #{transformer_forward.37} parent=1 // pred_fallthru
      _
    // Predicated region
    $region10: #{transformer_forward.37} parent=1 // pred_check
      _
    $region11: #{transformer_forward.37} parent=1 // pred_check_branch
      %25 = sbr.rel (0) target = $region13
    $region12: #{transformer_forward.37} parent=1 // pred_region
      _
    $region13: #{transformer_forward.37} parent=1 // pred_fallthru
      _
    // Predicated region
    $region14: #{transformer_forward.37} parent=1 // pred_check
      _
    $region15: #{transformer_forward.37} parent=1 // pred_check_branch
      %27 = sbr.rel (0) target = $region17
    $region16: #{transformer_forward.37} parent=1 // pred_region
      %29 = dma.done [#allocation4], 2048
    $region17: #{transformer_forward.37} parent=1 // pred_fallthru
      _
    %p30 = scmp.eq.s32.totalorder 0, 0
    // Predicated region
    $region18: #{transformer_forward.37} parent=1 // pred_check
      %p31 = pneg %p30
    $region19: #{transformer_forward.37} parent=1 // pred_check_branch
      %33 = sbr.rel (%p31) target = $region21
    $region20: #{transformer_forward.37} parent=1 // pred_region
      %34 = vst [vmem:[#allocation2] sm:$0xff] 0.0
      %35 = vst [vmem:[#allocation2 + $0x8] sm:$0xff] 0.0
      %36 = vst [vmem:[#allocation2 + $0x10] sm:$0xff] 0.0
      %37 = vst [vmem:[#allocation2 + $0x18] sm:$0xff] 0.0
    $region21: #{transformer_forward.37} parent=1 // pred_fallthru
      _
    %v38 = vld [vmem:[#allocation2] sm:$0xff]
    %v39 = vld [vmem:[#allocation2 + $0x8] sm:$0xff]
    %v40 = vld [vmem:[#allocation2 + $0x10] sm:$0xff]
    %v41 = vld [vmem:[#allocation2 + $0x18] sm:$0xff]
    %v42 = vld [vmem:[%s0] sm:$0xf]
    %v43 = vld [vmem:[%s0 + $0x4] sm:$0xf]
    %v44 = vld [vmem:[#allocation3] sm:$0xff]
    %v45 = vld [vmem:[#allocation3 + $0x8] sm:$0xff]
    %v46 = vld [vmem:[#allocation3 + $0x10] sm:$0xff]
    %v47 = vld [vmem:[#allocation3 + $0x18] sm:$0xff]
    %v48 = vld [vmem:[#allocation3 + $0x20] sm:$0xff]
    %v49 = vld [vmem:[#allocation3 + $0x28] sm:$0xff]
    %v50 = vld [vmem:[#allocation3 + $0x30] sm:$0xff]
    %v51 = vld [vmem:[#allocation3 + $0x38] sm:$0xff]
    %v52 = vld [vmem:[#allocation3 + $0x40] sm:$0xff]
    %v53 = vld [vmem:[#allocation3 + $0x48] sm:$0xff]
    %v54 = vld [vmem:[#allocation3 + $0x50] sm:$0xff]
    %v55 = vld [vmem:[#allocation3 + $0x58] sm:$0xff]
    %v56 = vld [vmem:[#allocation3 + $0x60] sm:$0xff]
    %v57 = vld [vmem:[#allocation3 + $0x68] sm:$0xff]
    %v58 = vld [vmem:[#allocation3 + $0x70] sm:$0xff]
    %v59 = vld [vmem:[#allocation3 + $0x78] sm:$0xff]
    %v62 = vunpack.c.l.b16 %v42
    %v63 = vunpack.c.l.b16 %v43
    %v64 = vpack.c.b16 %v63, %v62
    %v82 = vunpack.c.l.b16 %v44
    %v83 = vunpack.c.h.b16 %v44
    %v84 = vunpack.c.l.b16 %v45
    %v85 = vunpack.c.h.b16 %v45
    %v86 = vunpack.c.l.b16 %v46
    %v87 = vunpack.c.h.b16 %v46
    %v88 = vunpack.c.l.b16 %v47
    %v89 = vunpack.c.h.b16 %v47
    %v90 = vunpack.c.l.b16 %v48
    %v91 = vunpack.c.h.b16 %v48
    %v92 = vunpack.c.l.b16 %v49
    %v93 = vunpack.c.h.b16 %v49
    %v94 = vunpack.c.l.b16 %v50
    %v95 = vunpack.c.h.b16 %v50
    %v96 = vunpack.c.l.b16 %v51
    %v97 = vunpack.c.h.b16 %v51
    %v98 = vunpack.c.l.b16 %v52
    %v99 = vunpack.c.h.b16 %v52
    %v100 = vunpack.c.l.b16 %v53
    %v101 = vunpack.c.h.b16 %v53
    %v102 = vunpack.c.l.b16 %v54
    %v103 = vunpack.c.h.b16 %v54
    %v104 = vunpack.c.l.b16 %v55
    %v105 = vunpack.c.h.b16 %v55
    %v106 = vunpack.c.l.b16 %v56
    %v107 = vunpack.c.h.b16 %v56
    %v108 = vunpack.c.l.b16 %v57
    %v109 = vunpack.c.h.b16 %v57
    %v110 = vunpack.c.l.b16 %v58
    %v111 = vunpack.c.h.b16 %v58
    %v112 = vunpack.c.l.b16 %v59
    %v113 = vunpack.c.h.b16 %v59
    %v114 = vpack.c.b16 %v84, %v82
    %v115 = vpack.c.b16 %v85, %v83
    %v116 = vpack.c.b16 %v88, %v86
    %v117 = vpack.c.b16 %v89, %v87
    %v118 = vpack.c.b16 %v92, %v90
    %v119 = vpack.c.b16 %v93, %v91
    %v120 = vpack.c.b16 %v96, %v94
    %v121 = vpack.c.b16 %v97, %v95
    %v122 = vpack.c.b16 %v100, %v98
    %v123 = vpack.c.b16 %v101, %v99
    %v124 = vpack.c.b16 %v104, %v102
    %v125 = vpack.c.b16 %v105, %v103
    %v126 = vpack.c.b16 %v108, %v106
    %v127 = vpack.c.b16 %v109, %v107
    %v128 = vpack.c.b16 %v112, %v110
    %v129 = vpack.c.b16 %v113, %v111
    %146 = vmatpush.bf16.msra.mxu0 %v128
    %147 = vmatpush.bf16.msra.mxu0 %v126
    %148 = vmatpush.bf16.msra.mxu0 %v124
    %149 = vmatpush.bf16.msra.mxu0 %v122
    %150 = vmatpush.bf16.msra.mxu0 %v120
    %151 = vmatpush.bf16.msra.mxu0 %v118
    %152 = vmatpush.bf16.msra.mxu0 %v116
    %153 = vmatpush.bf16.msra.mxu0 %v114
    %154 = vmatmul.bf16.gmra.mxu0 %v64
    %v155 = vpop.f32.mrf.mxu0
    %v156 = vadd.f32 0.0, %v155
    %v157 = vpop.f32.mrf.mxu0
    %v158 = vadd.f32 0.0, %v157
    %159 = vdwg.mxu0
    %160 = vmatpush.bf16.msra.mxu0 %v129
    %161 = vmatpush.bf16.msra.mxu0 %v127
    %162 = vmatpush.bf16.msra.mxu0 %v125
    %163 = vmatpush.bf16.msra.mxu0 %v123
    %164 = vmatpush.bf16.msra.mxu0 %v121
    %165 = vmatpush.bf16.msra.mxu0 %v119
    %166 = vmatpush.bf16.msra.mxu0 %v117
    %167 = vmatpush.bf16.msra.mxu0 %v115
    %168 = vmatmul.bf16.gmra.mxu0 %v64
    %v169 = vpop.f32.mrf.mxu0
    %v170 = vadd.f32 0.0, %v169
    %v171 = vpop.f32.mrf.mxu0
    %v172 = vadd.f32 0.0, %v171
    %173 = vdwg.mxu0
    %v174 = vadd.f32 %v38, %v156
    %v175 = vadd.f32 %v39, %v170
    %v176 = vadd.f32 %v40, %v158
    %v177 = vadd.f32 %v41, %v172
    %178 = vst [vmem:[#allocation2] sm:$0xff] %v174
    %179 = vst [vmem:[#allocation2 + $0x8] sm:$0xff] %v175
    %180 = vst [vmem:[#allocation2 + $0x10] sm:$0xff] %v176
    %181 = vst [vmem:[#allocation2 + $0x18] sm:$0xff] %v177
    // Predicated region
    $region22: #{transformer_forward.37} parent=1 // pred_check
      %p182 = pneg %p30
    $region23: #{transformer_forward.37} parent=1 // pred_check_branch
      %184 = sbr.rel (%p182) target = $region25
    $region24: #{transformer_forward.37} parent=1 // pred_region
      %v185 = vld [vmem:[#allocation2] sm:$0xff]
      %v186 = vld [vmem:[#allocation2 + $0x8] sm:$0xff]
      %v187 = vld [vmem:[#allocation2 + $0x10] sm:$0xff]
      %v188 = vld [vmem:[#allocation2 + $0x18] sm:$0xff]
      %v189 = vld [vmem:[%s2] sm:$0x3]
      %v191 = vperm.slane %v189, 0
      %v192 = vperm.slane %v189, 1
      %v195 = vadd.f32 %v185, %v191
      %v196 = vadd.f32 %v186, %v192
      %v197 = vadd.f32 %v187, %v191
      %v198 = vadd.f32 %v188, %v192
      %v199 = vpack.c.bf16 %v196, %v195
      %v200 = vpack.c.bf16 %v198, %v197
      %201 = vst [vmem:[%s3] sm:$0xff] %v199
      %202 = vst [vmem:[%s3 + $0x8] sm:$0xff] %v200
    $region25: #{transformer_forward.37} parent=1 // pred_fallthru
      _
    // Predicated region
    $region26: #{transformer_forward.37} parent=1 // pred_check
      _
    $region27: #{transformer_forward.37} parent=1 // pred_check_branch
      %204 = sbr.rel (0) target = $region29
    $region28: #{transformer_forward.37} parent=1 // pred_region
      _
    $region29: #{transformer_forward.37} parent=1 // pred_fallthru
      _
    // Predicated region
    $region30: #{transformer_forward.37} parent=1 // pred_check
      _
    $region31: #{transformer_forward.37} parent=1 // pred_check_branch
      %206 = sbr.rel (0) target = $region33
    $region32: #{transformer_forward.37} parent=1 // pred_region
      _
    $region33: #{transformer_forward.37} parent=1 // pred_fallthru
      _
    %207 = vsyncpa [#allocation4], 1

// kernel: transformer_forward.32
$region0: #{transformer_forward.32}
  #allocation0 [shape = 'u32[]', space=smem, size = 0x4, offset = 0x4, fixed_abs, tag = 'smem constant byte address 0x4 - core index']
  #allocation1 [shape = 'u32[72,128]{1,0:T(1,128)}', space=vmem, size = 0x9000, scoped, tag = 'internal scratch']
  #allocation2 [shape = 'f32[16,128]{1,0:T(8,128)}', space=vmem, size = 0x2000, scoped, tag = 'scratch operand']
  %s0 = inlined_call_operand.vmem [shape: bf16[16,128], index: 0, kind: input, shape index: {}, may-alias: {0,5}]
  %s1 = inlined_call_operand.hbm [shape: bf16[128,512], index: 1, kind: input, shape index: {}]
  %s2 = inlined_call_operand.vmem [shape: f32[1,512], index: 2, kind: input, shape index: {}]
  %s3 = inlined_call_operand.hbm [shape: bf16[512,128], index: 3, kind: input, shape index: {}]
  %s4 = inlined_call_operand.vmem [shape: f32[1,128], index: 4, kind: input, shape index: {}]
  %s5 = inlined_call_operand.vmem [shape: bf16[16,128], index: 5, kind: input, shape index: {}, may-alias: {0,5}]
  %s6 = inlined_call_operand.vmem [shape: f32[1,128], index: 6, kind: input, shape index: {}]
  %s7 = inlined_call_operand.vmem [shape: f32[1,128], index: 7, kind: input, shape index: {}]
  %s8 = inlined_call_operand.vmem [shape: bf16[16,128], index: 8, kind: output, shape index: {}]
  %s9 = sld [smem:[#allocation0]]
  $region58: #{transformer_forward.32} parent=0
    _
  %s11 = ssub.s32 1, %s9
  %s12 = scalar_select 0, %s11, %s9
  $region1: #{transformer_forward.32} parent=0
    #allocation3 [shape = 'u8[131072]{0}', space=vmem, size = 0x20000, scoped, tag = 'input window, operand 1, single buffered']
    #allocation4 [shape = 's32[1]{0}', space=sflag, size = 0x4, scoped, tag = 'scoped memory for transformer_forward.32']
    #allocation5 [shape = 'u8[131072]{0}', space=vmem, size = 0x20000, scoped, tag = 'input window, operand 3, single buffered']
    #allocation6 [shape = 's32[1]{0}', space=sflag, size = 0x4, scoped, tag = 'scoped memory for transformer_forward.32']
    %13 = vsyncpa [#allocation4], 0
    %14 = vsyncpa [#allocation6], 0
    // Predicated region
    $region2: #{transformer_forward.32} parent=1 // pred_check
      _
    $region3: #{transformer_forward.32} parent=1 // pred_check_branch
      %16 = sbr.rel (0) target = $region5
    $region4: #{transformer_forward.32} parent=1 // pred_region
      _
    $region5: #{transformer_forward.32} parent=1 // pred_fallthru
      _
    // Predicated region
    $region6: #{transformer_forward.32} parent=1 // pred_check
      _
    $region7: #{transformer_forward.32} parent=1 // pred_check_branch
      %18 = sbr.rel (0) target = $region9
    $region8: #{transformer_forward.32} parent=1 // pred_region
      %20 = vsyncadd [#allocation4], 0
      %s21 = sshll.u32 %s1, 4
      %s22 = int_to_ptr.hbm [resolvable:$true] %s21
      %s23 = sshll.u32 [#allocation3], 4
      %s24 = int_to_ptr.vmem [resolvable:$true] %s23
      %29 = dma.hbm_to_vmem [thread:$0]  %s22, 4096, %s24, [#allocation4], 256, 256, 16
    $region9: #{transformer_forward.32} parent=1 // pred_fallthru
      _
    // Predicated region
    $region10: #{transformer_forward.32} parent=1 // pred_check
      _
    $region11: #{transformer_forward.32} parent=1 // pred_check_branch
      %31 = sbr.rel (0) target = $region13
    $region12: #{transformer_forward.32} parent=1 // pred_region
      _
    $region13: #{transformer_forward.32} parent=1 // pred_fallthru
      _
    // Predicated region
    $region14: #{transformer_forward.32} parent=1 // pred_check
      _
    $region15: #{transformer_forward.32} parent=1 // pred_check_branch
      %33 = sbr.rel (0) target = $region17
    $region16: #{transformer_forward.32} parent=1 // pred_region
      %35 = vsyncadd [#allocation6], 0
      %s36 = sshll.u32 %s3, 4
      %s37 = int_to_ptr.hbm [resolvable:$true] %s36
      %s38 = sshll.u32 [#allocation5], 4
      %s39 = int_to_ptr.vmem [resolvable:$true] %s38
      %44 = dma.hbm_to_vmem [thread:$0]  %s37, 4096, %s39, [#allocation6], 64, 64, 4
    $region17: #{transformer_forward.32} parent=1 // pred_fallthru
      _
    // Predicated region
    $region18: #{transformer_forward.32} parent=1 // pred_check
      _
    $region19: #{transformer_forward.32} parent=1 // pred_check_branch
      %46 = sbr.rel (0) target = $region21
    $region20: #{transformer_forward.32} parent=1 // pred_region
      _
    $region21: #{transformer_forward.32} parent=1 // pred_fallthru
      _
    // Predicated region
    $region22: #{transformer_forward.32} parent=1 // pred_check
      _
    $region23: #{transformer_forward.32} parent=1 // pred_check_branch
      %48 = sbr.rel (0) target = $region25
    $region24: #{transformer_forward.32} parent=1 // pred_region
      _
    $region25: #{transformer_forward.32} parent=1 // pred_fallthru
      _
    // Predicated region
    $region26: #{transformer_forward.32} parent=1 // pred_check
      _
    $region27: #{transformer_forward.32} parent=1 // pred_check_branch
      %50 = sbr.rel (0) target = $region29
    $region28: #{transformer_forward.32} parent=1 // pred_region
      _
    $region29: #{transformer_forward.32} parent=1 // pred_fallthru
      _
    // Predicated region
    $region30: #{transformer_forward.32} parent=1 // pred_check
      _
    $region31: #{transformer_forward.32} parent=1 // pred_check_branch
      %52 = sbr.rel (0) target = $region33
    $region32: #{transformer_forward.32} parent=1 // pred_region
      _
    $region33: #{transformer_forward.32} parent=1 // pred_fallthru
      _
    // Predicated region
    $region34: #{transformer_forward.32} parent=1 // pred_check
      _
    $region35: #{transformer_forward.32} parent=1 // pred_check_branch
      %54 = sbr.rel (0) target = $region37
    $region36: #{transformer_forward.32} parent=1 // pred_region
      %56 = dma.done [#allocation4], 4096
    $region37: #{transformer_forward.32} parent=1 // pred_fallthru
      _
    // Predicated region
    $region38: #{transformer_forward.32} parent=1 // pred_check
      _
    $region39: #{transformer_forward.32} parent=1 // pred_check_branch
      %58 = sbr.rel (0) target = $region41
    $region40: #{transformer_forward.32} parent=1 // pred_region
      %60 = dma.done [#allocation6], 4096
    $region41: #{transformer_forward.32} parent=1 // pred_fallthru
      _
    %p61 = scmp.eq.s32.totalorder 0, 0
    // Predicated region
    $region42: #{transformer_forward.32} parent=1 // pred_check
      %p62 = pneg %p61
    $region43: #{transformer_forward.32} parent=1 // pred_check_branch
      %64 = sbr.rel (%p62) target = $region45
    $region44: #{transformer_forward.32} parent=1 // pred_region
      %65 = vst [vmem:[#allocation2] sm:$0xff] 0.0
      %66 = vst [vmem:[#allocation2 + $0x8] sm:$0xff] 0.0
    $region45: #{transformer_forward.32} parent=1 // pred_fallthru
      _
    %v67 = vld [vmem:[%s0] sm:$0xf]
    %v68 = vld [vmem:[%s0 + $0x4] sm:$0xf]
    %v69 = vld [vmem:[#allocation3] sm:$0xff]
    %v70 = vld [vmem:[#allocation3 + $0x8] sm:$0xff]
    %v71 = vld [vmem:[#allocation3 + $0x10] sm:$0xff]
    %v72 = vld [vmem:[#allocation3 + $0x18] sm:$0xff]
    %v73 = vld [vmem:[#allocation3 + $0x20] sm:$0xff]
    %v74 = vld [vmem:[#allocation3 + $0x28] sm:$0xff]
    %v75 = vld [vmem:[#allocation3 + $0x30] sm:$0xff]
    %v76 = vld [vmem:[#allocation3 + $0x38] sm:$0xff]
    %v77 = vld [vmem:[#allocation3 + $0x40] sm:$0xff]
    %v78 = vld [vmem:[#allocation3 + $0x48] sm:$0xff]
    %v79 = vld [vmem:[#allocation3 + $0x50] sm:$0xff]
    %v80 = vld [vmem:[#allocation3 + $0x58] sm:$0xff]
    %v81 = vld [vmem:[#allocation3 + $0x60] sm:$0xff]
    %v82 = vld [vmem:[#allocation3 + $0x68] sm:$0xff]
    %v83 = vld [vmem:[#allocation3 + $0x70] sm:$0xff]
    %v84 = vld [vmem:[#allocation3 + $0x78] sm:$0xff]
    %v85 = vld [vmem:[#allocation3 + $0x80] sm:$0xff]
    %v86 = vld [vmem:[#allocation3 + $0x88] sm:$0xff]
    %v87 = vld [vmem:[#allocation3 + $0x90] sm:$0xff]
    %v88 = vld [vmem:[#allocation3 + $0x98] sm:$0xff]
    %v89 = vld [vmem:[#allocation3 + $0xa0] sm:$0xff]
    %v90 = vld [vmem:[#allocation3 + $0xa8] sm:$0xff]
    %v91 = vld [vmem:[#allocation3 + $0xb0] sm:$0xff]
    %v92 = vld [vmem:[#allocation3 + $0xb8] sm:$0xff]
    %v93 = vld [vmem:[#allocation3 + $0xc0] sm:$0xff]
    %v94 = vld [vmem:[#allocation3 + $0xc8] sm:$0xff]
    %v95 = vld [vmem:[#allocation3 + $0xd0] sm:$0xff]
    %v96 = vld [vmem:[#allocation3 + $0xd8] sm:$0xff]
    %v97 = vld [vmem:[#allocation3 + $0xe0] sm:$0xff]
    %v98 = vld [vmem:[#allocation3 + $0xe8] sm:$0xff]
    %v99 = vld [vmem:[#allocation3 + $0xf0] sm:$0xff]
    %v100 = vld [vmem:[#allocation3 + $0xf8] sm:$0xff]
    %v101 = vld [vmem:[%s2] sm:$0xf]
    %v103 = vperm.slane %v101, 0
    %v104 = vperm.slane %v101, 1
    %v105 = vperm.slane %v101, 2
    %v106 = vperm.slane %v101, 3
    %v113 = vunpack.c.l.b16 %v67
    %v114 = vunpack.c.l.b16 %v68
    %v115 = vpack.c.b16 %v114, %v113
    %v149 = vunpack.c.l.b16 %v69
    %v150 = vunpack.c.h.b16 %v69
    %v151 = vunpack.c.l.b16 %v70
    %v152 = vunpack.c.h.b16 %v70
    %v153 = vunpack.c.l.b16 %v71
    %v154 = vunpack.c.h.b16 %v71
    %v155 = vunpack.c.l.b16 %v72
    %v156 = vunpack.c.h.b16 %v72
    %v157 = vunpack.c.l.b16 %v73
    %v158 = vunpack.c.h.b16 %v73
    %v159 = vunpack.c.l.b16 %v74
    %v160 = vunpack.c.h.b16 %v74
    %v161 = vunpack.c.l.b16 %v75
    %v162 = vunpack.c.h.b16 %v75
    %v163 = vunpack.c.l.b16 %v76
    %v164 = vunpack.c.h.b16 %v76
    %v165 = vunpack.c.l.b16 %v77
    %v166 = vunpack.c.h.b16 %v77
    %v167 = vunpack.c.l.b16 %v78
    %v168 = vunpack.c.h.b16 %v78
    %v169 = vunpack.c.l.b16 %v79
    %v170 = vunpack.c.h.b16 %v79
    %v171 = vunpack.c.l.b16 %v80
    %v172 = vunpack.c.h.b16 %v80
    %v173 = vunpack.c.l.b16 %v81
    %v174 = vunpack.c.h.b16 %v81
    %v175 = vunpack.c.l.b16 %v82
    %v176 = vunpack.c.h.b16 %v82
    %v177 = vunpack.c.l.b16 %v83
    %v178 = vunpack.c.h.b16 %v83
    %v179 = vunpack.c.l.b16 %v84
    %v180 = vunpack.c.h.b16 %v84
    %v181 = vunpack.c.l.b16 %v85
    %v182 = vunpack.c.h.b16 %v85
    %v183 = vunpack.c.l.b16 %v86
    %v184 = vunpack.c.h.b16 %v86
    %v185 = vunpack.c.l.b16 %v87
    %v186 = vunpack.c.h.b16 %v87
    %v187 = vunpack.c.l.b16 %v88
    %v188 = vunpack.c.h.b16 %v88
    %v189 = vunpack.c.l.b16 %v89
    %v190 = vunpack.c.h.b16 %v89
    %v191 = vunpack.c.l.b16 %v90
    %v192 = vunpack.c.h.b16 %v90
    %v193 = vunpack.c.l.b16 %v91
    %v194 = vunpack.c.h.b16 %v91
    %v195 = vunpack.c.l.b16 %v92
    %v196 = vunpack.c.h.b16 %v92
    %v197 = vunpack.c.l.b16 %v93
    %v198 = vunpack.c.h.b16 %v93
    %v199 = vunpack.c.l.b16 %v94
    %v200 = vunpack.c.h.b16 %v94
    %v201 = vunpack.c.l.b16 %v95
    %v202 = vunpack.c.h.b16 %v95
    %v203 = vunpack.c.l.b16 %v96
    %v204 = vunpack.c.h.b16 %v96
    %v205 = vunpack.c.l.b16 %v97
    %v206 = vunpack.c.h.b16 %v97
    %v207 = vunpack.c.l.b16 %v98
    %v208 = vunpack.c.h.b16 %v98
    %v209 = vunpack.c.l.b16 %v99
    %v210 = vunpack.c.h.b16 %v99
    %v211 = vunpack.c.l.b16 %v100
    %v212 = vunpack.c.h.b16 %v100
    %v213 = vpack.c.b16 %v153, %v149
    %v214 = vpack.c.b16 %v154, %v150
    %v215 = vpack.c.b16 %v155, %v151
    %v216 = vpack.c.b16 %v156, %v152
    %v217 = vpack.c.b16 %v161, %v157
    %v218 = vpack.c.b16 %v162, %v158
    %v219 = vpack.c.b16 %v163, %v159
    %v220 = vpack.c.b16 %v164, %v160
    %v221 = vpack.c.b16 %v169, %v165
    %v222 = vpack.c.b16 %v170, %v166
    %v223 = vpack.c.b16 %v171, %v167
    %v224 = vpack.c.b16 %v172, %v168
    %v225 = vpack.c.b16 %v177, %v173
    %v226 = vpack.c.b16 %v178, %v174
    %v227 = vpack.c.b16 %v179, %v175
    %v228 = vpack.c.b16 %v180, %v176
    %v229 = vpack.c.b16 %v185, %v181
    %v230 = vpack.c.b16 %v186, %v182
    %v231 = vpack.c.b16 %v187, %v183
    %v232 = vpack.c.b16 %v188, %v184
    %v233 = vpack.c.b16 %v193, %v189
    %v234 = vpack.c.b16 %v194, %v190
    %v235 = vpack.c.b16 %v195, %v191
    %v236 = vpack.c.b16 %v196, %v192
    %v237 = vpack.c.b16 %v201, %v197
    %v238 = vpack.c.b16 %v202, %v198
    %v239 = vpack.c.b16 %v203, %v199
    %v240 = vpack.c.b16 %v204, %v200
    %v241 = vpack.c.b16 %v209, %v205
    %v242 = vpack.c.b16 %v210, %v206
    %v243 = vpack.c.b16 %v211, %v207
    %v244 = vpack.c.b16 %v212, %v208
    %277 = vmatpush.bf16.msra.mxu0 %v241
    %278 = vmatpush.bf16.msra.mxu0 %v237
    %279 = vmatpush.bf16.msra.mxu0 %v233
    %280 = vmatpush.bf16.msra.mxu0 %v229
    %281 = vmatpush.bf16.msra.mxu0 %v225
    %282 = vmatpush.bf16.msra.mxu0 %v221
    %283 = vmatpush.bf16.msra.mxu0 %v217
    %284 = vmatpush.bf16.msra.mxu0 %v213
    %285 = vmatmul.bf16.gmra.mxu0 %v115
    %v286 = vpop.f32.mrf.mxu0
    %v287 = vadd.f32 %v103, %v286
    %v288 = vpop.f32.mrf.mxu0
    %v289 = vadd.f32 %v103, %v288
    %290 = vdwg.mxu0
    %291 = vmatpush.bf16.msra.mxu0 %v242
    %292 = vmatpush.bf16.msra.mxu0 %v238
    %293 = vmatpush.bf16.msra.mxu0 %v234
    %294 = vmatpush.bf16.msra.mxu0 %v230
    %295 = vmatpush.bf16.msra.mxu0 %v226
    %296 = vmatpush.bf16.msra.mxu0 %v222
    %297 = vmatpush.bf16.msra.mxu0 %v218
    %298 = vmatpush.bf16.msra.mxu0 %v214
    %299 = vmatmul.bf16.gmra.mxu0 %v115
    %v300 = vpop.f32.mrf.mxu0
    %v301 = vadd.f32 %v104, %v300
    %v302 = vpop.f32.mrf.mxu0
    %v303 = vadd.f32 %v104, %v302
    %304 = vdwg.mxu0
    %305 = vmatpush.bf16.msra.mxu0 %v243
    %306 = vmatpush.bf16.msra.mxu0 %v239
    %307 = vmatpush.bf16.msra.mxu0 %v235
    %308 = vmatpush.bf16.msra.mxu0 %v231
    %309 = vmatpush.bf16.msra.mxu0 %v227
    %310 = vmatpush.bf16.msra.mxu0 %v223
    %311 = vmatpush.bf16.msra.mxu0 %v219
    %312 = vmatpush.bf16.msra.mxu0 %v215
    %313 = vmatmul.bf16.gmra.mxu0 %v115
    %v314 = vpop.f32.mrf.mxu0
    %v315 = vadd.f32 %v105, %v314
    %v316 = vpop.f32.mrf.mxu0
    %v317 = vadd.f32 %v105, %v316
    %318 = vdwg.mxu0
    %319 = vmatpush.bf16.msra.mxu0 %v244
    %320 = vmatpush.bf16.msra.mxu0 %v240
    %321 = vmatpush.bf16.msra.mxu0 %v236
    %322 = vmatpush.bf16.msra.mxu0 %v232
    %323 = vmatpush.bf16.msra.mxu0 %v228
    %324 = vmatpush.bf16.msra.mxu0 %v224
    %325 = vmatpush.bf16.msra.mxu0 %v220
    %326 = vmatpush.bf16.msra.mxu0 %v216
    %327 = vmatmul.bf16.gmra.mxu0 %v115
    %v328 = vpop.f32.mrf.mxu0
    %v329 = vadd.f32 %v106, %v328
    %v330 = vpop.f32.mrf.mxu0
    %v331 = vadd.f32 %v106, %v330
    %332 = vdwg.mxu0
    %v333 = vmax.f32 %v287, 0.0
    %v334 = vmax.f32 %v301, 0.0
    %v335 = vmax.f32 %v315, 0.0
    %v336 = vmax.f32 %v329, 0.0
    %v337 = vmax.f32 %v289, 0.0
    %v338 = vmax.f32 %v303, 0.0
    %v339 = vmax.f32 %v317, 0.0
    %v340 = vmax.f32 %v331, 0.0
    %v341 = vld [vmem:[#allocation2] sm:$0xff]
    %v342 = vld [vmem:[#allocation2 + $0x8] sm:$0xff]
    %v343 = vpack.c.bf16 %v337, %v333
    %v344 = vpack.c.bf16 %v338, %v334
    %v345 = vpack.c.bf16 %v339, %v335
    %v346 = vpack.c.bf16 %v340, %v336
    %v347 = vld [vmem:[#allocation5] sm:$0xf]
    %v348 = vld [vmem:[#allocation5 + $0x4] sm:$0xf]
    %v349 = vld [vmem:[#allocation5 + $0x8] sm:$0xf]
    %v350 = vld [vmem:[#allocation5 + $0xc] sm:$0xf]
    %v351 = vld [vmem:[#allocation5 + $0x10] sm:$0xf]
    %v352 = vld [vmem:[#allocation5 + $0x14] sm:$0xf]
    %v353 = vld [vmem:[#allocation5 + $0x18] sm:$0xf]
    %v354 = vld [vmem:[#allocation5 + $0x1c] sm:$0xf]
    %v355 = vld [vmem:[#allocation5 + $0x20] sm:$0xf]
    %v356 = vld [vmem:[#allocation5 + $0x24] sm:$0xf]
    %v357 = vld [vmem:[#allocation5 + $0x28] sm:$0xf]
    %v358 = vld [vmem:[#allocation5 + $0x2c] sm:$0xf]
    %v359 = vld [vmem:[#allocation5 + $0x30] sm:$0xf]
    %v360 = vld [vmem:[#allocation5 + $0x34] sm:$0xf]
    %v361 = vld [vmem:[#allocation5 + $0x38] sm:$0xf]
    %v362 = vld [vmem:[#allocation5 + $0x3c] sm:$0xf]
    %v363 = vld [vmem:[#allocation5 + $0x40] sm:$0xf]
    %v364 = vld [vmem:[#allocation5 + $0x44] sm:$0xf]
    %v365 = vld [vmem:[#allocation5 + $0x48] sm:$0xf]
    %v366 = vld [vmem:[#allocation5 + $0x4c] sm:$0xf]
    %v367 = vld [vmem:[#allocation5 + $0x50] sm:$0xf]
    %v368 = vld [vmem:[#allocation5 + $0x54] sm:$0xf]
    %v369 = vld [vmem:[#allocation5 + $0x58] sm:$0xf]
    %v370 = vld [vmem:[#allocation5 + $0x5c] sm:$0xf]
    %v371 = vld [vmem:[#allocation5 + $0x60] sm:$0xf]
    %v372 = vld [vmem:[#allocation5 + $0x64] sm:$0xf]
    %v373 = vld [vmem:[#allocation5 + $0x68] sm:$0xf]
    %v374 = vld [vmem:[#allocation5 + $0x6c] sm:$0xf]
    %v375 = vld [vmem:[#allocation5 + $0x70] sm:$0xf]
    %v376 = vld [vmem:[#allocation5 + $0x74] sm:$0xf]
    %v377 = vld [vmem:[#allocation5 + $0x78] sm:$0xf]
    %v378 = vld [vmem:[#allocation5 + $0x7c] sm:$0xf]
    %v379 = vld [vmem:[#allocation5 + $0x80] sm:$0xf]
    %v380 = vld [vmem:[#allocation5 + $0x84] sm:$0xf]
    %v381 = vld [vmem:[#allocation5 + $0x88] sm:$0xf]
    %v382 = vld [vmem:[#allocation5 + $0x8c] sm:$0xf]
    %v383 = vld [vmem:[#allocation5 + $0x90] sm:$0xf]
    %v384 = vld [vmem:[#allocation5 + $0x94] sm:$0xf]
    %v385 = vld [vmem:[#allocation5 + $0x98] sm:$0xf]
    %v386 = vld [vmem:[#allocation5 + $0x9c] sm:$0xf]
    %v387 = vld [vmem:[#allocation5 + $0xa0] sm:$0xf]
    %v388 = vld [vmem:[#allocation5 + $0xa4] sm:$0xf]
    %v389 = vld [vmem:[#allocation5 + $0xa8] sm:$0xf]
    %v390 = vld [vmem:[#allocation5 + $0xac] sm:$0xf]
    %v391 = vld [vmem:[#allocation5 + $0xb0] sm:$0xf]
    %v392 = vld [vmem:[#allocation5 + $0xb4] sm:$0xf]
    %v393 = vld [vmem:[#allocation5 + $0xb8] sm:$0xf]
    %v394 = vld [vmem:[#allocation5 + $0xbc] sm:$0xf]
    %v395 = vld [vmem:[#allocation5 + $0xc0] sm:$0xf]
    %v396 = vld [vmem:[#allocation5 + $0xc4] sm:$0xf]
    %v397 = vld [vmem:[#allocation5 + $0xc8] sm:$0xf]
    %v398 = vld [vmem:[#allocation5 + $0xcc] sm:$0xf]
    %v399 = vld [vmem:[#allocation5 + $0xd0] sm:$0xf]
    %v400 = vld [vmem:[#allocation5 + $0xd4] sm:$0xf]
    %v401 = vld [vmem:[#allocation5 + $0xd8] sm:$0xf]
    %v402 = vld [vmem:[#allocation5 + $0xdc] sm:$0xf]
    %v403 = vld [vmem:[#allocation5 + $0xe0] sm:$0xf]
    %v404 = vld [vmem:[#allocation5 + $0xe4] sm:$0xf]
    %v405 = vld [vmem:[#allocation5 + $0xe8] sm:$0xf]
    %v406 = vld [vmem:[#allocation5 + $0xec] sm:$0xf]
    %v407 = vld [vmem:[#allocation5 + $0xf0] sm:$0xf]
    %v408 = vld [vmem:[#allocation5 + $0xf4] sm:$0xf]
    %v409 = vld [vmem:[#allocation5 + $0xf8] sm:$0xf]
    %v410 = vld [vmem:[#allocation5 + $0xfc] sm:$0xf]
    %v475 = vunpack.c.l.b16 %v347
    %v476 = vunpack.c.l.b16 %v348
    %v477 = vunpack.c.l.b16 %v349
    %v478 = vunpack.c.l.b16 %v350
    %v479 = vunpack.c.l.b16 %v351
    %v480 = vunpack.c.l.b16 %v352
    %v481 = vunpack.c.l.b16 %v353
    %v482 = vunpack.c.l.b16 %v354
    %v483 = vunpack.c.l.b16 %v355
    %v484 = vunpack.c.l.b16 %v356
    %v485 = vunpack.c.l.b16 %v357
    %v486 = vunpack.c.l.b16 %v358
    %v487 = vunpack.c.l.b16 %v359
    %v488 = vunpack.c.l.b16 %v360
    %v489 = vunpack.c.l.b16 %v361
    %v490 = vunpack.c.l.b16 %v362
    %v491 = vunpack.c.l.b16 %v363
    %v492 = vunpack.c.l.b16 %v364
    %v493 = vunpack.c.l.b16 %v365
    %v494 = vunpack.c.l.b16 %v366
    %v495 = vunpack.c.l.b16 %v367
    %v496 = vunpack.c.l.b16 %v368
    %v497 = vunpack.c.l.b16 %v369
    %v498 = vunpack.c.l.b16 %v370
    %v499 = vunpack.c.l.b16 %v371
    %v500 = vunpack.c.l.b16 %v372
    %v501 = vunpack.c.l.b16 %v373
    %v502 = vunpack.c.l.b16 %v374
    %v503 = vunpack.c.l.b16 %v375
    %v504 = vunpack.c.l.b16 %v376
    %v505 = vunpack.c.l.b16 %v377
    %v506 = vunpack.c.l.b16 %v378
    %v507 = vunpack.c.l.b16 %v379
    %v508 = vunpack.c.l.b16 %v380
    %v509 = vunpack.c.l.b16 %v381
    %v510 = vunpack.c.l.b16 %v382
    %v511 = vunpack.c.l.b16 %v383
    %v512 = vunpack.c.l.b16 %v384
    %v513 = vunpack.c.l.b16 %v385
    %v514 = vunpack.c.l.b16 %v386
    %v515 = vunpack.c.l.b16 %v387
    %v516 = vunpack.c.l.b16 %v388
    %v517 = vunpack.c.l.b16 %v389
    %v518 = vunpack.c.l.b16 %v390
    %v519 = vunpack.c.l.b16 %v391
    %v520 = vunpack.c.l.b16 %v392
    %v521 = vunpack.c.l.b16 %v393
    %v522 = vunpack.c.l.b16 %v394
    %v523 = vunpack.c.l.b16 %v395
    %v524 = vunpack.c.l.b16 %v396
    %v525 = vunpack.c.l.b16 %v397
    %v526 = vunpack.c.l.b16 %v398
    %v527 = vunpack.c.l.b16 %v399
    %v528 = vunpack.c.l.b16 %v400
    %v529 = vunpack.c.l.b16 %v401
    %v530 = vunpack.c.l.b16 %v402
    %v531 = vunpack.c.l.b16 %v403
    %v532 = vunpack.c.l.b16 %v404
    %v533 = vunpack.c.l.b16 %v405
    %v534 = vunpack.c.l.b16 %v406
    %v535 = vunpack.c.l.b16 %v407
    %v536 = vunpack.c.l.b16 %v408
    %v537 = vunpack.c.l.b16 %v409
    %v538 = vunpack.c.l.b16 %v410
    %v539 = vpack.c.b16 %v476, %v475
    %v540 = vpack.c.b16 %v478, %v477
    %v541 = vpack.c.b16 %v480, %v479
    %v542 = vpack.c.b16 %v482, %v481
    %v543 = vpack.c.b16 %v484, %v483
    %v544 = vpack.c.b16 %v486, %v485
    %v545 = vpack.c.b16 %v488, %v487
    %v546 = vpack.c.b16 %v490, %v489
    %v547 = vpack.c.b16 %v492, %v491
    %v548 = vpack.c.b16 %v494, %v493
    %v549 = vpack.c.b16 %v496, %v495
    %v550 = vpack.c.b16 %v498, %v497
    %v551 = vpack.c.b16 %v500, %v499
    %v552 = vpack.c.b16 %v502, %v501
    %v553 = vpack.c.b16 %v504, %v503
    %v554 = vpack.c.b16 %v506, %v505
    %v555 = vpack.c.b16 %v508, %v507
    %v556 = vpack.c.b16 %v510, %v509
    %v557 = vpack.c.b16 %v512, %v511
    %v558 = vpack.c.b16 %v514, %v513
    %v559 = vpack.c.b16 %v516, %v515
    %v560 = vpack.c.b16 %v518, %v517
    %v561 = vpack.c.b16 %v520, %v519
    %v562 = vpack.c.b16 %v522, %v521
    %v563 = vpack.c.b16 %v524, %v523
    %v564 = vpack.c.b16 %v526, %v525
    %v565 = vpack.c.b16 %v528, %v527
    %v566 = vpack.c.b16 %v530, %v529
    %v567 = vpack.c.b16 %v532, %v531
    %v568 = vpack.c.b16 %v534, %v533
    %v569 = vpack.c.b16 %v536, %v535
    %v570 = vpack.c.b16 %v538, %v537
    %603 = vmatpush.bf16.msra.mxu0 %v546
    %604 = vmatpush.bf16.msra.mxu0 %v545
    %605 = vmatpush.bf16.msra.mxu0 %v544
    %606 = vmatpush.bf16.msra.mxu0 %v543
    %607 = vmatpush.bf16.msra.mxu0 %v542
    %608 = vmatpush.bf16.msra.mxu0 %v541
    %609 = vmatpush.bf16.msra.mxu0 %v540
    %610 = vmatpush.bf16.msra.mxu0 %v539
    %611 = vmatmul.bf16.gmra.mxu0 %v343
    %v612 = vpop.f32.mrf.mxu0
    %v613 = vadd.f32 0.0, %v612
    %v614 = vpop.f32.mrf.mxu0
    %v615 = vadd.f32 0.0, %v614
    %616 = vdwg.mxu0
    %617 = vmatpush.bf16.msra.mxu0 %v554
    %618 = vmatpush.bf16.msra.mxu0 %v553
    %619 = vmatpush.bf16.msra.mxu0 %v552
    %620 = vmatpush.bf16.msra.mxu0 %v551
    %621 = vmatpush.bf16.msra.mxu0 %v550
    %622 = vmatpush.bf16.msra.mxu0 %v549
    %623 = vmatpush.bf16.msra.mxu0 %v548
    %624 = vmatpush.bf16.msra.mxu0 %v547
    %625 = vmatmul.bf16.gmra.mxu0 %v344
    %v626 = vpop.f32.mrf.mxu0
    %v627 = vadd.f32 %v613, %v626
    %v628 = vpop.f32.mrf.mxu0
    %v629 = vadd.f32 %v615, %v628
    %630 = vdwg.mxu0
    %631 = vmatpush.bf16.msra.mxu0 %v562
    %632 = vmatpush.bf16.msra.mxu0 %v561
    %633 = vmatpush.bf16.msra.mxu0 %v560
    %634 = vmatpush.bf16.msra.mxu0 %v559
    %635 = vmatpush.bf16.msra.mxu0 %v558
    %636 = vmatpush.bf16.msra.mxu0 %v557
    %637 = vmatpush.bf16.msra.mxu0 %v556
    %638 = vmatpush.bf16.msra.mxu0 %v555
    %639 = vmatmul.bf16.gmra.mxu0 %v345
    %v640 = vpop.f32.mrf.mxu0
    %v641 = vadd.f32 %v627, %v640
    %v642 = vpop.f32.mrf.mxu0
    %v643 = vadd.f32 %v629, %v642
    %644 = vdwg.mxu0
    %645 = vmatpush.bf16.msra.mxu0 %v570
    %646 = vmatpush.bf16.msra.mxu0 %v569
    %647 = vmatpush.bf16.msra.mxu0 %v568
    %648 = vmatpush.bf16.msra.mxu0 %v567
    %649 = vmatpush.bf16.msra.mxu0 %v566
    %650 = vmatpush.bf16.msra.mxu0 %v565
    %651 = vmatpush.bf16.msra.mxu0 %v564
    %652 = vmatpush.bf16.msra.mxu0 %v563
    %653 = vmatmul.bf16.gmra.mxu0 %v346
    %v654 = vpop.f32.mrf.mxu0
    %v655 = vadd.f32 %v641, %v654
    %v656 = vpop.f32.mrf.mxu0
    %v657 = vadd.f32 %v643, %v656
    %658 = vdwg.mxu0
    %v659 = vadd.f32 %v341, %v655
    %v660 = vadd.f32 %v342, %v657
    %661 = vst [vmem:[#allocation2] sm:$0xff] %v659
    %662 = vst [vmem:[#allocation2 + $0x8] sm:$0xff] %v660
    // Predicated region
    $region46: #{transformer_forward.32} parent=1 // pred_check
      %p663 = pneg %p61
    $region47: #{transformer_forward.32} parent=1 // pred_check_branch
      %665 = sbr.rel (%p663) target = $region49
    $region48: #{transformer_forward.32} parent=1 // pred_region
      %v666 = vld [vmem:[#allocation2] sm:$0xff]
      %v667 = vld [vmem:[#allocation2 + $0x8] sm:$0xff]
      %v668 = vld [vmem:[%s4] sm:$0x1]
      %v670 = vperm.slane %v668, 0
      %v672 = vadd.f32 %v666, %v670
      %v673 = vadd.f32 %v667, %v670
      %v674 = vld [vmem:[%s5] sm:$0xf]
      %v675 = vld [vmem:[%s5 + $0x4] sm:$0xf]
      %v676 = vunpack.c.l.bf16 %v674
      %v677 = vunpack.c.l.bf16 %v675
      %v678 = vadd.f32 %v672, %v676
      %v679 = vadd.f32 %v673, %v677
      %680 = vadd.xlane.f32.xlu0 %v678
      %v681 = vpop.xlane.xlu0 %680
      %682 = vadd.xlane.f32.xlu0 %v679
      %v683 = vpop.xlane.xlu0 %682
      %v684 = vrcp.pop 128.0
      %v685 = vmul.f32 128.0, %v684
      %v686 = vsub.f32 1.0, %v685
      %v687 = vmul.f32 %v684, %v686
      %v688 = vadd.f32 %v684, %v687
      %vm689 = vweird.f32 %v684
      %v690 = vsel %vm689, %v684, %v688
      %v691 = vmul.f32 %v681, %v690
      %v692 = vmul.f32 %v683, %v690
      %v693 = vsub.f32 %v678, %v691
      %v694 = vsub.f32 %v679, %v692
      %v695 = vmul.f32 %v693, %v693
      %v696 = vmul.f32 %v694, %v694
      %697 = vadd.xlane.f32.xlu0 %v695
      %v698 = vpop.xlane.xlu0 %697
      %699 = vadd.xlane.f32.xlu0 %v696
      %v700 = vpop.xlane.xlu0 %699
      %v701 = vmul.f32 %v698, %v690
      %v702 = vmul.f32 %v700, %v690
      %v703 = vadd.f32 %v701, 1e-05
      %v704 = vadd.f32 %v702, 1e-05
      %v705 = vrsqrt.pop %v703
      %v706 = vmul.f32 %v705, %v703
      %v707 = vmul.f32 %v706, %v705
      %v708 = vmul.f32 0.5, %v707
      %v709 = vsub.f32 1.5, %v708
      %v710 = vmul.f32 %v705, %v709
      %vm711 = vweird.f32 %v703
      %vm712 = vweird.f32 %v705
      %vm713 = vmor %vm711, %vm712
      %v714 = vsel %vm713, %v705, %v710
      %v715 = vrsqrt.pop %v704
      %v716 = vmul.f32 %v715, %v704
      %v717 = vmul.f32 %v716, %v715
      %v718 = vmul.f32 0.5, %v717
      %v719 = vsub.f32 1.5, %v718
      %v720 = vmul.f32 %v715, %v719
      %vm721 = vweird.f32 %v704
      %vm722 = vweird.f32 %v715
      %vm723 = vmor %vm721, %vm722
      %v724 = vsel %vm723, %v715, %v720
      %v725 = vmul.f32 %v693, %v714
      %v726 = vmul.f32 %v694, %v724
      %v727 = vld [vmem:[%s6] sm:$0x1]
      %v729 = vperm.slane %v727, 0
      %v731 = vmul.f32 %v725, %v729
      %v732 = vmul.f32 %v726, %v729
      %v733 = vld [vmem:[%s7] sm:$0x1]
      %v735 = vperm.slane %v733, 0
      %v737 = vadd.f32 %v731, %v735
      %v738 = vadd.f32 %v732, %v735
      %v739 = vpack.c.bf16 %v737, %v737
      %v740 = vpack.c.bf16 %v738, %v738
      %741 = vst [vmem:[%s8] sm:$0xf] %v739
      %742 = vst [vmem:[%s8 + $0x4] sm:$0xf] %v740
    $region49: #{transformer_forward.32} parent=1 // pred_fallthru
      _
    // Predicated region
    $region50: #{transformer_forward.32} parent=1 // pred_check
      _
    $region51: #{transformer_forward.32} parent=1 // pred_check_branch
      %744 = sbr.rel (0) target = $region53
    $region52: #{transformer_forward.32} parent=1 // pred_region
      _
    $region53: #{transformer_forward.32} parent=1 // pred_fallthru
      _
    // Predicated region
    $region54: #{transformer_forward.32} parent=1 // pred_check
      _
    $region55: #{transformer_forward.32} parent=1 // pred_check_branch
      %746 = sbr.rel (0) target = $region57
    $region56: #{transformer_forward.32} parent=1 // pred_region
      _
    $region57: #{transformer_forward.32} parent=1 // pred_fallthru
      _
    %747 = vsyncpa [#allocation4], 1
    %748 = vsyncpa [#allocation6], 1

// kernel: transformer_forward.34
$region0: #{transformer_forward.34}
  #allocation0 [shape = 'u32[]', space=smem, size = 0x4, offset = 0x4, fixed_abs, tag = 'smem constant byte address 0x4 - core index']
  #allocation1 [shape = 'u32[72,128]{1,0:T(1,128)}', space=vmem, size = 0x9000, scoped, tag = 'internal scratch']
  #allocation2 [shape = 'f32[4,8,1]{2,1,0:T(8,128)}', space=vmem, size = 0x4000, scoped, tag = 'scratch operand']
  #allocation3 [shape = 'f32[4,8,1]{2,1,0:T(8,128)}', space=vmem, size = 0x4000, scoped, tag = 'scratch operand']
  #allocation4 [shape = 'f32[8,128]{1,0:T(8,128)}', space=vmem, size = 0x1000, scoped, tag = 'scratch operand']
  %s0 = inlined_call_operand.vmem [shape: s32[2,1,8], index: 0, kind: input, shape index: {}]
  %s1 = inlined_call_operand.vmem [shape: bf16[2,8,384], index: 1, kind: input, shape index: {}, may-alias: {1,2,3}]
  %s2 = inlined_call_operand.vmem [shape: bf16[2,8,384], index: 2, kind: input, shape index: {}, may-alias: {1,2,3}]
  %s3 = inlined_call_operand.vmem [shape: bf16[2,8,384], index: 3, kind: input, shape index: {}, may-alias: {1,2,3}]
  %s4 = inlined_call_operand.vmem [shape: bf16[2,8,128], index: 4, kind: output, shape index: {}]
  %s5 = sld [smem:[#allocation0]]
  $region57: #{transformer_forward.34} parent=0
    _
  %s7 = ssub.s32 1, %s5
  %s8 = scalar_select 0, %s7, %s5
  loop: start=0, step=1, limit=4
  $region2: #{transformer_forward.34} parent=0 // loop_pre_header
    _
  $region3: #{transformer_forward.34} parent=0 // loop_header
    %s10 = sphi 0, %s14
    %p11 = scmp.ge.s32.totalorder %s10, 4
    %s17 = sphi 0, %s36
    %s18 = sphi 0, %s32
    %s19 = sphi 0, %s28
    %s20 = sphi 0, %s17
    %s21 = sphi 0, %s18
    %s22 = sphi 0, %s19
    %s23 = sphi 0, %s20
    %s24 = sphi 0, %s21
    %s25 = sphi 0, %s22
    %s41 = sphi 0, %s43
    %s44 = sphi 0, %s41
    %s45 = sphi 0, %s44
    %s61 = sphi 0, %s45
    %s69 = sphi 0, %s71
    %s72 = sphi 0, %s69
    %s73 = sphi 0, %s72
    %s89 = sphi 0, %s73
    %s101 = sphi 0, %s103
    %s104 = sphi 0, %s101
    %s105 = sphi 0, %s104
    %s121 = sphi 0, %s105
    %s133 = sphi 0, %s135
    %s136 = sphi 0, %s133
    %s137 = sphi 0, %s136
    %s153 = sphi 0, %s137
    %s161 = sphi 0, %s163
    %s164 = sphi 0, %s161
    %s165 = sphi 0, %s164
    %s181 = sphi 0, %s165
  $region4: #{transformer_forward.34} parent=0 // loop_header_branch
    %13 = sbr.rel (%p11) target = $region8
  $region5: #{transformer_forward.34} parent=0 // loop_body
    %s15 = ssub.s32 %s10, 1
    %s16 = ssub.s32 %s10, 2
    %s26 = sadd.s32 1, %s19
    %p27 = scmp.ge.s32.totalorder %s26, 1
    %s28 = scalar_select %p27, 0, %s26
    %s29 = sadd.s32 1, %s18
    %s30 = scalar_select %p27, %s29, %s18
    %p31 = scmp.ge.s32.totalorder %s30, 1
    %s32 = scalar_select %p31, 0, %s30
    %s33 = sadd.s32 1, %s17
    %s34 = scalar_select %p31, %s33, %s17
    %p35 = scmp.ge.s32.totalorder %s34, 2
    %s36 = scalar_select %p35, 0, %s34
    %s37 = ssub.s32 %s17, %s36
    %s38 = ssub.s32 %s19, %s28
    %s39 = sor.u32 %s37, %s38
    %p40 = scmp.eq.s32.totalorder %s39, 0
    %s42 = sadd.s32 %s41, 1
    %s43 = scalar_select %p40, %s41, %s42
    %p46 = pneg %p40
    %p47 = scmp.eq.s32.totalorder %s10, 1
    %p48 = por %p46, %p47
    %p49 = scmp.ne.s32.totalorder %s41, %s44
    %p50 = scmp.eq.s32.totalorder %s10, 0
    %p51 = por %p49, %p50
    %p52 = scmp.ne.s32.totalorder %s41, %s44
    %p53 = scmp.eq.s32.totalorder %s15, 1
    %p54 = por %p52, %p53
    %p55 = scmp.ne.s32.totalorder %s44, %s45
    %p56 = scmp.eq.s32.totalorder %s15, 0
    %p57 = por %p55, %p56
    %p58 = scmp.ne.s32.totalorder %s44, %s45
    %p59 = scmp.eq.s32.totalorder %s16, 1
    %p60 = por %p58, %p59
    %p62 = scmp.ne.s32.totalorder %s45, %s61
    %p63 = scmp.eq.s32.totalorder %s16, 0
    %p64 = por %p62, %p63
    %s65 = ssub.s32 %s17, %s36
    %s66 = ssub.s32 %s18, %s32
    %s67 = sor.u32 %s65, %s66
    %p68 = scmp.eq.s32.totalorder %s67, 0
    %s70 = sadd.s32 %s69, 1
    %s71 = scalar_select %p68, %s69, %s70
    %p74 = pneg %p68
    %p75 = scmp.eq.s32.totalorder %s10, 1
    %p76 = por %p74, %p75
    %p77 = scmp.ne.s32.totalorder %s69, %s72
    %p78 = scmp.eq.s32.totalorder %s10, 0
    %p79 = por %p77, %p78
    %p80 = scmp.ne.s32.totalorder %s69, %s72
    %p81 = scmp.eq.s32.totalorder %s15, 1
    %p82 = por %p80, %p81
    %p83 = scmp.ne.s32.totalorder %s72, %s73
    %p84 = scmp.eq.s32.totalorder %s15, 0
    %p85 = por %p83, %p84
    %p86 = scmp.ne.s32.totalorder %s72, %s73
    %p87 = scmp.eq.s32.totalorder %s16, 1
    %p88 = por %p86, %p87
    %p90 = scmp.ne.s32.totalorder %s73, %s89
    %p91 = scmp.eq.s32.totalorder %s16, 0
    %p92 = por %p90, %p91
    %s93 = sadd.s32 %s18, 1
    %s94 = sadd.s32 %s32, 1
    %s95 = ssub.s32 %s17, %s36
    %s96 = ssub.s32 %s19, %s28
    %s97 = sor.u32 %s95, %s96
    %s98 = ssub.s32 %s93, %s94
    %s99 = sor.u32 %s97, %s98
    %p100 = scmp.eq.s32.totalorder %s99, 0
    %s102 = sadd.s32 %s101, 1
    %s103 = scalar_select %p100, %s101, %s102
    %p106 = pneg %p100
    %p107 = scmp.eq.s32.totalorder %s10, 1
    %p108 = por %p106, %p107
    %p109 = scmp.ne.s32.totalorder %s101, %s104
    %p110 = scmp.eq.s32.totalorder %s10, 0
    %p111 = por %p109, %p110
    %p112 = scmp.ne.s32.totalorder %s101, %s104
    %p113 = scmp.eq.s32.totalorder %s15, 1
    %p114 = por %p112, %p113
    %p115 = scmp.ne.s32.totalorder %s104, %s105
    %p116 = scmp.eq.s32.totalorder %s15, 0
    %p117 = por %p115, %p116
    %p118 = scmp.ne.s32.totalorder %s104, %s105
    %p119 = scmp.eq.s32.totalorder %s16, 1
    %p120 = por %p118, %p119
    %p122 = scmp.ne.s32.totalorder %s105, %s121
    %p123 = scmp.eq.s32.totalorder %s16, 0
    %p124 = por %p122, %p123
    %s125 = sadd.s32 %s18, 2
    %s126 = sadd.s32 %s32, 2
    %s127 = ssub.s32 %s17, %s36
    %s128 = ssub.s32 %s19, %s28
    %s129 = sor.u32 %s127, %s128
    %s130 = ssub.s32 %s125, %s126
    %s131 = sor.u32 %s129, %s130
    %p132 = scmp.eq.s32.totalorder %s131, 0
    %s134 = sadd.s32 %s133, 1
    %s135 = scalar_select %p132, %s133, %s134
    %p138 = pneg %p132
    %p139 = scmp.eq.s32.totalorder %s10, 1
    %p140 = por %p138, %p139
    %p141 = scmp.ne.s32.totalorder %s133, %s136
    %p142 = scmp.eq.s32.totalorder %s10, 0
    %p143 = por %p141, %p142
    %p144 = scmp.ne.s32.totalorder %s133, %s136
    %p145 = scmp.eq.s32.totalorder %s15, 1
    %p146 = por %p144, %p145
    %p147 = scmp.ne.s32.totalorder %s136, %s137
    %p148 = scmp.eq.s32.totalorder %s15, 0
    %p149 = por %p147, %p148
    %p150 = scmp.ne.s32.totalorder %s136, %s137
    %p151 = scmp.eq.s32.totalorder %s16, 1
    %p152 = por %p150, %p151
    %p154 = scmp.ne.s32.totalorder %s137, %s153
    %p155 = scmp.eq.s32.totalorder %s16, 0
    %p156 = por %p154, %p155
    %s157 = ssub.s32 %s17, %s36
    %s158 = ssub.s32 %s18, %s32
    %s159 = sor.u32 %s157, %s158
    %p160 = scmp.eq.s32.totalorder %s159, 0
    %s162 = sadd.s32 %s161, 1
    %s163 = scalar_select %p160, %s161, %s162
    %p166 = pneg %p160
    %p167 = scmp.eq.s32.totalorder %s10, 1
    %p168 = por %p166, %p167
    %p169 = scmp.ne.s32.totalorder %s161, %s164
    %p170 = scmp.eq.s32.totalorder %s10, 0
    %p171 = por %p169, %p170
    %p172 = scmp.ne.s32.totalorder %s161, %s164
    %p173 = scmp.eq.s32.totalorder %s15, 1
    %p174 = por %p172, %p173
    %p175 = scmp.ne.s32.totalorder %s164, %s165
    %p176 = scmp.eq.s32.totalorder %s15, 0
    %p177 = por %p175, %p176
    %p178 = scmp.ne.s32.totalorder %s164, %s165
    %p179 = scmp.eq.s32.totalorder %s16, 1
    %p180 = por %p178, %p179
    %p182 = scmp.ne.s32.totalorder %s165, %s181
    %p183 = scmp.eq.s32.totalorder %s16, 0
    %p184 = por %p182, %p183
    %p185 = scmp.le.s32.totalorder 1, %s10
    %p186 = scmp.lt.s32.totalorder %s10, 3
    %p187 = pnand %p185, %p186
    %p188 = pneg %p187
    // Predicated region
    $region9: #{transformer_forward.34} parent=5 // pred_check
      _
    $region10: #{transformer_forward.34} parent=5 // pred_check_branch
      %190 = sbr.rel (%p187) target = $region12
    $region11: #{transformer_forward.34} parent=5 // pred_region
      %s191 = ssub.s32 %s10, 1
    $region12: #{transformer_forward.34} parent=5 // pred_fallthru
      _
    %p192 = scmp.lt.s32.totalorder %s10, 2
    // Predicated region
    $region13: #{transformer_forward.34} parent=5 // pred_check
      %p193 = pneg %p192
    $region14: #{transformer_forward.34} parent=5 // pred_check_branch
      %195 = sbr.rel (%p193) target = $region16
    $region15: #{transformer_forward.34} parent=5 // pred_region
      // Predicated region
      $region17: #{transformer_forward.34} parent=15 // pred_check
        %p196 = pneg %p51
      $region18: #{transformer_forward.34} parent=15 // pred_check_branch
        %198 = sbr.rel (%p196) target = $region20
      $region19: #{transformer_forward.34} parent=15 // pred_region
        %p199 = scmp.lt.s32.totalorder %s17, 1
        %s200 = scalar_select %p199, %s17, 1
        %p201 = scmp.lt.s32.totalorder %s19, 0
        %s202 = scalar_select %p201, %s19, 0
        %s203 = sadd.s32 %s202, %s200
        %s204 = scalar_lea.vmem %s0, %s203
      $region20: #{transformer_forward.34} parent=15 // pred_fallthru
        _
      // Predicated region
      $region21: #{transformer_forward.34} parent=15 // pred_check
        %p205 = pneg %p79
      $region22: #{transformer_forward.34} parent=15 // pred_check_branch
        %207 = sbr.rel (%p205) target = $region24
      $region23: #{transformer_forward.34} parent=15 // pred_region
        %p208 = scmp.lt.s32.totalorder %s17, 1
        %s209 = scalar_select %p208, %s17, 1
        %p210 = scmp.lt.s32.totalorder %s18, 2
        %s211 = scalar_select %p210, %s18, 2
        %s212 = smul.addr %s209, 3
        %s213 = sadd.s32 %s211, %s212
        %s214 = smul.addr %s213, 4
        %s215 = scalar_lea.vmem %s1, %s214
      $region24: #{transformer_forward.34} parent=15 // pred_fallthru
        _
      // Predicated region
      $region25: #{transformer_forward.34} parent=15 // pred_check
        %p216 = pneg %p111
      $region26: #{transformer_forward.34} parent=15 // pred_check_branch
        %218 = sbr.rel (%p216) target = $region28
      $region27: #{transformer_forward.34} parent=15 // pred_region
        %s219 = sadd.s32 %s18, 1
        %p220 = scmp.lt.s32.totalorder %s17, 1
        %s221 = scalar_select %p220, %s17, 1
        %p222 = scmp.lt.s32.totalorder %s19, 0
        %s223 = scalar_select %p222, %s19, 0
        %p224 = scmp.lt.s32.totalorder %s219, 2
        %s225 = scalar_select %p224, %s219, 2
        %s226 = smul.addr %s223, 3
        %s227 = sadd.s32 %s225, %s226
        %s228 = smul.addr %s221, 3
        %s229 = sadd.s32 %s227, %s228
        %s230 = smul.addr %s229, 4
        %s231 = scalar_lea.vmem %s2, %s230
        %s232 = sadd.s32 %s18, 1
      $region28: #{transformer_forward.34} parent=15 // pred_fallthru
        _
      // Predicated region
      $region29: #{transformer_forward.34} parent=15 // pred_check
        %p233 = pneg %p143
      $region30: #{transformer_forward.34} parent=15 // pred_check_branch
        %235 = sbr.rel (%p233) target = $region32
      $region31: #{transformer_forward.34} parent=15 // pred_region
        %s236 = sadd.s32 %s18, 2
        %p237 = scmp.lt.s32.totalorder %s17, 1
        %s238 = scalar_select %p237, %s17, 1
        %p239 = scmp.lt.s32.totalorder %s19, 0
        %s240 = scalar_select %p239, %s19, 0
        %p241 = scmp.lt.s32.totalorder %s236, 2
        %s242 = scalar_select %p241, %s236, 2
        %s243 = smul.addr %s240, 3
        %s244 = sadd.s32 %s242, %s243
        %s245 = smul.addr %s238, 3
        %s246 = sadd.s32 %s244, %s245
        %s247 = smul.addr %s246, 4
        %s248 = scalar_lea.vmem %s3, %s247
        %s249 = sadd.s32 %s18, 2
      $region32: #{transformer_forward.34} parent=15 // pred_fallthru
        _
    $region16: #{transformer_forward.34} parent=5 // pred_fallthru
      _
    %p250 = scmp.le.s32.totalorder 1, %s10
    %p251 = scmp.lt.s32.totalorder %s10, 3
    %p252 = pnand %p250, %p251
    %p253 = pneg %p252
    // Predicated region
    $region33: #{transformer_forward.34} parent=5 // pred_check
      _
    $region34: #{transformer_forward.34} parent=5 // pred_check_branch
      %255 = sbr.rel (%p252) target = $region36
    $region35: #{transformer_forward.34} parent=5 // pred_region
      %s256 = ssub.s32 %s10, 1
      %p257 = scmp.lt.s32.totalorder %s20, 1
      %s258 = scalar_select %p257, %s20, 1
      %p259 = scmp.lt.s32.totalorder %s22, 0
      %s260 = scalar_select %p259, %s22, 0
      %s261 = sadd.s32 %s260, %s258
      %s262 = scalar_lea.vmem %s0, %s261
      %p263 = pneg %p57
      %p264 = pneg %p54
      %p265 = scmp.lt.s32.totalorder %s20, 1
      %s266 = scalar_select %p265, %s20, 1
      %p267 = scmp.lt.s32.totalorder %s21, 2
      %s268 = scalar_select %p267, %s21, 2
      %s269 = smul.addr %s266, 3
      %s270 = sadd.s32 %s268, %s269
      %s271 = smul.addr %s270, 4
      %s272 = scalar_lea.vmem %s1, %s271
      %p273 = pneg %p85
      %p274 = pneg %p82
      %s275 = sadd.s32 %s21, 1
      %p276 = scmp.lt.s32.totalorder %s20, 1
      %s277 = scalar_select %p276, %s20, 1
      %p278 = scmp.lt.s32.totalorder %s22, 0
      %s279 = scalar_select %p278, %s22, 0
      %p280 = scmp.lt.s32.totalorder %s275, 2
      %s281 = scalar_select %p280, %s275, 2
      %s282 = smul.addr %s279, 3
      %s283 = sadd.s32 %s281, %s282
      %s284 = smul.addr %s277, 3
      %s285 = sadd.s32 %s283, %s284
      %s286 = smul.addr %s285, 4
      %s287 = scalar_lea.vmem %s2, %s286
      %p288 = pneg %p117
      %p289 = pneg %p114
      %s290 = sadd.s32 %s21, 2
      %p291 = scmp.lt.s32.totalorder %s20, 1
      %s292 = scalar_select %p291, %s20, 1
      %p293 = scmp.lt.s32.totalorder %s22, 0
      %s294 = scalar_select %p293, %s22, 0
      %p295 = scmp.lt.s32.totalorder %s290, 2
      %s296 = scalar_select %p295, %s290, 2
      %s297 = smul.addr %s294, 3
      %s298 = sadd.s32 %s296, %s297
      %s299 = smul.addr %s292, 3
      %s300 = sadd.s32 %s298, %s299
      %s301 = smul.addr %s300, 4
      %s302 = scalar_lea.vmem %s3, %s301
      %p303 = pneg %p149
      %p304 = pneg %p146
      %p305 = pneg %p177
      %p306 = pneg %p174
      %p307 = scmp.lt.s32.totalorder %s20, 1
      %s308 = scalar_select %p307, %s20, 1
      %p309 = scmp.lt.s32.totalorder %s21, 0
      %s310 = scalar_select %p309, %s21, 0
      %s311 = sadd.s32 %s310, %s308
      %s312 = smul.addr %s311, 4
      %s313 = scalar_lea.vmem %s4, %s312
      %p314 = scmp.lt.s32.totalorder %s20, 1
      %s315 = scalar_select %p314, %s20, 1
      %p316 = scmp.lt.s32.totalorder %s22, 0
      %s317 = scalar_select %p316, %s22, 0
      %s318 = sadd.s32 %s317, %s315
      %s319 = scalar_lea.vmem %s0, %s318
      %p320 = scmp.lt.s32.totalorder %s20, 1
      %s321 = scalar_select %p320, %s20, 1
      %p322 = scmp.lt.s32.totalorder %s21, 2
      %s323 = scalar_select %p322, %s21, 2
      %s324 = smul.addr %s321, 3
      %s325 = sadd.s32 %s323, %s324
      %s326 = smul.addr %s325, 4
      %s327 = scalar_lea.vmem %s1, %s326
      %s328 = sadd.s32 %s21, 1
      %p329 = scmp.lt.s32.totalorder %s20, 1
      %s330 = scalar_select %p329, %s20, 1
      %p331 = scmp.lt.s32.totalorder %s22, 0
      %s332 = scalar_select %p331, %s22, 0
      %p333 = scmp.lt.s32.totalorder %s328, 2
      %s334 = scalar_select %p333, %s328, 2
      %s335 = smul.addr %s332, 3
      %s336 = sadd.s32 %s334, %s335
      %s337 = smul.addr %s330, 3
      %s338 = sadd.s32 %s336, %s337
      %s339 = smul.addr %s338, 4
      %s340 = scalar_lea.vmem %s2, %s339
      %s341 = sadd.s32 %s21, 1
      %s342 = sadd.s32 %s21, 2
      %p343 = scmp.lt.s32.totalorder %s20, 1
      %s344 = scalar_select %p343, %s20, 1
      %p345 = scmp.lt.s32.totalorder %s22, 0
      %s346 = scalar_select %p345, %s22, 0
      %p347 = scmp.lt.s32.totalorder %s342, 2
      %s348 = scalar_select %p347, %s342, 2
      %s349 = smul.addr %s346, 3
      %s350 = sadd.s32 %s348, %s349
      %s351 = smul.addr %s344, 3
      %s352 = sadd.s32 %s350, %s351
      %s353 = smul.addr %s352, 4
      %s354 = scalar_lea.vmem %s3, %s353
      %s355 = sadd.s32 %s21, 2
      %p356 = scmp.lt.s32.totalorder %s20, 1
      %s357 = scalar_select %p356, %s20, 1
      %p358 = scmp.lt.s32.totalorder %s21, 0
      %s359 = scalar_select %p358, %s21, 0
      %s360 = sadd.s32 %s359, %s357
      %s361 = smul.addr %s360, 4
      %s362 = scalar_lea.vmem %s4, %s361
      %p364 = scmp.eq.s32.totalorder %s22, 0
      // Predicated region
      $region37: #{transformer_forward.34} parent=35 // pred_check
        %p365 = pneg %p364
      $region38: #{transformer_forward.34} parent=35 // pred_check_branch
        %367 = sbr.rel (%p365) target = $region40
      $region39: #{transformer_forward.34} parent=35 // pred_region
        %vm368 = vcmask 7168
        %369 = vst.msk [vmem:[#allocation2] sm:$0xff] %vm368, -1e+30
        %370 = vst.msk [vmem:[#allocation2 + $0x8] sm:$0xff] %vm368, -1e+30
        %371 = vst.msk [vmem:[#allocation2 + $0x10] sm:$0xff] %vm368, -1e+30
        %372 = vst.msk [vmem:[#allocation2 + $0x18] sm:$0xff] %vm368, -1e+30
        %373 = vst.msk [vmem:[#allocation3] sm:$0xff] %vm368, 0.0
        %374 = vst.msk [vmem:[#allocation3 + $0x8] sm:$0xff] %vm368, 0.0
        %375 = vst.msk [vmem:[#allocation3 + $0x10] sm:$0xff] %vm368, 0.0
        %376 = vst.msk [vmem:[#allocation3 + $0x18] sm:$0xff] %vm368, 0.0
        %377 = vst [vmem:[#allocation4] sm:$0xff] 0.0
      $region40: #{transformer_forward.34} parent=35 // pred_fallthru
        _
      %v378 = vld [vmem:[%s327] sm:$0xf]
      %v379 = vld [vmem:[%s340] sm:$0xf]
      %v380 = vld [vmem:[%s354] sm:$0xf]
      %v381 = vld [vmem:[%s319] sm:$0x1]
      %vm382 = vcmp.eq.s32.totalorder %v381, 0
      %v383 = vsel %vm382, -1e+09, 0.0
      %v384 = vlaneseq
      %v385 = vshrl.u32 %v384, 7
      %v386 = vlaneseq
      %v387 = vand.u32 %v386, 127
      %s388 = smul.u32 %s22, 8
      %v389 = vstv %s388
      %v390 = vadd.s32 %v387, %v389
      %vm391 = vcmp.gt.s32.totalorder %v390, %v385
      %v392 = vsel %vm391, -1e+09, 0.0
      %v394 = vperm.slane %v383, 0
      %v396 = vadd.f32 %v394, %v392
      %vm397 = vcmask 261120
      %v399 = vsel %vm397, %v378, 0
      %v402 = vsel %vm397, %v379, 0
      %404 = vmatpush.bf16.xpose.msra.mxu0 0
      %405 = vmatpush.bf16.xpose.msra.mxu0 0
      %406 = vmatpush.bf16.xpose.msra.mxu0 0
      %407 = vmatpush.bf16.xpose.msra.mxu0 0
      %408 = vmatpush.bf16.xpose.msra.mxu0 0
      %409 = vmatpush.bf16.xpose.msra.mxu0 0
      %410 = vmatpush.bf16.xpose.msra.mxu0 0
      %411 = vmatpush.bf16.xpose.msra.mxu0 %v402
      %412 = vmatmul.bf16.gmra.mxu0 %v399
      %v413 = vpop.f32.mrf.mxu0
      %v414 = vadd.f32 0.0, %v413
      %v415 = vpop.f32.mrf.mxu0
      %416 = vdwg.mxu0
      %v417 = vmul.f32 %v414, 0.17677669
      %v418 = vadd.f32 %v417, %v396
      %v419 = vld [vmem:[#allocation2] sm:$0xff]
      %vm420 = vcmask 64512
      %v421 = vsel %vm420, %v418, -inf
      %422 = vmax.xlane.f32.xlu0 %v421
      %v423 = vpop.xlane.xlu0 %422
      %v424 = vmax.f32 %v419, %v423
      %v425 = vsub.f32 %v419, %v424
      %v426 = vmul.f32 %v425, 1.442695
      %v427 = vpow.pop %v426
      %429 = vset.pattern.permute.xlu0 0
      %430 = vperm.xlu0 %429, %v424
      %v431 = vpop.permute.xlu0 %430
      %v433 = vsub.f32 %v418, %v431
      %v434 = vmul.f32 %v433, 1.442695
      %v435 = vpow.pop %v434
      %v436 = vld [vmem:[#allocation3] sm:$0xff]
      %v437 = vmul.f32 %v427, %v436
      %v438 = vsel %vm420, %v435, 0.0
      %439 = vadd.xlane.f32.xlu0 %v438
      %v440 = vpop.xlane.xlu0 %439
      %v441 = vadd.f32 %v437, %v440
      %vm442 = vcmask 7168
      %443 = vst.msk [vmem:[#allocation3] sm:$0xff] %vm442, %v441
      %v444 = vld [vmem:[#allocation4] sm:$0xff]
      %446 = vset.pattern.permute.xlu0 0
      %447 = vperm.xlu0 %446, %v427
      %v448 = vpop.permute.xlu0 %447
      %v450 = vmul.f32 %v448, %v444
      %v451 = vpack.c.bf16 %v435, %v435
      %v453 = vsel %vm420, %v451, 0
      %vm455 = vcmask 1043456
      %v457 = vsel %vm455, %v380, 0
      %459 = vmatpush.bf16.msra.mxu0 0
      %460 = vmatpush.bf16.msra.mxu0 0
      %461 = vmatpush.bf16.msra.mxu0 0
      %462 = vmatpush.bf16.msra.mxu0 0
      %463 = vmatpush.bf16.msra.mxu0 0
      %464 = vmatpush.bf16.msra.mxu0 0
      %465 = vmatpush.bf16.msra.mxu0 0
      %466 = vmatpush.bf16.msra.mxu0 %v457
      %467 = vmatmul.bf16.gmra.mxu0 %v453
      %v468 = vpop.f32.mrf.mxu0
      %v469 = vadd.f32 0.0, %v468
      %v470 = vpop.f32.mrf.mxu0
      %471 = vdwg.mxu0
      %v472 = vadd.f32 %v450, %v469
      %473 = vst.msk [vmem:[#allocation4] sm:$0xff] %vm397, %v472
      %474 = vst.msk [vmem:[#allocation2] sm:$0xff] %vm442, %v424
      %v476 = vunpack.c.l.b16 %v378
      %v477 = vpack.c.b16 %v476, %v476
      %478 = vrot.lane.b32.xlu0 %v477, 96
      %v479 = vpop.permute.xlu0 %478
      %v481 = vunpack.c.l.b16 %v379
      %v482 = vpack.c.b16 %v481, %v481
      %483 = vrot.lane.b32.xlu0 %v482, 96
      %v484 = vpop.permute.xlu0 %483
      %v486 = vsel %vm397, %v479, 0
      %v489 = vsel %vm397, %v484, 0
      %491 = vmatpush.bf16.xpose.msra.mxu0 0
      %492 = vmatpush.bf16.xpose.msra.mxu0 0
      %493 = vmatpush.bf16.xpose.msra.mxu0 0
      %494 = vmatpush.bf16.xpose.msra.mxu0 0
      %495 = vmatpush.bf16.xpose.msra.mxu0 0
      %496 = vmatpush.bf16.xpose.msra.mxu0 0
      %497 = vmatpush.bf16.xpose.msra.mxu0 0
      %498 = vmatpush.bf16.xpose.msra.mxu0 %v489
      %499 = vmatmul.bf16.gmra.mxu0 %v486
      %v500 = vpop.f32.mrf.mxu0
      %v501 = vadd.f32 0.0, %v500
      %v502 = vpop.f32.mrf.mxu0
      %503 = vdwg.mxu0
      %v504 = vmul.f32 %v501, 0.17677669
      %v505 = vadd.f32 %v504, %v396
      %s506 = scalar_lea.vmem [#allocation2], 8
      %v507 = vld [vmem:[%s506] sm:$0xff]
      %v508 = vsel %vm420, %v505, -inf
      %509 = vmax.xlane.f32.xlu0 %v508
      %v510 = vpop.xlane.xlu0 %509
      %v511 = vmax.f32 %v507, %v510
      %v512 = vsub.f32 %v507, %v511
      %v513 = vmul.f32 %v512, 1.442695
      %v514 = vpow.pop %v513
      %516 = vset.pattern.permute.xlu0 0
      %517 = vperm.xlu0 %516, %v511
      %v518 = vpop.permute.xlu0 %517
      %v520 = vsub.f32 %v505, %v518
      %v521 = vmul.f32 %v520, 1.442695
      %v522 = vpow.pop %v521
      %s523 = scalar_lea.vmem [#allocation3], 8
      %v524 = vld [vmem:[%s523] sm:$0xff]
      %v525 = vmul.f32 %v514, %v524
      %v526 = vsel %vm420, %v522, 0.0
      %527 = vadd.xlane.f32.xlu0 %v526
      %v528 = vpop.xlane.xlu0 %527
      %v529 = vadd.f32 %v525, %v528
      %530 = vst.msk [vmem:[%s523] sm:$0xff] %vm442, %v529
      %v531 = vld [vmem:[#allocation4] sm:$0xff]
      %533 = vset.pattern.permute.xlu0 0
      %534 = vperm.xlu0 %533, %v514
      %v535 = vpop.permute.xlu0 %534
      %v537 = vmul.f32 %v535, %v531
      %v538 = vpack.c.bf16 %v522, %v522
      %v540 = vunpack.c.l.b16 %v380
      %v541 = vpack.c.b16 %v540, %v540
      %542 = vrot.lane.b32.xlu0 %v541, 96
      %v543 = vpop.permute.xlu0 %542
      %v545 = vsel %vm420, %v538, 0
      %v548 = vsel %vm455, %v543, 0
      %550 = vmatpush.bf16.msra.mxu0 0
      %551 = vmatpush.bf16.msra.mxu0 0
      %552 = vmatpush.bf16.msra.mxu0 0
      %553 = vmatpush.bf16.msra.mxu0 0
      %554 = vmatpush.bf16.msra.mxu0 0
      %555 = vmatpush.bf16.msra.mxu0 0
      %556 = vmatpush.bf16.msra.mxu0 0
      %557 = vmatpush.bf16.msra.mxu0 %v548
      %558 = vmatmul.bf16.gmra.mxu0 %v545
      %v559 = vpop.f32.mrf.mxu0
      %v560 = vadd.f32 0.0, %v559
      %v561 = vpop.f32.mrf.mxu0
      %562 = vdwg.mxu0
      %564 = vrot.lane.b32.xlu0 %v560, 32
      %v565 = vpop.permute.xlu0 %564
      %v567 = vadd.f32 %v537, %v565
      %vm568 = vcmask 523520
      %569 = vst.msk [vmem:[#allocation4] sm:$0xff] %vm568, %v567
      %570 = vst.msk [vmem:[%s506] sm:$0xff] %vm442, %v511
      %571 = vrot.lane.b32.xlu0 %v477, 64
      %v572 = vpop.permute.xlu0 %571
      %573 = vrot.lane.b32.xlu0 %v482, 64
      %v574 = vpop.permute.xlu0 %573
      %v576 = vsel %vm397, %v572, 0
      %v579 = vsel %vm397, %v574, 0
      %581 = vmatpush.bf16.xpose.msra.mxu0 0
      %582 = vmatpush.bf16.xpose.msra.mxu0 0
      %583 = vmatpush.bf16.xpose.msra.mxu0 0
      %584 = vmatpush.bf16.xpose.msra.mxu0 0
      %585 = vmatpush.bf16.xpose.msra.mxu0 0
      %586 = vmatpush.bf16.xpose.msra.mxu0 0
      %587 = vmatpush.bf16.xpose.msra.mxu0 0
      %588 = vmatpush.bf16.xpose.msra.mxu0 %v579
      %589 = vmatmul.bf16.gmra.mxu0 %v576
      %v590 = vpop.f32.mrf.mxu0
      %v591 = vadd.f32 0.0, %v590
      %v592 = vpop.f32.mrf.mxu0
      %593 = vdwg.mxu0
      %v594 = vmul.f32 %v591, 0.17677669
      %v595 = vadd.f32 %v594, %v396
      %s596 = scalar_lea.vmem [#allocation2], 16
      %v597 = vld [vmem:[%s596] sm:$0xff]
      %v598 = vsel %vm420, %v595, -inf
      %599 = vmax.xlane.f32.xlu0 %v598
      %v600 = vpop.xlane.xlu0 %599
      %v601 = vmax.f32 %v597, %v600
      %v602 = vsub.f32 %v597, %v601
      %v603 = vmul.f32 %v602, 1.442695
      %v604 = vpow.pop %v603
      %606 = vset.pattern.permute.xlu0 0
      %607 = vperm.xlu0 %606, %v601
      %v608 = vpop.permute.xlu0 %607
      %v610 = vsub.f32 %v595, %v608
      %v611 = vmul.f32 %v610, 1.442695
      %v612 = vpow.pop %v611
      %s613 = scalar_lea.vmem [#allocation3], 16
      %v614 = vld [vmem:[%s613] sm:$0xff]
      %v615 = vmul.f32 %v604, %v614
      %v616 = vsel %vm420, %v612, 0.0
      %617 = vadd.xlane.f32.xlu0 %v616
      %v618 = vpop.xlane.xlu0 %617
      %v619 = vadd.f32 %v615, %v618
      %620 = vst.msk [vmem:[%s613] sm:$0xff] %vm442, %v619
      %v621 = vld [vmem:[#allocation4] sm:$0xff]
      %623 = vset.pattern.permute.xlu0 0
      %624 = vperm.xlu0 %623, %v604
      %v625 = vpop.permute.xlu0 %624
      %v627 = vmul.f32 %v625, %v621
      %v628 = vpack.c.bf16 %v612, %v612
      %629 = vrot.lane.b32.xlu0 %v541, 64
      %v630 = vpop.permute.xlu0 %629
      %v632 = vsel %vm420, %v628, 0
      %v635 = vsel %vm455, %v630, 0
      %637 = vmatpush.bf16.msra.mxu0 0
      %638 = vmatpush.bf16.msra.mxu0 0
      %639 = vmatpush.bf16.msra.mxu0 0
      %640 = vmatpush.bf16.msra.mxu0 0
      %641 = vmatpush.bf16.msra.mxu0 0
      %642 = vmatpush.bf16.msra.mxu0 0
      %643 = vmatpush.bf16.msra.mxu0 0
      %644 = vmatpush.bf16.msra.mxu0 %v635
      %645 = vmatmul.bf16.gmra.mxu0 %v632
      %v646 = vpop.f32.mrf.mxu0
      %v647 = vadd.f32 0.0, %v646
      %v648 = vpop.f32.mrf.mxu0
      %649 = vdwg.mxu0
      %651 = vrot.lane.b32.xlu0 %v647, 64
      %v652 = vpop.permute.xlu0 %651
      %v654 = vadd.f32 %v627, %v652
      %vm655 = vcmask 785920
      %656 = vst.msk [vmem:[#allocation4] sm:$0xff] %vm655, %v654
      %657 = vst.msk [vmem:[%s596] sm:$0xff] %vm442, %v601
      %658 = vrot.lane.b32.xlu0 %v477, 32
      %v659 = vpop.permute.xlu0 %658
      %660 = vrot.lane.b32.xlu0 %v482, 32
      %v661 = vpop.permute.xlu0 %660
      %v663 = vsel %vm397, %v659, 0
      %v666 = vsel %vm397, %v661, 0
      %668 = vmatpush.bf16.xpose.msra.mxu0 0
      %669 = vmatpush.bf16.xpose.msra.mxu0 0
      %670 = vmatpush.bf16.xpose.msra.mxu0 0
      %671 = vmatpush.bf16.xpose.msra.mxu0 0
      %672 = vmatpush.bf16.xpose.msra.mxu0 0
      %673 = vmatpush.bf16.xpose.msra.mxu0 0
      %674 = vmatpush.bf16.xpose.msra.mxu0 0
      %675 = vmatpush.bf16.xpose.msra.mxu0 %v666
      %676 = vmatmul.bf16.gmra.mxu0 %v663
      %v677 = vpop.f32.mrf.mxu0
      %v678 = vadd.f32 0.0, %v677
      %v679 = vpop.f32.mrf.mxu0
      %680 = vdwg.mxu0
      %v681 = vmul.f32 %v678, 0.17677669
      %v682 = vadd.f32 %v681, %v396
      %s683 = scalar_lea.vmem [#allocation2], 24
      %v684 = vld [vmem:[%s683] sm:$0xff]
      %v685 = vsel %vm420, %v682, -inf
      %686 = vmax.xlane.f32.xlu0 %v685
      %v687 = vpop.xlane.xlu0 %686
      %v688 = vmax.f32 %v684, %v687
      %v689 = vsub.f32 %v684, %v688
      %v690 = vmul.f32 %v689, 1.442695
      %v691 = vpow.pop %v690
      %693 = vset.pattern.permute.xlu0 0
      %694 = vperm.xlu0 %693, %v688
      %v695 = vpop.permute.xlu0 %694
      %v697 = vsub.f32 %v682, %v695
      %v698 = vmul.f32 %v697, 1.442695
      %v699 = vpow.pop %v698
      %s700 = scalar_lea.vmem [#allocation3], 24
      %v701 = vld [vmem:[%s700] sm:$0xff]
      %v702 = vmul.f32 %v691, %v701
      %v703 = vsel %vm420, %v699, 0.0
      %704 = vadd.xlane.f32.xlu0 %v703
      %v705 = vpop.xlane.xlu0 %704
      %v706 = vadd.f32 %v702, %v705
      %707 = vst.msk [vmem:[%s700] sm:$0xff] %vm442, %v706
      %v708 = vld [vmem:[#allocation4] sm:$0xff]
      %710 = vset.pattern.permute.xlu0 0
      %711 = vperm.xlu0 %710, %v691
      %v712 = vpop.permute.xlu0 %711
      %v714 = vmul.f32 %v712, %v708
      %v715 = vpack.c.bf16 %v699, %v699
      %716 = vrot.lane.b32.xlu0 %v541, 32
      %v717 = vpop.permute.xlu0 %716
      %v719 = vsel %vm420, %v715, 0
      %v722 = vsel %vm455, %v717, 0
      %724 = vmatpush.bf16.msra.mxu0 0
      %725 = vmatpush.bf16.msra.mxu0 0
      %726 = vmatpush.bf16.msra.mxu0 0
      %727 = vmatpush.bf16.msra.mxu0 0
      %728 = vmatpush.bf16.msra.mxu0 0
      %729 = vmatpush.bf16.msra.mxu0 0
      %730 = vmatpush.bf16.msra.mxu0 0
      %731 = vmatpush.bf16.msra.mxu0 %v722
      %732 = vmatmul.bf16.gmra.mxu0 %v719
      %v733 = vpop.f32.mrf.mxu0
      %v734 = vadd.f32 0.0, %v733
      %v735 = vpop.f32.mrf.mxu0
      %736 = vdwg.mxu0
      %738 = vrot.lane.b32.xlu0 %v734, 96
      %v739 = vpop.permute.xlu0 %738
      %v741 = vadd.f32 %v714, %v739
      %vm742 = vcmask 1048320
      %743 = vst.msk [vmem:[#allocation4] sm:$0xff] %vm742, %v741
      %744 = vst.msk [vmem:[%s683] sm:$0xff] %vm442, %v688
      // Predicated region
      $region41: #{transformer_forward.34} parent=35 // pred_check
        %p745 = pneg %p364
      $region42: #{transformer_forward.34} parent=35 // pred_check_branch
        %747 = sbr.rel (%p745) target = $region44
      $region43: #{transformer_forward.34} parent=35 // pred_region
        %v748 = vld [vmem:[#allocation4] sm:$0xff]
        %v749 = vld [vmem:[#allocation3] sm:$0xff]
        %v750 = vrcp.pop %v749
        %752 = vset.pattern.permute.xlu0 0
        %753 = vperm.xlu0 %752, %v750
        %v754 = vpop.permute.xlu0 %753
        %v756 = vmul.f32 %v748, %v754
        %757 = vst.msk [vmem:[#allocation4] sm:$0xff] %vm397, %v756
        %v758 = vld [vmem:[#allocation4] sm:$0xff]
        %v759 = vld [vmem:[%s523] sm:$0xff]
        %v760 = vrcp.pop %v759
        %762 = vset.pattern.permute.xlu0 0
        %763 = vperm.xlu0 %762, %v760
        %v764 = vpop.permute.xlu0 %763
        %v766 = vmul.f32 %v758, %v764
        %767 = vst.msk [vmem:[#allocation4] sm:$0xff] %vm568, %v766
        %v768 = vld [vmem:[#allocation4] sm:$0xff]
        %v769 = vld [vmem:[%s613] sm:$0xff]
        %v770 = vrcp.pop %v769
        %772 = vset.pattern.permute.xlu0 0
        %773 = vperm.xlu0 %772, %v770
        %v774 = vpop.permute.xlu0 %773
        %v776 = vmul.f32 %v768, %v774
        %777 = vst.msk [vmem:[#allocation4] sm:$0xff] %vm655, %v776
        %v778 = vld [vmem:[#allocation4] sm:$0xff]
        %v779 = vld [vmem:[%s700] sm:$0xff]
        %v780 = vrcp.pop %v779
        %782 = vset.pattern.permute.xlu0 0
        %783 = vperm.xlu0 %782, %v780
        %v784 = vpop.permute.xlu0 %783
        %v786 = vmul.f32 %v778, %v784
        %787 = vst.msk [vmem:[#allocation4] sm:$0xff] %vm742, %v786
        %v788 = vld [vmem:[#allocation4] sm:$0xff]
        %v789 = vpack.c.bf16 %v788, %v788
        %790 = vst [vmem:[%s362] sm:$0xf] %v789
      $region44: #{transformer_forward.34} parent=35 // pred_fallthru
        _
      %p791 = scmp.lt.s32.totalorder %s20, 1
      %s792 = scalar_select %p791, %s20, 1
      %p793 = scmp.lt.s32.totalorder %s21, 0
      %s794 = scalar_select %p793, %s21, 0
      %s795 = sadd.s32 %s794, %s792
      %s796 = smul.addr %s795, 4
      %s797 = scalar_lea.vmem %s4, %s796
      // Predicated region
      $region45: #{transformer_forward.34} parent=35 // pred_check
        %p798 = pneg %p174
      $region46: #{transformer_forward.34} parent=35 // pred_check_branch
        %800 = sbr.rel (%p798) target = $region48
      $region47: #{transformer_forward.34} parent=35 // pred_region
        _
      $region48: #{transformer_forward.34} parent=35 // pred_fallthru
        _
    $region36: #{transformer_forward.34} parent=5 // pred_fallthru
      _
    %p801 = scmp.le.s32.totalorder 2, %s10
    // Predicated region
    $region49: #{transformer_forward.34} parent=5 // pred_check
      %p802 = pneg %p801
    $region50: #{transformer_forward.34} parent=5 // pred_check_branch
      %804 = sbr.rel (%p802) target = $region52
    $region51: #{transformer_forward.34} parent=5 // pred_region
      %s805 = ssub.s32 %s10, 2
      // Predicated region
      $region53: #{transformer_forward.34} parent=51 // pred_check
        %p806 = pneg %p180
      $region54: #{transformer_forward.34} parent=51 // pred_check_branch
        %808 = sbr.rel (%p806) target = $region56
      $region55: #{transformer_forward.34} parent=51 // pred_region
        %p809 = scmp.lt.s32.totalorder %s23, 1
        %s810 = scalar_select %p809, %s23, 1
        %p811 = scmp.lt.s32.totalorder %s24, 0
        %s812 = scalar_select %p811, %s24, 0
        %s813 = sadd.s32 %s812, %s810
        %s814 = smul.addr %s813, 4
        %s815 = scalar_lea.vmem %s4, %s814
      $region56: #{transformer_forward.34} parent=51 // pred_fallthru
        _
    $region52: #{transformer_forward.34} parent=5 // pred_fallthru
      _
  $region6: #{transformer_forward.34} parent=0 // loop_footer
    %s14 = sadd.s32 1, %s10
  $region7: #{transformer_forward.34} parent=0 // loop_footer_branch
    %9 = sbr.rel target = $region3
  $region8: #{transformer_forward.34} parent=0 // loop_exit
    _

// kernel: transformer_forward.36
$region0: #{transformer_forward.36}
  #allocation0 [shape = 'u32[]', space=smem, size = 0x4, offset = 0x4, fixed_abs, tag = 'smem constant byte address 0x4 - core index']
  #allocation1 [shape = 'u32[72,128]{1,0:T(1,128)}', space=vmem, size = 0x9000, scoped, tag = 'internal scratch']
  #allocation2 [shape = 'f32[16,128]{1,0:T(8,128)}', space=vmem, size = 0x2000, scoped, tag = 'scratch operand']
  %s0 = inlined_call_operand.vmem [shape: bf16[16,128], index: 0, kind: input, shape index: {}]
  %s1 = inlined_call_operand.hbm [shape: bf16[128,128], index: 1, kind: input, shape index: {}]
  %s2 = inlined_call_operand.vmem [shape: f32[1,128], index: 2, kind: input, shape index: {}]
  %s3 = inlined_call_operand.vmem [shape: bf16[16,128], index: 3, kind: output, shape index: {}]
  %s4 = sld [smem:[#allocation0]]
  $region34: #{transformer_forward.36} parent=0
    _
  %s6 = ssub.s32 1, %s4
  %s7 = scalar_select 0, %s6, %s4
  $region1: #{transformer_forward.36} parent=0
    #allocation3 [shape = 'u8[32768]{0}', space=vmem, size = 0x8000, scoped, tag = 'input window, operand 1, single buffered']
    #allocation4 [shape = 's32[1]{0}', space=sflag, size = 0x4, scoped, tag = 'scoped memory for transformer_forward.36']
    %8 = vsyncpa [#allocation4], 0
    // Predicated region
    $region2: #{transformer_forward.36} parent=1 // pred_check
      _
    $region3: #{transformer_forward.36} parent=1 // pred_check_branch
      %10 = sbr.rel (0) target = $region5
    $region4: #{transformer_forward.36} parent=1 // pred_region
      _
    $region5: #{transformer_forward.36} parent=1 // pred_fallthru
      _
    // Predicated region
    $region6: #{transformer_forward.36} parent=1 // pred_check
      _
    $region7: #{transformer_forward.36} parent=1 // pred_check_branch
      %12 = sbr.rel (0) target = $region9
    $region8: #{transformer_forward.36} parent=1 // pred_region
      %14 = vsyncadd [#allocation4], 0
      %s15 = sshll.u32 %s1, 4
      %s16 = int_to_ptr.hbm [resolvable:$true] %s15
      %s17 = sshll.u32 [#allocation3], 4
      %s18 = int_to_ptr.vmem [resolvable:$true] %s17
      %23 = dma.hbm_to_vmem [thread:$0]  %s16, 1024, %s18, [#allocation4], 64, 64, 4
    $region9: #{transformer_forward.36} parent=1 // pred_fallthru
      _
    // Predicated region
    $region10: #{transformer_forward.36} parent=1 // pred_check
      _
    $region11: #{transformer_forward.36} parent=1 // pred_check_branch
      %25 = sbr.rel (0) target = $region13
    $region12: #{transformer_forward.36} parent=1 // pred_region
      _
    $region13: #{transformer_forward.36} parent=1 // pred_fallthru
      _
    // Predicated region
    $region14: #{transformer_forward.36} parent=1 // pred_check
      _
    $region15: #{transformer_forward.36} parent=1 // pred_check_branch
      %27 = sbr.rel (0) target = $region17
    $region16: #{transformer_forward.36} parent=1 // pred_region
      %29 = dma.done [#allocation4], 1024
    $region17: #{transformer_forward.36} parent=1 // pred_fallthru
      _
    %p30 = scmp.eq.s32.totalorder 0, 0
    // Predicated region
    $region18: #{transformer_forward.36} parent=1 // pred_check
      %p31 = pneg %p30
    $region19: #{transformer_forward.36} parent=1 // pred_check_branch
      %33 = sbr.rel (%p31) target = $region21
    $region20: #{transformer_forward.36} parent=1 // pred_region
      %34 = vst [vmem:[#allocation2] sm:$0xff] 0.0
      %35 = vst [vmem:[#allocation2 + $0x8] sm:$0xff] 0.0
    $region21: #{transformer_forward.36} parent=1 // pred_fallthru
      _
    %v36 = vld [vmem:[#allocation2] sm:$0xff]
    %v37 = vld [vmem:[#allocation2 + $0x8] sm:$0xff]
    %v38 = vld [vmem:[%s0] sm:$0xf]
    %v39 = vld [vmem:[%s0 + $0x4] sm:$0xf]
    %v40 = vld [vmem:[#allocation3] sm:$0xf]
    %v41 = vld [vmem:[#allocation3 + $0x4] sm:$0xf]
    %v42 = vld [vmem:[#allocation3 + $0x8] sm:$0xf]
    %v43 = vld [vmem:[#allocation3 + $0xc] sm:$0xf]
    %v44 = vld [vmem:[#allocation3 + $0x10] sm:$0xf]
    %v45 = vld [vmem:[#allocation3 + $0x14] sm:$0xf]
    %v46 = vld [vmem:[#allocation3 + $0x18] sm:$0xf]
    %v47 = vld [vmem:[#allocation3 + $0x1c] sm:$0xf]
    %v48 = vld [vmem:[#allocation3 + $0x20] sm:$0xf]
    %v49 = vld [vmem:[#allocation3 + $0x24] sm:$0xf]
    %v50 = vld [vmem:[#allocation3 + $0x28] sm:$0xf]
    %v51 = vld [vmem:[#allocation3 + $0x2c] sm:$0xf]
    %v52 = vld [vmem:[#allocation3 + $0x30] sm:$0xf]
    %v53 = vld [vmem:[#allocation3 + $0x34] sm:$0xf]
    %v54 = vld [vmem:[#allocation3 + $0x38] sm:$0xf]
    %v55 = vld [vmem:[#allocation3 + $0x3c] sm:$0xf]
    %v58 = vunpack.c.l.b16 %v38
    %v59 = vunpack.c.l.b16 %v39
    %v60 = vpack.c.b16 %v59, %v58
    %v78 = vunpack.c.l.b16 %v40
    %v79 = vunpack.c.l.b16 %v41
    %v80 = vunpack.c.l.b16 %v42
    %v81 = vunpack.c.l.b16 %v43
    %v82 = vunpack.c.l.b16 %v44
    %v83 = vunpack.c.l.b16 %v45
    %v84 = vunpack.c.l.b16 %v46
    %v85 = vunpack.c.l.b16 %v47
    %v86 = vunpack.c.l.b16 %v48
    %v87 = vunpack.c.l.b16 %v49
    %v88 = vunpack.c.l.b16 %v50
    %v89 = vunpack.c.l.b16 %v51
    %v90 = vunpack.c.l.b16 %v52
    %v91 = vunpack.c.l.b16 %v53
    %v92 = vunpack.c.l.b16 %v54
    %v93 = vunpack.c.l.b16 %v55
    %v94 = vpack.c.b16 %v79, %v78
    %v95 = vpack.c.b16 %v81, %v80
    %v96 = vpack.c.b16 %v83, %v82
    %v97 = vpack.c.b16 %v85, %v84
    %v98 = vpack.c.b16 %v87, %v86
    %v99 = vpack.c.b16 %v89, %v88
    %v100 = vpack.c.b16 %v91, %v90
    %v101 = vpack.c.b16 %v93, %v92
    %110 = vmatpush.bf16.msra.mxu0 %v101
    %111 = vmatpush.bf16.msra.mxu0 %v100
    %112 = vmatpush.bf16.msra.mxu0 %v99
    %113 = vmatpush.bf16.msra.mxu0 %v98
    %114 = vmatpush.bf16.msra.mxu0 %v97
    %115 = vmatpush.bf16.msra.mxu0 %v96
    %116 = vmatpush.bf16.msra.mxu0 %v95
    %117 = vmatpush.bf16.msra.mxu0 %v94
    %118 = vmatmul.bf16.gmra.mxu0 %v60
    %v119 = vpop.f32.mrf.mxu0
    %v120 = vadd.f32 0.0, %v119
    %v121 = vpop.f32.mrf.mxu0
    %v122 = vadd.f32 0.0, %v121
    %123 = vdwg.mxu0
    %v124 = vadd.f32 %v36, %v120
    %v125 = vadd.f32 %v37, %v122
    %126 = vst [vmem:[#allocation2] sm:$0xff] %v124
    %127 = vst [vmem:[#allocation2 + $0x8] sm:$0xff] %v125
    // Predicated region
    $region22: #{transformer_forward.36} parent=1 // pred_check
      %p128 = pneg %p30
    $region23: #{transformer_forward.36} parent=1 // pred_check_branch
      %130 = sbr.rel (%p128) target = $region25
    $region24: #{transformer_forward.36} parent=1 // pred_region
      %v131 = vld [vmem:[#allocation2] sm:$0xff]
      %v132 = vld [vmem:[#allocation2 + $0x8] sm:$0xff]
      %v133 = vld [vmem:[%s2] sm:$0x1]
      %v135 = vperm.slane %v133, 0
      %v137 = vadd.f32 %v131, %v135
      %v138 = vadd.f32 %v132, %v135
      %v139 = vpack.c.bf16 %v137, %v137
      %v140 = vpack.c.bf16 %v138, %v138
      %141 = vst [vmem:[%s3] sm:$0xf] %v139
      %142 = vst [vmem:[%s3 + $0x4] sm:$0xf] %v140
    $region25: #{transformer_forward.36} parent=1 // pred_fallthru
      _
    // Predicated region
    $region26: #{transformer_forward.36} parent=1 // pred_check
      _
    $region27: #{transformer_forward.36} parent=1 // pred_check_branch
      %144 = sbr.rel (0) target = $region29
    $region28: #{transformer_forward.36} parent=1 // pred_region
      _
    $region29: #{transformer_forward.36} parent=1 // pred_fallthru
      _
    // Predicated region
    $region30: #{transformer_forward.36} parent=1 // pred_check
      _
    $region31: #{transformer_forward.36} parent=1 // pred_check_branch
      %146 = sbr.rel (0) target = $region33
    $region32: #{transformer_forward.36} parent=1 // pred_region
      _
    $region33: #{transformer_forward.36} parent=1 // pred_fallthru
      _
    %147 = vsyncpa [#allocation4], 1

// kernel: transformer_forward.38
$region0: #{transformer_forward.38}
  #allocation0 [shape = 'u32[]', space=smem, size = 0x4, offset = 0x4, fixed_abs, tag = 'smem constant byte address 0x4 - core index']
  #allocation1 [shape = 'u32[72,128]{1,0:T(1,128)}', space=vmem, size = 0x9000, scoped, tag = 'internal scratch']
  #allocation2 [shape = 'f32[4,8,1]{2,1,0:T(8,128)}', space=vmem, size = 0x4000, scoped, tag = 'scratch operand']
  #allocation3 [shape = 'f32[4,8,1]{2,1,0:T(8,128)}', space=vmem, size = 0x4000, scoped, tag = 'scratch operand']
  #allocation4 [shape = 'f32[8,128]{1,0:T(8,128)}', space=vmem, size = 0x1000, scoped, tag = 'scratch operand']
  %s0 = inlined_call_operand.vmem [shape: s32[2,1,8], index: 0, kind: input, shape index: {}]
  %s1 = inlined_call_operand.vmem [shape: bf16[2,8,128], index: 1, kind: input, shape index: {}]
  %s2 = inlined_call_operand.vmem [shape: bf16[2,8,256], index: 2, kind: input, shape index: {}, may-alias: {2,3}]
  %s3 = inlined_call_operand.vmem [shape: bf16[2,8,256], index: 3, kind: input, shape index: {}, may-alias: {2,3}]
  %s4 = inlined_call_operand.vmem [shape: bf16[2,8,128], index: 4, kind: output, shape index: {}]
  %s5 = sld [smem:[#allocation0]]
  $region57: #{transformer_forward.38} parent=0
    _
  %s7 = ssub.s32 1, %s5
  %s8 = scalar_select 0, %s7, %s5
  loop: start=0, step=1, limit=4
  $region2: #{transformer_forward.38} parent=0 // loop_pre_header
    _
  $region3: #{transformer_forward.38} parent=0 // loop_header
    %s10 = sphi 0, %s14
    %p11 = scmp.ge.s32.totalorder %s10, 4
    %s17 = sphi 0, %s36
    %s18 = sphi 0, %s32
    %s19 = sphi 0, %s28
    %s20 = sphi 0, %s17
    %s21 = sphi 0, %s18
    %s22 = sphi 0, %s19
    %s23 = sphi 0, %s20
    %s24 = sphi 0, %s21
    %s25 = sphi 0, %s22
    %s41 = sphi 0, %s43
    %s44 = sphi 0, %s41
    %s45 = sphi 0, %s44
    %s61 = sphi 0, %s45
    %s69 = sphi 0, %s71
    %s72 = sphi 0, %s69
    %s73 = sphi 0, %s72
    %s89 = sphi 0, %s73
    %s99 = sphi 0, %s101
    %s102 = sphi 0, %s99
    %s103 = sphi 0, %s102
    %s119 = sphi 0, %s103
    %s131 = sphi 0, %s133
    %s134 = sphi 0, %s131
    %s135 = sphi 0, %s134
    %s151 = sphi 0, %s135
    %s159 = sphi 0, %s161
    %s162 = sphi 0, %s159
    %s163 = sphi 0, %s162
    %s179 = sphi 0, %s163
  $region4: #{transformer_forward.38} parent=0 // loop_header_branch
    %13 = sbr.rel (%p11) target = $region8
  $region5: #{transformer_forward.38} parent=0 // loop_body
    %s15 = ssub.s32 %s10, 1
    %s16 = ssub.s32 %s10, 2
    %s26 = sadd.s32 1, %s19
    %p27 = scmp.ge.s32.totalorder %s26, 1
    %s28 = scalar_select %p27, 0, %s26
    %s29 = sadd.s32 1, %s18
    %s30 = scalar_select %p27, %s29, %s18
    %p31 = scmp.ge.s32.totalorder %s30, 1
    %s32 = scalar_select %p31, 0, %s30
    %s33 = sadd.s32 1, %s17
    %s34 = scalar_select %p31, %s33, %s17
    %p35 = scmp.ge.s32.totalorder %s34, 2
    %s36 = scalar_select %p35, 0, %s34
    %s37 = ssub.s32 %s17, %s36
    %s38 = ssub.s32 %s19, %s28
    %s39 = sor.u32 %s37, %s38
    %p40 = scmp.eq.s32.totalorder %s39, 0
    %s42 = sadd.s32 %s41, 1
    %s43 = scalar_select %p40, %s41, %s42
    %p46 = pneg %p40
    %p47 = scmp.eq.s32.totalorder %s10, 1
    %p48 = por %p46, %p47
    %p49 = scmp.ne.s32.totalorder %s41, %s44
    %p50 = scmp.eq.s32.totalorder %s10, 0
    %p51 = por %p49, %p50
    %p52 = scmp.ne.s32.totalorder %s41, %s44
    %p53 = scmp.eq.s32.totalorder %s15, 1
    %p54 = por %p52, %p53
    %p55 = scmp.ne.s32.totalorder %s44, %s45
    %p56 = scmp.eq.s32.totalorder %s15, 0
    %p57 = por %p55, %p56
    %p58 = scmp.ne.s32.totalorder %s44, %s45
    %p59 = scmp.eq.s32.totalorder %s16, 1
    %p60 = por %p58, %p59
    %p62 = scmp.ne.s32.totalorder %s45, %s61
    %p63 = scmp.eq.s32.totalorder %s16, 0
    %p64 = por %p62, %p63
    %s65 = ssub.s32 %s17, %s36
    %s66 = ssub.s32 %s18, %s32
    %s67 = sor.u32 %s65, %s66
    %p68 = scmp.eq.s32.totalorder %s67, 0
    %s70 = sadd.s32 %s69, 1
    %s71 = scalar_select %p68, %s69, %s70
    %p74 = pneg %p68
    %p75 = scmp.eq.s32.totalorder %s10, 1
    %p76 = por %p74, %p75
    %p77 = scmp.ne.s32.totalorder %s69, %s72
    %p78 = scmp.eq.s32.totalorder %s10, 0
    %p79 = por %p77, %p78
    %p80 = scmp.ne.s32.totalorder %s69, %s72
    %p81 = scmp.eq.s32.totalorder %s15, 1
    %p82 = por %p80, %p81
    %p83 = scmp.ne.s32.totalorder %s72, %s73
    %p84 = scmp.eq.s32.totalorder %s15, 0
    %p85 = por %p83, %p84
    %p86 = scmp.ne.s32.totalorder %s72, %s73
    %p87 = scmp.eq.s32.totalorder %s16, 1
    %p88 = por %p86, %p87
    %p90 = scmp.ne.s32.totalorder %s73, %s89
    %p91 = scmp.eq.s32.totalorder %s16, 0
    %p92 = por %p90, %p91
    %s93 = ssub.s32 %s17, %s36
    %s94 = ssub.s32 %s19, %s28
    %s95 = sor.u32 %s93, %s94
    %s96 = ssub.s32 %s18, %s32
    %s97 = sor.u32 %s95, %s96
    %p98 = scmp.eq.s32.totalorder %s97, 0
    %s100 = sadd.s32 %s99, 1
    %s101 = scalar_select %p98, %s99, %s100
    %p104 = pneg %p98
    %p105 = scmp.eq.s32.totalorder %s10, 1
    %p106 = por %p104, %p105
    %p107 = scmp.ne.s32.totalorder %s99, %s102
    %p108 = scmp.eq.s32.totalorder %s10, 0
    %p109 = por %p107, %p108
    %p110 = scmp.ne.s32.totalorder %s99, %s102
    %p111 = scmp.eq.s32.totalorder %s15, 1
    %p112 = por %p110, %p111
    %p113 = scmp.ne.s32.totalorder %s102, %s103
    %p114 = scmp.eq.s32.totalorder %s15, 0
    %p115 = por %p113, %p114
    %p116 = scmp.ne.s32.totalorder %s102, %s103
    %p117 = scmp.eq.s32.totalorder %s16, 1
    %p118 = por %p116, %p117
    %p120 = scmp.ne.s32.totalorder %s103, %s119
    %p121 = scmp.eq.s32.totalorder %s16, 0
    %p122 = por %p120, %p121
    %s123 = sadd.s32 %s18, 1
    %s124 = sadd.s32 %s32, 1
    %s125 = ssub.s32 %s17, %s36
    %s126 = ssub.s32 %s19, %s28
    %s127 = sor.u32 %s125, %s126
    %s128 = ssub.s32 %s123, %s124
    %s129 = sor.u32 %s127, %s128
    %p130 = scmp.eq.s32.totalorder %s129, 0
    %s132 = sadd.s32 %s131, 1
    %s133 = scalar_select %p130, %s131, %s132
    %p136 = pneg %p130
    %p137 = scmp.eq.s32.totalorder %s10, 1
    %p138 = por %p136, %p137
    %p139 = scmp.ne.s32.totalorder %s131, %s134
    %p140 = scmp.eq.s32.totalorder %s10, 0
    %p141 = por %p139, %p140
    %p142 = scmp.ne.s32.totalorder %s131, %s134
    %p143 = scmp.eq.s32.totalorder %s15, 1
    %p144 = por %p142, %p143
    %p145 = scmp.ne.s32.totalorder %s134, %s135
    %p146 = scmp.eq.s32.totalorder %s15, 0
    %p147 = por %p145, %p146
    %p148 = scmp.ne.s32.totalorder %s134, %s135
    %p149 = scmp.eq.s32.totalorder %s16, 1
    %p150 = por %p148, %p149
    %p152 = scmp.ne.s32.totalorder %s135, %s151
    %p153 = scmp.eq.s32.totalorder %s16, 0
    %p154 = por %p152, %p153
    %s155 = ssub.s32 %s17, %s36
    %s156 = ssub.s32 %s18, %s32
    %s157 = sor.u32 %s155, %s156
    %p158 = scmp.eq.s32.totalorder %s157, 0
    %s160 = sadd.s32 %s159, 1
    %s161 = scalar_select %p158, %s159, %s160
    %p164 = pneg %p158
    %p165 = scmp.eq.s32.totalorder %s10, 1
    %p166 = por %p164, %p165
    %p167 = scmp.ne.s32.totalorder %s159, %s162
    %p168 = scmp.eq.s32.totalorder %s10, 0
    %p169 = por %p167, %p168
    %p170 = scmp.ne.s32.totalorder %s159, %s162
    %p171 = scmp.eq.s32.totalorder %s15, 1
    %p172 = por %p170, %p171
    %p173 = scmp.ne.s32.totalorder %s162, %s163
    %p174 = scmp.eq.s32.totalorder %s15, 0
    %p175 = por %p173, %p174
    %p176 = scmp.ne.s32.totalorder %s162, %s163
    %p177 = scmp.eq.s32.totalorder %s16, 1
    %p178 = por %p176, %p177
    %p180 = scmp.ne.s32.totalorder %s163, %s179
    %p181 = scmp.eq.s32.totalorder %s16, 0
    %p182 = por %p180, %p181
    %p183 = scmp.le.s32.totalorder 1, %s10
    %p184 = scmp.lt.s32.totalorder %s10, 3
    %p185 = pnand %p183, %p184
    %p186 = pneg %p185
    // Predicated region
    $region9: #{transformer_forward.38} parent=5 // pred_check
      _
    $region10: #{transformer_forward.38} parent=5 // pred_check_branch
      %188 = sbr.rel (%p185) target = $region12
    $region11: #{transformer_forward.38} parent=5 // pred_region
      %s189 = ssub.s32 %s10, 1
    $region12: #{transformer_forward.38} parent=5 // pred_fallthru
      _
    %p190 = scmp.lt.s32.totalorder %s10, 2
    // Predicated region
    $region13: #{transformer_forward.38} parent=5 // pred_check
      %p191 = pneg %p190
    $region14: #{transformer_forward.38} parent=5 // pred_check_branch
      %193 = sbr.rel (%p191) target = $region16
    $region15: #{transformer_forward.38} parent=5 // pred_region
      // Predicated region
      $region17: #{transformer_forward.38} parent=15 // pred_check
        %p194 = pneg %p51
      $region18: #{transformer_forward.38} parent=15 // pred_check_branch
        %196 = sbr.rel (%p194) target = $region20
      $region19: #{transformer_forward.38} parent=15 // pred_region
        %p197 = scmp.lt.s32.totalorder %s17, 1
        %s198 = scalar_select %p197, %s17, 1
        %p199 = scmp.lt.s32.totalorder %s19, 0
        %s200 = scalar_select %p199, %s19, 0
        %s201 = sadd.s32 %s200, %s198
        %s202 = scalar_lea.vmem %s0, %s201
      $region20: #{transformer_forward.38} parent=15 // pred_fallthru
        _
      // Predicated region
      $region21: #{transformer_forward.38} parent=15 // pred_check
        %p203 = pneg %p79
      $region22: #{transformer_forward.38} parent=15 // pred_check_branch
        %205 = sbr.rel (%p203) target = $region24
      $region23: #{transformer_forward.38} parent=15 // pred_region
        %p206 = scmp.lt.s32.totalorder %s17, 1
        %s207 = scalar_select %p206, %s17, 1
        %p208 = scmp.lt.s32.totalorder %s18, 0
        %s209 = scalar_select %p208, %s18, 0
        %s210 = sadd.s32 %s209, %s207
        %s211 = smul.addr %s210, 4
        %s212 = scalar_lea.vmem %s1, %s211
      $region24: #{transformer_forward.38} parent=15 // pred_fallthru
        _
      // Predicated region
      $region25: #{transformer_forward.38} parent=15 // pred_check
        %p213 = pneg %p109
      $region26: #{transformer_forward.38} parent=15 // pred_check_branch
        %215 = sbr.rel (%p213) target = $region28
      $region27: #{transformer_forward.38} parent=15 // pred_region
        %p216 = scmp.lt.s32.totalorder %s17, 1
        %s217 = scalar_select %p216, %s17, 1
        %p218 = scmp.lt.s32.totalorder %s19, 0
        %s219 = scalar_select %p218, %s19, 0
        %p220 = scmp.lt.s32.totalorder %s18, 1
        %s221 = scalar_select %p220, %s18, 1
        %s222 = smul.addr %s219, 2
        %s223 = sadd.s32 %s221, %s222
        %s224 = smul.addr %s217, 2
        %s225 = sadd.s32 %s223, %s224
        %s226 = smul.addr %s225, 4
        %s227 = scalar_lea.vmem %s2, %s226
      $region28: #{transformer_forward.38} parent=15 // pred_fallthru
        _
      // Predicated region
      $region29: #{transformer_forward.38} parent=15 // pred_check
        %p228 = pneg %p141
      $region30: #{transformer_forward.38} parent=15 // pred_check_branch
        %230 = sbr.rel (%p228) target = $region32
      $region31: #{transformer_forward.38} parent=15 // pred_region
        %s231 = sadd.s32 %s18, 1
        %p232 = scmp.lt.s32.totalorder %s17, 1
        %s233 = scalar_select %p232, %s17, 1
        %p234 = scmp.lt.s32.totalorder %s19, 0
        %s235 = scalar_select %p234, %s19, 0
        %p236 = scmp.lt.s32.totalorder %s231, 1
        %s237 = scalar_select %p236, %s231, 1
        %s238 = smul.addr %s235, 2
        %s239 = sadd.s32 %s237, %s238
        %s240 = smul.addr %s233, 2
        %s241 = sadd.s32 %s239, %s240
        %s242 = smul.addr %s241, 4
        %s243 = scalar_lea.vmem %s3, %s242
        %s244 = sadd.s32 %s18, 1
      $region32: #{transformer_forward.38} parent=15 // pred_fallthru
        _
    $region16: #{transformer_forward.38} parent=5 // pred_fallthru
      _
    %p245 = scmp.le.s32.totalorder 1, %s10
    %p246 = scmp.lt.s32.totalorder %s10, 3
    %p247 = pnand %p245, %p246
    %p248 = pneg %p247
    // Predicated region
    $region33: #{transformer_forward.38} parent=5 // pred_check
      _
    $region34: #{transformer_forward.38} parent=5 // pred_check_branch
      %250 = sbr.rel (%p247) target = $region36
    $region35: #{transformer_forward.38} parent=5 // pred_region
      %s251 = ssub.s32 %s10, 1
      %p252 = scmp.lt.s32.totalorder %s20, 1
      %s253 = scalar_select %p252, %s20, 1
      %p254 = scmp.lt.s32.totalorder %s22, 0
      %s255 = scalar_select %p254, %s22, 0
      %s256 = sadd.s32 %s255, %s253
      %s257 = scalar_lea.vmem %s0, %s256
      %p258 = pneg %p57
      %p259 = pneg %p54
      %p260 = scmp.lt.s32.totalorder %s20, 1
      %s261 = scalar_select %p260, %s20, 1
      %p262 = scmp.lt.s32.totalorder %s21, 0
      %s263 = scalar_select %p262, %s21, 0
      %s264 = sadd.s32 %s263, %s261
      %s265 = smul.addr %s264, 4
      %s266 = scalar_lea.vmem %s1, %s265
      %p267 = pneg %p85
      %p268 = pneg %p82
      %p269 = scmp.lt.s32.totalorder %s20, 1
      %s270 = scalar_select %p269, %s20, 1
      %p271 = scmp.lt.s32.totalorder %s22, 0
      %s272 = scalar_select %p271, %s22, 0
      %p273 = scmp.lt.s32.totalorder %s21, 1
      %s274 = scalar_select %p273, %s21, 1
      %s275 = smul.addr %s272, 2
      %s276 = sadd.s32 %s274, %s275
      %s277 = smul.addr %s270, 2
      %s278 = sadd.s32 %s276, %s277
      %s279 = smul.addr %s278, 4
      %s280 = scalar_lea.vmem %s2, %s279
      %p281 = pneg %p115
      %p282 = pneg %p112
      %s283 = sadd.s32 %s21, 1
      %p284 = scmp.lt.s32.totalorder %s20, 1
      %s285 = scalar_select %p284, %s20, 1
      %p286 = scmp.lt.s32.totalorder %s22, 0
      %s287 = scalar_select %p286, %s22, 0
      %p288 = scmp.lt.s32.totalorder %s283, 1
      %s289 = scalar_select %p288, %s283, 1
      %s290 = smul.addr %s287, 2
      %s291 = sadd.s32 %s289, %s290
      %s292 = smul.addr %s285, 2
      %s293 = sadd.s32 %s291, %s292
      %s294 = smul.addr %s293, 4
      %s295 = scalar_lea.vmem %s3, %s294
      %p296 = pneg %p147
      %p297 = pneg %p144
      %p298 = pneg %p175
      %p299 = pneg %p172
      %p300 = scmp.lt.s32.totalorder %s20, 1
      %s301 = scalar_select %p300, %s20, 1
      %p302 = scmp.lt.s32.totalorder %s21, 0
      %s303 = scalar_select %p302, %s21, 0
      %s304 = sadd.s32 %s303, %s301
      %s305 = smul.addr %s304, 4
      %s306 = scalar_lea.vmem %s4, %s305
      %p307 = scmp.lt.s32.totalorder %s20, 1
      %s308 = scalar_select %p307, %s20, 1
      %p309 = scmp.lt.s32.totalorder %s22, 0
      %s310 = scalar_select %p309, %s22, 0
      %s311 = sadd.s32 %s310, %s308
      %s312 = scalar_lea.vmem %s0, %s311
      %p313 = scmp.lt.s32.totalorder %s20, 1
      %s314 = scalar_select %p313, %s20, 1
      %p315 = scmp.lt.s32.totalorder %s21, 0
      %s316 = scalar_select %p315, %s21, 0
      %s317 = sadd.s32 %s316, %s314
      %s318 = smul.addr %s317, 4
      %s319 = scalar_lea.vmem %s1, %s318
      %p320 = scmp.lt.s32.totalorder %s20, 1
      %s321 = scalar_select %p320, %s20, 1
      %p322 = scmp.lt.s32.totalorder %s22, 0
      %s323 = scalar_select %p322, %s22, 0
      %p324 = scmp.lt.s32.totalorder %s21, 1
      %s325 = scalar_select %p324, %s21, 1
      %s326 = smul.addr %s323, 2
      %s327 = sadd.s32 %s325, %s326
      %s328 = smul.addr %s321, 2
      %s329 = sadd.s32 %s327, %s328
      %s330 = smul.addr %s329, 4
      %s331 = scalar_lea.vmem %s2, %s330
      %s332 = sadd.s32 %s21, 1
      %p333 = scmp.lt.s32.totalorder %s20, 1
      %s334 = scalar_select %p333, %s20, 1
      %p335 = scmp.lt.s32.totalorder %s22, 0
      %s336 = scalar_select %p335, %s22, 0
      %p337 = scmp.lt.s32.totalorder %s332, 1
      %s338 = scalar_select %p337, %s332, 1
      %s339 = smul.addr %s336, 2
      %s340 = sadd.s32 %s338, %s339
      %s341 = smul.addr %s334, 2
      %s342 = sadd.s32 %s340, %s341
      %s343 = smul.addr %s342, 4
      %s344 = scalar_lea.vmem %s3, %s343
      %s345 = sadd.s32 %s21, 1
      %p346 = scmp.lt.s32.totalorder %s20, 1
      %s347 = scalar_select %p346, %s20, 1
      %p348 = scmp.lt.s32.totalorder %s21, 0
      %s349 = scalar_select %p348, %s21, 0
      %s350 = sadd.s32 %s349, %s347
      %s351 = smul.addr %s350, 4
      %s352 = scalar_lea.vmem %s4, %s351
      %p354 = scmp.eq.s32.totalorder %s22, 0
      // Predicated region
      $region37: #{transformer_forward.38} parent=35 // pred_check
        %p355 = pneg %p354
      $region38: #{transformer_forward.38} parent=35 // pred_check_branch
        %357 = sbr.rel (%p355) target = $region40
      $region39: #{transformer_forward.38} parent=35 // pred_region
        %vm358 = vcmask 7168
        %359 = vst.msk [vmem:[#allocation2] sm:$0xff] %vm358, -1e+30
        %360 = vst.msk [vmem:[#allocation2 + $0x8] sm:$0xff] %vm358, -1e+30
        %361 = vst.msk [vmem:[#allocation2 + $0x10] sm:$0xff] %vm358, -1e+30
        %362 = vst.msk [vmem:[#allocation2 + $0x18] sm:$0xff] %vm358, -1e+30
        %363 = vst.msk [vmem:[#allocation3] sm:$0xff] %vm358, 0.0
        %364 = vst.msk [vmem:[#allocation3 + $0x8] sm:$0xff] %vm358, 0.0
        %365 = vst.msk [vmem:[#allocation3 + $0x10] sm:$0xff] %vm358, 0.0
        %366 = vst.msk [vmem:[#allocation3 + $0x18] sm:$0xff] %vm358, 0.0
        %367 = vst [vmem:[#allocation4] sm:$0xff] 0.0
      $region40: #{transformer_forward.38} parent=35 // pred_fallthru
        _
      %v368 = vld [vmem:[%s319] sm:$0xf]
      %v369 = vld [vmem:[%s331] sm:$0xf]
      %v370 = vld [vmem:[%s344] sm:$0xf]
      %v371 = vld [vmem:[%s312] sm:$0x1]
      %vm372 = vcmp.eq.s32.totalorder %v371, 0
      %v373 = vsel %vm372, -1e+09, 0.0
      %vm374 = vcmask 261120
      %v376 = vsel %vm374, %v368, 0
      %v379 = vsel %vm374, %v369, 0
      %381 = vmatpush.bf16.xpose.msra.mxu0 0
      %382 = vmatpush.bf16.xpose.msra.mxu0 0
      %383 = vmatpush.bf16.xpose.msra.mxu0 0
      %384 = vmatpush.bf16.xpose.msra.mxu0 0
      %385 = vmatpush.bf16.xpose.msra.mxu0 0
      %386 = vmatpush.bf16.xpose.msra.mxu0 0
      %387 = vmatpush.bf16.xpose.msra.mxu0 0
      %388 = vmatpush.bf16.xpose.msra.mxu0 %v379
      %389 = vmatmul.bf16.gmra.mxu0 %v376
      %v390 = vpop.f32.mrf.mxu0
      %v391 = vadd.f32 0.0, %v390
      %v392 = vpop.f32.mrf.mxu0
      %393 = vdwg.mxu0
      %v394 = vmul.f32 %v391, 0.17677669
      %v396 = vperm.slane %v373, 0
      %v398 = vadd.f32 %v394, %v396
      %v399 = vld [vmem:[#allocation2] sm:$0xff]
      %vm400 = vcmask 64512
      %v401 = vsel %vm400, %v398, -inf
      %402 = vmax.xlane.f32.xlu0 %v401
      %v403 = vpop.xlane.xlu0 %402
      %v404 = vmax.f32 %v399, %v403
      %v405 = vsub.f32 %v399, %v404
      %v406 = vmul.f32 %v405, 1.442695
      %v407 = vpow.pop %v406
      %409 = vset.pattern.permute.xlu0 0
      %410 = vperm.xlu0 %409, %v404
      %v411 = vpop.permute.xlu0 %410
      %v413 = vsub.f32 %v398, %v411
      %v414 = vmul.f32 %v413, 1.442695
      %v415 = vpow.pop %v414
      %v416 = vld [vmem:[#allocation3] sm:$0xff]
      %v417 = vmul.f32 %v407, %v416
      %v418 = vsel %vm400, %v415, 0.0
      %419 = vadd.xlane.f32.xlu0 %v418
      %v420 = vpop.xlane.xlu0 %419
      %v421 = vadd.f32 %v417, %v420
      %vm422 = vcmask 7168
      %423 = vst.msk [vmem:[#allocation3] sm:$0xff] %vm422, %v421
      %v424 = vld [vmem:[#allocation4] sm:$0xff]
      %426 = vset.pattern.permute.xlu0 0
      %427 = vperm.xlu0 %426, %v407
      %v428 = vpop.permute.xlu0 %427
      %v430 = vmul.f32 %v428, %v424
      %v431 = vpack.c.bf16 %v415, %v415
      %v433 = vsel %vm400, %v431, 0
      %vm435 = vcmask 1043456
      %v437 = vsel %vm435, %v370, 0
      %439 = vmatpush.bf16.msra.mxu0 0
      %440 = vmatpush.bf16.msra.mxu0 0
      %441 = vmatpush.bf16.msra.mxu0 0
      %442 = vmatpush.bf16.msra.mxu0 0
      %443 = vmatpush.bf16.msra.mxu0 0
      %444 = vmatpush.bf16.msra.mxu0 0
      %445 = vmatpush.bf16.msra.mxu0 0
      %446 = vmatpush.bf16.msra.mxu0 %v437
      %447 = vmatmul.bf16.gmra.mxu0 %v433
      %v448 = vpop.f32.mrf.mxu0
      %v449 = vadd.f32 0.0, %v448
      %v450 = vpop.f32.mrf.mxu0
      %451 = vdwg.mxu0
      %v452 = vadd.f32 %v430, %v449
      %453 = vst.msk [vmem:[#allocation4] sm:$0xff] %vm374, %v452
      %454 = vst.msk [vmem:[#allocation2] sm:$0xff] %vm422, %v404
      %v456 = vunpack.c.l.b16 %v368
      %v457 = vpack.c.b16 %v456, %v456
      %458 = vrot.lane.b32.xlu0 %v457, 96
      %v459 = vpop.permute.xlu0 %458
      %v461 = vunpack.c.l.b16 %v369
      %v462 = vpack.c.b16 %v461, %v461
      %463 = vrot.lane.b32.xlu0 %v462, 96
      %v464 = vpop.permute.xlu0 %463
      %v466 = vsel %vm374, %v459, 0
      %v469 = vsel %vm374, %v464, 0
      %471 = vmatpush.bf16.xpose.msra.mxu0 0
      %472 = vmatpush.bf16.xpose.msra.mxu0 0
      %473 = vmatpush.bf16.xpose.msra.mxu0 0
      %474 = vmatpush.bf16.xpose.msra.mxu0 0
      %475 = vmatpush.bf16.xpose.msra.mxu0 0
      %476 = vmatpush.bf16.xpose.msra.mxu0 0
      %477 = vmatpush.bf16.xpose.msra.mxu0 0
      %478 = vmatpush.bf16.xpose.msra.mxu0 %v469
      %479 = vmatmul.bf16.gmra.mxu0 %v466
      %v480 = vpop.f32.mrf.mxu0
      %v481 = vadd.f32 0.0, %v480
      %v482 = vpop.f32.mrf.mxu0
      %483 = vdwg.mxu0
      %v484 = vmul.f32 %v481, 0.17677669
      %v485 = vadd.f32 %v484, %v396
      %s486 = scalar_lea.vmem [#allocation2], 8
      %v487 = vld [vmem:[%s486] sm:$0xff]
      %v488 = vsel %vm400, %v485, -inf
      %489 = vmax.xlane.f32.xlu0 %v488
      %v490 = vpop.xlane.xlu0 %489
      %v491 = vmax.f32 %v487, %v490
      %v492 = vsub.f32 %v487, %v491
      %v493 = vmul.f32 %v492, 1.442695
      %v494 = vpow.pop %v493
      %496 = vset.pattern.permute.xlu0 0
      %497 = vperm.xlu0 %496, %v491
      %v498 = vpop.permute.xlu0 %497
      %v500 = vsub.f32 %v485, %v498
      %v501 = vmul.f32 %v500, 1.442695
      %v502 = vpow.pop %v501
      %s503 = scalar_lea.vmem [#allocation3], 8
      %v504 = vld [vmem:[%s503] sm:$0xff]
      %v505 = vmul.f32 %v494, %v504
      %v506 = vsel %vm400, %v502, 0.0
      %507 = vadd.xlane.f32.xlu0 %v506
      %v508 = vpop.xlane.xlu0 %507
      %v509 = vadd.f32 %v505, %v508
      %510 = vst.msk [vmem:[%s503] sm:$0xff] %vm422, %v509
      %v511 = vld [vmem:[#allocation4] sm:$0xff]
      %513 = vset.pattern.permute.xlu0 0
      %514 = vperm.xlu0 %513, %v494
      %v515 = vpop.permute.xlu0 %514
      %v517 = vmul.f32 %v515, %v511
      %v518 = vpack.c.bf16 %v502, %v502
      %v520 = vunpack.c.l.b16 %v370
      %v521 = vpack.c.b16 %v520, %v520
      %522 = vrot.lane.b32.xlu0 %v521, 96
      %v523 = vpop.permute.xlu0 %522
      %v525 = vsel %vm400, %v518, 0
      %v528 = vsel %vm435, %v523, 0
      %530 = vmatpush.bf16.msra.mxu0 0
      %531 = vmatpush.bf16.msra.mxu0 0
      %532 = vmatpush.bf16.msra.mxu0 0
      %533 = vmatpush.bf16.msra.mxu0 0
      %534 = vmatpush.bf16.msra.mxu0 0
      %535 = vmatpush.bf16.msra.mxu0 0
      %536 = vmatpush.bf16.msra.mxu0 0
      %537 = vmatpush.bf16.msra.mxu0 %v528
      %538 = vmatmul.bf16.gmra.mxu0 %v525
      %v539 = vpop.f32.mrf.mxu0
      %v540 = vadd.f32 0.0, %v539
      %v541 = vpop.f32.mrf.mxu0
      %542 = vdwg.mxu0
      %544 = vrot.lane.b32.xlu0 %v540, 32
      %v545 = vpop.permute.xlu0 %544
      %v547 = vadd.f32 %v517, %v545
      %vm548 = vcmask 523520
      %549 = vst.msk [vmem:[#allocation4] sm:$0xff] %vm548, %v547
      %550 = vst.msk [vmem:[%s486] sm:$0xff] %vm422, %v491
      %551 = vrot.lane.b32.xlu0 %v457, 64
      %v552 = vpop.permute.xlu0 %551
      %553 = vrot.lane.b32.xlu0 %v462, 64
      %v554 = vpop.permute.xlu0 %553
      %v556 = vsel %vm374, %v552, 0
      %v559 = vsel %vm374, %v554, 0
      %561 = vmatpush.bf16.xpose.msra.mxu0 0
      %562 = vmatpush.bf16.xpose.msra.mxu0 0
      %563 = vmatpush.bf16.xpose.msra.mxu0 0
      %564 = vmatpush.bf16.xpose.msra.mxu0 0
      %565 = vmatpush.bf16.xpose.msra.mxu0 0
      %566 = vmatpush.bf16.xpose.msra.mxu0 0
      %567 = vmatpush.bf16.xpose.msra.mxu0 0
      %568 = vmatpush.bf16.xpose.msra.mxu0 %v559
      %569 = vmatmul.bf16.gmra.mxu0 %v556
      %v570 = vpop.f32.mrf.mxu0
      %v571 = vadd.f32 0.0, %v570
      %v572 = vpop.f32.mrf.mxu0
      %573 = vdwg.mxu0
      %v574 = vmul.f32 %v571, 0.17677669
      %v575 = vadd.f32 %v574, %v396
      %s576 = scalar_lea.vmem [#allocation2], 16
      %v577 = vld [vmem:[%s576] sm:$0xff]
      %v578 = vsel %vm400, %v575, -inf
      %579 = vmax.xlane.f32.xlu0 %v578
      %v580 = vpop.xlane.xlu0 %579
      %v581 = vmax.f32 %v577, %v580
      %v582 = vsub.f32 %v577, %v581
      %v583 = vmul.f32 %v582, 1.442695
      %v584 = vpow.pop %v583
      %586 = vset.pattern.permute.xlu0 0
      %587 = vperm.xlu0 %586, %v581
      %v588 = vpop.permute.xlu0 %587
      %v590 = vsub.f32 %v575, %v588
      %v591 = vmul.f32 %v590, 1.442695
      %v592 = vpow.pop %v591
      %s593 = scalar_lea.vmem [#allocation3], 16
      %v594 = vld [vmem:[%s593] sm:$0xff]
      %v595 = vmul.f32 %v584, %v594
      %v596 = vsel %vm400, %v592, 0.0
      %597 = vadd.xlane.f32.xlu0 %v596
      %v598 = vpop.xlane.xlu0 %597
      %v599 = vadd.f32 %v595, %v598
      %600 = vst.msk [vmem:[%s593] sm:$0xff] %vm422, %v599
      %v601 = vld [vmem:[#allocation4] sm:$0xff]
      %603 = vset.pattern.permute.xlu0 0
      %604 = vperm.xlu0 %603, %v584
      %v605 = vpop.permute.xlu0 %604
      %v607 = vmul.f32 %v605, %v601
      %v608 = vpack.c.bf16 %v592, %v592
      %609 = vrot.lane.b32.xlu0 %v521, 64
      %v610 = vpop.permute.xlu0 %609
      %v612 = vsel %vm400, %v608, 0
      %v615 = vsel %vm435, %v610, 0
      %617 = vmatpush.bf16.msra.mxu0 0
      %618 = vmatpush.bf16.msra.mxu0 0
      %619 = vmatpush.bf16.msra.mxu0 0
      %620 = vmatpush.bf16.msra.mxu0 0
      %621 = vmatpush.bf16.msra.mxu0 0
      %622 = vmatpush.bf16.msra.mxu0 0
      %623 = vmatpush.bf16.msra.mxu0 0
      %624 = vmatpush.bf16.msra.mxu0 %v615
      %625 = vmatmul.bf16.gmra.mxu0 %v612
      %v626 = vpop.f32.mrf.mxu0
      %v627 = vadd.f32 0.0, %v626
      %v628 = vpop.f32.mrf.mxu0
      %629 = vdwg.mxu0
      %631 = vrot.lane.b32.xlu0 %v627, 64
      %v632 = vpop.permute.xlu0 %631
      %v634 = vadd.f32 %v607, %v632
      %vm635 = vcmask 785920
      %636 = vst.msk [vmem:[#allocation4] sm:$0xff] %vm635, %v634
      %637 = vst.msk [vmem:[%s576] sm:$0xff] %vm422, %v581
      %638 = vrot.lane.b32.xlu0 %v457, 32
      %v639 = vpop.permute.xlu0 %638
      %640 = vrot.lane.b32.xlu0 %v462, 32
      %v641 = vpop.permute.xlu0 %640
      %v643 = vsel %vm374, %v639, 0
      %v646 = vsel %vm374, %v641, 0
      %648 = vmatpush.bf16.xpose.msra.mxu0 0
      %649 = vmatpush.bf16.xpose.msra.mxu0 0
      %650 = vmatpush.bf16.xpose.msra.mxu0 0
      %651 = vmatpush.bf16.xpose.msra.mxu0 0
      %652 = vmatpush.bf16.xpose.msra.mxu0 0
      %653 = vmatpush.bf16.xpose.msra.mxu0 0
      %654 = vmatpush.bf16.xpose.msra.mxu0 0
      %655 = vmatpush.bf16.xpose.msra.mxu0 %v646
      %656 = vmatmul.bf16.gmra.mxu0 %v643
      %v657 = vpop.f32.mrf.mxu0
      %v658 = vadd.f32 0.0, %v657
      %v659 = vpop.f32.mrf.mxu0
      %660 = vdwg.mxu0
      %v661 = vmul.f32 %v658, 0.17677669
      %v662 = vadd.f32 %v661, %v396
      %s663 = scalar_lea.vmem [#allocation2], 24
      %v664 = vld [vmem:[%s663] sm:$0xff]
      %v665 = vsel %vm400, %v662, -inf
      %666 = vmax.xlane.f32.xlu0 %v665
      %v667 = vpop.xlane.xlu0 %666
      %v668 = vmax.f32 %v664, %v667
      %v669 = vsub.f32 %v664, %v668
      %v670 = vmul.f32 %v669, 1.442695
      %v671 = vpow.pop %v670
      %673 = vset.pattern.permute.xlu0 0
      %674 = vperm.xlu0 %673, %v668
      %v675 = vpop.permute.xlu0 %674
      %v677 = vsub.f32 %v662, %v675
      %v678 = vmul.f32 %v677, 1.442695
      %v679 = vpow.pop %v678
      %s680 = scalar_lea.vmem [#allocation3], 24
      %v681 = vld [vmem:[%s680] sm:$0xff]
      %v682 = vmul.f32 %v671, %v681
      %v683 = vsel %vm400, %v679, 0.0
      %684 = vadd.xlane.f32.xlu0 %v683
      %v685 = vpop.xlane.xlu0 %684
      %v686 = vadd.f32 %v682, %v685
      %687 = vst.msk [vmem:[%s680] sm:$0xff] %vm422, %v686
      %v688 = vld [vmem:[#allocation4] sm:$0xff]
      %690 = vset.pattern.permute.xlu0 0
      %691 = vperm.xlu0 %690, %v671
      %v692 = vpop.permute.xlu0 %691
      %v694 = vmul.f32 %v692, %v688
      %v695 = vpack.c.bf16 %v679, %v679
      %696 = vrot.lane.b32.xlu0 %v521, 32
      %v697 = vpop.permute.xlu0 %696
      %v699 = vsel %vm400, %v695, 0
      %v702 = vsel %vm435, %v697, 0
      %704 = vmatpush.bf16.msra.mxu0 0
      %705 = vmatpush.bf16.msra.mxu0 0
      %706 = vmatpush.bf16.msra.mxu0 0
      %707 = vmatpush.bf16.msra.mxu0 0
      %708 = vmatpush.bf16.msra.mxu0 0
      %709 = vmatpush.bf16.msra.mxu0 0
      %710 = vmatpush.bf16.msra.mxu0 0
      %711 = vmatpush.bf16.msra.mxu0 %v702
      %712 = vmatmul.bf16.gmra.mxu0 %v699
      %v713 = vpop.f32.mrf.mxu0
      %v714 = vadd.f32 0.0, %v713
      %v715 = vpop.f32.mrf.mxu0
      %716 = vdwg.mxu0
      %718 = vrot.lane.b32.xlu0 %v714, 96
      %v719 = vpop.permute.xlu0 %718
      %v721 = vadd.f32 %v694, %v719
      %vm722 = vcmask 1048320
      %723 = vst.msk [vmem:[#allocation4] sm:$0xff] %vm722, %v721
      %724 = vst.msk [vmem:[%s663] sm:$0xff] %vm422, %v668
      // Predicated region
      $region41: #{transformer_forward.38} parent=35 // pred_check
        %p725 = pneg %p354
      $region42: #{transformer_forward.38} parent=35 // pred_check_branch
        %727 = sbr.rel (%p725) target = $region44
      $region43: #{transformer_forward.38} parent=35 // pred_region
        %v728 = vld [vmem:[#allocation4] sm:$0xff]
        %v729 = vld [vmem:[#allocation3] sm:$0xff]
        %v730 = vrcp.pop %v729
        %732 = vset.pattern.permute.xlu0 0
        %733 = vperm.xlu0 %732, %v730
        %v734 = vpop.permute.xlu0 %733
        %v736 = vmul.f32 %v728, %v734
        %737 = vst.msk [vmem:[#allocation4] sm:$0xff] %vm374, %v736
        %v738 = vld [vmem:[#allocation4] sm:$0xff]
        %v739 = vld [vmem:[%s503] sm:$0xff]
        %v740 = vrcp.pop %v739
        %742 = vset.pattern.permute.xlu0 0
        %743 = vperm.xlu0 %742, %v740
        %v744 = vpop.permute.xlu0 %743
        %v746 = vmul.f32 %v738, %v744
        %747 = vst.msk [vmem:[#allocation4] sm:$0xff] %vm548, %v746
        %v748 = vld [vmem:[#allocation4] sm:$0xff]
        %v749 = vld [vmem:[%s593] sm:$0xff]
        %v750 = vrcp.pop %v749
        %752 = vset.pattern.permute.xlu0 0
        %753 = vperm.xlu0 %752, %v750
        %v754 = vpop.permute.xlu0 %753
        %v756 = vmul.f32 %v748, %v754
        %757 = vst.msk [vmem:[#allocation4] sm:$0xff] %vm635, %v756
        %v758 = vld [vmem:[#allocation4] sm:$0xff]
        %v759 = vld [vmem:[%s680] sm:$0xff]
        %v760 = vrcp.pop %v759
        %762 = vset.pattern.permute.xlu0 0
        %763 = vperm.xlu0 %762, %v760
        %v764 = vpop.permute.xlu0 %763
        %v766 = vmul.f32 %v758, %v764
        %767 = vst.msk [vmem:[#allocation4] sm:$0xff] %vm722, %v766
        %v768 = vld [vmem:[#allocation4] sm:$0xff]
        %v769 = vpack.c.bf16 %v768, %v768
        %770 = vst [vmem:[%s352] sm:$0xf] %v769
      $region44: #{transformer_forward.38} parent=35 // pred_fallthru
        _
      %p771 = scmp.lt.s32.totalorder %s20, 1
      %s772 = scalar_select %p771, %s20, 1
      %p773 = scmp.lt.s32.totalorder %s21, 0
      %s774 = scalar_select %p773, %s21, 0
      %s775 = sadd.s32 %s774, %s772
      %s776 = smul.addr %s775, 4
      %s777 = scalar_lea.vmem %s4, %s776
      // Predicated region
      $region45: #{transformer_forward.38} parent=35 // pred_check
        %p778 = pneg %p172
      $region46: #{transformer_forward.38} parent=35 // pred_check_branch
        %780 = sbr.rel (%p778) target = $region48
      $region47: #{transformer_forward.38} parent=35 // pred_region
        _
      $region48: #{transformer_forward.38} parent=35 // pred_fallthru
        _
    $region36: #{transformer_forward.38} parent=5 // pred_fallthru
      _
    %p781 = scmp.le.s32.totalorder 2, %s10
    // Predicated region
    $region49: #{transformer_forward.38} parent=5 // pred_check
      %p782 = pneg %p781
    $region50: #{transformer_forward.38} parent=5 // pred_check_branch
      %784 = sbr.rel (%p782) target = $region52
    $region51: #{transformer_forward.38} parent=5 // pred_region
      %s785 = ssub.s32 %s10, 2
      // Predicated region
      $region53: #{transformer_forward.38} parent=51 // pred_check
        %p786 = pneg %p178
      $region54: #{transformer_forward.38} parent=51 // pred_check_branch
        %788 = sbr.rel (%p786) target = $region56
      $region55: #{transformer_forward.38} parent=51 // pred_region
        %p789 = scmp.lt.s32.totalorder %s23, 1
        %s790 = scalar_select %p789, %s23, 1
        %p791 = scmp.lt.s32.totalorder %s24, 0
        %s792 = scalar_select %p791, %s24, 0
        %s793 = sadd.s32 %s792, %s790
        %s794 = smul.addr %s793, 4
        %s795 = scalar_lea.vmem %s4, %s794
      $region56: #{transformer_forward.38} parent=51 // pred_fallthru
        _
    $region52: #{transformer_forward.38} parent=5 // pred_fallthru
      _
  $region6: #{transformer_forward.38} parent=0 // loop_footer
    %s14 = sadd.s32 1, %s10
  $region7: #{transformer_forward.38} parent=0 // loop_footer_branch
    %9 = sbr.rel target = $region3
  $region8: #{transformer_forward.38} parent=0 // loop_exit
    _

// kernel: transformer_forward.49
$region0: #{transformer_forward.49}
  #allocation0 [shape = 'u32[]', space=smem, size = 0x4, offset = 0x4, fixed_abs, tag = 'smem constant byte address 0x4 - core index']
  #allocation1 [shape = 'u32[72,128]{1,0:T(1,128)}', space=vmem, size = 0x9000, scoped, tag = 'internal scratch']
  #allocation2 [shape = 'f32[16,128]{1,0:T(8,128)}', space=vmem, size = 0x2000, scoped, tag = 'scratch operand']
  %s0 = inlined_call_operand.vmem [shape: bf16[16,128], index: 0, kind: input, shape index: {}]
  %s1 = inlined_call_operand.vmem [shape: bf16[128,128], index: 1, kind: input, shape index: {}]
  %s2 = inlined_call_operand.vmem [shape: f32[1,128], index: 2, kind: input, shape index: {}]
  %s3 = inlined_call_operand.vmem [shape: f32[16,128], index: 3, kind: output, shape index: {}]
  %s4 = sld [smem:[#allocation0]]
  $region30: #{transformer_forward.49} parent=0
    _
  %s6 = ssub.s32 1, %s4
  %s7 = scalar_select 0, %s6, %s4
  // Predicated region
  $region2: #{transformer_forward.49} parent=0 // pred_check
    _
  $region3: #{transformer_forward.49} parent=0 // pred_check_branch
    %9 = sbr.rel (0) target = $region5
  $region4: #{transformer_forward.49} parent=0 // pred_region
    _
  $region5: #{transformer_forward.49} parent=0 // pred_fallthru
    _
  // Predicated region
  $region6: #{transformer_forward.49} parent=0 // pred_check
    _
  $region7: #{transformer_forward.49} parent=0 // pred_check_branch
    %11 = sbr.rel (0) target = $region9
  $region8: #{transformer_forward.49} parent=0 // pred_region
    _
  $region9: #{transformer_forward.49} parent=0 // pred_fallthru
    _
  // Predicated region
  $region10: #{transformer_forward.49} parent=0 // pred_check
    _
  $region11: #{transformer_forward.49} parent=0 // pred_check_branch
    %13 = sbr.rel (0) target = $region13
  $region12: #{transformer_forward.49} parent=0 // pred_region
    _
  $region13: #{transformer_forward.49} parent=0 // pred_fallthru
    _
  %p14 = scmp.eq.s32.totalorder 0, 0
  // Predicated region
  $region14: #{transformer_forward.49} parent=0 // pred_check
    %p15 = pneg %p14
  $region15: #{transformer_forward.49} parent=0 // pred_check_branch
    %17 = sbr.rel (%p15) target = $region17
  $region16: #{transformer_forward.49} parent=0 // pred_region
    %18 = vst [vmem:[#allocation2] sm:$0xff] 0.0
    %19 = vst [vmem:[#allocation2 + $0x8] sm:$0xff] 0.0
  $region17: #{transformer_forward.49} parent=0 // pred_fallthru
    _
  %v20 = vld [vmem:[#allocation2] sm:$0xff]
  %v21 = vld [vmem:[#allocation2 + $0x8] sm:$0xff]
  %v22 = vld [vmem:[%s0] sm:$0xf]
  %v23 = vld [vmem:[%s0 + $0x4] sm:$0xf]
  %v24 = vld [vmem:[%s1] sm:$0xf]
  %v25 = vld [vmem:[%s1 + $0x4] sm:$0xf]
  %v26 = vld [vmem:[%s1 + $0x8] sm:$0xf]
  %v27 = vld [vmem:[%s1 + $0xc] sm:$0xf]
  %v28 = vld [vmem:[%s1 + $0x10] sm:$0xf]
  %v29 = vld [vmem:[%s1 + $0x14] sm:$0xf]
  %v30 = vld [vmem:[%s1 + $0x18] sm:$0xf]
  %v31 = vld [vmem:[%s1 + $0x1c] sm:$0xf]
  %v32 = vld [vmem:[%s1 + $0x20] sm:$0xf]
  %v33 = vld [vmem:[%s1 + $0x24] sm:$0xf]
  %v34 = vld [vmem:[%s1 + $0x28] sm:$0xf]
  %v35 = vld [vmem:[%s1 + $0x2c] sm:$0xf]
  %v36 = vld [vmem:[%s1 + $0x30] sm:$0xf]
  %v37 = vld [vmem:[%s1 + $0x34] sm:$0xf]
  %v38 = vld [vmem:[%s1 + $0x38] sm:$0xf]
  %v39 = vld [vmem:[%s1 + $0x3c] sm:$0xf]
  %v42 = vunpack.c.l.b16 %v22
  %v43 = vunpack.c.l.b16 %v23
  %v44 = vpack.c.b16 %v43, %v42
  %v62 = vunpack.c.l.b16 %v24
  %v63 = vunpack.c.l.b16 %v25
  %v64 = vunpack.c.l.b16 %v26
  %v65 = vunpack.c.l.b16 %v27
  %v66 = vunpack.c.l.b16 %v28
  %v67 = vunpack.c.l.b16 %v29
  %v68 = vunpack.c.l.b16 %v30
  %v69 = vunpack.c.l.b16 %v31
  %v70 = vunpack.c.l.b16 %v32
  %v71 = vunpack.c.l.b16 %v33
  %v72 = vunpack.c.l.b16 %v34
  %v73 = vunpack.c.l.b16 %v35
  %v74 = vunpack.c.l.b16 %v36
  %v75 = vunpack.c.l.b16 %v37
  %v76 = vunpack.c.l.b16 %v38
  %v77 = vunpack.c.l.b16 %v39
  %v78 = vpack.c.b16 %v63, %v62
  %v79 = vpack.c.b16 %v65, %v64
  %v80 = vpack.c.b16 %v67, %v66
  %v81 = vpack.c.b16 %v69, %v68
  %v82 = vpack.c.b16 %v71, %v70
  %v83 = vpack.c.b16 %v73, %v72
  %v84 = vpack.c.b16 %v75, %v74
  %v85 = vpack.c.b16 %v77, %v76
  %94 = vmatpush.bf16.msra.mxu0 %v85
  %95 = vmatpush.bf16.msra.mxu0 %v84
  %96 = vmatpush.bf16.msra.mxu0 %v83
  %97 = vmatpush.bf16.msra.mxu0 %v82
  %98 = vmatpush.bf16.msra.mxu0 %v81
  %99 = vmatpush.bf16.msra.mxu0 %v80
  %100 = vmatpush.bf16.msra.mxu0 %v79
  %101 = vmatpush.bf16.msra.mxu0 %v78
  %102 = vmatmul.bf16.gmra.mxu0 %v44
  %v103 = vpop.f32.mrf.mxu0
  %v104 = vadd.f32 0.0, %v103
  %v105 = vpop.f32.mrf.mxu0
  %v106 = vadd.f32 0.0, %v105
  %107 = vdwg.mxu0
  %v108 = vadd.f32 %v20, %v104
  %v109 = vadd.f32 %v21, %v106
  %110 = vst [vmem:[#allocation2] sm:$0xff] %v108
  %111 = vst [vmem:[#allocation2 + $0x8] sm:$0xff] %v109
  // Predicated region
  $region18: #{transformer_forward.49} parent=0 // pred_check
    %p112 = pneg %p14
  $region19: #{transformer_forward.49} parent=0 // pred_check_branch
    %114 = sbr.rel (%p112) target = $region21
  $region20: #{transformer_forward.49} parent=0 // pred_region
    %v115 = vld [vmem:[#allocation2] sm:$0xff]
    %v116 = vld [vmem:[#allocation2 + $0x8] sm:$0xff]
    %v117 = vld [vmem:[%s2] sm:$0x1]
    %v119 = vperm.slane %v117, 0
    %v121 = vadd.f32 %v115, %v119
    %v122 = vadd.f32 %v116, %v119
    %123 = vst [vmem:[%s3] sm:$0xff] %v121
    %124 = vst [vmem:[%s3 + $0x8] sm:$0xff] %v122
  $region21: #{transformer_forward.49} parent=0 // pred_fallthru
    _
  // Predicated region
  $region22: #{transformer_forward.49} parent=0 // pred_check
    _
  $region23: #{transformer_forward.49} parent=0 // pred_check_branch
    %126 = sbr.rel (0) target = $region25
  $region24: #{transformer_forward.49} parent=0 // pred_region
    _
  $region25: #{transformer_forward.49} parent=0 // pred_fallthru
    _
  // Predicated region
  $region26: #{transformer_forward.49} parent=0 // pred_check
    _
  $region27: #{transformer_forward.49} parent=0 // pred_check_branch
    %128 = sbr.rel (0) target = $region29
  $region28: #{transformer_forward.49} parent=0 // pred_region
    _
  $region29: #{transformer_forward.49} parent=0 // pred_fallthru
    _

</llo_original>
